<compile_context>
chip_gen: v7x
topology: tpu7x:2x2x1
jax: 0.10.0
libtpu: 0.0.40
codegen_flags: <defaults>
</compile_context>

<pallas_src>
import jax
import jax.numpy as jnp
from jax.experimental import pallas as pl
from jax.experimental.pallas import tpu as pltpu

EPS_BN = 1e-5      # nn.BatchNorm1d default eps
EPS_COS = 1e-8     # F.cosine_similarity default eps

# small-shape configuration (module fixes hidden_dim=2048; scaled down here)
BATCH = 8
C_IN = 4
C_PAD = 8                      # channels zero-padded to one f32 sublane tile
SPATIAL = 16
PIX = SPATIAL * SPATIAL
C_ENC = 128                    # root.encoder_out_channels
HIDDEN = 256                   # stands in for hidden_dim = 2048
PRED_HIDDEN = HIDDEN // 4      # 64 at toy scale (512 at real scale)
# Lane-dense padding, gated: a no-op when PRED_HIDDEN is already lane-aligned.
PRED_PAD = PRED_HIDDEN if PRED_HIDDEN % 128 == 0 else ((PRED_HIDDEN + 127) // 128) * 128

_VMEM = pl.BlockSpec(memory_space=pltpu.MemorySpace.VMEM)


def _per_view_bn(x, gamma=None, beta=None):
    """Training-mode BatchNorm1d with PER-VIEW batch statistics.

    Rows [:BATCH] are view 1, rows [BATCH:] are view 2 (the PyTorch module runs
    each view through the head separately, so stats must stay per view).
    Implemented as a free (2B,N)->(2,B,N) reshape + in-tile sublane reduce.
    """
    n = x.shape[-1]
    v = x.reshape(2, BATCH, n)
    m = jnp.mean(v, axis=1, keepdims=True)
    var = jnp.mean(jnp.square(v - m), axis=1, keepdims=True)
    y = ((v - m) * jax.lax.rsqrt(var + EPS_BN)).reshape(2 * BATCH, n)
    if gamma is None:          # final BatchNorm1d(affine=False)
        return y
    return y * gamma + beta


def _simsiam_fused_kernel(
    x_ref,                     # (2B, C_PAD, PIX) f32 — both views, lane-dense pixels
    ew_ref,                    # (C_PAD, C_ENC) bf16 — stand-in 1x1 conv (rows >= C_IN are 0)
    eb_ref,                    # (1, C_ENC) f32 — conv bias
    w1_ref, w2_ref, w3_ref,    # projection MLP weights, bf16
    wp1_ref, wp2_ref,          # prediction MLP weights, bf16
    hvec_ref,                  # (8, HIDDEN) f32: [b1, g1, be1, b2, g2, be2, b3, bp2]
    pvec_ref,                  # (3, PRED_PAD) f32: [bp1, gp1, bep1]
    loss_ref,                  # (1, 1) f32
    feats_ref,                 # VMEM scratch (2B, C_ENC) f32
):
    rows = 2 * BATCH
    inv_pix = 1.0 / float(PIX)
    ew = ew_ref[...]
    eb = eb_ref[...]

    # ---- stand-in encoder, streamed one image at a time ----
    # Per image: (PIX, C_PAD)x(C_PAD, C_ENC) MXU dot (lhs contracted on dim 0),
    # bias + ReLU + sublane-reduce pooling; the per-image activation is only
    # ~32 vregs, so the full (2B*PIX, C_ENC) conv output never materializes.
    # Static Python loop: 16 iterations, all indices static.
    for b in range(rows):
        xb = x_ref[b].astype(jnp.bfloat16)                       # (C_PAD, PIX)
        hb = jax.lax.dot_general(
            xb, ew, (((0,), (0,)), ((), ())),
            preferred_element_type=jnp.float32)                   # (PIX, C_ENC)
        hb = jnp.maximum(hb + eb, 0.0)
        feats_ref[b:b + 1, :] = jnp.sum(hb, axis=0, keepdims=True) * inv_pix

    feats = feats_ref[...]                                        # (2B, C_ENC) f32

    def dot16(a, w_ref):       # bf16 MXU matmul, f32 accumulation
        return jnp.dot(a.astype(jnp.bfloat16), w_ref[...],
                       preferred_element_type=jnp.float32)

    b1, g1, be1 = hvec_ref[0:1, :], hvec_ref[1:2, :], hvec_ref[2:3, :]
    b2, g2, be2 = hvec_ref[3:4, :], hvec_ref[4:5, :], hvec_ref[5:6, :]
    b3, bp2 = hvec_ref[6:7, :], hvec_ref[7:8, :]
    bp1, gp1, bep1 = pvec_ref[0:1, :], pvec_ref[1:2, :], pvec_ref[2:3, :]

    # ---- projection MLP (weights shared by both stacked views) ----
    z = dot16(feats, w1_ref) + b1
    z = jnp.maximum(_per_view_bn(z, g1, be1), 0.0)
    z = dot16(z, w2_ref) + b2
    z = jnp.maximum(_per_view_bn(z, g2, be2), 0.0)
    z = dot16(z, w3_ref) + b3
    z = _per_view_bn(z)                                           # affine=False

    # ---- prediction MLP (hidden width zero-padded to PRED_PAD lanes) ----
    p = dot16(z, wp1_ref) + bp1
    p = jnp.maximum(_per_view_bn(p, gp1, bep1), 0.0)
    p = dot16(p, wp2_ref) + bp2

    # ---- symmetric negative cosine-similarity loss ----
    # Pair p(view1) with z(view2) and vice versa: a single XLU sublane roll
    # (shift = half the rows, so either roll direction gives the swap).
    # z.detach() in PyTorch only affects gradients; the forward value is
    # identical.
    # TODO(synk): apply lax.stop_gradient to z_sw if this kernel is ever
    # differentiated.
    z_sw = pltpu.roll(z, shift=BATCH, axis=0)
    pn2 = jnp.sum(p * p, axis=-1, keepdims=True)
    zn2 = jnp.sum(z_sw * z_sw, axis=-1, keepdims=True)
    # torch clamps each norm: 1/max(||v||, eps) == rsqrt(max(||v||^2, eps^2))
    inv = (jax.lax.rsqrt(jnp.maximum(pn2, EPS_COS * EPS_COS)) *
           jax.lax.rsqrt(jnp.maximum(zn2, EPS_COS * EPS_COS)))
    cos = jnp.sum(p * z_sw, axis=-1, keepdims=True) * inv        # (2B, 1)
    loss_ref[...] = -jnp.sum(cos, axis=0, keepdims=True) / float(rows)


# ----------------------------------------------------------------------------
# Full forward (equivalent of SIMSIAMWrapper.forward): one fused pallas_call.
# ----------------------------------------------------------------------------
@jax.jit
def simsiam_forward(img1, img2, enc_params, head_params):
    B, Cin, H, W = img1.shape
    # (2B, Cin, H, W) -> (2B, Cin, PIX): free reshape of NCHW (no transpose);
    # channels zero-padded to one sublane tile so every DMA/slice is dense.
    imgs = jnp.concatenate([img1, img2], axis=0).reshape(2 * B, Cin, H * W)
    x = jnp.pad(imgs, ((0, 0), (0, C_PAD - Cin), (0, 0)))
    args = (x,) + tuple(enc_params) + tuple(head_params)
    loss = pl.pallas_call(
        _simsiam_fused_kernel,
        out_shape=jax.ShapeDtypeStruct((1, 1), jnp.float32),
        in_specs=[_VMEM] * len(args),
        out_specs=_VMEM,
        scratch_shapes=[pltpu.VMEM((2 * BATCH, C_ENC), jnp.float32)],
        compiler_params=pltpu.CompilerParams(
            vmem_limit_bytes=32 * 1024 * 1024),
    )(*args)
    return loss[0, 0]


# ----------------------------------------------------------------------------
# Parameter initialization (PyTorch-style uniform for linears, ones/zeros for
# BatchNorm affine params).  Matmul weights stored in bf16; vectors in f32 and
# packed into two slabs to minimize DMA descriptors.
# ----------------------------------------------------------------------------
def _linear_init(key, fan_in, fan_out):
    kw, kb = jax.random.split(key)
    s = 1.0 / jnp.sqrt(float(fan_in))
    w = jax.random.uniform(kw, (fan_in, fan_out), jnp.float32, -s, s)
    b = jax.random.uniform(kb, (1, fan_out), jnp.float32, -s, s)
    return w, b


def init_params(key):
    keys = jax.random.split(key, 6)
    bf16 = jnp.bfloat16

    enc_w, enc_b = _linear_init(keys[0], C_IN, C_ENC)            # 1x1 conv
    enc_w = jnp.pad(enc_w, ((0, C_PAD - C_IN), (0, 0)))          # zero rows for padded chans

    w1, b1 = _linear_init(keys[1], C_ENC, HIDDEN)
    w2, b2 = _linear_init(keys[2], HIDDEN, HIDDEN)
    w3, b3 = _linear_init(keys[3], HIDDEN, HIDDEN)
    wp1, bp1 = _linear_init(keys[4], HIDDEN, PRED_HIDDEN)
    wp2, bp2 = _linear_init(keys[5], PRED_HIDDEN, HIDDEN)

    # Zero-pad the prediction hidden width to a lane-dense multiple of 128
    # (no-op at real scale where PRED_HIDDEN=512).  Padded columns stay exactly
    # zero through bias/BN/ReLU, and the padded wp2 rows are zero, so the
    # forward value is unchanged.
    pad = PRED_PAD - PRED_HIDDEN
    wp1 = jnp.pad(wp1, ((0, 0), (0, pad)))
    bp1 = jnp.pad(bp1, ((0, 0), (0, pad)))
    wp2 = jnp.pad(wp2, ((0, pad), (0, 0)))

    ones_h = jnp.ones((1, HIDDEN), jnp.float32)
    zeros_h = jnp.zeros((1, HIDDEN), jnp.float32)
    ones_p = jnp.ones((1, PRED_PAD), jnp.float32)
    zeros_p = jnp.zeros((1, PRED_PAD), jnp.float32)

    # Pack the twelve (1, N) bias/gamma/beta vectors into two f32 slabs so the
    # kernel sees 2 DMA descriptors instead of 12 (and no 8x sublane padding).
    hvec = jnp.concatenate([b1, ones_h, zeros_h,        # layer-1 bias/gamma/beta
                            b2, ones_h, zeros_h,        # layer-2 bias/gamma/beta
                            b3, bp2], axis=0)           # layer-3 bias, pred-out bias
    pvec = jnp.concatenate([bp1, ones_p, zeros_p], axis=0)

    enc_params = (enc_w.astype(bf16), enc_b)
    head_params = (w1.astype(bf16), w2.astype(bf16), w3.astype(bf16),
                   wp1.astype(bf16), wp2.astype(bf16), hvec, pvec)
    return enc_params, head_params


# ----------------------------------------------------------------------------
# Pure-JAX reference (mirrors the kernel math: bf16 matmuls, per-view BN).
# ----------------------------------------------------------------------------
def _reference(img1, img2, enc_params, head_params):
    enc_w, enc_b = enc_params
    w1, w2, w3, wp1, wp2, hvec, pvec = head_params
    b1, g1, be1 = hvec[0:1], hvec[1:2], hvec[2:3]
    b2, g2, be2 = hvec[3:4], hvec[4:5], hvec[5:6]
    b3, bp2 = hvec[6:7], hvec[7:8]
    bp1, gp1, bep1 = pvec[0:1], pvec[1:2], pvec[2:3]

    def dot16(a, w):
        return jnp.dot(a.astype(jnp.bfloat16), w,
                       preferred_element_type=jnp.float32)

    def enc(img):
        B = img.shape[0]
        x = img.reshape(B, C_IN, PIX).astype(jnp.bfloat16)
        h = jnp.einsum('bcp,ce->bpe', x, enc_w[:C_IN],
                       preferred_element_type=jnp.float32) + enc_b
        return jnp.mean(jnp.maximum(h, 0.0), axis=1)

    def bn(x, g=None, b=None):
        m = jnp.mean(x, axis=0, keepdims=True)
        v = jnp.mean((x - m) ** 2, axis=0, keepdims=True)
        y = (x - m) * jax.lax.rsqrt(v + EPS_BN)
        return y if g is None else y * g + b

    def proj(f):
        h = jnp.maximum(bn(dot16(f, w1) + b1, g1, be1), 0.0)
        h = jnp.maximum(bn(dot16(h, w2) + b2, g2, be2), 0.0)
        return bn(dot16(h, w3) + b3)

    def pred(z):
        h = jnp.maximum(bn(dot16(z, wp1) + bp1, gp1, bep1), 0.0)
        return dot16(h, wp2) + bp2

    def ncm(p, z):
        num = jnp.sum(p * z, -1)
        den = (jnp.maximum(jnp.linalg.norm(p, axis=-1), EPS_COS) *
               jnp.maximum(jnp.linalg.norm(z, axis=-1), EPS_COS))
        return -jnp.mean(num / den)

    f1, f2 = enc(img1), enc(img2)
    z1, z2 = proj(f1), proj(f2)
    p1, p2 = pred(z1), pred(z2)
    return 0.5 * ncm(p1, z2) + 0.5 * ncm(p2, z1)


if __name__ == "__main__":
    key = jax.random.PRNGKey(0)
    k_img1, k_img2, k_params = jax.random.split(key, 3)
    img1 = jax.random.normal(k_img1, (BATCH, C_IN, SPATIAL, SPATIAL), jnp.float32)
    img2 = jax.random.normal(k_img2, (BATCH, C_IN, SPATIAL, SPATIAL), jnp.float32)
    enc_params, head_params = init_params(k_params)

    loss = simsiam_forward(img1, img2, enc_params, head_params)
    loss = jax.block_until_ready(loss)

    ref = _reference(img1, img2, enc_params, head_params)
    assert jnp.isfinite(loss), "non-finite loss"
    assert abs(float(loss) - float(ref)) < 3e-3, (float(loss), float(ref))

    print("KERNEL_OK")
</pallas_src>

<mosaic_0001>
module attributes {stable_mosaic.version = 11 : i64} {
  func.func @_simsiam_fused_kernel(%arg0: memref<16x8x256xf32, #tpu.memory_space<vmem>>, %arg1: memref<8x128xbf16, #tpu.memory_space<vmem>>, %arg2: memref<1x128xf32, #tpu.memory_space<vmem>>, %arg3: memref<128x256xbf16, #tpu.memory_space<vmem>>, %arg4: memref<256x256xbf16, #tpu.memory_space<vmem>>, %arg5: memref<256x256xbf16, #tpu.memory_space<vmem>>, %arg6: memref<256x128xbf16, #tpu.memory_space<vmem>>, %arg7: memref<128x256xbf16, #tpu.memory_space<vmem>>, %arg8: memref<8x256xf32, #tpu.memory_space<vmem>>, %arg9: memref<3x128xf32, #tpu.memory_space<vmem>>, %arg10: memref<1x1xf32, #tpu.memory_space<vmem>>, %arg11: memref<16x128xf32, #tpu.memory_space<vmem>>) attributes {dimension_semantics = [], scalar_prefetch = 0 : i64, scratch_operands = 1 : i64, tpu.core_type = #tpu.core_type<tc>} {
    %c0 = arith.constant 0 : index
    %c0_0 = arith.constant 0 : index
    %0 = vector.load %arg1[%c0, %c0_0] : memref<8x128xbf16, #tpu.memory_space<vmem>>, vector<8x128xbf16>
    %c0_1 = arith.constant 0 : index
    %c0_2 = arith.constant 0 : index
    %1 = vector.load %arg2[%c0_1, %c0_2] : memref<1x128xf32, #tpu.memory_space<vmem>>, vector<1x128xf32>
    %c0_3 = arith.constant 0 : index
    %c0_4 = arith.constant 0 : index
    %c0_5 = arith.constant 0 : index
    %2 = vector.load %arg0[%c0_3, %c0_4, %c0_5] : memref<16x8x256xf32, #tpu.memory_space<vmem>>, vector<1x8x256xf32>
    %3 = vector.shape_cast %2 : vector<1x8x256xf32> to vector<8x256xf32>
    %4 = arith.truncf %3 : vector<8x256xf32> to vector<8x256xbf16>
    %cst = arith.constant dense<0.000000e+00> : vector<256x128xf32>
    %5 = tpu.matmul %4, %0, %cst {dimension_numbers = #tpu.dot_dimension_numbers<[0], [0], [1], [1], [0, 1, 1, 1], [], []>} : vector<8x256xbf16>, vector<8x128xbf16>, vector<256x128xf32> -> vector<256x128xf32>
    %6 = vector.broadcast %1 : vector<1x128xf32> to vector<256x128xf32>
    %7 = arith.addf %5, %6 : vector<256x128xf32>
    %cst_6 = arith.constant 0.000000e+00 : f32
    %8 = vector.broadcast %cst_6 : f32 to vector<256x128xf32>
    %9 = arith.maximumf %7, %8 : vector<256x128xf32>
    %cst_7 = arith.constant dense<0.000000e+00> : vector<128xf32>
    %10 = vector.multi_reduction <add>, %9, %cst_7 [0] : vector<256x128xf32> to vector<128xf32>
    %11 = vector.shape_cast %10 : vector<128xf32> to vector<1x128xf32>
    %cst_8 = arith.constant 3.906250e-03 : f32
    %12 = vector.broadcast %cst_8 : f32 to vector<1x128xf32>
    %13 = arith.mulf %11, %12 : vector<1x128xf32>
    %c0_9 = arith.constant 0 : index
    %c0_10 = arith.constant 0 : index
    %14 = vector.load %arg11[%c0_9, %c0_10] : memref<16x128xf32, #tpu.memory_space<vmem>>, vector<1x128xf32>
    tpu.vector_store %arg11[%c0_9, %c0_10], %13 {strides = array<i32>} : memref<16x128xf32, #tpu.memory_space<vmem>>, vector<1x128xf32>,
    %c1 = arith.constant 1 : index
    %c0_11 = arith.constant 0 : index
    %c0_12 = arith.constant 0 : index
    %15 = vector.load %arg0[%c1, %c0_11, %c0_12] : memref<16x8x256xf32, #tpu.memory_space<vmem>>, vector<1x8x256xf32>
    %16 = vector.shape_cast %15 : vector<1x8x256xf32> to vector<8x256xf32>
    %17 = arith.truncf %16 : vector<8x256xf32> to vector<8x256xbf16>
    %cst_13 = arith.constant dense<0.000000e+00> : vector<256x128xf32>
    %18 = tpu.matmul %17, %0, %cst_13 {dimension_numbers = #tpu.dot_dimension_numbers<[0], [0], [1], [1], [0, 1, 1, 1], [], []>} : vector<8x256xbf16>, vector<8x128xbf16>, vector<256x128xf32> -> vector<256x128xf32>
    %19 = vector.broadcast %1 : vector<1x128xf32> to vector<256x128xf32>
    %20 = arith.addf %18, %19 : vector<256x128xf32>
    %cst_14 = arith.constant 0.000000e+00 : f32
    %21 = vector.broadcast %cst_14 : f32 to vector<256x128xf32>
    %22 = arith.maximumf %20, %21 : vector<256x128xf32>
    %cst_15 = arith.constant dense<0.000000e+00> : vector<128xf32>
    %23 = vector.multi_reduction <add>, %22, %cst_15 [0] : vector<256x128xf32> to vector<128xf32>
    %24 = vector.shape_cast %23 : vector<128xf32> to vector<1x128xf32>
    %cst_16 = arith.constant 3.906250e-03 : f32
    %25 = vector.broadcast %cst_16 : f32 to vector<1x128xf32>
    %26 = arith.mulf %24, %25 : vector<1x128xf32>
    %c1_17 = arith.constant 1 : index
    %c0_18 = arith.constant 0 : index
    %27 = vector.load %arg11[%c1_17, %c0_18] : memref<16x128xf32, #tpu.memory_space<vmem>>, vector<1x128xf32>
    tpu.vector_store %arg11[%c1_17, %c0_18], %26 {strides = array<i32>} : memref<16x128xf32, #tpu.memory_space<vmem>>, vector<1x128xf32>,
    %c2 = arith.constant 2 : index
    %c0_19 = arith.constant 0 : index
    %c0_20 = arith.constant 0 : index
    %28 = vector.load %arg0[%c2, %c0_19, %c0_20] : memref<16x8x256xf32, #tpu.memory_space<vmem>>, vector<1x8x256xf32>
    %29 = vector.shape_cast %28 : vector<1x8x256xf32> to vector<8x256xf32>
    %30 = arith.truncf %29 : vector<8x256xf32> to vector<8x256xbf16>
    %cst_21 = arith.constant dense<0.000000e+00> : vector<256x128xf32>
    %31 = tpu.matmul %30, %0, %cst_21 {dimension_numbers = #tpu.dot_dimension_numbers<[0], [0], [1], [1], [0, 1, 1, 1], [], []>} : vector<8x256xbf16>, vector<8x128xbf16>, vector<256x128xf32> -> vector<256x128xf32>
    %32 = vector.broadcast %1 : vector<1x128xf32> to vector<256x128xf32>
    %33 = arith.addf %31, %32 : vector<256x128xf32>
    %cst_22 = arith.constant 0.000000e+00 : f32
    %34 = vector.broadcast %cst_22 : f32 to vector<256x128xf32>
    %35 = arith.maximumf %33, %34 : vector<256x128xf32>
    %cst_23 = arith.constant dense<0.000000e+00> : vector<128xf32>
    %36 = vector.multi_reduction <add>, %35, %cst_23 [0] : vector<256x128xf32> to vector<128xf32>
    %37 = vector.shape_cast %36 : vector<128xf32> to vector<1x128xf32>
    %cst_24 = arith.constant 3.906250e-03 : f32
    %38 = vector.broadcast %cst_24 : f32 to vector<1x128xf32>
    %39 = arith.mulf %37, %38 : vector<1x128xf32>
    %c2_25 = arith.constant 2 : index
    %c0_26 = arith.constant 0 : index
    %40 = vector.load %arg11[%c2_25, %c0_26] : memref<16x128xf32, #tpu.memory_space<vmem>>, vector<1x128xf32>
    tpu.vector_store %arg11[%c2_25, %c0_26], %39 {strides = array<i32>} : memref<16x128xf32, #tpu.memory_space<vmem>>, vector<1x128xf32>,
    %c3 = arith.constant 3 : index
    %c0_27 = arith.constant 0 : index
    %c0_28 = arith.constant 0 : index
    %41 = vector.load %arg0[%c3, %c0_27, %c0_28] : memref<16x8x256xf32, #tpu.memory_space<vmem>>, vector<1x8x256xf32>
    %42 = vector.shape_cast %41 : vector<1x8x256xf32> to vector<8x256xf32>
    %43 = arith.truncf %42 : vector<8x256xf32> to vector<8x256xbf16>
    %cst_29 = arith.constant dense<0.000000e+00> : vector<256x128xf32>
    %44 = tpu.matmul %43, %0, %cst_29 {dimension_numbers = #tpu.dot_dimension_numbers<[0], [0], [1], [1], [0, 1, 1, 1], [], []>} : vector<8x256xbf16>, vector<8x128xbf16>, vector<256x128xf32> -> vector<256x128xf32>
    %45 = vector.broadcast %1 : vector<1x128xf32> to vector<256x128xf32>
    %46 = arith.addf %44, %45 : vector<256x128xf32>
    %cst_30 = arith.constant 0.000000e+00 : f32
    %47 = vector.broadcast %cst_30 : f32 to vector<256x128xf32>
    %48 = arith.maximumf %46, %47 : vector<256x128xf32>
    %cst_31 = arith.constant dense<0.000000e+00> : vector<128xf32>
    %49 = vector.multi_reduction <add>, %48, %cst_31 [0] : vector<256x128xf32> to vector<128xf32>
    %50 = vector.shape_cast %49 : vector<128xf32> to vector<1x128xf32>
    %cst_32 = arith.constant 3.906250e-03 : f32
    %51 = vector.broadcast %cst_32 : f32 to vector<1x128xf32>
    %52 = arith.mulf %50, %51 : vector<1x128xf32>
    %c3_33 = arith.constant 3 : index
    %c0_34 = arith.constant 0 : index
    %53 = vector.load %arg11[%c3_33, %c0_34] : memref<16x128xf32, #tpu.memory_space<vmem>>, vector<1x128xf32>
    tpu.vector_store %arg11[%c3_33, %c0_34], %52 {strides = array<i32>} : memref<16x128xf32, #tpu.memory_space<vmem>>, vector<1x128xf32>,
    %c4 = arith.constant 4 : index
    %c0_35 = arith.constant 0 : index
    %c0_36 = arith.constant 0 : index
    %54 = vector.load %arg0[%c4, %c0_35, %c0_36] : memref<16x8x256xf32, #tpu.memory_space<vmem>>, vector<1x8x256xf32>
    %55 = vector.shape_cast %54 : vector<1x8x256xf32> to vector<8x256xf32>
    %56 = arith.truncf %55 : vector<8x256xf32> to vector<8x256xbf16>
    %cst_37 = arith.constant dense<0.000000e+00> : vector<256x128xf32>
    %57 = tpu.matmul %56, %0, %cst_37 {dimension_numbers = #tpu.dot_dimension_numbers<[0], [0], [1], [1], [0, 1, 1, 1], [], []>} : vector<8x256xbf16>, vector<8x128xbf16>, vector<256x128xf32> -> vector<256x128xf32>
    %58 = vector.broadcast %1 : vector<1x128xf32> to vector<256x128xf32>
    %59 = arith.addf %57, %58 : vector<256x128xf32>
    %cst_38 = arith.constant 0.000000e+00 : f32
    %60 = vector.broadcast %cst_38 : f32 to vector<256x128xf32>
    %61 = arith.maximumf %59, %60 : vector<256x128xf32>
    %cst_39 = arith.constant dense<0.000000e+00> : vector<128xf32>
    %62 = vector.multi_reduction <add>, %61, %cst_39 [0] : vector<256x128xf32> to vector<128xf32>
    %63 = vector.shape_cast %62 : vector<128xf32> to vector<1x128xf32>
    %cst_40 = arith.constant 3.906250e-03 : f32
    %64 = vector.broadcast %cst_40 : f32 to vector<1x128xf32>
    %65 = arith.mulf %63, %64 : vector<1x128xf32>
    %c4_41 = arith.constant 4 : index
    %c0_42 = arith.constant 0 : index
    %66 = vector.load %arg11[%c4_41, %c0_42] : memref<16x128xf32, #tpu.memory_space<vmem>>, vector<1x128xf32>
    tpu.vector_store %arg11[%c4_41, %c0_42], %65 {strides = array<i32>} : memref<16x128xf32, #tpu.memory_space<vmem>>, vector<1x128xf32>,
    %c5 = arith.constant 5 : index
    %c0_43 = arith.constant 0 : index
    %c0_44 = arith.constant 0 : index
    %67 = vector.load %arg0[%c5, %c0_43, %c0_44] : memref<16x8x256xf32, #tpu.memory_space<vmem>>, vector<1x8x256xf32>
    %68 = vector.shape_cast %67 : vector<1x8x256xf32> to vector<8x256xf32>
    %69 = arith.truncf %68 : vector<8x256xf32> to vector<8x256xbf16>
    %cst_45 = arith.constant dense<0.000000e+00> : vector<256x128xf32>
    %70 = tpu.matmul %69, %0, %cst_45 {dimension_numbers = #tpu.dot_dimension_numbers<[0], [0], [1], [1], [0, 1, 1, 1], [], []>} : vector<8x256xbf16>, vector<8x128xbf16>, vector<256x128xf32> -> vector<256x128xf32>
    %71 = vector.broadcast %1 : vector<1x128xf32> to vector<256x128xf32>
    %72 = arith.addf %70, %71 : vector<256x128xf32>
    %cst_46 = arith.constant 0.000000e+00 : f32
    %73 = vector.broadcast %cst_46 : f32 to vector<256x128xf32>
    %74 = arith.maximumf %72, %73 : vector<256x128xf32>
    %cst_47 = arith.constant dense<0.000000e+00> : vector<128xf32>
    %75 = vector.multi_reduction <add>, %74, %cst_47 [0] : vector<256x128xf32> to vector<128xf32>
    %76 = vector.shape_cast %75 : vector<128xf32> to vector<1x128xf32>
    %cst_48 = arith.constant 3.906250e-03 : f32
    %77 = vector.broadcast %cst_48 : f32 to vector<1x128xf32>
    %78 = arith.mulf %76, %77 : vector<1x128xf32>
    %c5_49 = arith.constant 5 : index
    %c0_50 = arith.constant 0 : index
    %79 = vector.load %arg11[%c5_49, %c0_50] : memref<16x128xf32, #tpu.memory_space<vmem>>, vector<1x128xf32>
    tpu.vector_store %arg11[%c5_49, %c0_50], %78 {strides = array<i32>} : memref<16x128xf32, #tpu.memory_space<vmem>>, vector<1x128xf32>,
    %c6 = arith.constant 6 : index
    %c0_51 = arith.constant 0 : index
    %c0_52 = arith.constant 0 : index
    %80 = vector.load %arg0[%c6, %c0_51, %c0_52] : memref<16x8x256xf32, #tpu.memory_space<vmem>>, vector<1x8x256xf32>
    %81 = vector.shape_cast %80 : vector<1x8x256xf32> to vector<8x256xf32>
    %82 = arith.truncf %81 : vector<8x256xf32> to vector<8x256xbf16>
    %cst_53 = arith.constant dense<0.000000e+00> : vector<256x128xf32>
    %83 = tpu.matmul %82, %0, %cst_53 {dimension_numbers = #tpu.dot_dimension_numbers<[0], [0], [1], [1], [0, 1, 1, 1], [], []>} : vector<8x256xbf16>, vector<8x128xbf16>, vector<256x128xf32> -> vector<256x128xf32>
    %84 = vector.broadcast %1 : vector<1x128xf32> to vector<256x128xf32>
    %85 = arith.addf %83, %84 : vector<256x128xf32>
    %cst_54 = arith.constant 0.000000e+00 : f32
    %86 = vector.broadcast %cst_54 : f32 to vector<256x128xf32>
    %87 = arith.maximumf %85, %86 : vector<256x128xf32>
    %cst_55 = arith.constant dense<0.000000e+00> : vector<128xf32>
    %88 = vector.multi_reduction <add>, %87, %cst_55 [0] : vector<256x128xf32> to vector<128xf32>
    %89 = vector.shape_cast %88 : vector<128xf32> to vector<1x128xf32>
    %cst_56 = arith.constant 3.906250e-03 : f32
    %90 = vector.broadcast %cst_56 : f32 to vector<1x128xf32>
    %91 = arith.mulf %89, %90 : vector<1x128xf32>
    %c6_57 = arith.constant 6 : index
    %c0_58 = arith.constant 0 : index
    %92 = vector.load %arg11[%c6_57, %c0_58] : memref<16x128xf32, #tpu.memory_space<vmem>>, vector<1x128xf32>
    tpu.vector_store %arg11[%c6_57, %c0_58], %91 {strides = array<i32>} : memref<16x128xf32, #tpu.memory_space<vmem>>, vector<1x128xf32>,
    %c7 = arith.constant 7 : index
    %c0_59 = arith.constant 0 : index
    %c0_60 = arith.constant 0 : index
    %93 = vector.load %arg0[%c7, %c0_59, %c0_60] : memref<16x8x256xf32, #tpu.memory_space<vmem>>, vector<1x8x256xf32>
    %94 = vector.shape_cast %93 : vector<1x8x256xf32> to vector<8x256xf32>
    %95 = arith.truncf %94 : vector<8x256xf32> to vector<8x256xbf16>
    %cst_61 = arith.constant dense<0.000000e+00> : vector<256x128xf32>
    %96 = tpu.matmul %95, %0, %cst_61 {dimension_numbers = #tpu.dot_dimension_numbers<[0], [0], [1], [1], [0, 1, 1, 1], [], []>} : vector<8x256xbf16>, vector<8x128xbf16>, vector<256x128xf32> -> vector<256x128xf32>
    %97 = vector.broadcast %1 : vector<1x128xf32> to vector<256x128xf32>
    %98 = arith.addf %96, %97 : vector<256x128xf32>
    %cst_62 = arith.constant 0.000000e+00 : f32
    %99 = vector.broadcast %cst_62 : f32 to vector<256x128xf32>
    %100 = arith.maximumf %98, %99 : vector<256x128xf32>
    %cst_63 = arith.constant dense<0.000000e+00> : vector<128xf32>
    %101 = vector.multi_reduction <add>, %100, %cst_63 [0] : vector<256x128xf32> to vector<128xf32>
    %102 = vector.shape_cast %101 : vector<128xf32> to vector<1x128xf32>
    %cst_64 = arith.constant 3.906250e-03 : f32
    %103 = vector.broadcast %cst_64 : f32 to vector<1x128xf32>
    %104 = arith.mulf %102, %103 : vector<1x128xf32>
    %c7_65 = arith.constant 7 : index
    %c0_66 = arith.constant 0 : index
    %105 = vector.load %arg11[%c7_65, %c0_66] : memref<16x128xf32, #tpu.memory_space<vmem>>, vector<1x128xf32>
    tpu.vector_store %arg11[%c7_65, %c0_66], %104 {strides = array<i32>} : memref<16x128xf32, #tpu.memory_space<vmem>>, vector<1x128xf32>,
    %c8 = arith.constant 8 : index
    %c0_67 = arith.constant 0 : index
    %c0_68 = arith.constant 0 : index
    %106 = vector.load %arg0[%c8, %c0_67, %c0_68] : memref<16x8x256xf32, #tpu.memory_space<vmem>>, vector<1x8x256xf32>
    %107 = vector.shape_cast %106 : vector<1x8x256xf32> to vector<8x256xf32>
    %108 = arith.truncf %107 : vector<8x256xf32> to vector<8x256xbf16>
    %cst_69 = arith.constant dense<0.000000e+00> : vector<256x128xf32>
    %109 = tpu.matmul %108, %0, %cst_69 {dimension_numbers = #tpu.dot_dimension_numbers<[0], [0], [1], [1], [0, 1, 1, 1], [], []>} : vector<8x256xbf16>, vector<8x128xbf16>, vector<256x128xf32> -> vector<256x128xf32>
    %110 = vector.broadcast %1 : vector<1x128xf32> to vector<256x128xf32>
    %111 = arith.addf %109, %110 : vector<256x128xf32>
    %cst_70 = arith.constant 0.000000e+00 : f32
    %112 = vector.broadcast %cst_70 : f32 to vector<256x128xf32>
    %113 = arith.maximumf %111, %112 : vector<256x128xf32>
    %cst_71 = arith.constant dense<0.000000e+00> : vector<128xf32>
    %114 = vector.multi_reduction <add>, %113, %cst_71 [0] : vector<256x128xf32> to vector<128xf32>
    %115 = vector.shape_cast %114 : vector<128xf32> to vector<1x128xf32>
    %cst_72 = arith.constant 3.906250e-03 : f32
    %116 = vector.broadcast %cst_72 : f32 to vector<1x128xf32>
    %117 = arith.mulf %115, %116 : vector<1x128xf32>
    %c8_73 = arith.constant 8 : index
    %c0_74 = arith.constant 0 : index
    %118 = vector.load %arg11[%c8_73, %c0_74] : memref<16x128xf32, #tpu.memory_space<vmem>>, vector<1x128xf32>
    tpu.vector_store %arg11[%c8_73, %c0_74], %117 {strides = array<i32>} : memref<16x128xf32, #tpu.memory_space<vmem>>, vector<1x128xf32>,
    %c9 = arith.constant 9 : index
    %c0_75 = arith.constant 0 : index
    %c0_76 = arith.constant 0 : index
    %119 = vector.load %arg0[%c9, %c0_75, %c0_76] : memref<16x8x256xf32, #tpu.memory_space<vmem>>, vector<1x8x256xf32>
    %120 = vector.shape_cast %119 : vector<1x8x256xf32> to vector<8x256xf32>
    %121 = arith.truncf %120 : vector<8x256xf32> to vector<8x256xbf16>
    %cst_77 = arith.constant dense<0.000000e+00> : vector<256x128xf32>
    %122 = tpu.matmul %121, %0, %cst_77 {dimension_numbers = #tpu.dot_dimension_numbers<[0], [0], [1], [1], [0, 1, 1, 1], [], []>} : vector<8x256xbf16>, vector<8x128xbf16>, vector<256x128xf32> -> vector<256x128xf32>
    %123 = vector.broadcast %1 : vector<1x128xf32> to vector<256x128xf32>
    %124 = arith.addf %122, %123 : vector<256x128xf32>
    %cst_78 = arith.constant 0.000000e+00 : f32
    %125 = vector.broadcast %cst_78 : f32 to vector<256x128xf32>
    %126 = arith.maximumf %124, %125 : vector<256x128xf32>
    %cst_79 = arith.constant dense<0.000000e+00> : vector<128xf32>
    %127 = vector.multi_reduction <add>, %126, %cst_79 [0] : vector<256x128xf32> to vector<128xf32>
    %128 = vector.shape_cast %127 : vector<128xf32> to vector<1x128xf32>
    %cst_80 = arith.constant 3.906250e-03 : f32
    %129 = vector.broadcast %cst_80 : f32 to vector<1x128xf32>
    %130 = arith.mulf %128, %129 : vector<1x128xf32>
    %c9_81 = arith.constant 9 : index
    %c0_82 = arith.constant 0 : index
    %131 = vector.load %arg11[%c9_81, %c0_82] : memref<16x128xf32, #tpu.memory_space<vmem>>, vector<1x128xf32>
    tpu.vector_store %arg11[%c9_81, %c0_82], %130 {strides = array<i32>} : memref<16x128xf32, #tpu.memory_space<vmem>>, vector<1x128xf32>,
    %c10 = arith.constant 10 : index
    %c0_83 = arith.constant 0 : index
    %c0_84 = arith.constant 0 : index
    %132 = vector.load %arg0[%c10, %c0_83, %c0_84] : memref<16x8x256xf32, #tpu.memory_space<vmem>>, vector<1x8x256xf32>
    %133 = vector.shape_cast %132 : vector<1x8x256xf32> to vector<8x256xf32>
    %134 = arith.truncf %133 : vector<8x256xf32> to vector<8x256xbf16>
    %cst_85 = arith.constant dense<0.000000e+00> : vector<256x128xf32>
    %135 = tpu.matmul %134, %0, %cst_85 {dimension_numbers = #tpu.dot_dimension_numbers<[0], [0], [1], [1], [0, 1, 1, 1], [], []>} : vector<8x256xbf16>, vector<8x128xbf16>, vector<256x128xf32> -> vector<256x128xf32>
    %136 = vector.broadcast %1 : vector<1x128xf32> to vector<256x128xf32>
    %137 = arith.addf %135, %136 : vector<256x128xf32>
    %cst_86 = arith.constant 0.000000e+00 : f32
    %138 = vector.broadcast %cst_86 : f32 to vector<256x128xf32>
    %139 = arith.maximumf %137, %138 : vector<256x128xf32>
    %cst_87 = arith.constant dense<0.000000e+00> : vector<128xf32>
    %140 = vector.multi_reduction <add>, %139, %cst_87 [0] : vector<256x128xf32> to vector<128xf32>
    %141 = vector.shape_cast %140 : vector<128xf32> to vector<1x128xf32>
    %cst_88 = arith.constant 3.906250e-03 : f32
    %142 = vector.broadcast %cst_88 : f32 to vector<1x128xf32>
    %143 = arith.mulf %141, %142 : vector<1x128xf32>
    %c10_89 = arith.constant 10 : index
    %c0_90 = arith.constant 0 : index
    %144 = vector.load %arg11[%c10_89, %c0_90] : memref<16x128xf32, #tpu.memory_space<vmem>>, vector<1x128xf32>
    tpu.vector_store %arg11[%c10_89, %c0_90], %143 {strides = array<i32>} : memref<16x128xf32, #tpu.memory_space<vmem>>, vector<1x128xf32>,
    %c11 = arith.constant 11 : index
    %c0_91 = arith.constant 0 : index
    %c0_92 = arith.constant 0 : index
    %145 = vector.load %arg0[%c11, %c0_91, %c0_92] : memref<16x8x256xf32, #tpu.memory_space<vmem>>, vector<1x8x256xf32>
    %146 = vector.shape_cast %145 : vector<1x8x256xf32> to vector<8x256xf32>
    %147 = arith.truncf %146 : vector<8x256xf32> to vector<8x256xbf16>
    %cst_93 = arith.constant dense<0.000000e+00> : vector<256x128xf32>
    %148 = tpu.matmul %147, %0, %cst_93 {dimension_numbers = #tpu.dot_dimension_numbers<[0], [0], [1], [1], [0, 1, 1, 1], [], []>} : vector<8x256xbf16>, vector<8x128xbf16>, vector<256x128xf32> -> vector<256x128xf32>
    %149 = vector.broadcast %1 : vector<1x128xf32> to vector<256x128xf32>
    %150 = arith.addf %148, %149 : vector<256x128xf32>
    %cst_94 = arith.constant 0.000000e+00 : f32
    %151 = vector.broadcast %cst_94 : f32 to vector<256x128xf32>
    %152 = arith.maximumf %150, %151 : vector<256x128xf32>
    %cst_95 = arith.constant dense<0.000000e+00> : vector<128xf32>
    %153 = vector.multi_reduction <add>, %152, %cst_95 [0] : vector<256x128xf32> to vector<128xf32>
    %154 = vector.shape_cast %153 : vector<128xf32> to vector<1x128xf32>
    %cst_96 = arith.constant 3.906250e-03 : f32
    %155 = vector.broadcast %cst_96 : f32 to vector<1x128xf32>
    %156 = arith.mulf %154, %155 : vector<1x128xf32>
    %c11_97 = arith.constant 11 : index
    %c0_98 = arith.constant 0 : index
    %157 = vector.load %arg11[%c11_97, %c0_98] : memref<16x128xf32, #tpu.memory_space<vmem>>, vector<1x128xf32>
    tpu.vector_store %arg11[%c11_97, %c0_98], %156 {strides = array<i32>} : memref<16x128xf32, #tpu.memory_space<vmem>>, vector<1x128xf32>,
    %c12 = arith.constant 12 : index
    %c0_99 = arith.constant 0 : index
    %c0_100 = arith.constant 0 : index
    %158 = vector.load %arg0[%c12, %c0_99, %c0_100] : memref<16x8x256xf32, #tpu.memory_space<vmem>>, vector<1x8x256xf32>
    %159 = vector.shape_cast %158 : vector<1x8x256xf32> to vector<8x256xf32>
    %160 = arith.truncf %159 : vector<8x256xf32> to vector<8x256xbf16>
    %cst_101 = arith.constant dense<0.000000e+00> : vector<256x128xf32>
    %161 = tpu.matmul %160, %0, %cst_101 {dimension_numbers = #tpu.dot_dimension_numbers<[0], [0], [1], [1], [0, 1, 1, 1], [], []>} : vector<8x256xbf16>, vector<8x128xbf16>, vector<256x128xf32> -> vector<256x128xf32>
    %162 = vector.broadcast %1 : vector<1x128xf32> to vector<256x128xf32>
    %163 = arith.addf %161, %162 : vector<256x128xf32>
    %cst_102 = arith.constant 0.000000e+00 : f32
    %164 = vector.broadcast %cst_102 : f32 to vector<256x128xf32>
    %165 = arith.maximumf %163, %164 : vector<256x128xf32>
    %cst_103 = arith.constant dense<0.000000e+00> : vector<128xf32>
    %166 = vector.multi_reduction <add>, %165, %cst_103 [0] : vector<256x128xf32> to vector<128xf32>
    %167 = vector.shape_cast %166 : vector<128xf32> to vector<1x128xf32>
    %cst_104 = arith.constant 3.906250e-03 : f32
    %168 = vector.broadcast %cst_104 : f32 to vector<1x128xf32>
    %169 = arith.mulf %167, %168 : vector<1x128xf32>
    %c12_105 = arith.constant 12 : index
    %c0_106 = arith.constant 0 : index
    %170 = vector.load %arg11[%c12_105, %c0_106] : memref<16x128xf32, #tpu.memory_space<vmem>>, vector<1x128xf32>
    tpu.vector_store %arg11[%c12_105, %c0_106], %169 {strides = array<i32>} : memref<16x128xf32, #tpu.memory_space<vmem>>, vector<1x128xf32>,
    %c13 = arith.constant 13 : index
    %c0_107 = arith.constant 0 : index
    %c0_108 = arith.constant 0 : index
    %171 = vector.load %arg0[%c13, %c0_107, %c0_108] : memref<16x8x256xf32, #tpu.memory_space<vmem>>, vector<1x8x256xf32>
    %172 = vector.shape_cast %171 : vector<1x8x256xf32> to vector<8x256xf32>
    %173 = arith.truncf %172 : vector<8x256xf32> to vector<8x256xbf16>
    %cst_109 = arith.constant dense<0.000000e+00> : vector<256x128xf32>
    %174 = tpu.matmul %173, %0, %cst_109 {dimension_numbers = #tpu.dot_dimension_numbers<[0], [0], [1], [1], [0, 1, 1, 1], [], []>} : vector<8x256xbf16>, vector<8x128xbf16>, vector<256x128xf32> -> vector<256x128xf32>
    %175 = vector.broadcast %1 : vector<1x128xf32> to vector<256x128xf32>
    %176 = arith.addf %174, %175 : vector<256x128xf32>
    %cst_110 = arith.constant 0.000000e+00 : f32
    %177 = vector.broadcast %cst_110 : f32 to vector<256x128xf32>
    %178 = arith.maximumf %176, %177 : vector<256x128xf32>
    %cst_111 = arith.constant dense<0.000000e+00> : vector<128xf32>
    %179 = vector.multi_reduction <add>, %178, %cst_111 [0] : vector<256x128xf32> to vector<128xf32>
    %180 = vector.shape_cast %179 : vector<128xf32> to vector<1x128xf32>
    %cst_112 = arith.constant 3.906250e-03 : f32
    %181 = vector.broadcast %cst_112 : f32 to vector<1x128xf32>
    %182 = arith.mulf %180, %181 : vector<1x128xf32>
    %c13_113 = arith.constant 13 : index
    %c0_114 = arith.constant 0 : index
    %183 = vector.load %arg11[%c13_113, %c0_114] : memref<16x128xf32, #tpu.memory_space<vmem>>, vector<1x128xf32>
    tpu.vector_store %arg11[%c13_113, %c0_114], %182 {strides = array<i32>} : memref<16x128xf32, #tpu.memory_space<vmem>>, vector<1x128xf32>,
    %c14 = arith.constant 14 : index
    %c0_115 = arith.constant 0 : index
    %c0_116 = arith.constant 0 : index
    %184 = vector.load %arg0[%c14, %c0_115, %c0_116] : memref<16x8x256xf32, #tpu.memory_space<vmem>>, vector<1x8x256xf32>
    %185 = vector.shape_cast %184 : vector<1x8x256xf32> to vector<8x256xf32>
    %186 = arith.truncf %185 : vector<8x256xf32> to vector<8x256xbf16>
    %cst_117 = arith.constant dense<0.000000e+00> : vector<256x128xf32>
    %187 = tpu.matmul %186, %0, %cst_117 {dimension_numbers = #tpu.dot_dimension_numbers<[0], [0], [1], [1], [0, 1, 1, 1], [], []>} : vector<8x256xbf16>, vector<8x128xbf16>, vector<256x128xf32> -> vector<256x128xf32>
    %188 = vector.broadcast %1 : vector<1x128xf32> to vector<256x128xf32>
    %189 = arith.addf %187, %188 : vector<256x128xf32>
    %cst_118 = arith.constant 0.000000e+00 : f32
    %190 = vector.broadcast %cst_118 : f32 to vector<256x128xf32>
    %191 = arith.maximumf %189, %190 : vector<256x128xf32>
    %cst_119 = arith.constant dense<0.000000e+00> : vector<128xf32>
    %192 = vector.multi_reduction <add>, %191, %cst_119 [0] : vector<256x128xf32> to vector<128xf32>
    %193 = vector.shape_cast %192 : vector<128xf32> to vector<1x128xf32>
    %cst_120 = arith.constant 3.906250e-03 : f32
    %194 = vector.broadcast %cst_120 : f32 to vector<1x128xf32>
    %195 = arith.mulf %193, %194 : vector<1x128xf32>
    %c14_121 = arith.constant 14 : index
    %c0_122 = arith.constant 0 : index
    %196 = vector.load %arg11[%c14_121, %c0_122] : memref<16x128xf32, #tpu.memory_space<vmem>>, vector<1x128xf32>
    tpu.vector_store %arg11[%c14_121, %c0_122], %195 {strides = array<i32>} : memref<16x128xf32, #tpu.memory_space<vmem>>, vector<1x128xf32>,
    %c15 = arith.constant 15 : index
    %c0_123 = arith.constant 0 : index
    %c0_124 = arith.constant 0 : index
    %197 = vector.load %arg0[%c15, %c0_123, %c0_124] : memref<16x8x256xf32, #tpu.memory_space<vmem>>, vector<1x8x256xf32>
    %198 = vector.shape_cast %197 : vector<1x8x256xf32> to vector<8x256xf32>
    %199 = arith.truncf %198 : vector<8x256xf32> to vector<8x256xbf16>
    %cst_125 = arith.constant dense<0.000000e+00> : vector<256x128xf32>
    %200 = tpu.matmul %199, %0, %cst_125 {dimension_numbers = #tpu.dot_dimension_numbers<[0], [0], [1], [1], [0, 1, 1, 1], [], []>} : vector<8x256xbf16>, vector<8x128xbf16>, vector<256x128xf32> -> vector<256x128xf32>
    %201 = vector.broadcast %1 : vector<1x128xf32> to vector<256x128xf32>
    %202 = arith.addf %200, %201 : vector<256x128xf32>
    %cst_126 = arith.constant 0.000000e+00 : f32
    %203 = vector.broadcast %cst_126 : f32 to vector<256x128xf32>
    %204 = arith.maximumf %202, %203 : vector<256x128xf32>
    %cst_127 = arith.constant dense<0.000000e+00> : vector<128xf32>
    %205 = vector.multi_reduction <add>, %204, %cst_127 [0] : vector<256x128xf32> to vector<128xf32>
    %206 = vector.shape_cast %205 : vector<128xf32> to vector<1x128xf32>
    %cst_128 = arith.constant 3.906250e-03 : f32
    %207 = vector.broadcast %cst_128 : f32 to vector<1x128xf32>
    %208 = arith.mulf %206, %207 : vector<1x128xf32>
    %c15_129 = arith.constant 15 : index
    %c0_130 = arith.constant 0 : index
    %209 = vector.load %arg11[%c15_129, %c0_130] : memref<16x128xf32, #tpu.memory_space<vmem>>, vector<1x128xf32>
    tpu.vector_store %arg11[%c15_129, %c0_130], %208 {strides = array<i32>} : memref<16x128xf32, #tpu.memory_space<vmem>>, vector<1x128xf32>,
    %c0_131 = arith.constant 0 : index
    %c0_132 = arith.constant 0 : index
    %210 = vector.load %arg11[%c0_131, %c0_132] : memref<16x128xf32, #tpu.memory_space<vmem>>, vector<16x128xf32>
    %c0_133 = arith.constant 0 : index
    %c0_134 = arith.constant 0 : index
    %211 = vector.load %arg8[%c0_133, %c0_134] : memref<8x256xf32, #tpu.memory_space<vmem>>, vector<1x256xf32>
    %c1_135 = arith.constant 1 : index
    %c0_136 = arith.constant 0 : index
    %212 = vector.load %arg8[%c1_135, %c0_136] : memref<8x256xf32, #tpu.memory_space<vmem>>, vector<1x256xf32>
    %c2_137 = arith.constant 2 : index
    %c0_138 = arith.constant 0 : index
    %213 = vector.load %arg8[%c2_137, %c0_138] : memref<8x256xf32, #tpu.memory_space<vmem>>, vector<1x256xf32>
    %c3_139 = arith.constant 3 : index
    %c0_140 = arith.constant 0 : index
    %214 = vector.load %arg8[%c3_139, %c0_140] : memref<8x256xf32, #tpu.memory_space<vmem>>, vector<1x256xf32>
    %c4_141 = arith.constant 4 : index
    %c0_142 = arith.constant 0 : index
    %215 = vector.load %arg8[%c4_141, %c0_142] : memref<8x256xf32, #tpu.memory_space<vmem>>, vector<1x256xf32>
    %c5_143 = arith.constant 5 : index
    %c0_144 = arith.constant 0 : index
    %216 = vector.load %arg8[%c5_143, %c0_144] : memref<8x256xf32, #tpu.memory_space<vmem>>, vector<1x256xf32>
    %c6_145 = arith.constant 6 : index
    %c0_146 = arith.constant 0 : index
    %217 = vector.load %arg8[%c6_145, %c0_146] : memref<8x256xf32, #tpu.memory_space<vmem>>, vector<1x256xf32>
    %c7_147 = arith.constant 7 : index
    %c0_148 = arith.constant 0 : index
    %218 = vector.load %arg8[%c7_147, %c0_148] : memref<8x256xf32, #tpu.memory_space<vmem>>, vector<1x256xf32>
    %c0_149 = arith.constant 0 : index
    %c0_150 = arith.constant 0 : index
    %219 = vector.load %arg9[%c0_149, %c0_150] : memref<3x128xf32, #tpu.memory_space<vmem>>, vector<1x128xf32>
    %c1_151 = arith.constant 1 : index
    %c0_152 = arith.constant 0 : index
    %220 = vector.load %arg9[%c1_151, %c0_152] : memref<3x128xf32, #tpu.memory_space<vmem>>, vector<1x128xf32>
    %c2_153 = arith.constant 2 : index
    %c0_154 = arith.constant 0 : index
    %221 = vector.load %arg9[%c2_153, %c0_154] : memref<3x128xf32, #tpu.memory_space<vmem>>, vector<1x128xf32>
    %222 = arith.truncf %210 : vector<16x128xf32> to vector<16x128xbf16>
    %c0_155 = arith.constant 0 : index
    %c0_156 = arith.constant 0 : index
    %223 = vector.load %arg3[%c0_155, %c0_156] : memref<128x256xbf16, #tpu.memory_space<vmem>>, vector<128x256xbf16>
    %cst_157 = arith.constant dense<0.000000e+00> : vector<16x256xf32>
    %224 = tpu.matmul %222, %223, %cst_157 {dimension_numbers = #tpu.dot_dimension_numbers<[1], [0], [0], [1], [0, 0, 1, 1], [], []>} : vector<16x128xbf16>, vector<128x256xbf16>, vector<16x256xf32> -> vector<16x256xf32>
    %225 = vector.broadcast %211 : vector<1x256xf32> to vector<16x256xf32>
    %226 = arith.addf %224, %225 : vector<16x256xf32>
    %227 = vector.shape_cast %226 : vector<16x256xf32> to vector<2x8x256xf32>
    %cst_158 = arith.constant dense<0.000000e+00> : vector<2x256xf32>
    %228 = vector.multi_reduction <add>, %227, %cst_158 [1] : vector<2x8x256xf32> to vector<2x256xf32>
    %229 = vector.shape_cast %228 : vector<2x256xf32> to vector<2x1x256xf32>
    %cst_159 = arith.constant 8.000000e+00 : f32
    %230 = vector.broadcast %cst_159 : f32 to vector<2x1x256xf32>
    %231 = arith.divf %229, %230 : vector<2x1x256xf32>
    %232 = vector.broadcast %231 : vector<2x1x256xf32> to vector<2x8x256xf32>
    %233 = arith.subf %227, %232 : vector<2x8x256xf32>
    %234 = arith.mulf %233, %233 : vector<2x8x256xf32>
    %cst_160 = arith.constant dense<0.000000e+00> : vector<2x256xf32>
    %235 = vector.multi_reduction <add>, %234, %cst_160 [1] : vector<2x8x256xf32> to vector<2x256xf32>
    %236 = vector.shape_cast %235 : vector<2x256xf32> to vector<2x1x256xf32>
    %cst_161 = arith.constant 8.000000e+00 : f32
    %237 = vector.broadcast %cst_161 : f32 to vector<2x1x256xf32>
    %238 = arith.divf %236, %237 : vector<2x1x256xf32>
    %239 = vector.broadcast %231 : vector<2x1x256xf32> to vector<2x8x256xf32>
    %240 = arith.subf %227, %239 : vector<2x8x256xf32>
    %cst_162 = arith.constant 9.99999974E-6 : f32
    %241 = vector.broadcast %cst_162 : f32 to vector<2x1x256xf32>
    %242 = arith.addf %238, %241 : vector<2x1x256xf32>
    %243 = math.rsqrt %242 : vector<2x1x256xf32>
    %244 = vector.broadcast %243 : vector<2x1x256xf32> to vector<2x8x256xf32>
    %245 = arith.mulf %240, %244 : vector<2x8x256xf32>
    %246 = vector.shape_cast %245 : vector<2x8x256xf32> to vector<16x256xf32>
    %247 = vector.broadcast %212 : vector<1x256xf32> to vector<16x256xf32>
    %248 = arith.mulf %246, %247 : vector<16x256xf32>
    %249 = vector.broadcast %213 : vector<1x256xf32> to vector<16x256xf32>
    %250 = arith.addf %248, %249 : vector<16x256xf32>
    %cst_163 = arith.constant 0.000000e+00 : f32
    %251 = vector.broadcast %cst_163 : f32 to vector<16x256xf32>
    %252 = arith.maximumf %250, %251 : vector<16x256xf32>
    %253 = arith.truncf %252 : vector<16x256xf32> to vector<16x256xbf16>
    %c0_164 = arith.constant 0 : index
    %c0_165 = arith.constant 0 : index
    %254 = vector.load %arg4[%c0_164, %c0_165] : memref<256x256xbf16, #tpu.memory_space<vmem>>, vector<256x256xbf16>
    %cst_166 = arith.constant dense<0.000000e+00> : vector<16x256xf32>
    %255 = tpu.matmul %253, %254, %cst_166 {dimension_numbers = #tpu.dot_dimension_numbers<[1], [0], [0], [1], [0, 0, 1, 1], [], []>} : vector<16x256xbf16>, vector<256x256xbf16>, vector<16x256xf32> -> vector<16x256xf32>
    %256 = vector.broadcast %214 : vector<1x256xf32> to vector<16x256xf32>
    %257 = arith.addf %255, %256 : vector<16x256xf32>
    %258 = vector.shape_cast %257 : vector<16x256xf32> to vector<2x8x256xf32>
    %cst_167 = arith.constant dense<0.000000e+00> : vector<2x256xf32>
    %259 = vector.multi_reduction <add>, %258, %cst_167 [1] : vector<2x8x256xf32> to vector<2x256xf32>
    %260 = vector.shape_cast %259 : vector<2x256xf32> to vector<2x1x256xf32>
    %cst_168 = arith.constant 8.000000e+00 : f32
    %261 = vector.broadcast %cst_168 : f32 to vector<2x1x256xf32>
    %262 = arith.divf %260, %261 : vector<2x1x256xf32>
    %263 = vector.broadcast %262 : vector<2x1x256xf32> to vector<2x8x256xf32>
    %264 = arith.subf %258, %263 : vector<2x8x256xf32>
    %265 = arith.mulf %264, %264 : vector<2x8x256xf32>
    %cst_169 = arith.constant dense<0.000000e+00> : vector<2x256xf32>
    %266 = vector.multi_reduction <add>, %265, %cst_169 [1] : vector<2x8x256xf32> to vector<2x256xf32>
    %267 = vector.shape_cast %266 : vector<2x256xf32> to vector<2x1x256xf32>
    %cst_170 = arith.constant 8.000000e+00 : f32
    %268 = vector.broadcast %cst_170 : f32 to vector<2x1x256xf32>
    %269 = arith.divf %267, %268 : vector<2x1x256xf32>
    %270 = vector.broadcast %262 : vector<2x1x256xf32> to vector<2x8x256xf32>
    %271 = arith.subf %258, %270 : vector<2x8x256xf32>
    %cst_171 = arith.constant 9.99999974E-6 : f32
    %272 = vector.broadcast %cst_171 : f32 to vector<2x1x256xf32>
    %273 = arith.addf %269, %272 : vector<2x1x256xf32>
    %274 = math.rsqrt %273 : vector<2x1x256xf32>
    %275 = vector.broadcast %274 : vector<2x1x256xf32> to vector<2x8x256xf32>
    %276 = arith.mulf %271, %275 : vector<2x8x256xf32>
    %277 = vector.shape_cast %276 : vector<2x8x256xf32> to vector<16x256xf32>
    %278 = vector.broadcast %215 : vector<1x256xf32> to vector<16x256xf32>
    %279 = arith.mulf %277, %278 : vector<16x256xf32>
    %280 = vector.broadcast %216 : vector<1x256xf32> to vector<16x256xf32>
    %281 = arith.addf %279, %280 : vector<16x256xf32>
    %cst_172 = arith.constant 0.000000e+00 : f32
    %282 = vector.broadcast %cst_172 : f32 to vector<16x256xf32>
    %283 = arith.maximumf %281, %282 : vector<16x256xf32>
    %284 = arith.truncf %283 : vector<16x256xf32> to vector<16x256xbf16>
    %c0_173 = arith.constant 0 : index
    %c0_174 = arith.constant 0 : index
    %285 = vector.load %arg5[%c0_173, %c0_174] : memref<256x256xbf16, #tpu.memory_space<vmem>>, vector<256x256xbf16>
    %cst_175 = arith.constant dense<0.000000e+00> : vector<16x256xf32>
    %286 = tpu.matmul %284, %285, %cst_175 {dimension_numbers = #tpu.dot_dimension_numbers<[1], [0], [0], [1], [0, 0, 1, 1], [], []>} : vector<16x256xbf16>, vector<256x256xbf16>, vector<16x256xf32> -> vector<16x256xf32>
    %287 = vector.broadcast %217 : vector<1x256xf32> to vector<16x256xf32>
    %288 = arith.addf %286, %287 : vector<16x256xf32>
    %289 = vector.shape_cast %288 : vector<16x256xf32> to vector<2x8x256xf32>
    %cst_176 = arith.constant dense<0.000000e+00> : vector<2x256xf32>
    %290 = vector.multi_reduction <add>, %289, %cst_176 [1] : vector<2x8x256xf32> to vector<2x256xf32>
    %291 = vector.shape_cast %290 : vector<2x256xf32> to vector<2x1x256xf32>
    %cst_177 = arith.constant 8.000000e+00 : f32
    %292 = vector.broadcast %cst_177 : f32 to vector<2x1x256xf32>
    %293 = arith.divf %291, %292 : vector<2x1x256xf32>
    %294 = vector.broadcast %293 : vector<2x1x256xf32> to vector<2x8x256xf32>
    %295 = arith.subf %289, %294 : vector<2x8x256xf32>
    %296 = arith.mulf %295, %295 : vector<2x8x256xf32>
    %cst_178 = arith.constant dense<0.000000e+00> : vector<2x256xf32>
    %297 = vector.multi_reduction <add>, %296, %cst_178 [1] : vector<2x8x256xf32> to vector<2x256xf32>
    %298 = vector.shape_cast %297 : vector<2x256xf32> to vector<2x1x256xf32>
    %cst_179 = arith.constant 8.000000e+00 : f32
    %299 = vector.broadcast %cst_179 : f32 to vector<2x1x256xf32>
    %300 = arith.divf %298, %299 : vector<2x1x256xf32>
    %301 = vector.broadcast %293 : vector<2x1x256xf32> to vector<2x8x256xf32>
    %302 = arith.subf %289, %301 : vector<2x8x256xf32>
    %cst_180 = arith.constant 9.99999974E-6 : f32
    %303 = vector.broadcast %cst_180 : f32 to vector<2x1x256xf32>
    %304 = arith.addf %300, %303 : vector<2x1x256xf32>
    %305 = math.rsqrt %304 : vector<2x1x256xf32>
    %306 = vector.broadcast %305 : vector<2x1x256xf32> to vector<2x8x256xf32>
    %307 = arith.mulf %302, %306 : vector<2x8x256xf32>
    %308 = vector.shape_cast %307 : vector<2x8x256xf32> to vector<16x256xf32>
    %309 = arith.truncf %308 : vector<16x256xf32> to vector<16x256xbf16>
    %c0_181 = arith.constant 0 : index
    %c0_182 = arith.constant 0 : index
    %310 = vector.load %arg6[%c0_181, %c0_182] : memref<256x128xbf16, #tpu.memory_space<vmem>>, vector<256x128xbf16>
    %cst_183 = arith.constant dense<0.000000e+00> : vector<16x128xf32>
    %311 = tpu.matmul %309, %310, %cst_183 {dimension_numbers = #tpu.dot_dimension_numbers<[1], [0], [0], [1], [0, 0, 1, 1], [], []>} : vector<16x256xbf16>, vector<256x128xbf16>, vector<16x128xf32> -> vector<16x128xf32>
    %312 = vector.broadcast %219 : vector<1x128xf32> to vector<16x128xf32>
    %313 = arith.addf %311, %312 : vector<16x128xf32>
    %314 = vector.shape_cast %313 : vector<16x128xf32> to vector<2x8x128xf32>
    %cst_184 = arith.constant dense<0.000000e+00> : vector<2x128xf32>
    %315 = vector.multi_reduction <add>, %314, %cst_184 [1] : vector<2x8x128xf32> to vector<2x128xf32>
    %316 = vector.shape_cast %315 : vector<2x128xf32> to vector<2x1x128xf32>
    %cst_185 = arith.constant 8.000000e+00 : f32
    %317 = vector.broadcast %cst_185 : f32 to vector<2x1x128xf32>
    %318 = arith.divf %316, %317 : vector<2x1x128xf32>
    %319 = vector.broadcast %318 : vector<2x1x128xf32> to vector<2x8x128xf32>
    %320 = arith.subf %314, %319 : vector<2x8x128xf32>
    %321 = arith.mulf %320, %320 : vector<2x8x128xf32>
    %cst_186 = arith.constant dense<0.000000e+00> : vector<2x128xf32>
    %322 = vector.multi_reduction <add>, %321, %cst_186 [1] : vector<2x8x128xf32> to vector<2x128xf32>
    %323 = vector.shape_cast %322 : vector<2x128xf32> to vector<2x1x128xf32>
    %cst_187 = arith.constant 8.000000e+00 : f32
    %324 = vector.broadcast %cst_187 : f32 to vector<2x1x128xf32>
    %325 = arith.divf %323, %324 : vector<2x1x128xf32>
    %326 = vector.broadcast %318 : vector<2x1x128xf32> to vector<2x8x128xf32>
    %327 = arith.subf %314, %326 : vector<2x8x128xf32>
    %cst_188 = arith.constant 9.99999974E-6 : f32
    %328 = vector.broadcast %cst_188 : f32 to vector<2x1x128xf32>
    %329 = arith.addf %325, %328 : vector<2x1x128xf32>
    %330 = math.rsqrt %329 : vector<2x1x128xf32>
    %331 = vector.broadcast %330 : vector<2x1x128xf32> to vector<2x8x128xf32>
    %332 = arith.mulf %327, %331 : vector<2x8x128xf32>
    %333 = vector.shape_cast %332 : vector<2x8x128xf32> to vector<16x128xf32>
    %334 = vector.broadcast %220 : vector<1x128xf32> to vector<16x128xf32>
    %335 = arith.mulf %333, %334 : vector<16x128xf32>
    %336 = vector.broadcast %221 : vector<1x128xf32> to vector<16x128xf32>
    %337 = arith.addf %335, %336 : vector<16x128xf32>
    %cst_189 = arith.constant 0.000000e+00 : f32
    %338 = vector.broadcast %cst_189 : f32 to vector<16x128xf32>
    %339 = arith.maximumf %337, %338 : vector<16x128xf32>
    %340 = arith.truncf %339 : vector<16x128xf32> to vector<16x128xbf16>
    %c0_190 = arith.constant 0 : index
    %c0_191 = arith.constant 0 : index
    %341 = vector.load %arg7[%c0_190, %c0_191] : memref<128x256xbf16, #tpu.memory_space<vmem>>, vector<128x256xbf16>
    %cst_192 = arith.constant dense<0.000000e+00> : vector<16x256xf32>
    %342 = tpu.matmul %340, %341, %cst_192 {dimension_numbers = #tpu.dot_dimension_numbers<[1], [0], [0], [1], [0, 0, 1, 1], [], []>} : vector<16x128xbf16>, vector<128x256xbf16>, vector<16x256xf32> -> vector<16x256xf32>
    %343 = vector.broadcast %218 : vector<1x256xf32> to vector<16x256xf32>
    %344 = arith.addf %342, %343 : vector<16x256xf32>
    %c8_i32 = arith.constant 8 : i32
    %345 = tpu.dynamic_rotate %308 by %c8_i32 dim 0 : vector<16x256xf32>, i32 -> vector<16x256xf32>
    %346 = arith.mulf %344, %344 : vector<16x256xf32>
    %cst_193 = arith.constant dense<0.000000e+00> : vector<16xf32>
    %347 = vector.multi_reduction <add>, %346, %cst_193 [1] : vector<16x256xf32> to vector<16xf32>
    %348 = vector.shape_cast %347 : vector<16xf32> to vector<16x1xf32>
    %349 = arith.mulf %345, %345 : vector<16x256xf32>
    %cst_194 = arith.constant dense<0.000000e+00> : vector<16xf32>
    %350 = vector.multi_reduction <add>, %349, %cst_194 [1] : vector<16x256xf32> to vector<16xf32>
    %351 = vector.shape_cast %350 : vector<16xf32> to vector<16x1xf32>
    %cst_195 = arith.constant 1.000000e-16 : f32
    %352 = vector.broadcast %cst_195 : f32 to vector<16x1xf32>
    %353 = arith.maximumf %348, %352 : vector<16x1xf32>
    %354 = math.rsqrt %353 : vector<16x1xf32>
    %cst_196 = arith.constant 1.000000e-16 : f32
    %355 = vector.broadcast %cst_196 : f32 to vector<16x1xf32>
    %356 = arith.maximumf %351, %355 : vector<16x1xf32>
    %357 = math.rsqrt %356 : vector<16x1xf32>
    %358 = arith.mulf %354, %357 : vector<16x1xf32>
    %359 = arith.mulf %344, %345 : vector<16x256xf32>
    %cst_197 = arith.constant dense<0.000000e+00> : vector<16xf32>
    %360 = vector.multi_reduction <add>, %359, %cst_197 [1] : vector<16x256xf32> to vector<16xf32>
    %361 = vector.shape_cast %360 : vector<16xf32> to vector<16x1xf32>
    %362 = arith.mulf %361, %358 : vector<16x1xf32>
    %cst_198 = arith.constant dense<0.000000e+00> : vector<1xf32>
    %363 = vector.multi_reduction <add>, %362, %cst_198 [0] : vector<16x1xf32> to vector<1xf32>
    %364 = vector.shape_cast %363 : vector<1xf32> to vector<1x1xf32>
    %cst_199 = arith.constant 0.000000e+00 : f32
    %365 = vector.broadcast %cst_199 : f32 to vector<1x1xf32>
    %366 = arith.subf %365, %364 : vector<1x1xf32>
    %cst_200 = arith.constant 1.600000e+01 : f32
    %367 = vector.broadcast %cst_200 : f32 to vector<1x1xf32>
    %368 = arith.divf %366, %367 : vector<1x1xf32>
    %c0_201 = arith.constant 0 : index
    %c0_202 = arith.constant 0 : index
    %369 = vector.load %arg10[%c0_201, %c0_202] : memref<1x1xf32, #tpu.memory_space<vmem>>, vector<1x1xf32>
    tpu.vector_store %arg10[%c0_201, %c0_202], %368 {strides = array<i32>} : memref<1x1xf32, #tpu.memory_space<vmem>>, vector<1x1xf32>,
    return
  }
}

</mosaic_0001>

<llo_original>
// kernel: simsiam_forward.1
$region0: #{simsiam_forward.1}
  #allocation0 [shape = 'u32[]', space=smem, size = 0x4, offset = 0x4, fixed_abs, tag = 'smem constant byte address 0x4 - core index']
  #allocation1 [shape = 'u32[144,128]{1,0:T(1,128)}', space=vmem, size = 0x12000, scoped, tag = 'internal scratch']
  #allocation2 [shape = 'f32[16,128]{1,0:T(8,128)}', space=vmem, size = 0x2000, scoped, tag = 'scratch operand']
  %s0 = inlined_call_operand.vmem [shape: f32[16,8,256], index: 0, kind: input, shape index: {}]
  %s1 = inlined_call_operand.vmem [shape: bf16[8,128], index: 1, kind: input, shape index: {}]
  %s2 = inlined_call_operand.vmem [shape: f32[1,128], index: 2, kind: input, shape index: {}]
  %s3 = inlined_call_operand.vmem [shape: bf16[128,256], index: 3, kind: input, shape index: {}]
  %s4 = inlined_call_operand.vmem [shape: bf16[256,256], index: 4, kind: input, shape index: {}]
  %s5 = inlined_call_operand.vmem [shape: bf16[256,256], index: 5, kind: input, shape index: {}]
  %s6 = inlined_call_operand.vmem [shape: bf16[256,128], index: 6, kind: input, shape index: {}]
  %s7 = inlined_call_operand.vmem [shape: bf16[128,256], index: 7, kind: input, shape index: {}]
  %s8 = inlined_call_operand.vmem [shape: f32[8,256], index: 8, kind: input, shape index: {}]
  %s9 = inlined_call_operand.vmem [shape: f32[3,128], index: 9, kind: input, shape index: {}]
  %s10 = inlined_call_operand.hbm [shape: f32[1,1], index: 10, kind: output, shape index: {}]
  %s11 = sld [smem:[#allocation0]]
  $region50: #{simsiam_forward.1} parent=0
    _
  %s13 = ssub.s32 1, %s11
  %s14 = scalar_select 0, %s13, %s11
  $region1: #{simsiam_forward.1} parent=0
    #allocation3 [shape = 'u8[512]{0}', space=vmem, size = 0x400, scoped, tag = 'output window, operand 0, single buffered']
    #allocation4 [shape = 's32[1]{0}', space=sflag, size = 0x4, scoped, tag = 'scoped memory for simsiam_forward.1']
    %15 = vsyncpa [#allocation4], 0
    // Predicated region
    $region2: #{simsiam_forward.1} parent=1 // pred_check
      _
    $region3: #{simsiam_forward.1} parent=1 // pred_check_branch
      %17 = sbr.rel (0) target = $region5
    $region4: #{simsiam_forward.1} parent=1 // pred_region
      _
    $region5: #{simsiam_forward.1} parent=1 // pred_fallthru
      _
    // Predicated region
    $region6: #{simsiam_forward.1} parent=1 // pred_check
      _
    $region7: #{simsiam_forward.1} parent=1 // pred_check_branch
      %19 = sbr.rel (0) target = $region9
    $region8: #{simsiam_forward.1} parent=1 // pred_region
      _
    $region9: #{simsiam_forward.1} parent=1 // pred_fallthru
      _
    // Predicated region
    $region10: #{simsiam_forward.1} parent=1 // pred_check
      _
    $region11: #{simsiam_forward.1} parent=1 // pred_check_branch
      %21 = sbr.rel (0) target = $region13
    $region12: #{simsiam_forward.1} parent=1 // pred_region
      _
    $region13: #{simsiam_forward.1} parent=1 // pred_fallthru
      _
    // Predicated region
    $region14: #{simsiam_forward.1} parent=1 // pred_check
      _
    $region15: #{simsiam_forward.1} parent=1 // pred_check_branch
      %23 = sbr.rel (0) target = $region17
    $region16: #{simsiam_forward.1} parent=1 // pred_region
      _
    $region17: #{simsiam_forward.1} parent=1 // pred_fallthru
      _
    // Predicated region
    $region18: #{simsiam_forward.1} parent=1 // pred_check
      _
    $region19: #{simsiam_forward.1} parent=1 // pred_check_branch
      %25 = sbr.rel (0) target = $region21
    $region20: #{simsiam_forward.1} parent=1 // pred_region
      _
    $region21: #{simsiam_forward.1} parent=1 // pred_fallthru
      _
    // Predicated region
    $region22: #{simsiam_forward.1} parent=1 // pred_check
      _
    $region23: #{simsiam_forward.1} parent=1 // pred_check_branch
      %27 = sbr.rel (0) target = $region25
    $region24: #{simsiam_forward.1} parent=1 // pred_region
      _
    $region25: #{simsiam_forward.1} parent=1 // pred_fallthru
      _
    // Predicated region
    $region26: #{simsiam_forward.1} parent=1 // pred_check
      _
    $region27: #{simsiam_forward.1} parent=1 // pred_check_branch
      %29 = sbr.rel (0) target = $region29
    $region28: #{simsiam_forward.1} parent=1 // pred_region
      _
    $region29: #{simsiam_forward.1} parent=1 // pred_fallthru
      _
    // Predicated region
    $region30: #{simsiam_forward.1} parent=1 // pred_check
      _
    $region31: #{simsiam_forward.1} parent=1 // pred_check_branch
      %31 = sbr.rel (0) target = $region33
    $region32: #{simsiam_forward.1} parent=1 // pred_region
      _
    $region33: #{simsiam_forward.1} parent=1 // pred_fallthru
      _
    // Predicated region
    $region34: #{simsiam_forward.1} parent=1 // pred_check
      _
    $region35: #{simsiam_forward.1} parent=1 // pred_check_branch
      %33 = sbr.rel (0) target = $region37
    $region36: #{simsiam_forward.1} parent=1 // pred_region
      _
    $region37: #{simsiam_forward.1} parent=1 // pred_fallthru
      _
    // Predicated region
    $region38: #{simsiam_forward.1} parent=1 // pred_check
      _
    $region39: #{simsiam_forward.1} parent=1 // pred_check_branch
      %35 = sbr.rel (0) target = $region41
    $region40: #{simsiam_forward.1} parent=1 // pred_region
      _
    $region41: #{simsiam_forward.1} parent=1 // pred_fallthru
      _
    %v37 = vld [vmem:[%s1] sm:$0xf]
    %v38 = vld [vmem:[%s2] sm:$0x1]
    %v39 = vld [vmem:[%s0] sm:$0xff]
    %v40 = vld [vmem:[%s0 + $0x8] sm:$0xff]
    %v41 = vpack.c.bf16 %v39, %v39
    %v42 = vpack.c.bf16 %v40, %v40
    %v44 = vlaneseq
    %v45 = vshrl.u32 %v44, 7
    %v46 = vsub.s32 0, %v45
    %v47 = vrot.slane %v38, %v46
    %49 = vxpose.xlu0.c.b16.start [1/8] %v41, 128
    %50 = vxpose.xlu0.c.b16.cont [2/8] 0, 128
    %51 = vxpose.xlu0.c.b16.cont [3/8] 0, 128
    %52 = vxpose.xlu0.c.b16.cont [4/8] 0, 128
    %53 = vxpose.xlu0.c.b16.cont [5/8] 0, 128
    %54 = vxpose.xlu0.c.b16.cont [6/8] 0, 128
    %55 = vxpose.xlu0.c.b16.cont [7/8] 0, 128
    %56 = vxpose.xlu0.c.b16.end [8/8] 0, 128
    %v57 = vpop.trf.xlu0
    %v58 = vpop.trf.xlu0
    %v59 = vpop.trf.xlu0
    %v60 = vpop.trf.xlu0
    %v61 = vpop.trf.xlu0
    %v62 = vpop.trf.xlu0
    %v63 = vpop.trf.xlu0
    %v64 = vpop.trf.xlu0
    %65 = vxpose.xlu0.c.b16.start [1/8] %v42, 128
    %66 = vxpose.xlu0.c.b16.cont [2/8] 0, 128
    %67 = vxpose.xlu0.c.b16.cont [3/8] 0, 128
    %68 = vxpose.xlu0.c.b16.cont [4/8] 0, 128
    %69 = vxpose.xlu0.c.b16.cont [5/8] 0, 128
    %70 = vxpose.xlu0.c.b16.cont [6/8] 0, 128
    %71 = vxpose.xlu0.c.b16.cont [7/8] 0, 128
    %72 = vxpose.xlu0.c.b16.end [8/8] 0, 128
    %v73 = vpop.trf.xlu0
    %v74 = vpop.trf.xlu0
    %v75 = vpop.trf.xlu0
    %v76 = vpop.trf.xlu0
    %v77 = vpop.trf.xlu0
    %v78 = vpop.trf.xlu0
    %v79 = vpop.trf.xlu0
    %v80 = vpop.trf.xlu0
    %vm81 = vcmask 64512
    %v83 = vsel %vm81, %v57, 0
    %v86 = vsel %vm81, %v58, 0
    %v89 = vsel %vm81, %v59, 0
    %v92 = vsel %vm81, %v60, 0
    %v95 = vsel %vm81, %v61, 0
    %v98 = vsel %vm81, %v62, 0
    %v101 = vsel %vm81, %v63, 0
    %v104 = vsel %vm81, %v64, 0
    %v107 = vsel %vm81, %v73, 0
    %v110 = vsel %vm81, %v74, 0
    %v113 = vsel %vm81, %v75, 0
    %v116 = vsel %vm81, %v76, 0
    %v119 = vsel %vm81, %v77, 0
    %v122 = vsel %vm81, %v78, 0
    %v125 = vsel %vm81, %v79, 0
    %v128 = vsel %vm81, %v80, 0
    %vm130 = vcmask 1043456
    %v132 = vsel %vm130, %v37, 0
    %134 = vmatprep.subr.bf16.mxu0 0
    %135 = vmatpush1.bf16.msra.mxu0 %v132
    %136 = vmatprep.subr.bf16.mxu0 0
    %137 = vmatpush1.bf16.msra.mxu0 0
    %138 = vmatprep.subr.bf16.mxu0 0
    %139 = vmatpush1.bf16.msra.mxu0 0
    %140 = vmatprep.subr.bf16.mxu0 0
    %141 = vmatpush1.bf16.msra.mxu0 0
    %142 = vmatprep.subr.bf16.mxu0 0
    %143 = vmatpush1.bf16.msra.mxu0 0
    %144 = vmatprep.subr.bf16.mxu0 0
    %145 = vmatpush1.bf16.msra.mxu0 0
    %146 = vmatprep.subr.bf16.mxu0 0
    %147 = vmatpush1.bf16.msra.mxu0 0
    %148 = vmatprep.subr.bf16.mxu0 0
    %149 = vmatpush1.bf16.msra.mxu0 0
    %150 = vmatprep.subr.bf16.mxu0 0
    %151 = vmatpush1.bf16.msra.mxu0 0
    %152 = vmatprep.subr.bf16.mxu0 0
    %153 = vmatpush1.bf16.msra.mxu0 0
    %154 = vmatprep.subr.bf16.mxu0 0
    %155 = vmatpush1.bf16.msra.mxu0 0
    %156 = vmatprep.subr.bf16.mxu0 0
    %157 = vmatpush1.bf16.msra.mxu0 0
    %158 = vmatprep.subr.bf16.mxu0 0
    %159 = vmatpush1.bf16.msra.mxu0 0
    %160 = vmatprep.subr.bf16.mxu0 0
    %161 = vmatpush1.bf16.msra.mxu0 0
    %162 = vmatprep.subr.bf16.mxu0 0
    %163 = vmatpush1.bf16.msra.mxu0 0
    %164 = vmatprep.subr.bf16.mxu0 0
    %165 = vmatpush1.bf16.msra.mxu0 0
    %166 = vmatprep.mubr.bf16.mxu0 0
    %167 = vmatmul.mubr.bf16.gmra.mrb[0].mxu0 %v83
    %v168 = vpop.f32.mrb[0].mxu0
    %v169 = vadd.f32 %v47, %v168
    %v170 = vpop.f32.mrb[0].mxu0
    %v171 = vpop.f32.mrb[0].mxu0
    %v172 = vadd.f32 %v47, %v171
    %v173 = vpop.f32.mrb[0].mxu0
    %174 = vmatprep.mubr.bf16.mxu0 0
    %175 = vmatmul.mubr.bf16.gmra.mrb[0].mxu0 %v86
    %v176 = vpop.f32.mrb[0].mxu0
    %v177 = vadd.f32 %v47, %v176
    %v178 = vpop.f32.mrb[0].mxu0
    %v179 = vpop.f32.mrb[0].mxu0
    %v180 = vadd.f32 %v47, %v179
    %v181 = vpop.f32.mrb[0].mxu0
    %182 = vmatprep.mubr.bf16.mxu0 0
    %183 = vmatmul.mubr.bf16.gmra.mrb[0].mxu0 %v89
    %v184 = vpop.f32.mrb[0].mxu0
    %v185 = vadd.f32 %v47, %v184
    %v186 = vpop.f32.mrb[0].mxu0
    %v187 = vpop.f32.mrb[0].mxu0
    %v188 = vadd.f32 %v47, %v187
    %v189 = vpop.f32.mrb[0].mxu0
    %190 = vmatprep.mubr.bf16.mxu0 0
    %191 = vmatmul.mubr.bf16.gmra.mrb[0].mxu0 %v92
    %v192 = vpop.f32.mrb[0].mxu0
    %v193 = vadd.f32 %v47, %v192
    %v194 = vpop.f32.mrb[0].mxu0
    %v195 = vpop.f32.mrb[0].mxu0
    %v196 = vadd.f32 %v47, %v195
    %v197 = vpop.f32.mrb[0].mxu0
    %198 = vmatprep.mubr.bf16.mxu0 0
    %199 = vmatmul.mubr.bf16.gmra.mrb[0].mxu0 %v95
    %v200 = vpop.f32.mrb[0].mxu0
    %v201 = vadd.f32 %v47, %v200
    %v202 = vpop.f32.mrb[0].mxu0
    %v203 = vpop.f32.mrb[0].mxu0
    %v204 = vadd.f32 %v47, %v203
    %v205 = vpop.f32.mrb[0].mxu0
    %206 = vmatprep.mubr.bf16.mxu0 0
    %207 = vmatmul.mubr.bf16.gmra.mrb[0].mxu0 %v98
    %v208 = vpop.f32.mrb[0].mxu0
    %v209 = vadd.f32 %v47, %v208
    %v210 = vpop.f32.mrb[0].mxu0
    %v211 = vpop.f32.mrb[0].mxu0
    %v212 = vadd.f32 %v47, %v211
    %v213 = vpop.f32.mrb[0].mxu0
    %214 = vmatprep.mubr.bf16.mxu0 0
    %215 = vmatmul.mubr.bf16.gmra.mrb[0].mxu0 %v101
    %v216 = vpop.f32.mrb[0].mxu0
    %v217 = vadd.f32 %v47, %v216
    %v218 = vpop.f32.mrb[0].mxu0
    %v219 = vpop.f32.mrb[0].mxu0
    %v220 = vadd.f32 %v47, %v219
    %v221 = vpop.f32.mrb[0].mxu0
    %222 = vmatprep.mubr.bf16.mxu0 0
    %223 = vmatmul.mubr.bf16.gmra.mrb[0].mxu0 %v104
    %v224 = vpop.f32.mrb[0].mxu0
    %v225 = vadd.f32 %v47, %v224
    %v226 = vpop.f32.mrb[0].mxu0
    %v227 = vpop.f32.mrb[0].mxu0
    %v228 = vadd.f32 %v47, %v227
    %v229 = vpop.f32.mrb[0].mxu0
    %230 = vmatprep.mubr.bf16.mxu0 0
    %231 = vmatmul.mubr.bf16.gmra.mrb[0].mxu0 %v107
    %v232 = vpop.f32.mrb[0].mxu0
    %v233 = vadd.f32 %v47, %v232
    %v234 = vpop.f32.mrb[0].mxu0
    %v235 = vpop.f32.mrb[0].mxu0
    %v236 = vadd.f32 %v47, %v235
    %v237 = vpop.f32.mrb[0].mxu0
    %238 = vmatprep.mubr.bf16.mxu0 0
    %239 = vmatmul.mubr.bf16.gmra.mrb[0].mxu0 %v110
    %v240 = vpop.f32.mrb[0].mxu0
    %v241 = vadd.f32 %v47, %v240
    %v242 = vpop.f32.mrb[0].mxu0
    %v243 = vpop.f32.mrb[0].mxu0
    %v244 = vadd.f32 %v47, %v243
    %v245 = vpop.f32.mrb[0].mxu0
    %246 = vmatprep.mubr.bf16.mxu0 0
    %247 = vmatmul.mubr.bf16.gmra.mrb[0].mxu0 %v113
    %v248 = vpop.f32.mrb[0].mxu0
    %v249 = vadd.f32 %v47, %v248
    %v250 = vpop.f32.mrb[0].mxu0
    %v251 = vpop.f32.mrb[0].mxu0
    %v252 = vadd.f32 %v47, %v251
    %v253 = vpop.f32.mrb[0].mxu0
    %254 = vmatprep.mubr.bf16.mxu0 0
    %255 = vmatmul.mubr.bf16.gmra.mrb[0].mxu0 %v116
    %v256 = vpop.f32.mrb[0].mxu0
    %v257 = vadd.f32 %v47, %v256
    %v258 = vpop.f32.mrb[0].mxu0
    %v259 = vpop.f32.mrb[0].mxu0
    %v260 = vadd.f32 %v47, %v259
    %v261 = vpop.f32.mrb[0].mxu0
    %262 = vmatprep.mubr.bf16.mxu0 0
    %263 = vmatmul.mubr.bf16.gmra.mrb[0].mxu0 %v119
    %v264 = vpop.f32.mrb[0].mxu0
    %v265 = vadd.f32 %v47, %v264
    %v266 = vpop.f32.mrb[0].mxu0
    %v267 = vpop.f32.mrb[0].mxu0
    %v268 = vadd.f32 %v47, %v267
    %v269 = vpop.f32.mrb[0].mxu0
    %270 = vmatprep.mubr.bf16.mxu0 0
    %271 = vmatmul.mubr.bf16.gmra.mrb[0].mxu0 %v122
    %v272 = vpop.f32.mrb[0].mxu0
    %v273 = vadd.f32 %v47, %v272
    %v274 = vpop.f32.mrb[0].mxu0
    %v275 = vpop.f32.mrb[0].mxu0
    %v276 = vadd.f32 %v47, %v275
    %v277 = vpop.f32.mrb[0].mxu0
    %278 = vmatprep.mubr.bf16.mxu0 0
    %279 = vmatmul.mubr.bf16.gmra.mrb[0].mxu0 %v125
    %v280 = vpop.f32.mrb[0].mxu0
    %v281 = vadd.f32 %v47, %v280
    %v282 = vpop.f32.mrb[0].mxu0
    %v283 = vpop.f32.mrb[0].mxu0
    %v284 = vadd.f32 %v47, %v283
    %v285 = vpop.f32.mrb[0].mxu0
    %286 = vmatprep.mubr.bf16.mxu0 0
    %287 = vmatmul.mubr.bf16.gmra.mrb[0].mxu0 %v128
    %v288 = vpop.f32.mrb[0].mxu0
    %v289 = vadd.f32 %v47, %v288
    %v290 = vpop.f32.mrb[0].mxu0
    %v291 = vpop.f32.mrb[0].mxu0
    %v292 = vadd.f32 %v47, %v291
    %v293 = vpop.f32.mrb[0].mxu0
    %294 = vdwg.mxu0
    %v295 = vmax.f32 %v169, 0.0
    %v296 = vmax.f32 %v172, 0.0
    %v297 = vmax.f32 %v177, 0.0
    %v298 = vmax.f32 %v180, 0.0
    %v299 = vmax.f32 %v185, 0.0
    %v300 = vmax.f32 %v188, 0.0
    %v301 = vmax.f32 %v193, 0.0
    %v302 = vmax.f32 %v196, 0.0
    %v303 = vmax.f32 %v201, 0.0
    %v304 = vmax.f32 %v204, 0.0
    %v305 = vmax.f32 %v209, 0.0
    %v306 = vmax.f32 %v212, 0.0
    %v307 = vmax.f32 %v217, 0.0
    %v308 = vmax.f32 %v220, 0.0
    %v309 = vmax.f32 %v225, 0.0
    %v310 = vmax.f32 %v228, 0.0
    %v311 = vmax.f32 %v233, 0.0
    %v312 = vmax.f32 %v236, 0.0
    %v313 = vmax.f32 %v241, 0.0
    %v314 = vmax.f32 %v244, 0.0
    %v315 = vmax.f32 %v249, 0.0
    %v316 = vmax.f32 %v252, 0.0
    %v317 = vmax.f32 %v257, 0.0
    %v318 = vmax.f32 %v260, 0.0
    %v319 = vmax.f32 %v265, 0.0
    %v320 = vmax.f32 %v268, 0.0
    %v321 = vmax.f32 %v273, 0.0
    %v322 = vmax.f32 %v276, 0.0
    %v323 = vmax.f32 %v281, 0.0
    %v324 = vmax.f32 %v284, 0.0
    %v325 = vmax.f32 %v289, 0.0
    %v326 = vmax.f32 %v292, 0.0
    %v327 = vadd.f32 %v295, %v296
    %v328 = vadd.f32 %v327, %v297
    %v329 = vadd.f32 %v328, %v298
    %v330 = vadd.f32 %v329, %v299
    %v331 = vadd.f32 %v330, %v300
    %v332 = vadd.f32 %v331, %v301
    %v333 = vadd.f32 %v332, %v302
    %v334 = vadd.f32 %v333, %v303
    %v335 = vadd.f32 %v334, %v304
    %v336 = vadd.f32 %v335, %v305
    %v337 = vadd.f32 %v336, %v306
    %v338 = vadd.f32 %v337, %v307
    %v339 = vadd.f32 %v338, %v308
    %v340 = vadd.f32 %v339, %v309
    %v341 = vadd.f32 %v340, %v310
    %v342 = vadd.f32 %v341, %v311
    %v343 = vadd.f32 %v342, %v312
    %v344 = vadd.f32 %v343, %v313
    %v345 = vadd.f32 %v344, %v314
    %v346 = vadd.f32 %v345, %v315
    %v347 = vadd.f32 %v346, %v316
    %v348 = vadd.f32 %v347, %v317
    %v349 = vadd.f32 %v348, %v318
    %v350 = vadd.f32 %v349, %v319
    %v351 = vadd.f32 %v350, %v320
    %v352 = vadd.f32 %v351, %v321
    %v353 = vadd.f32 %v352, %v322
    %v354 = vadd.f32 %v353, %v323
    %v355 = vadd.f32 %v354, %v324
    %v356 = vadd.f32 %v355, %v325
    %v357 = vadd.f32 %v356, %v326
    %v358 = vrot.slane %v357, 4
    %v359 = vadd.f32 %v357, %v358
    %v360 = vrot.slane %v359, 2
    %v361 = vadd.f32 %v359, %v360
    %v362 = vrot.slane %v361, 1
    %v363 = vadd.f32 %v361, %v362
    %v364 = vmul.f32 %v363, 0.00390625
    %365 = vst [vmem:[#allocation2] sm:$0x1] %v364
    %s366 = scalar_lea.vmem %s0, 16
    %v367 = vld [vmem:[%s366] sm:$0xff]
    %v368 = vld [vmem:[%s366 + $0x8] sm:$0xff]
    %v369 = vpack.c.bf16 %v367, %v367
    %v370 = vpack.c.bf16 %v368, %v368
    %371 = vxpose.xlu0.c.b16.start [1/8] %v369, 128
    %372 = vxpose.xlu0.c.b16.cont [2/8] 0, 128
    %373 = vxpose.xlu0.c.b16.cont [3/8] 0, 128
    %374 = vxpose.xlu0.c.b16.cont [4/8] 0, 128
    %375 = vxpose.xlu0.c.b16.cont [5/8] 0, 128
    %376 = vxpose.xlu0.c.b16.cont [6/8] 0, 128
    %377 = vxpose.xlu0.c.b16.cont [7/8] 0, 128
    %378 = vxpose.xlu0.c.b16.end [8/8] 0, 128
    %v379 = vpop.trf.xlu0
    %v380 = vpop.trf.xlu0
    %v381 = vpop.trf.xlu0
    %v382 = vpop.trf.xlu0
    %v383 = vpop.trf.xlu0
    %v384 = vpop.trf.xlu0
    %v385 = vpop.trf.xlu0
    %v386 = vpop.trf.xlu0
    %387 = vxpose.xlu0.c.b16.start [1/8] %v370, 128
    %388 = vxpose.xlu0.c.b16.cont [2/8] 0, 128
    %389 = vxpose.xlu0.c.b16.cont [3/8] 0, 128
    %390 = vxpose.xlu0.c.b16.cont [4/8] 0, 128
    %391 = vxpose.xlu0.c.b16.cont [5/8] 0, 128
    %392 = vxpose.xlu0.c.b16.cont [6/8] 0, 128
    %393 = vxpose.xlu0.c.b16.cont [7/8] 0, 128
    %394 = vxpose.xlu0.c.b16.end [8/8] 0, 128
    %v395 = vpop.trf.xlu0
    %v396 = vpop.trf.xlu0
    %v397 = vpop.trf.xlu0
    %v398 = vpop.trf.xlu0
    %v399 = vpop.trf.xlu0
    %v400 = vpop.trf.xlu0
    %v401 = vpop.trf.xlu0
    %v402 = vpop.trf.xlu0
    %v404 = vsel %vm81, %v379, 0
    %v407 = vsel %vm81, %v380, 0
    %v410 = vsel %vm81, %v381, 0
    %v413 = vsel %vm81, %v382, 0
    %v416 = vsel %vm81, %v383, 0
    %v419 = vsel %vm81, %v384, 0
    %v422 = vsel %vm81, %v385, 0
    %v425 = vsel %vm81, %v386, 0
    %v428 = vsel %vm81, %v395, 0
    %v431 = vsel %vm81, %v396, 0
    %v434 = vsel %vm81, %v397, 0
    %v437 = vsel %vm81, %v398, 0
    %v440 = vsel %vm81, %v399, 0
    %v443 = vsel %vm81, %v400, 0
    %v446 = vsel %vm81, %v401, 0
    %v449 = vsel %vm81, %v402, 0
    %451 = vmatprep.subr.bf16.mxu0 0
    %452 = vmatpush1.bf16.msra.mxu0 %v132
    %453 = vmatprep.subr.bf16.mxu0 0
    %454 = vmatpush1.bf16.msra.mxu0 0
    %455 = vmatprep.subr.bf16.mxu0 0
    %456 = vmatpush1.bf16.msra.mxu0 0
    %457 = vmatprep.subr.bf16.mxu0 0
    %458 = vmatpush1.bf16.msra.mxu0 0
    %459 = vmatprep.subr.bf16.mxu0 0
    %460 = vmatpush1.bf16.msra.mxu0 0
    %461 = vmatprep.subr.bf16.mxu0 0
    %462 = vmatpush1.bf16.msra.mxu0 0
    %463 = vmatprep.subr.bf16.mxu0 0
    %464 = vmatpush1.bf16.msra.mxu0 0
    %465 = vmatprep.subr.bf16.mxu0 0
    %466 = vmatpush1.bf16.msra.mxu0 0
    %467 = vmatprep.subr.bf16.mxu0 0
    %468 = vmatpush1.bf16.msra.mxu0 0
    %469 = vmatprep.subr.bf16.mxu0 0
    %470 = vmatpush1.bf16.msra.mxu0 0
    %471 = vmatprep.subr.bf16.mxu0 0
    %472 = vmatpush1.bf16.msra.mxu0 0
    %473 = vmatprep.subr.bf16.mxu0 0
    %474 = vmatpush1.bf16.msra.mxu0 0
    %475 = vmatprep.subr.bf16.mxu0 0
    %476 = vmatpush1.bf16.msra.mxu0 0
    %477 = vmatprep.subr.bf16.mxu0 0
    %478 = vmatpush1.bf16.msra.mxu0 0
    %479 = vmatprep.subr.bf16.mxu0 0
    %480 = vmatpush1.bf16.msra.mxu0 0
    %481 = vmatprep.subr.bf16.mxu0 0
    %482 = vmatpush1.bf16.msra.mxu0 0
    %483 = vmatprep.mubr.bf16.mxu0 0
    %484 = vmatmul.mubr.bf16.gmra.mrb[0].mxu0 %v404
    %v485 = vpop.f32.mrb[0].mxu0
    %v486 = vadd.f32 %v47, %v485
    %v487 = vpop.f32.mrb[0].mxu0
    %v488 = vpop.f32.mrb[0].mxu0
    %v489 = vadd.f32 %v47, %v488
    %v490 = vpop.f32.mrb[0].mxu0
    %491 = vmatprep.mubr.bf16.mxu0 0
    %492 = vmatmul.mubr.bf16.gmra.mrb[0].mxu0 %v407
    %v493 = vpop.f32.mrb[0].mxu0
    %v494 = vadd.f32 %v47, %v493
    %v495 = vpop.f32.mrb[0].mxu0
    %v496 = vpop.f32.mrb[0].mxu0
    %v497 = vadd.f32 %v47, %v496
    %v498 = vpop.f32.mrb[0].mxu0
    %499 = vmatprep.mubr.bf16.mxu0 0
    %500 = vmatmul.mubr.bf16.gmra.mrb[0].mxu0 %v410
    %v501 = vpop.f32.mrb[0].mxu0
    %v502 = vadd.f32 %v47, %v501
    %v503 = vpop.f32.mrb[0].mxu0
    %v504 = vpop.f32.mrb[0].mxu0
    %v505 = vadd.f32 %v47, %v504
    %v506 = vpop.f32.mrb[0].mxu0
    %507 = vmatprep.mubr.bf16.mxu0 0
    %508 = vmatmul.mubr.bf16.gmra.mrb[0].mxu0 %v413
    %v509 = vpop.f32.mrb[0].mxu0
    %v510 = vadd.f32 %v47, %v509
    %v511 = vpop.f32.mrb[0].mxu0
    %v512 = vpop.f32.mrb[0].mxu0
    %v513 = vadd.f32 %v47, %v512
    %v514 = vpop.f32.mrb[0].mxu0
    %515 = vmatprep.mubr.bf16.mxu0 0
    %516 = vmatmul.mubr.bf16.gmra.mrb[0].mxu0 %v416
    %v517 = vpop.f32.mrb[0].mxu0
    %v518 = vadd.f32 %v47, %v517
    %v519 = vpop.f32.mrb[0].mxu0
    %v520 = vpop.f32.mrb[0].mxu0
    %v521 = vadd.f32 %v47, %v520
    %v522 = vpop.f32.mrb[0].mxu0
    %523 = vmatprep.mubr.bf16.mxu0 0
    %524 = vmatmul.mubr.bf16.gmra.mrb[0].mxu0 %v419
    %v525 = vpop.f32.mrb[0].mxu0
    %v526 = vadd.f32 %v47, %v525
    %v527 = vpop.f32.mrb[0].mxu0
    %v528 = vpop.f32.mrb[0].mxu0
    %v529 = vadd.f32 %v47, %v528
    %v530 = vpop.f32.mrb[0].mxu0
    %531 = vmatprep.mubr.bf16.mxu0 0
    %532 = vmatmul.mubr.bf16.gmra.mrb[0].mxu0 %v422
    %v533 = vpop.f32.mrb[0].mxu0
    %v534 = vadd.f32 %v47, %v533
    %v535 = vpop.f32.mrb[0].mxu0
    %v536 = vpop.f32.mrb[0].mxu0
    %v537 = vadd.f32 %v47, %v536
    %v538 = vpop.f32.mrb[0].mxu0
    %539 = vmatprep.mubr.bf16.mxu0 0
    %540 = vmatmul.mubr.bf16.gmra.mrb[0].mxu0 %v425
    %v541 = vpop.f32.mrb[0].mxu0
    %v542 = vadd.f32 %v47, %v541
    %v543 = vpop.f32.mrb[0].mxu0
    %v544 = vpop.f32.mrb[0].mxu0
    %v545 = vadd.f32 %v47, %v544
    %v546 = vpop.f32.mrb[0].mxu0
    %547 = vmatprep.mubr.bf16.mxu0 0
    %548 = vmatmul.mubr.bf16.gmra.mrb[0].mxu0 %v428
    %v549 = vpop.f32.mrb[0].mxu0
    %v550 = vadd.f32 %v47, %v549
    %v551 = vpop.f32.mrb[0].mxu0
    %v552 = vpop.f32.mrb[0].mxu0
    %v553 = vadd.f32 %v47, %v552
    %v554 = vpop.f32.mrb[0].mxu0
    %555 = vmatprep.mubr.bf16.mxu0 0
    %556 = vmatmul.mubr.bf16.gmra.mrb[0].mxu0 %v431
    %v557 = vpop.f32.mrb[0].mxu0
    %v558 = vadd.f32 %v47, %v557
    %v559 = vpop.f32.mrb[0].mxu0
    %v560 = vpop.f32.mrb[0].mxu0
    %v561 = vadd.f32 %v47, %v560
    %v562 = vpop.f32.mrb[0].mxu0
    %563 = vmatprep.mubr.bf16.mxu0 0
    %564 = vmatmul.mubr.bf16.gmra.mrb[0].mxu0 %v434
    %v565 = vpop.f32.mrb[0].mxu0
    %v566 = vadd.f32 %v47, %v565
    %v567 = vpop.f32.mrb[0].mxu0
    %v568 = vpop.f32.mrb[0].mxu0
    %v569 = vadd.f32 %v47, %v568
    %v570 = vpop.f32.mrb[0].mxu0
    %571 = vmatprep.mubr.bf16.mxu0 0
    %572 = vmatmul.mubr.bf16.gmra.mrb[0].mxu0 %v437
    %v573 = vpop.f32.mrb[0].mxu0
    %v574 = vadd.f32 %v47, %v573
    %v575 = vpop.f32.mrb[0].mxu0
    %v576 = vpop.f32.mrb[0].mxu0
    %v577 = vadd.f32 %v47, %v576
    %v578 = vpop.f32.mrb[0].mxu0
    %579 = vmatprep.mubr.bf16.mxu0 0
    %580 = vmatmul.mubr.bf16.gmra.mrb[0].mxu0 %v440
    %v581 = vpop.f32.mrb[0].mxu0
    %v582 = vadd.f32 %v47, %v581
    %v583 = vpop.f32.mrb[0].mxu0
    %v584 = vpop.f32.mrb[0].mxu0
    %v585 = vadd.f32 %v47, %v584
    %v586 = vpop.f32.mrb[0].mxu0
    %587 = vmatprep.mubr.bf16.mxu0 0
    %588 = vmatmul.mubr.bf16.gmra.mrb[0].mxu0 %v443
    %v589 = vpop.f32.mrb[0].mxu0
    %v590 = vadd.f32 %v47, %v589
    %v591 = vpop.f32.mrb[0].mxu0
    %v592 = vpop.f32.mrb[0].mxu0
    %v593 = vadd.f32 %v47, %v592
    %v594 = vpop.f32.mrb[0].mxu0
    %595 = vmatprep.mubr.bf16.mxu0 0
    %596 = vmatmul.mubr.bf16.gmra.mrb[0].mxu0 %v446
    %v597 = vpop.f32.mrb[0].mxu0
    %v598 = vadd.f32 %v47, %v597
    %v599 = vpop.f32.mrb[0].mxu0
    %v600 = vpop.f32.mrb[0].mxu0
    %v601 = vadd.f32 %v47, %v600
    %v602 = vpop.f32.mrb[0].mxu0
    %603 = vmatprep.mubr.bf16.mxu0 0
    %604 = vmatmul.mubr.bf16.gmra.mrb[0].mxu0 %v449
    %v605 = vpop.f32.mrb[0].mxu0
    %v606 = vadd.f32 %v47, %v605
    %v607 = vpop.f32.mrb[0].mxu0
    %v608 = vpop.f32.mrb[0].mxu0
    %v609 = vadd.f32 %v47, %v608
    %v610 = vpop.f32.mrb[0].mxu0
    %611 = vdwg.mxu0
    %v612 = vmax.f32 %v486, 0.0
    %v613 = vmax.f32 %v489, 0.0
    %v614 = vmax.f32 %v494, 0.0
    %v615 = vmax.f32 %v497, 0.0
    %v616 = vmax.f32 %v502, 0.0
    %v617 = vmax.f32 %v505, 0.0
    %v618 = vmax.f32 %v510, 0.0
    %v619 = vmax.f32 %v513, 0.0
    %v620 = vmax.f32 %v518, 0.0
    %v621 = vmax.f32 %v521, 0.0
    %v622 = vmax.f32 %v526, 0.0
    %v623 = vmax.f32 %v529, 0.0
    %v624 = vmax.f32 %v534, 0.0
    %v625 = vmax.f32 %v537, 0.0
    %v626 = vmax.f32 %v542, 0.0
    %v627 = vmax.f32 %v545, 0.0
    %v628 = vmax.f32 %v550, 0.0
    %v629 = vmax.f32 %v553, 0.0
    %v630 = vmax.f32 %v558, 0.0
    %v631 = vmax.f32 %v561, 0.0
    %v632 = vmax.f32 %v566, 0.0
    %v633 = vmax.f32 %v569, 0.0
    %v634 = vmax.f32 %v574, 0.0
    %v635 = vmax.f32 %v577, 0.0
    %v636 = vmax.f32 %v582, 0.0
    %v637 = vmax.f32 %v585, 0.0
    %v638 = vmax.f32 %v590, 0.0
    %v639 = vmax.f32 %v593, 0.0
    %v640 = vmax.f32 %v598, 0.0
    %v641 = vmax.f32 %v601, 0.0
    %v642 = vmax.f32 %v606, 0.0
    %v643 = vmax.f32 %v609, 0.0
    %v644 = vadd.f32 %v612, %v613
    %v645 = vadd.f32 %v644, %v614
    %v646 = vadd.f32 %v645, %v615
    %v647 = vadd.f32 %v646, %v616
    %v648 = vadd.f32 %v647, %v617
    %v649 = vadd.f32 %v648, %v618
    %v650 = vadd.f32 %v649, %v619
    %v651 = vadd.f32 %v650, %v620
    %v652 = vadd.f32 %v651, %v621
    %v653 = vadd.f32 %v652, %v622
    %v654 = vadd.f32 %v653, %v623
    %v655 = vadd.f32 %v654, %v624
    %v656 = vadd.f32 %v655, %v625
    %v657 = vadd.f32 %v656, %v626
    %v658 = vadd.f32 %v657, %v627
    %v659 = vadd.f32 %v658, %v628
    %v660 = vadd.f32 %v659, %v629
    %v661 = vadd.f32 %v660, %v630
    %v662 = vadd.f32 %v661, %v631
    %v663 = vadd.f32 %v662, %v632
    %v664 = vadd.f32 %v663, %v633
    %v665 = vadd.f32 %v664, %v634
    %v666 = vadd.f32 %v665, %v635
    %v667 = vadd.f32 %v666, %v636
    %v668 = vadd.f32 %v667, %v637
    %v669 = vadd.f32 %v668, %v638
    %v670 = vadd.f32 %v669, %v639
    %v671 = vadd.f32 %v670, %v640
    %v672 = vadd.f32 %v671, %v641
    %v673 = vadd.f32 %v672, %v642
    %v674 = vadd.f32 %v673, %v643
    %v675 = vrot.slane %v674, 4
    %v676 = vadd.f32 %v674, %v675
    %v677 = vrot.slane %v676, 2
    %v678 = vadd.f32 %v676, %v677
    %v679 = vrot.slane %v678, 1
    %v680 = vadd.f32 %v678, %v679
    %v681 = vmul.f32 %v680, 0.00390625
    %682 = vst [vmem:[#allocation2 + $0x1] sm:$0x1] %v681
    %s683 = scalar_lea.vmem %s0, 32
    %v684 = vld [vmem:[%s683] sm:$0xff]
    %v685 = vld [vmem:[%s683 + $0x8] sm:$0xff]
    %v686 = vpack.c.bf16 %v684, %v684
    %v687 = vpack.c.bf16 %v685, %v685
    %688 = vxpose.xlu0.c.b16.start [1/8] %v686, 128
    %689 = vxpose.xlu0.c.b16.cont [2/8] 0, 128
    %690 = vxpose.xlu0.c.b16.cont [3/8] 0, 128
    %691 = vxpose.xlu0.c.b16.cont [4/8] 0, 128
    %692 = vxpose.xlu0.c.b16.cont [5/8] 0, 128
    %693 = vxpose.xlu0.c.b16.cont [6/8] 0, 128
    %694 = vxpose.xlu0.c.b16.cont [7/8] 0, 128
    %695 = vxpose.xlu0.c.b16.end [8/8] 0, 128
    %v696 = vpop.trf.xlu0
    %v697 = vpop.trf.xlu0
    %v698 = vpop.trf.xlu0
    %v699 = vpop.trf.xlu0
    %v700 = vpop.trf.xlu0
    %v701 = vpop.trf.xlu0
    %v702 = vpop.trf.xlu0
    %v703 = vpop.trf.xlu0
    %704 = vxpose.xlu0.c.b16.start [1/8] %v687, 128
    %705 = vxpose.xlu0.c.b16.cont [2/8] 0, 128
    %706 = vxpose.xlu0.c.b16.cont [3/8] 0, 128
    %707 = vxpose.xlu0.c.b16.cont [4/8] 0, 128
    %708 = vxpose.xlu0.c.b16.cont [5/8] 0, 128
    %709 = vxpose.xlu0.c.b16.cont [6/8] 0, 128
    %710 = vxpose.xlu0.c.b16.cont [7/8] 0, 128
    %711 = vxpose.xlu0.c.b16.end [8/8] 0, 128
    %v712 = vpop.trf.xlu0
    %v713 = vpop.trf.xlu0
    %v714 = vpop.trf.xlu0
    %v715 = vpop.trf.xlu0
    %v716 = vpop.trf.xlu0
    %v717 = vpop.trf.xlu0
    %v718 = vpop.trf.xlu0
    %v719 = vpop.trf.xlu0
    %v721 = vsel %vm81, %v696, 0
    %v724 = vsel %vm81, %v697, 0
    %v727 = vsel %vm81, %v698, 0
    %v730 = vsel %vm81, %v699, 0
    %v733 = vsel %vm81, %v700, 0
    %v736 = vsel %vm81, %v701, 0
    %v739 = vsel %vm81, %v702, 0
    %v742 = vsel %vm81, %v703, 0
    %v745 = vsel %vm81, %v712, 0
    %v748 = vsel %vm81, %v713, 0
    %v751 = vsel %vm81, %v714, 0
    %v754 = vsel %vm81, %v715, 0
    %v757 = vsel %vm81, %v716, 0
    %v760 = vsel %vm81, %v717, 0
    %v763 = vsel %vm81, %v718, 0
    %v766 = vsel %vm81, %v719, 0
    %768 = vmatprep.subr.bf16.mxu0 0
    %769 = vmatpush1.bf16.msra.mxu0 %v132
    %770 = vmatprep.subr.bf16.mxu0 0
    %771 = vmatpush1.bf16.msra.mxu0 0
    %772 = vmatprep.subr.bf16.mxu0 0
    %773 = vmatpush1.bf16.msra.mxu0 0
    %774 = vmatprep.subr.bf16.mxu0 0
    %775 = vmatpush1.bf16.msra.mxu0 0
    %776 = vmatprep.subr.bf16.mxu0 0
    %777 = vmatpush1.bf16.msra.mxu0 0
    %778 = vmatprep.subr.bf16.mxu0 0
    %779 = vmatpush1.bf16.msra.mxu0 0
    %780 = vmatprep.subr.bf16.mxu0 0
    %781 = vmatpush1.bf16.msra.mxu0 0
    %782 = vmatprep.subr.bf16.mxu0 0
    %783 = vmatpush1.bf16.msra.mxu0 0
    %784 = vmatprep.subr.bf16.mxu0 0
    %785 = vmatpush1.bf16.msra.mxu0 0
    %786 = vmatprep.subr.bf16.mxu0 0
    %787 = vmatpush1.bf16.msra.mxu0 0
    %788 = vmatprep.subr.bf16.mxu0 0
    %789 = vmatpush1.bf16.msra.mxu0 0
    %790 = vmatprep.subr.bf16.mxu0 0
    %791 = vmatpush1.bf16.msra.mxu0 0
    %792 = vmatprep.subr.bf16.mxu0 0
    %793 = vmatpush1.bf16.msra.mxu0 0
    %794 = vmatprep.subr.bf16.mxu0 0
    %795 = vmatpush1.bf16.msra.mxu0 0
    %796 = vmatprep.subr.bf16.mxu0 0
    %797 = vmatpush1.bf16.msra.mxu0 0
    %798 = vmatprep.subr.bf16.mxu0 0
    %799 = vmatpush1.bf16.msra.mxu0 0
    %800 = vmatprep.mubr.bf16.mxu0 0
    %801 = vmatmul.mubr.bf16.gmra.mrb[0].mxu0 %v721
    %v802 = vpop.f32.mrb[0].mxu0
    %v803 = vadd.f32 %v47, %v802
    %v804 = vpop.f32.mrb[0].mxu0
    %v805 = vpop.f32.mrb[0].mxu0
    %v806 = vadd.f32 %v47, %v805
    %v807 = vpop.f32.mrb[0].mxu0
    %808 = vmatprep.mubr.bf16.mxu0 0
    %809 = vmatmul.mubr.bf16.gmra.mrb[0].mxu0 %v724
    %v810 = vpop.f32.mrb[0].mxu0
    %v811 = vadd.f32 %v47, %v810
    %v812 = vpop.f32.mrb[0].mxu0
    %v813 = vpop.f32.mrb[0].mxu0
    %v814 = vadd.f32 %v47, %v813
    %v815 = vpop.f32.mrb[0].mxu0
    %816 = vmatprep.mubr.bf16.mxu0 0
    %817 = vmatmul.mubr.bf16.gmra.mrb[0].mxu0 %v727
    %v818 = vpop.f32.mrb[0].mxu0
    %v819 = vadd.f32 %v47, %v818
    %v820 = vpop.f32.mrb[0].mxu0
    %v821 = vpop.f32.mrb[0].mxu0
    %v822 = vadd.f32 %v47, %v821
    %v823 = vpop.f32.mrb[0].mxu0
    %824 = vmatprep.mubr.bf16.mxu0 0
    %825 = vmatmul.mubr.bf16.gmra.mrb[0].mxu0 %v730
    %v826 = vpop.f32.mrb[0].mxu0
    %v827 = vadd.f32 %v47, %v826
    %v828 = vpop.f32.mrb[0].mxu0
    %v829 = vpop.f32.mrb[0].mxu0
    %v830 = vadd.f32 %v47, %v829
    %v831 = vpop.f32.mrb[0].mxu0
    %832 = vmatprep.mubr.bf16.mxu0 0
    %833 = vmatmul.mubr.bf16.gmra.mrb[0].mxu0 %v733
    %v834 = vpop.f32.mrb[0].mxu0
    %v835 = vadd.f32 %v47, %v834
    %v836 = vpop.f32.mrb[0].mxu0
    %v837 = vpop.f32.mrb[0].mxu0
    %v838 = vadd.f32 %v47, %v837
    %v839 = vpop.f32.mrb[0].mxu0
    %840 = vmatprep.mubr.bf16.mxu0 0
    %841 = vmatmul.mubr.bf16.gmra.mrb[0].mxu0 %v736
    %v842 = vpop.f32.mrb[0].mxu0
    %v843 = vadd.f32 %v47, %v842
    %v844 = vpop.f32.mrb[0].mxu0
    %v845 = vpop.f32.mrb[0].mxu0
    %v846 = vadd.f32 %v47, %v845
    %v847 = vpop.f32.mrb[0].mxu0
    %848 = vmatprep.mubr.bf16.mxu0 0
    %849 = vmatmul.mubr.bf16.gmra.mrb[0].mxu0 %v739
    %v850 = vpop.f32.mrb[0].mxu0
    %v851 = vadd.f32 %v47, %v850
    %v852 = vpop.f32.mrb[0].mxu0
    %v853 = vpop.f32.mrb[0].mxu0
    %v854 = vadd.f32 %v47, %v853
    %v855 = vpop.f32.mrb[0].mxu0
    %856 = vmatprep.mubr.bf16.mxu0 0
    %857 = vmatmul.mubr.bf16.gmra.mrb[0].mxu0 %v742
    %v858 = vpop.f32.mrb[0].mxu0
    %v859 = vadd.f32 %v47, %v858
    %v860 = vpop.f32.mrb[0].mxu0
    %v861 = vpop.f32.mrb[0].mxu0
    %v862 = vadd.f32 %v47, %v861
    %v863 = vpop.f32.mrb[0].mxu0
    %864 = vmatprep.mubr.bf16.mxu0 0
    %865 = vmatmul.mubr.bf16.gmra.mrb[0].mxu0 %v745
    %v866 = vpop.f32.mrb[0].mxu0
    %v867 = vadd.f32 %v47, %v866
    %v868 = vpop.f32.mrb[0].mxu0
    %v869 = vpop.f32.mrb[0].mxu0
    %v870 = vadd.f32 %v47, %v869
    %v871 = vpop.f32.mrb[0].mxu0
    %872 = vmatprep.mubr.bf16.mxu0 0
    %873 = vmatmul.mubr.bf16.gmra.mrb[0].mxu0 %v748
    %v874 = vpop.f32.mrb[0].mxu0
    %v875 = vadd.f32 %v47, %v874
    %v876 = vpop.f32.mrb[0].mxu0
    %v877 = vpop.f32.mrb[0].mxu0
    %v878 = vadd.f32 %v47, %v877
    %v879 = vpop.f32.mrb[0].mxu0
    %880 = vmatprep.mubr.bf16.mxu0 0
    %881 = vmatmul.mubr.bf16.gmra.mrb[0].mxu0 %v751
    %v882 = vpop.f32.mrb[0].mxu0
    %v883 = vadd.f32 %v47, %v882
    %v884 = vpop.f32.mrb[0].mxu0
    %v885 = vpop.f32.mrb[0].mxu0
    %v886 = vadd.f32 %v47, %v885
    %v887 = vpop.f32.mrb[0].mxu0
    %888 = vmatprep.mubr.bf16.mxu0 0
    %889 = vmatmul.mubr.bf16.gmra.mrb[0].mxu0 %v754
    %v890 = vpop.f32.mrb[0].mxu0
    %v891 = vadd.f32 %v47, %v890
    %v892 = vpop.f32.mrb[0].mxu0
    %v893 = vpop.f32.mrb[0].mxu0
    %v894 = vadd.f32 %v47, %v893
    %v895 = vpop.f32.mrb[0].mxu0
    %896 = vmatprep.mubr.bf16.mxu0 0
    %897 = vmatmul.mubr.bf16.gmra.mrb[0].mxu0 %v757
    %v898 = vpop.f32.mrb[0].mxu0
    %v899 = vadd.f32 %v47, %v898
    %v900 = vpop.f32.mrb[0].mxu0
    %v901 = vpop.f32.mrb[0].mxu0
    %v902 = vadd.f32 %v47, %v901
    %v903 = vpop.f32.mrb[0].mxu0
    %904 = vmatprep.mubr.bf16.mxu0 0
    %905 = vmatmul.mubr.bf16.gmra.mrb[0].mxu0 %v760
    %v906 = vpop.f32.mrb[0].mxu0
    %v907 = vadd.f32 %v47, %v906
    %v908 = vpop.f32.mrb[0].mxu0
    %v909 = vpop.f32.mrb[0].mxu0
    %v910 = vadd.f32 %v47, %v909
    %v911 = vpop.f32.mrb[0].mxu0
    %912 = vmatprep.mubr.bf16.mxu0 0
    %913 = vmatmul.mubr.bf16.gmra.mrb[0].mxu0 %v763
    %v914 = vpop.f32.mrb[0].mxu0
    %v915 = vadd.f32 %v47, %v914
    %v916 = vpop.f32.mrb[0].mxu0
    %v917 = vpop.f32.mrb[0].mxu0
    %v918 = vadd.f32 %v47, %v917
    %v919 = vpop.f32.mrb[0].mxu0
    %920 = vmatprep.mubr.bf16.mxu0 0
    %921 = vmatmul.mubr.bf16.gmra.mrb[0].mxu0 %v766
    %v922 = vpop.f32.mrb[0].mxu0
    %v923 = vadd.f32 %v47, %v922
    %v924 = vpop.f32.mrb[0].mxu0
    %v925 = vpop.f32.mrb[0].mxu0
    %v926 = vadd.f32 %v47, %v925
    %v927 = vpop.f32.mrb[0].mxu0
    %928 = vdwg.mxu0
    %v929 = vmax.f32 %v803, 0.0
    %v930 = vmax.f32 %v806, 0.0
    %v931 = vmax.f32 %v811, 0.0
    %v932 = vmax.f32 %v814, 0.0
    %v933 = vmax.f32 %v819, 0.0
    %v934 = vmax.f32 %v822, 0.0
    %v935 = vmax.f32 %v827, 0.0
    %v936 = vmax.f32 %v830, 0.0
    %v937 = vmax.f32 %v835, 0.0
    %v938 = vmax.f32 %v838, 0.0
    %v939 = vmax.f32 %v843, 0.0
    %v940 = vmax.f32 %v846, 0.0
    %v941 = vmax.f32 %v851, 0.0
    %v942 = vmax.f32 %v854, 0.0
    %v943 = vmax.f32 %v859, 0.0
    %v944 = vmax.f32 %v862, 0.0
    %v945 = vmax.f32 %v867, 0.0
    %v946 = vmax.f32 %v870, 0.0
    %v947 = vmax.f32 %v875, 0.0
    %v948 = vmax.f32 %v878, 0.0
    %v949 = vmax.f32 %v883, 0.0
    %v950 = vmax.f32 %v886, 0.0
    %v951 = vmax.f32 %v891, 0.0
    %v952 = vmax.f32 %v894, 0.0
    %v953 = vmax.f32 %v899, 0.0
    %v954 = vmax.f32 %v902, 0.0
    %v955 = vmax.f32 %v907, 0.0
    %v956 = vmax.f32 %v910, 0.0
    %v957 = vmax.f32 %v915, 0.0
    %v958 = vmax.f32 %v918, 0.0
    %v959 = vmax.f32 %v923, 0.0
    %v960 = vmax.f32 %v926, 0.0
    %v961 = vadd.f32 %v929, %v930
    %v962 = vadd.f32 %v961, %v931
    %v963 = vadd.f32 %v962, %v932
    %v964 = vadd.f32 %v963, %v933
    %v965 = vadd.f32 %v964, %v934
    %v966 = vadd.f32 %v965, %v935
    %v967 = vadd.f32 %v966, %v936
    %v968 = vadd.f32 %v967, %v937
    %v969 = vadd.f32 %v968, %v938
    %v970 = vadd.f32 %v969, %v939
    %v971 = vadd.f32 %v970, %v940
    %v972 = vadd.f32 %v971, %v941
    %v973 = vadd.f32 %v972, %v942
    %v974 = vadd.f32 %v973, %v943
    %v975 = vadd.f32 %v974, %v944
    %v976 = vadd.f32 %v975, %v945
    %v977 = vadd.f32 %v976, %v946
    %v978 = vadd.f32 %v977, %v947
    %v979 = vadd.f32 %v978, %v948
    %v980 = vadd.f32 %v979, %v949
    %v981 = vadd.f32 %v980, %v950
    %v982 = vadd.f32 %v981, %v951
    %v983 = vadd.f32 %v982, %v952
    %v984 = vadd.f32 %v983, %v953
    %v985 = vadd.f32 %v984, %v954
    %v986 = vadd.f32 %v985, %v955
    %v987 = vadd.f32 %v986, %v956
    %v988 = vadd.f32 %v987, %v957
    %v989 = vadd.f32 %v988, %v958
    %v990 = vadd.f32 %v989, %v959
    %v991 = vadd.f32 %v990, %v960
    %v992 = vrot.slane %v991, 4
    %v993 = vadd.f32 %v991, %v992
    %v994 = vrot.slane %v993, 2
    %v995 = vadd.f32 %v993, %v994
    %v996 = vrot.slane %v995, 1
    %v997 = vadd.f32 %v995, %v996
    %v998 = vmul.f32 %v997, 0.00390625
    %999 = vst [vmem:[#allocation2 + $0x2] sm:$0x1] %v998
    %s1000 = scalar_lea.vmem %s0, 48
    %v1001 = vld [vmem:[%s1000] sm:$0xff]
    %v1002 = vld [vmem:[%s1000 + $0x8] sm:$0xff]
    %v1003 = vpack.c.bf16 %v1001, %v1001
    %v1004 = vpack.c.bf16 %v1002, %v1002
    %1005 = vxpose.xlu0.c.b16.start [1/8] %v1003, 128
    %1006 = vxpose.xlu0.c.b16.cont [2/8] 0, 128
    %1007 = vxpose.xlu0.c.b16.cont [3/8] 0, 128
    %1008 = vxpose.xlu0.c.b16.cont [4/8] 0, 128
    %1009 = vxpose.xlu0.c.b16.cont [5/8] 0, 128
    %1010 = vxpose.xlu0.c.b16.cont [6/8] 0, 128
    %1011 = vxpose.xlu0.c.b16.cont [7/8] 0, 128
    %1012 = vxpose.xlu0.c.b16.end [8/8] 0, 128
    %v1013 = vpop.trf.xlu0
    %v1014 = vpop.trf.xlu0
    %v1015 = vpop.trf.xlu0
    %v1016 = vpop.trf.xlu0
    %v1017 = vpop.trf.xlu0
    %v1018 = vpop.trf.xlu0
    %v1019 = vpop.trf.xlu0
    %v1020 = vpop.trf.xlu0
    %1021 = vxpose.xlu0.c.b16.start [1/8] %v1004, 128
    %1022 = vxpose.xlu0.c.b16.cont [2/8] 0, 128
    %1023 = vxpose.xlu0.c.b16.cont [3/8] 0, 128
    %1024 = vxpose.xlu0.c.b16.cont [4/8] 0, 128
    %1025 = vxpose.xlu0.c.b16.cont [5/8] 0, 128
    %1026 = vxpose.xlu0.c.b16.cont [6/8] 0, 128
    %1027 = vxpose.xlu0.c.b16.cont [7/8] 0, 128
    %1028 = vxpose.xlu0.c.b16.end [8/8] 0, 128
    %v1029 = vpop.trf.xlu0
    %v1030 = vpop.trf.xlu0
    %v1031 = vpop.trf.xlu0
    %v1032 = vpop.trf.xlu0
    %v1033 = vpop.trf.xlu0
    %v1034 = vpop.trf.xlu0
    %v1035 = vpop.trf.xlu0
    %v1036 = vpop.trf.xlu0
    %v1038 = vsel %vm81, %v1013, 0
    %v1041 = vsel %vm81, %v1014, 0
    %v1044 = vsel %vm81, %v1015, 0
    %v1047 = vsel %vm81, %v1016, 0
    %v1050 = vsel %vm81, %v1017, 0
    %v1053 = vsel %vm81, %v1018, 0
    %v1056 = vsel %vm81, %v1019, 0
    %v1059 = vsel %vm81, %v1020, 0
    %v1062 = vsel %vm81, %v1029, 0
    %v1065 = vsel %vm81, %v1030, 0
    %v1068 = vsel %vm81, %v1031, 0
    %v1071 = vsel %vm81, %v1032, 0
    %v1074 = vsel %vm81, %v1033, 0
    %v1077 = vsel %vm81, %v1034, 0
    %v1080 = vsel %vm81, %v1035, 0
    %v1083 = vsel %vm81, %v1036, 0
    %1085 = vmatprep.subr.bf16.mxu0 0
    %1086 = vmatpush1.bf16.msra.mxu0 %v132
    %1087 = vmatprep.subr.bf16.mxu0 0
    %1088 = vmatpush1.bf16.msra.mxu0 0
    %1089 = vmatprep.subr.bf16.mxu0 0
    %1090 = vmatpush1.bf16.msra.mxu0 0
    %1091 = vmatprep.subr.bf16.mxu0 0
    %1092 = vmatpush1.bf16.msra.mxu0 0
    %1093 = vmatprep.subr.bf16.mxu0 0
    %1094 = vmatpush1.bf16.msra.mxu0 0
    %1095 = vmatprep.subr.bf16.mxu0 0
    %1096 = vmatpush1.bf16.msra.mxu0 0
    %1097 = vmatprep.subr.bf16.mxu0 0
    %1098 = vmatpush1.bf16.msra.mxu0 0
    %1099 = vmatprep.subr.bf16.mxu0 0
    %1100 = vmatpush1.bf16.msra.mxu0 0
    %1101 = vmatprep.subr.bf16.mxu0 0
    %1102 = vmatpush1.bf16.msra.mxu0 0
    %1103 = vmatprep.subr.bf16.mxu0 0
    %1104 = vmatpush1.bf16.msra.mxu0 0
    %1105 = vmatprep.subr.bf16.mxu0 0
    %1106 = vmatpush1.bf16.msra.mxu0 0
    %1107 = vmatprep.subr.bf16.mxu0 0
    %1108 = vmatpush1.bf16.msra.mxu0 0
    %1109 = vmatprep.subr.bf16.mxu0 0
    %1110 = vmatpush1.bf16.msra.mxu0 0
    %1111 = vmatprep.subr.bf16.mxu0 0
    %1112 = vmatpush1.bf16.msra.mxu0 0
    %1113 = vmatprep.subr.bf16.mxu0 0
    %1114 = vmatpush1.bf16.msra.mxu0 0
    %1115 = vmatprep.subr.bf16.mxu0 0
    %1116 = vmatpush1.bf16.msra.mxu0 0
    %1117 = vmatprep.mubr.bf16.mxu0 0
    %1118 = vmatmul.mubr.bf16.gmra.mrb[0].mxu0 %v1038
    %v1119 = vpop.f32.mrb[0].mxu0
    %v1120 = vadd.f32 %v47, %v1119
    %v1121 = vpop.f32.mrb[0].mxu0
    %v1122 = vpop.f32.mrb[0].mxu0
    %v1123 = vadd.f32 %v47, %v1122
    %v1124 = vpop.f32.mrb[0].mxu0
    %1125 = vmatprep.mubr.bf16.mxu0 0
    %1126 = vmatmul.mubr.bf16.gmra.mrb[0].mxu0 %v1041
    %v1127 = vpop.f32.mrb[0].mxu0
    %v1128 = vadd.f32 %v47, %v1127
    %v1129 = vpop.f32.mrb[0].mxu0
    %v1130 = vpop.f32.mrb[0].mxu0
    %v1131 = vadd.f32 %v47, %v1130
    %v1132 = vpop.f32.mrb[0].mxu0
    %1133 = vmatprep.mubr.bf16.mxu0 0
    %1134 = vmatmul.mubr.bf16.gmra.mrb[0].mxu0 %v1044
    %v1135 = vpop.f32.mrb[0].mxu0
    %v1136 = vadd.f32 %v47, %v1135
    %v1137 = vpop.f32.mrb[0].mxu0
    %v1138 = vpop.f32.mrb[0].mxu0
    %v1139 = vadd.f32 %v47, %v1138
    %v1140 = vpop.f32.mrb[0].mxu0
    %1141 = vmatprep.mubr.bf16.mxu0 0
    %1142 = vmatmul.mubr.bf16.gmra.mrb[0].mxu0 %v1047
    %v1143 = vpop.f32.mrb[0].mxu0
    %v1144 = vadd.f32 %v47, %v1143
    %v1145 = vpop.f32.mrb[0].mxu0
    %v1146 = vpop.f32.mrb[0].mxu0
    %v1147 = vadd.f32 %v47, %v1146
    %v1148 = vpop.f32.mrb[0].mxu0
    %1149 = vmatprep.mubr.bf16.mxu0 0
    %1150 = vmatmul.mubr.bf16.gmra.mrb[0].mxu0 %v1050
    %v1151 = vpop.f32.mrb[0].mxu0
    %v1152 = vadd.f32 %v47, %v1151
    %v1153 = vpop.f32.mrb[0].mxu0
    %v1154 = vpop.f32.mrb[0].mxu0
    %v1155 = vadd.f32 %v47, %v1154
    %v1156 = vpop.f32.mrb[0].mxu0
    %1157 = vmatprep.mubr.bf16.mxu0 0
    %1158 = vmatmul.mubr.bf16.gmra.mrb[0].mxu0 %v1053
    %v1159 = vpop.f32.mrb[0].mxu0
    %v1160 = vadd.f32 %v47, %v1159
    %v1161 = vpop.f32.mrb[0].mxu0
    %v1162 = vpop.f32.mrb[0].mxu0
    %v1163 = vadd.f32 %v47, %v1162
    %v1164 = vpop.f32.mrb[0].mxu0
    %1165 = vmatprep.mubr.bf16.mxu0 0
    %1166 = vmatmul.mubr.bf16.gmra.mrb[0].mxu0 %v1056
    %v1167 = vpop.f32.mrb[0].mxu0
    %v1168 = vadd.f32 %v47, %v1167
    %v1169 = vpop.f32.mrb[0].mxu0
    %v1170 = vpop.f32.mrb[0].mxu0
    %v1171 = vadd.f32 %v47, %v1170
    %v1172 = vpop.f32.mrb[0].mxu0
    %1173 = vmatprep.mubr.bf16.mxu0 0
    %1174 = vmatmul.mubr.bf16.gmra.mrb[0].mxu0 %v1059
    %v1175 = vpop.f32.mrb[0].mxu0
    %v1176 = vadd.f32 %v47, %v1175
    %v1177 = vpop.f32.mrb[0].mxu0
    %v1178 = vpop.f32.mrb[0].mxu0
    %v1179 = vadd.f32 %v47, %v1178
    %v1180 = vpop.f32.mrb[0].mxu0
    %1181 = vmatprep.mubr.bf16.mxu0 0
    %1182 = vmatmul.mubr.bf16.gmra.mrb[0].mxu0 %v1062
    %v1183 = vpop.f32.mrb[0].mxu0
    %v1184 = vadd.f32 %v47, %v1183
    %v1185 = vpop.f32.mrb[0].mxu0
    %v1186 = vpop.f32.mrb[0].mxu0
    %v1187 = vadd.f32 %v47, %v1186
    %v1188 = vpop.f32.mrb[0].mxu0
    %1189 = vmatprep.mubr.bf16.mxu0 0
    %1190 = vmatmul.mubr.bf16.gmra.mrb[0].mxu0 %v1065
    %v1191 = vpop.f32.mrb[0].mxu0
    %v1192 = vadd.f32 %v47, %v1191
    %v1193 = vpop.f32.mrb[0].mxu0
    %v1194 = vpop.f32.mrb[0].mxu0
    %v1195 = vadd.f32 %v47, %v1194
    %v1196 = vpop.f32.mrb[0].mxu0
    %1197 = vmatprep.mubr.bf16.mxu0 0
    %1198 = vmatmul.mubr.bf16.gmra.mrb[0].mxu0 %v1068
    %v1199 = vpop.f32.mrb[0].mxu0
    %v1200 = vadd.f32 %v47, %v1199
    %v1201 = vpop.f32.mrb[0].mxu0
    %v1202 = vpop.f32.mrb[0].mxu0
    %v1203 = vadd.f32 %v47, %v1202
    %v1204 = vpop.f32.mrb[0].mxu0
    %1205 = vmatprep.mubr.bf16.mxu0 0
    %1206 = vmatmul.mubr.bf16.gmra.mrb[0].mxu0 %v1071
    %v1207 = vpop.f32.mrb[0].mxu0
    %v1208 = vadd.f32 %v47, %v1207
    %v1209 = vpop.f32.mrb[0].mxu0
    %v1210 = vpop.f32.mrb[0].mxu0
    %v1211 = vadd.f32 %v47, %v1210
    %v1212 = vpop.f32.mrb[0].mxu0
    %1213 = vmatprep.mubr.bf16.mxu0 0
    %1214 = vmatmul.mubr.bf16.gmra.mrb[0].mxu0 %v1074
    %v1215 = vpop.f32.mrb[0].mxu0
    %v1216 = vadd.f32 %v47, %v1215
    %v1217 = vpop.f32.mrb[0].mxu0
    %v1218 = vpop.f32.mrb[0].mxu0
    %v1219 = vadd.f32 %v47, %v1218
    %v1220 = vpop.f32.mrb[0].mxu0
    %1221 = vmatprep.mubr.bf16.mxu0 0
    %1222 = vmatmul.mubr.bf16.gmra.mrb[0].mxu0 %v1077
    %v1223 = vpop.f32.mrb[0].mxu0
    %v1224 = vadd.f32 %v47, %v1223
    %v1225 = vpop.f32.mrb[0].mxu0
    %v1226 = vpop.f32.mrb[0].mxu0
    %v1227 = vadd.f32 %v47, %v1226
    %v1228 = vpop.f32.mrb[0].mxu0
    %1229 = vmatprep.mubr.bf16.mxu0 0
    %1230 = vmatmul.mubr.bf16.gmra.mrb[0].mxu0 %v1080
    %v1231 = vpop.f32.mrb[0].mxu0
    %v1232 = vadd.f32 %v47, %v1231
    %v1233 = vpop.f32.mrb[0].mxu0
    %v1234 = vpop.f32.mrb[0].mxu0
    %v1235 = vadd.f32 %v47, %v1234
    %v1236 = vpop.f32.mrb[0].mxu0
    %1237 = vmatprep.mubr.bf16.mxu0 0
    %1238 = vmatmul.mubr.bf16.gmra.mrb[0].mxu0 %v1083
    %v1239 = vpop.f32.mrb[0].mxu0
    %v1240 = vadd.f32 %v47, %v1239
    %v1241 = vpop.f32.mrb[0].mxu0
    %v1242 = vpop.f32.mrb[0].mxu0
    %v1243 = vadd.f32 %v47, %v1242
    %v1244 = vpop.f32.mrb[0].mxu0
    %1245 = vdwg.mxu0
    %v1246 = vmax.f32 %v1120, 0.0
    %v1247 = vmax.f32 %v1123, 0.0
    %v1248 = vmax.f32 %v1128, 0.0
    %v1249 = vmax.f32 %v1131, 0.0
    %v1250 = vmax.f32 %v1136, 0.0
    %v1251 = vmax.f32 %v1139, 0.0
    %v1252 = vmax.f32 %v1144, 0.0
    %v1253 = vmax.f32 %v1147, 0.0
    %v1254 = vmax.f32 %v1152, 0.0
    %v1255 = vmax.f32 %v1155, 0.0
    %v1256 = vmax.f32 %v1160, 0.0
    %v1257 = vmax.f32 %v1163, 0.0
    %v1258 = vmax.f32 %v1168, 0.0
    %v1259 = vmax.f32 %v1171, 0.0
    %v1260 = vmax.f32 %v1176, 0.0
    %v1261 = vmax.f32 %v1179, 0.0
    %v1262 = vmax.f32 %v1184, 0.0
    %v1263 = vmax.f32 %v1187, 0.0
    %v1264 = vmax.f32 %v1192, 0.0
    %v1265 = vmax.f32 %v1195, 0.0
    %v1266 = vmax.f32 %v1200, 0.0
    %v1267 = vmax.f32 %v1203, 0.0
    %v1268 = vmax.f32 %v1208, 0.0
    %v1269 = vmax.f32 %v1211, 0.0
    %v1270 = vmax.f32 %v1216, 0.0
    %v1271 = vmax.f32 %v1219, 0.0
    %v1272 = vmax.f32 %v1224, 0.0
    %v1273 = vmax.f32 %v1227, 0.0
    %v1274 = vmax.f32 %v1232, 0.0
    %v1275 = vmax.f32 %v1235, 0.0
    %v1276 = vmax.f32 %v1240, 0.0
    %v1277 = vmax.f32 %v1243, 0.0
    %v1278 = vadd.f32 %v1246, %v1247
    %v1279 = vadd.f32 %v1278, %v1248
    %v1280 = vadd.f32 %v1279, %v1249
    %v1281 = vadd.f32 %v1280, %v1250
    %v1282 = vadd.f32 %v1281, %v1251
    %v1283 = vadd.f32 %v1282, %v1252
    %v1284 = vadd.f32 %v1283, %v1253
    %v1285 = vadd.f32 %v1284, %v1254
    %v1286 = vadd.f32 %v1285, %v1255
    %v1287 = vadd.f32 %v1286, %v1256
    %v1288 = vadd.f32 %v1287, %v1257
    %v1289 = vadd.f32 %v1288, %v1258
    %v1290 = vadd.f32 %v1289, %v1259
    %v1291 = vadd.f32 %v1290, %v1260
    %v1292 = vadd.f32 %v1291, %v1261
    %v1293 = vadd.f32 %v1292, %v1262
    %v1294 = vadd.f32 %v1293, %v1263
    %v1295 = vadd.f32 %v1294, %v1264
    %v1296 = vadd.f32 %v1295, %v1265
    %v1297 = vadd.f32 %v1296, %v1266
    %v1298 = vadd.f32 %v1297, %v1267
    %v1299 = vadd.f32 %v1298, %v1268
    %v1300 = vadd.f32 %v1299, %v1269
    %v1301 = vadd.f32 %v1300, %v1270
    %v1302 = vadd.f32 %v1301, %v1271
    %v1303 = vadd.f32 %v1302, %v1272
    %v1304 = vadd.f32 %v1303, %v1273
    %v1305 = vadd.f32 %v1304, %v1274
    %v1306 = vadd.f32 %v1305, %v1275
    %v1307 = vadd.f32 %v1306, %v1276
    %v1308 = vadd.f32 %v1307, %v1277
    %v1309 = vrot.slane %v1308, 4
    %v1310 = vadd.f32 %v1308, %v1309
    %v1311 = vrot.slane %v1310, 2
    %v1312 = vadd.f32 %v1310, %v1311
    %v1313 = vrot.slane %v1312, 1
    %v1314 = vadd.f32 %v1312, %v1313
    %v1315 = vmul.f32 %v1314, 0.00390625
    %1316 = vst [vmem:[#allocation2 + $0x3] sm:$0x1] %v1315
    %s1317 = scalar_lea.vmem %s0, 64
    %v1318 = vld [vmem:[%s1317] sm:$0xff]
    %v1319 = vld [vmem:[%s1317 + $0x8] sm:$0xff]
    %v1320 = vpack.c.bf16 %v1318, %v1318
    %v1321 = vpack.c.bf16 %v1319, %v1319
    %1322 = vxpose.xlu0.c.b16.start [1/8] %v1320, 128
    %1323 = vxpose.xlu0.c.b16.cont [2/8] 0, 128
    %1324 = vxpose.xlu0.c.b16.cont [3/8] 0, 128
    %1325 = vxpose.xlu0.c.b16.cont [4/8] 0, 128
    %1326 = vxpose.xlu0.c.b16.cont [5/8] 0, 128
    %1327 = vxpose.xlu0.c.b16.cont [6/8] 0, 128
    %1328 = vxpose.xlu0.c.b16.cont [7/8] 0, 128
    %1329 = vxpose.xlu0.c.b16.end [8/8] 0, 128
    %v1330 = vpop.trf.xlu0
    %v1331 = vpop.trf.xlu0
    %v1332 = vpop.trf.xlu0
    %v1333 = vpop.trf.xlu0
    %v1334 = vpop.trf.xlu0
    %v1335 = vpop.trf.xlu0
    %v1336 = vpop.trf.xlu0
    %v1337 = vpop.trf.xlu0
    %1338 = vxpose.xlu0.c.b16.start [1/8] %v1321, 128
    %1339 = vxpose.xlu0.c.b16.cont [2/8] 0, 128
    %1340 = vxpose.xlu0.c.b16.cont [3/8] 0, 128
    %1341 = vxpose.xlu0.c.b16.cont [4/8] 0, 128
    %1342 = vxpose.xlu0.c.b16.cont [5/8] 0, 128
    %1343 = vxpose.xlu0.c.b16.cont [6/8] 0, 128
    %1344 = vxpose.xlu0.c.b16.cont [7/8] 0, 128
    %1345 = vxpose.xlu0.c.b16.end [8/8] 0, 128
    %v1346 = vpop.trf.xlu0
    %v1347 = vpop.trf.xlu0
    %v1348 = vpop.trf.xlu0
    %v1349 = vpop.trf.xlu0
    %v1350 = vpop.trf.xlu0
    %v1351 = vpop.trf.xlu0
    %v1352 = vpop.trf.xlu0
    %v1353 = vpop.trf.xlu0
    %v1355 = vsel %vm81, %v1330, 0
    %v1358 = vsel %vm81, %v1331, 0
    %v1361 = vsel %vm81, %v1332, 0
    %v1364 = vsel %vm81, %v1333, 0
    %v1367 = vsel %vm81, %v1334, 0
    %v1370 = vsel %vm81, %v1335, 0
    %v1373 = vsel %vm81, %v1336, 0
    %v1376 = vsel %vm81, %v1337, 0
    %v1379 = vsel %vm81, %v1346, 0
    %v1382 = vsel %vm81, %v1347, 0
    %v1385 = vsel %vm81, %v1348, 0
    %v1388 = vsel %vm81, %v1349, 0
    %v1391 = vsel %vm81, %v1350, 0
    %v1394 = vsel %vm81, %v1351, 0
    %v1397 = vsel %vm81, %v1352, 0
    %v1400 = vsel %vm81, %v1353, 0
    %1402 = vmatprep.subr.bf16.mxu0 0
    %1403 = vmatpush1.bf16.msra.mxu0 %v132
    %1404 = vmatprep.subr.bf16.mxu0 0
    %1405 = vmatpush1.bf16.msra.mxu0 0
    %1406 = vmatprep.subr.bf16.mxu0 0
    %1407 = vmatpush1.bf16.msra.mxu0 0
    %1408 = vmatprep.subr.bf16.mxu0 0
    %1409 = vmatpush1.bf16.msra.mxu0 0
    %1410 = vmatprep.subr.bf16.mxu0 0
    %1411 = vmatpush1.bf16.msra.mxu0 0
    %1412 = vmatprep.subr.bf16.mxu0 0
    %1413 = vmatpush1.bf16.msra.mxu0 0
    %1414 = vmatprep.subr.bf16.mxu0 0
    %1415 = vmatpush1.bf16.msra.mxu0 0
    %1416 = vmatprep.subr.bf16.mxu0 0
    %1417 = vmatpush1.bf16.msra.mxu0 0
    %1418 = vmatprep.subr.bf16.mxu0 0
    %1419 = vmatpush1.bf16.msra.mxu0 0
    %1420 = vmatprep.subr.bf16.mxu0 0
    %1421 = vmatpush1.bf16.msra.mxu0 0
    %1422 = vmatprep.subr.bf16.mxu0 0
    %1423 = vmatpush1.bf16.msra.mxu0 0
    %1424 = vmatprep.subr.bf16.mxu0 0
    %1425 = vmatpush1.bf16.msra.mxu0 0
    %1426 = vmatprep.subr.bf16.mxu0 0
    %1427 = vmatpush1.bf16.msra.mxu0 0
    %1428 = vmatprep.subr.bf16.mxu0 0
    %1429 = vmatpush1.bf16.msra.mxu0 0
    %1430 = vmatprep.subr.bf16.mxu0 0
    %1431 = vmatpush1.bf16.msra.mxu0 0
    %1432 = vmatprep.subr.bf16.mxu0 0
    %1433 = vmatpush1.bf16.msra.mxu0 0
    %1434 = vmatprep.mubr.bf16.mxu0 0
    %1435 = vmatmul.mubr.bf16.gmra.mrb[0].mxu0 %v1355
    %v1436 = vpop.f32.mrb[0].mxu0
    %v1437 = vadd.f32 %v47, %v1436
    %v1438 = vpop.f32.mrb[0].mxu0
    %v1439 = vpop.f32.mrb[0].mxu0
    %v1440 = vadd.f32 %v47, %v1439
    %v1441 = vpop.f32.mrb[0].mxu0
    %1442 = vmatprep.mubr.bf16.mxu0 0
    %1443 = vmatmul.mubr.bf16.gmra.mrb[0].mxu0 %v1358
    %v1444 = vpop.f32.mrb[0].mxu0
    %v1445 = vadd.f32 %v47, %v1444
    %v1446 = vpop.f32.mrb[0].mxu0
    %v1447 = vpop.f32.mrb[0].mxu0
    %v1448 = vadd.f32 %v47, %v1447
    %v1449 = vpop.f32.mrb[0].mxu0
    %1450 = vmatprep.mubr.bf16.mxu0 0
    %1451 = vmatmul.mubr.bf16.gmra.mrb[0].mxu0 %v1361
    %v1452 = vpop.f32.mrb[0].mxu0
    %v1453 = vadd.f32 %v47, %v1452
    %v1454 = vpop.f32.mrb[0].mxu0
    %v1455 = vpop.f32.mrb[0].mxu0
    %v1456 = vadd.f32 %v47, %v1455
    %v1457 = vpop.f32.mrb[0].mxu0
    %1458 = vmatprep.mubr.bf16.mxu0 0
    %1459 = vmatmul.mubr.bf16.gmra.mrb[0].mxu0 %v1364
    %v1460 = vpop.f32.mrb[0].mxu0
    %v1461 = vadd.f32 %v47, %v1460
    %v1462 = vpop.f32.mrb[0].mxu0
    %v1463 = vpop.f32.mrb[0].mxu0
    %v1464 = vadd.f32 %v47, %v1463
    %v1465 = vpop.f32.mrb[0].mxu0
    %1466 = vmatprep.mubr.bf16.mxu0 0
    %1467 = vmatmul.mubr.bf16.gmra.mrb[0].mxu0 %v1367
    %v1468 = vpop.f32.mrb[0].mxu0
    %v1469 = vadd.f32 %v47, %v1468
    %v1470 = vpop.f32.mrb[0].mxu0
    %v1471 = vpop.f32.mrb[0].mxu0
    %v1472 = vadd.f32 %v47, %v1471
    %v1473 = vpop.f32.mrb[0].mxu0
    %1474 = vmatprep.mubr.bf16.mxu0 0
    %1475 = vmatmul.mubr.bf16.gmra.mrb[0].mxu0 %v1370
    %v1476 = vpop.f32.mrb[0].mxu0
    %v1477 = vadd.f32 %v47, %v1476
    %v1478 = vpop.f32.mrb[0].mxu0
    %v1479 = vpop.f32.mrb[0].mxu0
    %v1480 = vadd.f32 %v47, %v1479
    %v1481 = vpop.f32.mrb[0].mxu0
    %1482 = vmatprep.mubr.bf16.mxu0 0
    %1483 = vmatmul.mubr.bf16.gmra.mrb[0].mxu0 %v1373
    %v1484 = vpop.f32.mrb[0].mxu0
    %v1485 = vadd.f32 %v47, %v1484
    %v1486 = vpop.f32.mrb[0].mxu0
    %v1487 = vpop.f32.mrb[0].mxu0
    %v1488 = vadd.f32 %v47, %v1487
    %v1489 = vpop.f32.mrb[0].mxu0
    %1490 = vmatprep.mubr.bf16.mxu0 0
    %1491 = vmatmul.mubr.bf16.gmra.mrb[0].mxu0 %v1376
    %v1492 = vpop.f32.mrb[0].mxu0
    %v1493 = vadd.f32 %v47, %v1492
    %v1494 = vpop.f32.mrb[0].mxu0
    %v1495 = vpop.f32.mrb[0].mxu0
    %v1496 = vadd.f32 %v47, %v1495
    %v1497 = vpop.f32.mrb[0].mxu0
    %1498 = vmatprep.mubr.bf16.mxu0 0
    %1499 = vmatmul.mubr.bf16.gmra.mrb[0].mxu0 %v1379
    %v1500 = vpop.f32.mrb[0].mxu0
    %v1501 = vadd.f32 %v47, %v1500
    %v1502 = vpop.f32.mrb[0].mxu0
    %v1503 = vpop.f32.mrb[0].mxu0
    %v1504 = vadd.f32 %v47, %v1503
    %v1505 = vpop.f32.mrb[0].mxu0
    %1506 = vmatprep.mubr.bf16.mxu0 0
    %1507 = vmatmul.mubr.bf16.gmra.mrb[0].mxu0 %v1382
    %v1508 = vpop.f32.mrb[0].mxu0
    %v1509 = vadd.f32 %v47, %v1508
    %v1510 = vpop.f32.mrb[0].mxu0
    %v1511 = vpop.f32.mrb[0].mxu0
    %v1512 = vadd.f32 %v47, %v1511
    %v1513 = vpop.f32.mrb[0].mxu0
    %1514 = vmatprep.mubr.bf16.mxu0 0
    %1515 = vmatmul.mubr.bf16.gmra.mrb[0].mxu0 %v1385
    %v1516 = vpop.f32.mrb[0].mxu0
    %v1517 = vadd.f32 %v47, %v1516
    %v1518 = vpop.f32.mrb[0].mxu0
    %v1519 = vpop.f32.mrb[0].mxu0
    %v1520 = vadd.f32 %v47, %v1519
    %v1521 = vpop.f32.mrb[0].mxu0
    %1522 = vmatprep.mubr.bf16.mxu0 0
    %1523 = vmatmul.mubr.bf16.gmra.mrb[0].mxu0 %v1388
    %v1524 = vpop.f32.mrb[0].mxu0
    %v1525 = vadd.f32 %v47, %v1524
    %v1526 = vpop.f32.mrb[0].mxu0
    %v1527 = vpop.f32.mrb[0].mxu0
    %v1528 = vadd.f32 %v47, %v1527
    %v1529 = vpop.f32.mrb[0].mxu0
    %1530 = vmatprep.mubr.bf16.mxu0 0
    %1531 = vmatmul.mubr.bf16.gmra.mrb[0].mxu0 %v1391
    %v1532 = vpop.f32.mrb[0].mxu0
    %v1533 = vadd.f32 %v47, %v1532
    %v1534 = vpop.f32.mrb[0].mxu0
    %v1535 = vpop.f32.mrb[0].mxu0
    %v1536 = vadd.f32 %v47, %v1535
    %v1537 = vpop.f32.mrb[0].mxu0
    %1538 = vmatprep.mubr.bf16.mxu0 0
    %1539 = vmatmul.mubr.bf16.gmra.mrb[0].mxu0 %v1394
    %v1540 = vpop.f32.mrb[0].mxu0
    %v1541 = vadd.f32 %v47, %v1540
    %v1542 = vpop.f32.mrb[0].mxu0
    %v1543 = vpop.f32.mrb[0].mxu0
    %v1544 = vadd.f32 %v47, %v1543
    %v1545 = vpop.f32.mrb[0].mxu0
    %1546 = vmatprep.mubr.bf16.mxu0 0
    %1547 = vmatmul.mubr.bf16.gmra.mrb[0].mxu0 %v1397
    %v1548 = vpop.f32.mrb[0].mxu0
    %v1549 = vadd.f32 %v47, %v1548
    %v1550 = vpop.f32.mrb[0].mxu0
    %v1551 = vpop.f32.mrb[0].mxu0
    %v1552 = vadd.f32 %v47, %v1551
    %v1553 = vpop.f32.mrb[0].mxu0
    %1554 = vmatprep.mubr.bf16.mxu0 0
    %1555 = vmatmul.mubr.bf16.gmra.mrb[0].mxu0 %v1400
    %v1556 = vpop.f32.mrb[0].mxu0
    %v1557 = vadd.f32 %v47, %v1556
    %v1558 = vpop.f32.mrb[0].mxu0
    %v1559 = vpop.f32.mrb[0].mxu0
    %v1560 = vadd.f32 %v47, %v1559
    %v1561 = vpop.f32.mrb[0].mxu0
    %1562 = vdwg.mxu0
    %v1563 = vmax.f32 %v1437, 0.0
    %v1564 = vmax.f32 %v1440, 0.0
    %v1565 = vmax.f32 %v1445, 0.0
    %v1566 = vmax.f32 %v1448, 0.0
    %v1567 = vmax.f32 %v1453, 0.0
    %v1568 = vmax.f32 %v1456, 0.0
    %v1569 = vmax.f32 %v1461, 0.0
    %v1570 = vmax.f32 %v1464, 0.0
    %v1571 = vmax.f32 %v1469, 0.0
    %v1572 = vmax.f32 %v1472, 0.0
    %v1573 = vmax.f32 %v1477, 0.0
    %v1574 = vmax.f32 %v1480, 0.0
    %v1575 = vmax.f32 %v1485, 0.0
    %v1576 = vmax.f32 %v1488, 0.0
    %v1577 = vmax.f32 %v1493, 0.0
    %v1578 = vmax.f32 %v1496, 0.0
    %v1579 = vmax.f32 %v1501, 0.0
    %v1580 = vmax.f32 %v1504, 0.0
    %v1581 = vmax.f32 %v1509, 0.0
    %v1582 = vmax.f32 %v1512, 0.0
    %v1583 = vmax.f32 %v1517, 0.0
    %v1584 = vmax.f32 %v1520, 0.0
    %v1585 = vmax.f32 %v1525, 0.0
    %v1586 = vmax.f32 %v1528, 0.0
    %v1587 = vmax.f32 %v1533, 0.0
    %v1588 = vmax.f32 %v1536, 0.0
    %v1589 = vmax.f32 %v1541, 0.0
    %v1590 = vmax.f32 %v1544, 0.0
    %v1591 = vmax.f32 %v1549, 0.0
    %v1592 = vmax.f32 %v1552, 0.0
    %v1593 = vmax.f32 %v1557, 0.0
    %v1594 = vmax.f32 %v1560, 0.0
    %v1595 = vadd.f32 %v1563, %v1564
    %v1596 = vadd.f32 %v1595, %v1565
    %v1597 = vadd.f32 %v1596, %v1566
    %v1598 = vadd.f32 %v1597, %v1567
    %v1599 = vadd.f32 %v1598, %v1568
    %v1600 = vadd.f32 %v1599, %v1569
    %v1601 = vadd.f32 %v1600, %v1570
    %v1602 = vadd.f32 %v1601, %v1571
    %v1603 = vadd.f32 %v1602, %v1572
    %v1604 = vadd.f32 %v1603, %v1573
    %v1605 = vadd.f32 %v1604, %v1574
    %v1606 = vadd.f32 %v1605, %v1575
    %v1607 = vadd.f32 %v1606, %v1576
    %v1608 = vadd.f32 %v1607, %v1577
    %v1609 = vadd.f32 %v1608, %v1578
    %v1610 = vadd.f32 %v1609, %v1579
    %v1611 = vadd.f32 %v1610, %v1580
    %v1612 = vadd.f32 %v1611, %v1581
    %v1613 = vadd.f32 %v1612, %v1582
    %v1614 = vadd.f32 %v1613, %v1583
    %v1615 = vadd.f32 %v1614, %v1584
    %v1616 = vadd.f32 %v1615, %v1585
    %v1617 = vadd.f32 %v1616, %v1586
    %v1618 = vadd.f32 %v1617, %v1587
    %v1619 = vadd.f32 %v1618, %v1588
    %v1620 = vadd.f32 %v1619, %v1589
    %v1621 = vadd.f32 %v1620, %v1590
    %v1622 = vadd.f32 %v1621, %v1591
    %v1623 = vadd.f32 %v1622, %v1592
    %v1624 = vadd.f32 %v1623, %v1593
    %v1625 = vadd.f32 %v1624, %v1594
    %v1626 = vrot.slane %v1625, 4
    %v1627 = vadd.f32 %v1625, %v1626
    %v1628 = vrot.slane %v1627, 2
    %v1629 = vadd.f32 %v1627, %v1628
    %v1630 = vrot.slane %v1629, 1
    %v1631 = vadd.f32 %v1629, %v1630
    %v1632 = vmul.f32 %v1631, 0.00390625
    %1633 = vst [vmem:[#allocation2 + $0x4] sm:$0x1] %v1632
    %s1634 = scalar_lea.vmem %s0, 80
    %v1635 = vld [vmem:[%s1634] sm:$0xff]
    %v1636 = vld [vmem:[%s1634 + $0x8] sm:$0xff]
    %v1637 = vpack.c.bf16 %v1635, %v1635
    %v1638 = vpack.c.bf16 %v1636, %v1636
    %1639 = vxpose.xlu0.c.b16.start [1/8] %v1637, 128
    %1640 = vxpose.xlu0.c.b16.cont [2/8] 0, 128
    %1641 = vxpose.xlu0.c.b16.cont [3/8] 0, 128
    %1642 = vxpose.xlu0.c.b16.cont [4/8] 0, 128
    %1643 = vxpose.xlu0.c.b16.cont [5/8] 0, 128
    %1644 = vxpose.xlu0.c.b16.cont [6/8] 0, 128
    %1645 = vxpose.xlu0.c.b16.cont [7/8] 0, 128
    %1646 = vxpose.xlu0.c.b16.end [8/8] 0, 128
    %v1647 = vpop.trf.xlu0
    %v1648 = vpop.trf.xlu0
    %v1649 = vpop.trf.xlu0
    %v1650 = vpop.trf.xlu0
    %v1651 = vpop.trf.xlu0
    %v1652 = vpop.trf.xlu0
    %v1653 = vpop.trf.xlu0
    %v1654 = vpop.trf.xlu0
    %1655 = vxpose.xlu0.c.b16.start [1/8] %v1638, 128
    %1656 = vxpose.xlu0.c.b16.cont [2/8] 0, 128
    %1657 = vxpose.xlu0.c.b16.cont [3/8] 0, 128
    %1658 = vxpose.xlu0.c.b16.cont [4/8] 0, 128
    %1659 = vxpose.xlu0.c.b16.cont [5/8] 0, 128
    %1660 = vxpose.xlu0.c.b16.cont [6/8] 0, 128
    %1661 = vxpose.xlu0.c.b16.cont [7/8] 0, 128
    %1662 = vxpose.xlu0.c.b16.end [8/8] 0, 128
    %v1663 = vpop.trf.xlu0
    %v1664 = vpop.trf.xlu0
    %v1665 = vpop.trf.xlu0
    %v1666 = vpop.trf.xlu0
    %v1667 = vpop.trf.xlu0
    %v1668 = vpop.trf.xlu0
    %v1669 = vpop.trf.xlu0
    %v1670 = vpop.trf.xlu0
    %v1672 = vsel %vm81, %v1647, 0
    %v1675 = vsel %vm81, %v1648, 0
    %v1678 = vsel %vm81, %v1649, 0
    %v1681 = vsel %vm81, %v1650, 0
    %v1684 = vsel %vm81, %v1651, 0
    %v1687 = vsel %vm81, %v1652, 0
    %v1690 = vsel %vm81, %v1653, 0
    %v1693 = vsel %vm81, %v1654, 0
    %v1696 = vsel %vm81, %v1663, 0
    %v1699 = vsel %vm81, %v1664, 0
    %v1702 = vsel %vm81, %v1665, 0
    %v1705 = vsel %vm81, %v1666, 0
    %v1708 = vsel %vm81, %v1667, 0
    %v1711 = vsel %vm81, %v1668, 0
    %v1714 = vsel %vm81, %v1669, 0
    %v1717 = vsel %vm81, %v1670, 0
    %1719 = vmatprep.subr.bf16.mxu0 0
    %1720 = vmatpush1.bf16.msra.mxu0 %v132
    %1721 = vmatprep.subr.bf16.mxu0 0
    %1722 = vmatpush1.bf16.msra.mxu0 0
    %1723 = vmatprep.subr.bf16.mxu0 0
    %1724 = vmatpush1.bf16.msra.mxu0 0
    %1725 = vmatprep.subr.bf16.mxu0 0
    %1726 = vmatpush1.bf16.msra.mxu0 0
    %1727 = vmatprep.subr.bf16.mxu0 0
    %1728 = vmatpush1.bf16.msra.mxu0 0
    %1729 = vmatprep.subr.bf16.mxu0 0
    %1730 = vmatpush1.bf16.msra.mxu0 0
    %1731 = vmatprep.subr.bf16.mxu0 0
    %1732 = vmatpush1.bf16.msra.mxu0 0
    %1733 = vmatprep.subr.bf16.mxu0 0
    %1734 = vmatpush1.bf16.msra.mxu0 0
    %1735 = vmatprep.subr.bf16.mxu0 0
    %1736 = vmatpush1.bf16.msra.mxu0 0
    %1737 = vmatprep.subr.bf16.mxu0 0
    %1738 = vmatpush1.bf16.msra.mxu0 0
    %1739 = vmatprep.subr.bf16.mxu0 0
    %1740 = vmatpush1.bf16.msra.mxu0 0
    %1741 = vmatprep.subr.bf16.mxu0 0
    %1742 = vmatpush1.bf16.msra.mxu0 0
    %1743 = vmatprep.subr.bf16.mxu0 0
    %1744 = vmatpush1.bf16.msra.mxu0 0
    %1745 = vmatprep.subr.bf16.mxu0 0
    %1746 = vmatpush1.bf16.msra.mxu0 0
    %1747 = vmatprep.subr.bf16.mxu0 0
    %1748 = vmatpush1.bf16.msra.mxu0 0
    %1749 = vmatprep.subr.bf16.mxu0 0
    %1750 = vmatpush1.bf16.msra.mxu0 0
    %1751 = vmatprep.mubr.bf16.mxu0 0
    %1752 = vmatmul.mubr.bf16.gmra.mrb[0].mxu0 %v1672
    %v1753 = vpop.f32.mrb[0].mxu0
    %v1754 = vadd.f32 %v47, %v1753
    %v1755 = vpop.f32.mrb[0].mxu0
    %v1756 = vpop.f32.mrb[0].mxu0
    %v1757 = vadd.f32 %v47, %v1756
    %v1758 = vpop.f32.mrb[0].mxu0
    %1759 = vmatprep.mubr.bf16.mxu0 0
    %1760 = vmatmul.mubr.bf16.gmra.mrb[0].mxu0 %v1675
    %v1761 = vpop.f32.mrb[0].mxu0
    %v1762 = vadd.f32 %v47, %v1761
    %v1763 = vpop.f32.mrb[0].mxu0
    %v1764 = vpop.f32.mrb[0].mxu0
    %v1765 = vadd.f32 %v47, %v1764
    %v1766 = vpop.f32.mrb[0].mxu0
    %1767 = vmatprep.mubr.bf16.mxu0 0
    %1768 = vmatmul.mubr.bf16.gmra.mrb[0].mxu0 %v1678
    %v1769 = vpop.f32.mrb[0].mxu0
    %v1770 = vadd.f32 %v47, %v1769
    %v1771 = vpop.f32.mrb[0].mxu0
    %v1772 = vpop.f32.mrb[0].mxu0
    %v1773 = vadd.f32 %v47, %v1772
    %v1774 = vpop.f32.mrb[0].mxu0
    %1775 = vmatprep.mubr.bf16.mxu0 0
    %1776 = vmatmul.mubr.bf16.gmra.mrb[0].mxu0 %v1681
    %v1777 = vpop.f32.mrb[0].mxu0
    %v1778 = vadd.f32 %v47, %v1777
    %v1779 = vpop.f32.mrb[0].mxu0
    %v1780 = vpop.f32.mrb[0].mxu0
    %v1781 = vadd.f32 %v47, %v1780
    %v1782 = vpop.f32.mrb[0].mxu0
    %1783 = vmatprep.mubr.bf16.mxu0 0
    %1784 = vmatmul.mubr.bf16.gmra.mrb[0].mxu0 %v1684
    %v1785 = vpop.f32.mrb[0].mxu0
    %v1786 = vadd.f32 %v47, %v1785
    %v1787 = vpop.f32.mrb[0].mxu0
    %v1788 = vpop.f32.mrb[0].mxu0
    %v1789 = vadd.f32 %v47, %v1788
    %v1790 = vpop.f32.mrb[0].mxu0
    %1791 = vmatprep.mubr.bf16.mxu0 0
    %1792 = vmatmul.mubr.bf16.gmra.mrb[0].mxu0 %v1687
    %v1793 = vpop.f32.mrb[0].mxu0
    %v1794 = vadd.f32 %v47, %v1793
    %v1795 = vpop.f32.mrb[0].mxu0
    %v1796 = vpop.f32.mrb[0].mxu0
    %v1797 = vadd.f32 %v47, %v1796
    %v1798 = vpop.f32.mrb[0].mxu0
    %1799 = vmatprep.mubr.bf16.mxu0 0
    %1800 = vmatmul.mubr.bf16.gmra.mrb[0].mxu0 %v1690
    %v1801 = vpop.f32.mrb[0].mxu0
    %v1802 = vadd.f32 %v47, %v1801
    %v1803 = vpop.f32.mrb[0].mxu0
    %v1804 = vpop.f32.mrb[0].mxu0
    %v1805 = vadd.f32 %v47, %v1804
    %v1806 = vpop.f32.mrb[0].mxu0
    %1807 = vmatprep.mubr.bf16.mxu0 0
    %1808 = vmatmul.mubr.bf16.gmra.mrb[0].mxu0 %v1693
    %v1809 = vpop.f32.mrb[0].mxu0
    %v1810 = vadd.f32 %v47, %v1809
    %v1811 = vpop.f32.mrb[0].mxu0
    %v1812 = vpop.f32.mrb[0].mxu0
    %v1813 = vadd.f32 %v47, %v1812
    %v1814 = vpop.f32.mrb[0].mxu0
    %1815 = vmatprep.mubr.bf16.mxu0 0
    %1816 = vmatmul.mubr.bf16.gmra.mrb[0].mxu0 %v1696
    %v1817 = vpop.f32.mrb[0].mxu0
    %v1818 = vadd.f32 %v47, %v1817
    %v1819 = vpop.f32.mrb[0].mxu0
    %v1820 = vpop.f32.mrb[0].mxu0
    %v1821 = vadd.f32 %v47, %v1820
    %v1822 = vpop.f32.mrb[0].mxu0
    %1823 = vmatprep.mubr.bf16.mxu0 0
    %1824 = vmatmul.mubr.bf16.gmra.mrb[0].mxu0 %v1699
    %v1825 = vpop.f32.mrb[0].mxu0
    %v1826 = vadd.f32 %v47, %v1825
    %v1827 = vpop.f32.mrb[0].mxu0
    %v1828 = vpop.f32.mrb[0].mxu0
    %v1829 = vadd.f32 %v47, %v1828
    %v1830 = vpop.f32.mrb[0].mxu0
    %1831 = vmatprep.mubr.bf16.mxu0 0
    %1832 = vmatmul.mubr.bf16.gmra.mrb[0].mxu0 %v1702
    %v1833 = vpop.f32.mrb[0].mxu0
    %v1834 = vadd.f32 %v47, %v1833
    %v1835 = vpop.f32.mrb[0].mxu0
    %v1836 = vpop.f32.mrb[0].mxu0
    %v1837 = vadd.f32 %v47, %v1836
    %v1838 = vpop.f32.mrb[0].mxu0
    %1839 = vmatprep.mubr.bf16.mxu0 0
    %1840 = vmatmul.mubr.bf16.gmra.mrb[0].mxu0 %v1705
    %v1841 = vpop.f32.mrb[0].mxu0
    %v1842 = vadd.f32 %v47, %v1841
    %v1843 = vpop.f32.mrb[0].mxu0
    %v1844 = vpop.f32.mrb[0].mxu0
    %v1845 = vadd.f32 %v47, %v1844
    %v1846 = vpop.f32.mrb[0].mxu0
    %1847 = vmatprep.mubr.bf16.mxu0 0
    %1848 = vmatmul.mubr.bf16.gmra.mrb[0].mxu0 %v1708
    %v1849 = vpop.f32.mrb[0].mxu0
    %v1850 = vadd.f32 %v47, %v1849
    %v1851 = vpop.f32.mrb[0].mxu0
    %v1852 = vpop.f32.mrb[0].mxu0
    %v1853 = vadd.f32 %v47, %v1852
    %v1854 = vpop.f32.mrb[0].mxu0
    %1855 = vmatprep.mubr.bf16.mxu0 0
    %1856 = vmatmul.mubr.bf16.gmra.mrb[0].mxu0 %v1711
    %v1857 = vpop.f32.mrb[0].mxu0
    %v1858 = vadd.f32 %v47, %v1857
    %v1859 = vpop.f32.mrb[0].mxu0
    %v1860 = vpop.f32.mrb[0].mxu0
    %v1861 = vadd.f32 %v47, %v1860
    %v1862 = vpop.f32.mrb[0].mxu0
    %1863 = vmatprep.mubr.bf16.mxu0 0
    %1864 = vmatmul.mubr.bf16.gmra.mrb[0].mxu0 %v1714
    %v1865 = vpop.f32.mrb[0].mxu0
    %v1866 = vadd.f32 %v47, %v1865
    %v1867 = vpop.f32.mrb[0].mxu0
    %v1868 = vpop.f32.mrb[0].mxu0
    %v1869 = vadd.f32 %v47, %v1868
    %v1870 = vpop.f32.mrb[0].mxu0
    %1871 = vmatprep.mubr.bf16.mxu0 0
    %1872 = vmatmul.mubr.bf16.gmra.mrb[0].mxu0 %v1717
    %v1873 = vpop.f32.mrb[0].mxu0
    %v1874 = vadd.f32 %v47, %v1873
    %v1875 = vpop.f32.mrb[0].mxu0
    %v1876 = vpop.f32.mrb[0].mxu0
    %v1877 = vadd.f32 %v47, %v1876
    %v1878 = vpop.f32.mrb[0].mxu0
    %1879 = vdwg.mxu0
    %v1880 = vmax.f32 %v1754, 0.0
    %v1881 = vmax.f32 %v1757, 0.0
    %v1882 = vmax.f32 %v1762, 0.0
    %v1883 = vmax.f32 %v1765, 0.0
    %v1884 = vmax.f32 %v1770, 0.0
    %v1885 = vmax.f32 %v1773, 0.0
    %v1886 = vmax.f32 %v1778, 0.0
    %v1887 = vmax.f32 %v1781, 0.0
    %v1888 = vmax.f32 %v1786, 0.0
    %v1889 = vmax.f32 %v1789, 0.0
    %v1890 = vmax.f32 %v1794, 0.0
    %v1891 = vmax.f32 %v1797, 0.0
    %v1892 = vmax.f32 %v1802, 0.0
    %v1893 = vmax.f32 %v1805, 0.0
    %v1894 = vmax.f32 %v1810, 0.0
    %v1895 = vmax.f32 %v1813, 0.0
    %v1896 = vmax.f32 %v1818, 0.0
    %v1897 = vmax.f32 %v1821, 0.0
    %v1898 = vmax.f32 %v1826, 0.0
    %v1899 = vmax.f32 %v1829, 0.0
    %v1900 = vmax.f32 %v1834, 0.0
    %v1901 = vmax.f32 %v1837, 0.0
    %v1902 = vmax.f32 %v1842, 0.0
    %v1903 = vmax.f32 %v1845, 0.0
    %v1904 = vmax.f32 %v1850, 0.0
    %v1905 = vmax.f32 %v1853, 0.0
    %v1906 = vmax.f32 %v1858, 0.0
    %v1907 = vmax.f32 %v1861, 0.0
    %v1908 = vmax.f32 %v1866, 0.0
    %v1909 = vmax.f32 %v1869, 0.0
    %v1910 = vmax.f32 %v1874, 0.0
    %v1911 = vmax.f32 %v1877, 0.0
    %v1912 = vadd.f32 %v1880, %v1881
    %v1913 = vadd.f32 %v1912, %v1882
    %v1914 = vadd.f32 %v1913, %v1883
    %v1915 = vadd.f32 %v1914, %v1884
    %v1916 = vadd.f32 %v1915, %v1885
    %v1917 = vadd.f32 %v1916, %v1886
    %v1918 = vadd.f32 %v1917, %v1887
    %v1919 = vadd.f32 %v1918, %v1888
    %v1920 = vadd.f32 %v1919, %v1889
    %v1921 = vadd.f32 %v1920, %v1890
    %v1922 = vadd.f32 %v1921, %v1891
    %v1923 = vadd.f32 %v1922, %v1892
    %v1924 = vadd.f32 %v1923, %v1893
    %v1925 = vadd.f32 %v1924, %v1894
    %v1926 = vadd.f32 %v1925, %v1895
    %v1927 = vadd.f32 %v1926, %v1896
    %v1928 = vadd.f32 %v1927, %v1897
    %v1929 = vadd.f32 %v1928, %v1898
    %v1930 = vadd.f32 %v1929, %v1899
    %v1931 = vadd.f32 %v1930, %v1900
    %v1932 = vadd.f32 %v1931, %v1901
    %v1933 = vadd.f32 %v1932, %v1902
    %v1934 = vadd.f32 %v1933, %v1903
    %v1935 = vadd.f32 %v1934, %v1904
    %v1936 = vadd.f32 %v1935, %v1905
    %v1937 = vadd.f32 %v1936, %v1906
    %v1938 = vadd.f32 %v1937, %v1907
    %v1939 = vadd.f32 %v1938, %v1908
    %v1940 = vadd.f32 %v1939, %v1909
    %v1941 = vadd.f32 %v1940, %v1910
    %v1942 = vadd.f32 %v1941, %v1911
    %v1943 = vrot.slane %v1942, 4
    %v1944 = vadd.f32 %v1942, %v1943
    %v1945 = vrot.slane %v1944, 2
    %v1946 = vadd.f32 %v1944, %v1945
    %v1947 = vrot.slane %v1946, 1
    %v1948 = vadd.f32 %v1946, %v1947
    %v1949 = vmul.f32 %v1948, 0.00390625
    %1950 = vst [vmem:[#allocation2 + $0x5] sm:$0x1] %v1949
    %s1951 = scalar_lea.vmem %s0, 96
    %v1952 = vld [vmem:[%s1951] sm:$0xff]
    %v1953 = vld [vmem:[%s1951 + $0x8] sm:$0xff]
    %v1954 = vpack.c.bf16 %v1952, %v1952
    %v1955 = vpack.c.bf16 %v1953, %v1953
    %1956 = vxpose.xlu0.c.b16.start [1/8] %v1954, 128
    %1957 = vxpose.xlu0.c.b16.cont [2/8] 0, 128
    %1958 = vxpose.xlu0.c.b16.cont [3/8] 0, 128
    %1959 = vxpose.xlu0.c.b16.cont [4/8] 0, 128
    %1960 = vxpose.xlu0.c.b16.cont [5/8] 0, 128
    %1961 = vxpose.xlu0.c.b16.cont [6/8] 0, 128
    %1962 = vxpose.xlu0.c.b16.cont [7/8] 0, 128
    %1963 = vxpose.xlu0.c.b16.end [8/8] 0, 128
    %v1964 = vpop.trf.xlu0
    %v1965 = vpop.trf.xlu0
    %v1966 = vpop.trf.xlu0
    %v1967 = vpop.trf.xlu0
    %v1968 = vpop.trf.xlu0
    %v1969 = vpop.trf.xlu0
    %v1970 = vpop.trf.xlu0
    %v1971 = vpop.trf.xlu0
    %1972 = vxpose.xlu0.c.b16.start [1/8] %v1955, 128
    %1973 = vxpose.xlu0.c.b16.cont [2/8] 0, 128
    %1974 = vxpose.xlu0.c.b16.cont [3/8] 0, 128
    %1975 = vxpose.xlu0.c.b16.cont [4/8] 0, 128
    %1976 = vxpose.xlu0.c.b16.cont [5/8] 0, 128
    %1977 = vxpose.xlu0.c.b16.cont [6/8] 0, 128
    %1978 = vxpose.xlu0.c.b16.cont [7/8] 0, 128
    %1979 = vxpose.xlu0.c.b16.end [8/8] 0, 128
    %v1980 = vpop.trf.xlu0
    %v1981 = vpop.trf.xlu0
    %v1982 = vpop.trf.xlu0
    %v1983 = vpop.trf.xlu0
    %v1984 = vpop.trf.xlu0
    %v1985 = vpop.trf.xlu0
    %v1986 = vpop.trf.xlu0
    %v1987 = vpop.trf.xlu0
    %v1989 = vsel %vm81, %v1964, 0
    %v1992 = vsel %vm81, %v1965, 0
    %v1995 = vsel %vm81, %v1966, 0
    %v1998 = vsel %vm81, %v1967, 0
    %v2001 = vsel %vm81, %v1968, 0
    %v2004 = vsel %vm81, %v1969, 0
    %v2007 = vsel %vm81, %v1970, 0
    %v2010 = vsel %vm81, %v1971, 0
    %v2013 = vsel %vm81, %v1980, 0
    %v2016 = vsel %vm81, %v1981, 0
    %v2019 = vsel %vm81, %v1982, 0
    %v2022 = vsel %vm81, %v1983, 0
    %v2025 = vsel %vm81, %v1984, 0
    %v2028 = vsel %vm81, %v1985, 0
    %v2031 = vsel %vm81, %v1986, 0
    %v2034 = vsel %vm81, %v1987, 0
    %2036 = vmatprep.subr.bf16.mxu0 0
    %2037 = vmatpush1.bf16.msra.mxu0 %v132
    %2038 = vmatprep.subr.bf16.mxu0 0
    %2039 = vmatpush1.bf16.msra.mxu0 0
    %2040 = vmatprep.subr.bf16.mxu0 0
    %2041 = vmatpush1.bf16.msra.mxu0 0
    %2042 = vmatprep.subr.bf16.mxu0 0
    %2043 = vmatpush1.bf16.msra.mxu0 0
    %2044 = vmatprep.subr.bf16.mxu0 0
    %2045 = vmatpush1.bf16.msra.mxu0 0
    %2046 = vmatprep.subr.bf16.mxu0 0
    %2047 = vmatpush1.bf16.msra.mxu0 0
    %2048 = vmatprep.subr.bf16.mxu0 0
    %2049 = vmatpush1.bf16.msra.mxu0 0
    %2050 = vmatprep.subr.bf16.mxu0 0
    %2051 = vmatpush1.bf16.msra.mxu0 0
    %2052 = vmatprep.subr.bf16.mxu0 0
    %2053 = vmatpush1.bf16.msra.mxu0 0
    %2054 = vmatprep.subr.bf16.mxu0 0
    %2055 = vmatpush1.bf16.msra.mxu0 0
    %2056 = vmatprep.subr.bf16.mxu0 0
    %2057 = vmatpush1.bf16.msra.mxu0 0
    %2058 = vmatprep.subr.bf16.mxu0 0
    %2059 = vmatpush1.bf16.msra.mxu0 0
    %2060 = vmatprep.subr.bf16.mxu0 0
    %2061 = vmatpush1.bf16.msra.mxu0 0
    %2062 = vmatprep.subr.bf16.mxu0 0
    %2063 = vmatpush1.bf16.msra.mxu0 0
    %2064 = vmatprep.subr.bf16.mxu0 0
    %2065 = vmatpush1.bf16.msra.mxu0 0
    %2066 = vmatprep.subr.bf16.mxu0 0
    %2067 = vmatpush1.bf16.msra.mxu0 0
    %2068 = vmatprep.mubr.bf16.mxu0 0
    %2069 = vmatmul.mubr.bf16.gmra.mrb[0].mxu0 %v1989
    %v2070 = vpop.f32.mrb[0].mxu0
    %v2071 = vadd.f32 %v47, %v2070
    %v2072 = vpop.f32.mrb[0].mxu0
    %v2073 = vpop.f32.mrb[0].mxu0
    %v2074 = vadd.f32 %v47, %v2073
    %v2075 = vpop.f32.mrb[0].mxu0
    %2076 = vmatprep.mubr.bf16.mxu0 0
    %2077 = vmatmul.mubr.bf16.gmra.mrb[0].mxu0 %v1992
    %v2078 = vpop.f32.mrb[0].mxu0
    %v2079 = vadd.f32 %v47, %v2078
    %v2080 = vpop.f32.mrb[0].mxu0
    %v2081 = vpop.f32.mrb[0].mxu0
    %v2082 = vadd.f32 %v47, %v2081
    %v2083 = vpop.f32.mrb[0].mxu0
    %2084 = vmatprep.mubr.bf16.mxu0 0
    %2085 = vmatmul.mubr.bf16.gmra.mrb[0].mxu0 %v1995
    %v2086 = vpop.f32.mrb[0].mxu0
    %v2087 = vadd.f32 %v47, %v2086
    %v2088 = vpop.f32.mrb[0].mxu0
    %v2089 = vpop.f32.mrb[0].mxu0
    %v2090 = vadd.f32 %v47, %v2089
    %v2091 = vpop.f32.mrb[0].mxu0
    %2092 = vmatprep.mubr.bf16.mxu0 0
    %2093 = vmatmul.mubr.bf16.gmra.mrb[0].mxu0 %v1998
    %v2094 = vpop.f32.mrb[0].mxu0
    %v2095 = vadd.f32 %v47, %v2094
    %v2096 = vpop.f32.mrb[0].mxu0
    %v2097 = vpop.f32.mrb[0].mxu0
    %v2098 = vadd.f32 %v47, %v2097
    %v2099 = vpop.f32.mrb[0].mxu0
    %2100 = vmatprep.mubr.bf16.mxu0 0
    %2101 = vmatmul.mubr.bf16.gmra.mrb[0].mxu0 %v2001
    %v2102 = vpop.f32.mrb[0].mxu0
    %v2103 = vadd.f32 %v47, %v2102
    %v2104 = vpop.f32.mrb[0].mxu0
    %v2105 = vpop.f32.mrb[0].mxu0
    %v2106 = vadd.f32 %v47, %v2105
    %v2107 = vpop.f32.mrb[0].mxu0
    %2108 = vmatprep.mubr.bf16.mxu0 0
    %2109 = vmatmul.mubr.bf16.gmra.mrb[0].mxu0 %v2004
    %v2110 = vpop.f32.mrb[0].mxu0
    %v2111 = vadd.f32 %v47, %v2110
    %v2112 = vpop.f32.mrb[0].mxu0
    %v2113 = vpop.f32.mrb[0].mxu0
    %v2114 = vadd.f32 %v47, %v2113
    %v2115 = vpop.f32.mrb[0].mxu0
    %2116 = vmatprep.mubr.bf16.mxu0 0
    %2117 = vmatmul.mubr.bf16.gmra.mrb[0].mxu0 %v2007
    %v2118 = vpop.f32.mrb[0].mxu0
    %v2119 = vadd.f32 %v47, %v2118
    %v2120 = vpop.f32.mrb[0].mxu0
    %v2121 = vpop.f32.mrb[0].mxu0
    %v2122 = vadd.f32 %v47, %v2121
    %v2123 = vpop.f32.mrb[0].mxu0
    %2124 = vmatprep.mubr.bf16.mxu0 0
    %2125 = vmatmul.mubr.bf16.gmra.mrb[0].mxu0 %v2010
    %v2126 = vpop.f32.mrb[0].mxu0
    %v2127 = vadd.f32 %v47, %v2126
    %v2128 = vpop.f32.mrb[0].mxu0
    %v2129 = vpop.f32.mrb[0].mxu0
    %v2130 = vadd.f32 %v47, %v2129
    %v2131 = vpop.f32.mrb[0].mxu0
    %2132 = vmatprep.mubr.bf16.mxu0 0
    %2133 = vmatmul.mubr.bf16.gmra.mrb[0].mxu0 %v2013
    %v2134 = vpop.f32.mrb[0].mxu0
    %v2135 = vadd.f32 %v47, %v2134
    %v2136 = vpop.f32.mrb[0].mxu0
    %v2137 = vpop.f32.mrb[0].mxu0
    %v2138 = vadd.f32 %v47, %v2137
    %v2139 = vpop.f32.mrb[0].mxu0
    %2140 = vmatprep.mubr.bf16.mxu0 0
    %2141 = vmatmul.mubr.bf16.gmra.mrb[0].mxu0 %v2016
    %v2142 = vpop.f32.mrb[0].mxu0
    %v2143 = vadd.f32 %v47, %v2142
    %v2144 = vpop.f32.mrb[0].mxu0
    %v2145 = vpop.f32.mrb[0].mxu0
    %v2146 = vadd.f32 %v47, %v2145
    %v2147 = vpop.f32.mrb[0].mxu0
    %2148 = vmatprep.mubr.bf16.mxu0 0
    %2149 = vmatmul.mubr.bf16.gmra.mrb[0].mxu0 %v2019
    %v2150 = vpop.f32.mrb[0].mxu0
    %v2151 = vadd.f32 %v47, %v2150
    %v2152 = vpop.f32.mrb[0].mxu0
    %v2153 = vpop.f32.mrb[0].mxu0
    %v2154 = vadd.f32 %v47, %v2153
    %v2155 = vpop.f32.mrb[0].mxu0
    %2156 = vmatprep.mubr.bf16.mxu0 0
    %2157 = vmatmul.mubr.bf16.gmra.mrb[0].mxu0 %v2022
    %v2158 = vpop.f32.mrb[0].mxu0
    %v2159 = vadd.f32 %v47, %v2158
    %v2160 = vpop.f32.mrb[0].mxu0
    %v2161 = vpop.f32.mrb[0].mxu0
    %v2162 = vadd.f32 %v47, %v2161
    %v2163 = vpop.f32.mrb[0].mxu0
    %2164 = vmatprep.mubr.bf16.mxu0 0
    %2165 = vmatmul.mubr.bf16.gmra.mrb[0].mxu0 %v2025
    %v2166 = vpop.f32.mrb[0].mxu0
    %v2167 = vadd.f32 %v47, %v2166
    %v2168 = vpop.f32.mrb[0].mxu0
    %v2169 = vpop.f32.mrb[0].mxu0
    %v2170 = vadd.f32 %v47, %v2169
    %v2171 = vpop.f32.mrb[0].mxu0
    %2172 = vmatprep.mubr.bf16.mxu0 0
    %2173 = vmatmul.mubr.bf16.gmra.mrb[0].mxu0 %v2028
    %v2174 = vpop.f32.mrb[0].mxu0
    %v2175 = vadd.f32 %v47, %v2174
    %v2176 = vpop.f32.mrb[0].mxu0
    %v2177 = vpop.f32.mrb[0].mxu0
    %v2178 = vadd.f32 %v47, %v2177
    %v2179 = vpop.f32.mrb[0].mxu0
    %2180 = vmatprep.mubr.bf16.mxu0 0
    %2181 = vmatmul.mubr.bf16.gmra.mrb[0].mxu0 %v2031
    %v2182 = vpop.f32.mrb[0].mxu0
    %v2183 = vadd.f32 %v47, %v2182
    %v2184 = vpop.f32.mrb[0].mxu0
    %v2185 = vpop.f32.mrb[0].mxu0
    %v2186 = vadd.f32 %v47, %v2185
    %v2187 = vpop.f32.mrb[0].mxu0
    %2188 = vmatprep.mubr.bf16.mxu0 0
    %2189 = vmatmul.mubr.bf16.gmra.mrb[0].mxu0 %v2034
    %v2190 = vpop.f32.mrb[0].mxu0
    %v2191 = vadd.f32 %v47, %v2190
    %v2192 = vpop.f32.mrb[0].mxu0
    %v2193 = vpop.f32.mrb[0].mxu0
    %v2194 = vadd.f32 %v47, %v2193
    %v2195 = vpop.f32.mrb[0].mxu0
    %2196 = vdwg.mxu0
    %v2197 = vmax.f32 %v2071, 0.0
    %v2198 = vmax.f32 %v2074, 0.0
    %v2199 = vmax.f32 %v2079, 0.0
    %v2200 = vmax.f32 %v2082, 0.0
    %v2201 = vmax.f32 %v2087, 0.0
    %v2202 = vmax.f32 %v2090, 0.0
    %v2203 = vmax.f32 %v2095, 0.0
    %v2204 = vmax.f32 %v2098, 0.0
    %v2205 = vmax.f32 %v2103, 0.0
    %v2206 = vmax.f32 %v2106, 0.0
    %v2207 = vmax.f32 %v2111, 0.0
    %v2208 = vmax.f32 %v2114, 0.0
    %v2209 = vmax.f32 %v2119, 0.0
    %v2210 = vmax.f32 %v2122, 0.0
    %v2211 = vmax.f32 %v2127, 0.0
    %v2212 = vmax.f32 %v2130, 0.0
    %v2213 = vmax.f32 %v2135, 0.0
    %v2214 = vmax.f32 %v2138, 0.0
    %v2215 = vmax.f32 %v2143, 0.0
    %v2216 = vmax.f32 %v2146, 0.0
    %v2217 = vmax.f32 %v2151, 0.0
    %v2218 = vmax.f32 %v2154, 0.0
    %v2219 = vmax.f32 %v2159, 0.0
    %v2220 = vmax.f32 %v2162, 0.0
    %v2221 = vmax.f32 %v2167, 0.0
    %v2222 = vmax.f32 %v2170, 0.0
    %v2223 = vmax.f32 %v2175, 0.0
    %v2224 = vmax.f32 %v2178, 0.0
    %v2225 = vmax.f32 %v2183, 0.0
    %v2226 = vmax.f32 %v2186, 0.0
    %v2227 = vmax.f32 %v2191, 0.0
    %v2228 = vmax.f32 %v2194, 0.0
    %v2229 = vadd.f32 %v2197, %v2198
    %v2230 = vadd.f32 %v2229, %v2199
    %v2231 = vadd.f32 %v2230, %v2200
    %v2232 = vadd.f32 %v2231, %v2201
    %v2233 = vadd.f32 %v2232, %v2202
    %v2234 = vadd.f32 %v2233, %v2203
    %v2235 = vadd.f32 %v2234, %v2204
    %v2236 = vadd.f32 %v2235, %v2205
    %v2237 = vadd.f32 %v2236, %v2206
    %v2238 = vadd.f32 %v2237, %v2207
    %v2239 = vadd.f32 %v2238, %v2208
    %v2240 = vadd.f32 %v2239, %v2209
    %v2241 = vadd.f32 %v2240, %v2210
    %v2242 = vadd.f32 %v2241, %v2211
    %v2243 = vadd.f32 %v2242, %v2212
    %v2244 = vadd.f32 %v2243, %v2213
    %v2245 = vadd.f32 %v2244, %v2214
    %v2246 = vadd.f32 %v2245, %v2215
    %v2247 = vadd.f32 %v2246, %v2216
    %v2248 = vadd.f32 %v2247, %v2217
    %v2249 = vadd.f32 %v2248, %v2218
    %v2250 = vadd.f32 %v2249, %v2219
    %v2251 = vadd.f32 %v2250, %v2220
    %v2252 = vadd.f32 %v2251, %v2221
    %v2253 = vadd.f32 %v2252, %v2222
    %v2254 = vadd.f32 %v2253, %v2223
    %v2255 = vadd.f32 %v2254, %v2224
    %v2256 = vadd.f32 %v2255, %v2225
    %v2257 = vadd.f32 %v2256, %v2226
    %v2258 = vadd.f32 %v2257, %v2227
    %v2259 = vadd.f32 %v2258, %v2228
    %v2260 = vrot.slane %v2259, 4
    %v2261 = vadd.f32 %v2259, %v2260
    %v2262 = vrot.slane %v2261, 2
    %v2263 = vadd.f32 %v2261, %v2262
    %v2264 = vrot.slane %v2263, 1
    %v2265 = vadd.f32 %v2263, %v2264
    %v2266 = vmul.f32 %v2265, 0.00390625
    %2267 = vst [vmem:[#allocation2 + $0x6] sm:$0x1] %v2266
    %s2268 = scalar_lea.vmem %s0, 112
    %v2269 = vld [vmem:[%s2268] sm:$0xff]
    %v2270 = vld [vmem:[%s2268 + $0x8] sm:$0xff]
    %v2271 = vpack.c.bf16 %v2269, %v2269
    %v2272 = vpack.c.bf16 %v2270, %v2270
    %2273 = vxpose.xlu0.c.b16.start [1/8] %v2271, 128
    %2274 = vxpose.xlu0.c.b16.cont [2/8] 0, 128
    %2275 = vxpose.xlu0.c.b16.cont [3/8] 0, 128
    %2276 = vxpose.xlu0.c.b16.cont [4/8] 0, 128
    %2277 = vxpose.xlu0.c.b16.cont [5/8] 0, 128
    %2278 = vxpose.xlu0.c.b16.cont [6/8] 0, 128
    %2279 = vxpose.xlu0.c.b16.cont [7/8] 0, 128
    %2280 = vxpose.xlu0.c.b16.end [8/8] 0, 128
    %v2281 = vpop.trf.xlu0
    %v2282 = vpop.trf.xlu0
    %v2283 = vpop.trf.xlu0
    %v2284 = vpop.trf.xlu0
    %v2285 = vpop.trf.xlu0
    %v2286 = vpop.trf.xlu0
    %v2287 = vpop.trf.xlu0
    %v2288 = vpop.trf.xlu0
    %2289 = vxpose.xlu0.c.b16.start [1/8] %v2272, 128
    %2290 = vxpose.xlu0.c.b16.cont [2/8] 0, 128
    %2291 = vxpose.xlu0.c.b16.cont [3/8] 0, 128
    %2292 = vxpose.xlu0.c.b16.cont [4/8] 0, 128
    %2293 = vxpose.xlu0.c.b16.cont [5/8] 0, 128
    %2294 = vxpose.xlu0.c.b16.cont [6/8] 0, 128
    %2295 = vxpose.xlu0.c.b16.cont [7/8] 0, 128
    %2296 = vxpose.xlu0.c.b16.end [8/8] 0, 128
    %v2297 = vpop.trf.xlu0
    %v2298 = vpop.trf.xlu0
    %v2299 = vpop.trf.xlu0
    %v2300 = vpop.trf.xlu0
    %v2301 = vpop.trf.xlu0
    %v2302 = vpop.trf.xlu0
    %v2303 = vpop.trf.xlu0
    %v2304 = vpop.trf.xlu0
    %v2306 = vsel %vm81, %v2281, 0
    %v2309 = vsel %vm81, %v2282, 0
    %v2312 = vsel %vm81, %v2283, 0
    %v2315 = vsel %vm81, %v2284, 0
    %v2318 = vsel %vm81, %v2285, 0
    %v2321 = vsel %vm81, %v2286, 0
    %v2324 = vsel %vm81, %v2287, 0
    %v2327 = vsel %vm81, %v2288, 0
    %v2330 = vsel %vm81, %v2297, 0
    %v2333 = vsel %vm81, %v2298, 0
    %v2336 = vsel %vm81, %v2299, 0
    %v2339 = vsel %vm81, %v2300, 0
    %v2342 = vsel %vm81, %v2301, 0
    %v2345 = vsel %vm81, %v2302, 0
    %v2348 = vsel %vm81, %v2303, 0
    %v2351 = vsel %vm81, %v2304, 0
    %2353 = vmatprep.subr.bf16.mxu0 0
    %2354 = vmatpush1.bf16.msra.mxu0 %v132
    %2355 = vmatprep.subr.bf16.mxu0 0
    %2356 = vmatpush1.bf16.msra.mxu0 0
    %2357 = vmatprep.subr.bf16.mxu0 0
    %2358 = vmatpush1.bf16.msra.mxu0 0
    %2359 = vmatprep.subr.bf16.mxu0 0
    %2360 = vmatpush1.bf16.msra.mxu0 0
    %2361 = vmatprep.subr.bf16.mxu0 0
    %2362 = vmatpush1.bf16.msra.mxu0 0
    %2363 = vmatprep.subr.bf16.mxu0 0
    %2364 = vmatpush1.bf16.msra.mxu0 0
    %2365 = vmatprep.subr.bf16.mxu0 0
    %2366 = vmatpush1.bf16.msra.mxu0 0
    %2367 = vmatprep.subr.bf16.mxu0 0
    %2368 = vmatpush1.bf16.msra.mxu0 0
    %2369 = vmatprep.subr.bf16.mxu0 0
    %2370 = vmatpush1.bf16.msra.mxu0 0
    %2371 = vmatprep.subr.bf16.mxu0 0
    %2372 = vmatpush1.bf16.msra.mxu0 0
    %2373 = vmatprep.subr.bf16.mxu0 0
    %2374 = vmatpush1.bf16.msra.mxu0 0
    %2375 = vmatprep.subr.bf16.mxu0 0
    %2376 = vmatpush1.bf16.msra.mxu0 0
    %2377 = vmatprep.subr.bf16.mxu0 0
    %2378 = vmatpush1.bf16.msra.mxu0 0
    %2379 = vmatprep.subr.bf16.mxu0 0
    %2380 = vmatpush1.bf16.msra.mxu0 0
    %2381 = vmatprep.subr.bf16.mxu0 0
    %2382 = vmatpush1.bf16.msra.mxu0 0
    %2383 = vmatprep.subr.bf16.mxu0 0
    %2384 = vmatpush1.bf16.msra.mxu0 0
    %2385 = vmatprep.mubr.bf16.mxu0 0
    %2386 = vmatmul.mubr.bf16.gmra.mrb[0].mxu0 %v2306
    %v2387 = vpop.f32.mrb[0].mxu0
    %v2388 = vadd.f32 %v47, %v2387
    %v2389 = vpop.f32.mrb[0].mxu0
    %v2390 = vpop.f32.mrb[0].mxu0
    %v2391 = vadd.f32 %v47, %v2390
    %v2392 = vpop.f32.mrb[0].mxu0
    %2393 = vmatprep.mubr.bf16.mxu0 0
    %2394 = vmatmul.mubr.bf16.gmra.mrb[0].mxu0 %v2309
    %v2395 = vpop.f32.mrb[0].mxu0
    %v2396 = vadd.f32 %v47, %v2395
    %v2397 = vpop.f32.mrb[0].mxu0
    %v2398 = vpop.f32.mrb[0].mxu0
    %v2399 = vadd.f32 %v47, %v2398
    %v2400 = vpop.f32.mrb[0].mxu0
    %2401 = vmatprep.mubr.bf16.mxu0 0
    %2402 = vmatmul.mubr.bf16.gmra.mrb[0].mxu0 %v2312
    %v2403 = vpop.f32.mrb[0].mxu0
    %v2404 = vadd.f32 %v47, %v2403
    %v2405 = vpop.f32.mrb[0].mxu0
    %v2406 = vpop.f32.mrb[0].mxu0
    %v2407 = vadd.f32 %v47, %v2406
    %v2408 = vpop.f32.mrb[0].mxu0
    %2409 = vmatprep.mubr.bf16.mxu0 0
    %2410 = vmatmul.mubr.bf16.gmra.mrb[0].mxu0 %v2315
    %v2411 = vpop.f32.mrb[0].mxu0
    %v2412 = vadd.f32 %v47, %v2411
    %v2413 = vpop.f32.mrb[0].mxu0
    %v2414 = vpop.f32.mrb[0].mxu0
    %v2415 = vadd.f32 %v47, %v2414
    %v2416 = vpop.f32.mrb[0].mxu0
    %2417 = vmatprep.mubr.bf16.mxu0 0
    %2418 = vmatmul.mubr.bf16.gmra.mrb[0].mxu0 %v2318
    %v2419 = vpop.f32.mrb[0].mxu0
    %v2420 = vadd.f32 %v47, %v2419
    %v2421 = vpop.f32.mrb[0].mxu0
    %v2422 = vpop.f32.mrb[0].mxu0
    %v2423 = vadd.f32 %v47, %v2422
    %v2424 = vpop.f32.mrb[0].mxu0
    %2425 = vmatprep.mubr.bf16.mxu0 0
    %2426 = vmatmul.mubr.bf16.gmra.mrb[0].mxu0 %v2321
    %v2427 = vpop.f32.mrb[0].mxu0
    %v2428 = vadd.f32 %v47, %v2427
    %v2429 = vpop.f32.mrb[0].mxu0
    %v2430 = vpop.f32.mrb[0].mxu0
    %v2431 = vadd.f32 %v47, %v2430
    %v2432 = vpop.f32.mrb[0].mxu0
    %2433 = vmatprep.mubr.bf16.mxu0 0
    %2434 = vmatmul.mubr.bf16.gmra.mrb[0].mxu0 %v2324
    %v2435 = vpop.f32.mrb[0].mxu0
    %v2436 = vadd.f32 %v47, %v2435
    %v2437 = vpop.f32.mrb[0].mxu0
    %v2438 = vpop.f32.mrb[0].mxu0
    %v2439 = vadd.f32 %v47, %v2438
    %v2440 = vpop.f32.mrb[0].mxu0
    %2441 = vmatprep.mubr.bf16.mxu0 0
    %2442 = vmatmul.mubr.bf16.gmra.mrb[0].mxu0 %v2327
    %v2443 = vpop.f32.mrb[0].mxu0
    %v2444 = vadd.f32 %v47, %v2443
    %v2445 = vpop.f32.mrb[0].mxu0
    %v2446 = vpop.f32.mrb[0].mxu0
    %v2447 = vadd.f32 %v47, %v2446
    %v2448 = vpop.f32.mrb[0].mxu0
    %2449 = vmatprep.mubr.bf16.mxu0 0
    %2450 = vmatmul.mubr.bf16.gmra.mrb[0].mxu0 %v2330
    %v2451 = vpop.f32.mrb[0].mxu0
    %v2452 = vadd.f32 %v47, %v2451
    %v2453 = vpop.f32.mrb[0].mxu0
    %v2454 = vpop.f32.mrb[0].mxu0
    %v2455 = vadd.f32 %v47, %v2454
    %v2456 = vpop.f32.mrb[0].mxu0
    %2457 = vmatprep.mubr.bf16.mxu0 0
    %2458 = vmatmul.mubr.bf16.gmra.mrb[0].mxu0 %v2333
    %v2459 = vpop.f32.mrb[0].mxu0
    %v2460 = vadd.f32 %v47, %v2459
    %v2461 = vpop.f32.mrb[0].mxu0
    %v2462 = vpop.f32.mrb[0].mxu0
    %v2463 = vadd.f32 %v47, %v2462
    %v2464 = vpop.f32.mrb[0].mxu0
    %2465 = vmatprep.mubr.bf16.mxu0 0
    %2466 = vmatmul.mubr.bf16.gmra.mrb[0].mxu0 %v2336
    %v2467 = vpop.f32.mrb[0].mxu0
    %v2468 = vadd.f32 %v47, %v2467
    %v2469 = vpop.f32.mrb[0].mxu0
    %v2470 = vpop.f32.mrb[0].mxu0
    %v2471 = vadd.f32 %v47, %v2470
    %v2472 = vpop.f32.mrb[0].mxu0
    %2473 = vmatprep.mubr.bf16.mxu0 0
    %2474 = vmatmul.mubr.bf16.gmra.mrb[0].mxu0 %v2339
    %v2475 = vpop.f32.mrb[0].mxu0
    %v2476 = vadd.f32 %v47, %v2475
    %v2477 = vpop.f32.mrb[0].mxu0
    %v2478 = vpop.f32.mrb[0].mxu0
    %v2479 = vadd.f32 %v47, %v2478
    %v2480 = vpop.f32.mrb[0].mxu0
    %2481 = vmatprep.mubr.bf16.mxu0 0
    %2482 = vmatmul.mubr.bf16.gmra.mrb[0].mxu0 %v2342
    %v2483 = vpop.f32.mrb[0].mxu0
    %v2484 = vadd.f32 %v47, %v2483
    %v2485 = vpop.f32.mrb[0].mxu0
    %v2486 = vpop.f32.mrb[0].mxu0
    %v2487 = vadd.f32 %v47, %v2486
    %v2488 = vpop.f32.mrb[0].mxu0
    %2489 = vmatprep.mubr.bf16.mxu0 0
    %2490 = vmatmul.mubr.bf16.gmra.mrb[0].mxu0 %v2345
    %v2491 = vpop.f32.mrb[0].mxu0
    %v2492 = vadd.f32 %v47, %v2491
    %v2493 = vpop.f32.mrb[0].mxu0
    %v2494 = vpop.f32.mrb[0].mxu0
    %v2495 = vadd.f32 %v47, %v2494
    %v2496 = vpop.f32.mrb[0].mxu0
    %2497 = vmatprep.mubr.bf16.mxu0 0
    %2498 = vmatmul.mubr.bf16.gmra.mrb[0].mxu0 %v2348
    %v2499 = vpop.f32.mrb[0].mxu0
    %v2500 = vadd.f32 %v47, %v2499
    %v2501 = vpop.f32.mrb[0].mxu0
    %v2502 = vpop.f32.mrb[0].mxu0
    %v2503 = vadd.f32 %v47, %v2502
    %v2504 = vpop.f32.mrb[0].mxu0
    %2505 = vmatprep.mubr.bf16.mxu0 0
    %2506 = vmatmul.mubr.bf16.gmra.mrb[0].mxu0 %v2351
    %v2507 = vpop.f32.mrb[0].mxu0
    %v2508 = vadd.f32 %v47, %v2507
    %v2509 = vpop.f32.mrb[0].mxu0
    %v2510 = vpop.f32.mrb[0].mxu0
    %v2511 = vadd.f32 %v47, %v2510
    %v2512 = vpop.f32.mrb[0].mxu0
    %2513 = vdwg.mxu0
    %v2514 = vmax.f32 %v2388, 0.0
    %v2515 = vmax.f32 %v2391, 0.0
    %v2516 = vmax.f32 %v2396, 0.0
    %v2517 = vmax.f32 %v2399, 0.0
    %v2518 = vmax.f32 %v2404, 0.0
    %v2519 = vmax.f32 %v2407, 0.0
    %v2520 = vmax.f32 %v2412, 0.0
    %v2521 = vmax.f32 %v2415, 0.0
    %v2522 = vmax.f32 %v2420, 0.0
    %v2523 = vmax.f32 %v2423, 0.0
    %v2524 = vmax.f32 %v2428, 0.0
    %v2525 = vmax.f32 %v2431, 0.0
    %v2526 = vmax.f32 %v2436, 0.0
    %v2527 = vmax.f32 %v2439, 0.0
    %v2528 = vmax.f32 %v2444, 0.0
    %v2529 = vmax.f32 %v2447, 0.0
    %v2530 = vmax.f32 %v2452, 0.0
    %v2531 = vmax.f32 %v2455, 0.0
    %v2532 = vmax.f32 %v2460, 0.0
    %v2533 = vmax.f32 %v2463, 0.0
    %v2534 = vmax.f32 %v2468, 0.0
    %v2535 = vmax.f32 %v2471, 0.0
    %v2536 = vmax.f32 %v2476, 0.0
    %v2537 = vmax.f32 %v2479, 0.0
    %v2538 = vmax.f32 %v2484, 0.0
    %v2539 = vmax.f32 %v2487, 0.0
    %v2540 = vmax.f32 %v2492, 0.0
    %v2541 = vmax.f32 %v2495, 0.0
    %v2542 = vmax.f32 %v2500, 0.0
    %v2543 = vmax.f32 %v2503, 0.0
    %v2544 = vmax.f32 %v2508, 0.0
    %v2545 = vmax.f32 %v2511, 0.0
    %v2546 = vadd.f32 %v2514, %v2515
    %v2547 = vadd.f32 %v2546, %v2516
    %v2548 = vadd.f32 %v2547, %v2517
    %v2549 = vadd.f32 %v2548, %v2518
    %v2550 = vadd.f32 %v2549, %v2519
    %v2551 = vadd.f32 %v2550, %v2520
    %v2552 = vadd.f32 %v2551, %v2521
    %v2553 = vadd.f32 %v2552, %v2522
    %v2554 = vadd.f32 %v2553, %v2523
    %v2555 = vadd.f32 %v2554, %v2524
    %v2556 = vadd.f32 %v2555, %v2525
    %v2557 = vadd.f32 %v2556, %v2526
    %v2558 = vadd.f32 %v2557, %v2527
    %v2559 = vadd.f32 %v2558, %v2528
    %v2560 = vadd.f32 %v2559, %v2529
    %v2561 = vadd.f32 %v2560, %v2530
    %v2562 = vadd.f32 %v2561, %v2531
    %v2563 = vadd.f32 %v2562, %v2532
    %v2564 = vadd.f32 %v2563, %v2533
    %v2565 = vadd.f32 %v2564, %v2534
    %v2566 = vadd.f32 %v2565, %v2535
    %v2567 = vadd.f32 %v2566, %v2536
    %v2568 = vadd.f32 %v2567, %v2537
    %v2569 = vadd.f32 %v2568, %v2538
    %v2570 = vadd.f32 %v2569, %v2539
    %v2571 = vadd.f32 %v2570, %v2540
    %v2572 = vadd.f32 %v2571, %v2541
    %v2573 = vadd.f32 %v2572, %v2542
    %v2574 = vadd.f32 %v2573, %v2543
    %v2575 = vadd.f32 %v2574, %v2544
    %v2576 = vadd.f32 %v2575, %v2545
    %v2577 = vrot.slane %v2576, 4
    %v2578 = vadd.f32 %v2576, %v2577
    %v2579 = vrot.slane %v2578, 2
    %v2580 = vadd.f32 %v2578, %v2579
    %v2581 = vrot.slane %v2580, 1
    %v2582 = vadd.f32 %v2580, %v2581
    %v2583 = vmul.f32 %v2582, 0.00390625
    %2584 = vst [vmem:[#allocation2 + $0x7] sm:$0x1] %v2583
    %s2585 = scalar_lea.vmem %s0, 128
    %v2586 = vld [vmem:[%s2585] sm:$0xff]
    %v2587 = vld [vmem:[%s2585 + $0x8] sm:$0xff]
    %v2588 = vpack.c.bf16 %v2586, %v2586
    %v2589 = vpack.c.bf16 %v2587, %v2587
    %2590 = vxpose.xlu0.c.b16.start [1/8] %v2588, 128
    %2591 = vxpose.xlu0.c.b16.cont [2/8] 0, 128
    %2592 = vxpose.xlu0.c.b16.cont [3/8] 0, 128
    %2593 = vxpose.xlu0.c.b16.cont [4/8] 0, 128
    %2594 = vxpose.xlu0.c.b16.cont [5/8] 0, 128
    %2595 = vxpose.xlu0.c.b16.cont [6/8] 0, 128
    %2596 = vxpose.xlu0.c.b16.cont [7/8] 0, 128
    %2597 = vxpose.xlu0.c.b16.end [8/8] 0, 128
    %v2598 = vpop.trf.xlu0
    %v2599 = vpop.trf.xlu0
    %v2600 = vpop.trf.xlu0
    %v2601 = vpop.trf.xlu0
    %v2602 = vpop.trf.xlu0
    %v2603 = vpop.trf.xlu0
    %v2604 = vpop.trf.xlu0
    %v2605 = vpop.trf.xlu0
    %2606 = vxpose.xlu0.c.b16.start [1/8] %v2589, 128
    %2607 = vxpose.xlu0.c.b16.cont [2/8] 0, 128
    %2608 = vxpose.xlu0.c.b16.cont [3/8] 0, 128
    %2609 = vxpose.xlu0.c.b16.cont [4/8] 0, 128
    %2610 = vxpose.xlu0.c.b16.cont [5/8] 0, 128
    %2611 = vxpose.xlu0.c.b16.cont [6/8] 0, 128
    %2612 = vxpose.xlu0.c.b16.cont [7/8] 0, 128
    %2613 = vxpose.xlu0.c.b16.end [8/8] 0, 128
    %v2614 = vpop.trf.xlu0
    %v2615 = vpop.trf.xlu0
    %v2616 = vpop.trf.xlu0
    %v2617 = vpop.trf.xlu0
    %v2618 = vpop.trf.xlu0
    %v2619 = vpop.trf.xlu0
    %v2620 = vpop.trf.xlu0
    %v2621 = vpop.trf.xlu0
    %v2623 = vsel %vm81, %v2598, 0
    %v2626 = vsel %vm81, %v2599, 0
    %v2629 = vsel %vm81, %v2600, 0
    %v2632 = vsel %vm81, %v2601, 0
    %v2635 = vsel %vm81, %v2602, 0
    %v2638 = vsel %vm81, %v2603, 0
    %v2641 = vsel %vm81, %v2604, 0
    %v2644 = vsel %vm81, %v2605, 0
    %v2647 = vsel %vm81, %v2614, 0
    %v2650 = vsel %vm81, %v2615, 0
    %v2653 = vsel %vm81, %v2616, 0
    %v2656 = vsel %vm81, %v2617, 0
    %v2659 = vsel %vm81, %v2618, 0
    %v2662 = vsel %vm81, %v2619, 0
    %v2665 = vsel %vm81, %v2620, 0
    %v2668 = vsel %vm81, %v2621, 0
    %2670 = vmatprep.subr.bf16.mxu0 0
    %2671 = vmatpush1.bf16.msra.mxu0 %v132
    %2672 = vmatprep.subr.bf16.mxu0 0
    %2673 = vmatpush1.bf16.msra.mxu0 0
    %2674 = vmatprep.subr.bf16.mxu0 0
    %2675 = vmatpush1.bf16.msra.mxu0 0
    %2676 = vmatprep.subr.bf16.mxu0 0
    %2677 = vmatpush1.bf16.msra.mxu0 0
    %2678 = vmatprep.subr.bf16.mxu0 0
    %2679 = vmatpush1.bf16.msra.mxu0 0
    %2680 = vmatprep.subr.bf16.mxu0 0
    %2681 = vmatpush1.bf16.msra.mxu0 0
    %2682 = vmatprep.subr.bf16.mxu0 0
    %2683 = vmatpush1.bf16.msra.mxu0 0
    %2684 = vmatprep.subr.bf16.mxu0 0
    %2685 = vmatpush1.bf16.msra.mxu0 0
    %2686 = vmatprep.subr.bf16.mxu0 0
    %2687 = vmatpush1.bf16.msra.mxu0 0
    %2688 = vmatprep.subr.bf16.mxu0 0
    %2689 = vmatpush1.bf16.msra.mxu0 0
    %2690 = vmatprep.subr.bf16.mxu0 0
    %2691 = vmatpush1.bf16.msra.mxu0 0
    %2692 = vmatprep.subr.bf16.mxu0 0
    %2693 = vmatpush1.bf16.msra.mxu0 0
    %2694 = vmatprep.subr.bf16.mxu0 0
    %2695 = vmatpush1.bf16.msra.mxu0 0
    %2696 = vmatprep.subr.bf16.mxu0 0
    %2697 = vmatpush1.bf16.msra.mxu0 0
    %2698 = vmatprep.subr.bf16.mxu0 0
    %2699 = vmatpush1.bf16.msra.mxu0 0
    %2700 = vmatprep.subr.bf16.mxu0 0
    %2701 = vmatpush1.bf16.msra.mxu0 0
    %2702 = vmatprep.mubr.bf16.mxu0 0
    %2703 = vmatmul.mubr.bf16.gmra.mrb[0].mxu0 %v2623
    %v2704 = vpop.f32.mrb[0].mxu0
    %v2705 = vadd.f32 %v47, %v2704
    %v2706 = vpop.f32.mrb[0].mxu0
    %v2707 = vpop.f32.mrb[0].mxu0
    %v2708 = vadd.f32 %v47, %v2707
    %v2709 = vpop.f32.mrb[0].mxu0
    %2710 = vmatprep.mubr.bf16.mxu0 0
    %2711 = vmatmul.mubr.bf16.gmra.mrb[0].mxu0 %v2626
    %v2712 = vpop.f32.mrb[0].mxu0
    %v2713 = vadd.f32 %v47, %v2712
    %v2714 = vpop.f32.mrb[0].mxu0
    %v2715 = vpop.f32.mrb[0].mxu0
    %v2716 = vadd.f32 %v47, %v2715
    %v2717 = vpop.f32.mrb[0].mxu0
    %2718 = vmatprep.mubr.bf16.mxu0 0
    %2719 = vmatmul.mubr.bf16.gmra.mrb[0].mxu0 %v2629
    %v2720 = vpop.f32.mrb[0].mxu0
    %v2721 = vadd.f32 %v47, %v2720
    %v2722 = vpop.f32.mrb[0].mxu0
    %v2723 = vpop.f32.mrb[0].mxu0
    %v2724 = vadd.f32 %v47, %v2723
    %v2725 = vpop.f32.mrb[0].mxu0
    %2726 = vmatprep.mubr.bf16.mxu0 0
    %2727 = vmatmul.mubr.bf16.gmra.mrb[0].mxu0 %v2632
    %v2728 = vpop.f32.mrb[0].mxu0
    %v2729 = vadd.f32 %v47, %v2728
    %v2730 = vpop.f32.mrb[0].mxu0
    %v2731 = vpop.f32.mrb[0].mxu0
    %v2732 = vadd.f32 %v47, %v2731
    %v2733 = vpop.f32.mrb[0].mxu0
    %2734 = vmatprep.mubr.bf16.mxu0 0
    %2735 = vmatmul.mubr.bf16.gmra.mrb[0].mxu0 %v2635
    %v2736 = vpop.f32.mrb[0].mxu0
    %v2737 = vadd.f32 %v47, %v2736
    %v2738 = vpop.f32.mrb[0].mxu0
    %v2739 = vpop.f32.mrb[0].mxu0
    %v2740 = vadd.f32 %v47, %v2739
    %v2741 = vpop.f32.mrb[0].mxu0
    %2742 = vmatprep.mubr.bf16.mxu0 0
    %2743 = vmatmul.mubr.bf16.gmra.mrb[0].mxu0 %v2638
    %v2744 = vpop.f32.mrb[0].mxu0
    %v2745 = vadd.f32 %v47, %v2744
    %v2746 = vpop.f32.mrb[0].mxu0
    %v2747 = vpop.f32.mrb[0].mxu0
    %v2748 = vadd.f32 %v47, %v2747
    %v2749 = vpop.f32.mrb[0].mxu0
    %2750 = vmatprep.mubr.bf16.mxu0 0
    %2751 = vmatmul.mubr.bf16.gmra.mrb[0].mxu0 %v2641
    %v2752 = vpop.f32.mrb[0].mxu0
    %v2753 = vadd.f32 %v47, %v2752
    %v2754 = vpop.f32.mrb[0].mxu0
    %v2755 = vpop.f32.mrb[0].mxu0
    %v2756 = vadd.f32 %v47, %v2755
    %v2757 = vpop.f32.mrb[0].mxu0
    %2758 = vmatprep.mubr.bf16.mxu0 0
    %2759 = vmatmul.mubr.bf16.gmra.mrb[0].mxu0 %v2644
    %v2760 = vpop.f32.mrb[0].mxu0
    %v2761 = vadd.f32 %v47, %v2760
    %v2762 = vpop.f32.mrb[0].mxu0
    %v2763 = vpop.f32.mrb[0].mxu0
    %v2764 = vadd.f32 %v47, %v2763
    %v2765 = vpop.f32.mrb[0].mxu0
    %2766 = vmatprep.mubr.bf16.mxu0 0
    %2767 = vmatmul.mubr.bf16.gmra.mrb[0].mxu0 %v2647
    %v2768 = vpop.f32.mrb[0].mxu0
    %v2769 = vadd.f32 %v47, %v2768
    %v2770 = vpop.f32.mrb[0].mxu0
    %v2771 = vpop.f32.mrb[0].mxu0
    %v2772 = vadd.f32 %v47, %v2771
    %v2773 = vpop.f32.mrb[0].mxu0
    %2774 = vmatprep.mubr.bf16.mxu0 0
    %2775 = vmatmul.mubr.bf16.gmra.mrb[0].mxu0 %v2650
    %v2776 = vpop.f32.mrb[0].mxu0
    %v2777 = vadd.f32 %v47, %v2776
    %v2778 = vpop.f32.mrb[0].mxu0
    %v2779 = vpop.f32.mrb[0].mxu0
    %v2780 = vadd.f32 %v47, %v2779
    %v2781 = vpop.f32.mrb[0].mxu0
    %2782 = vmatprep.mubr.bf16.mxu0 0
    %2783 = vmatmul.mubr.bf16.gmra.mrb[0].mxu0 %v2653
    %v2784 = vpop.f32.mrb[0].mxu0
    %v2785 = vadd.f32 %v47, %v2784
    %v2786 = vpop.f32.mrb[0].mxu0
    %v2787 = vpop.f32.mrb[0].mxu0
    %v2788 = vadd.f32 %v47, %v2787
    %v2789 = vpop.f32.mrb[0].mxu0
    %2790 = vmatprep.mubr.bf16.mxu0 0
    %2791 = vmatmul.mubr.bf16.gmra.mrb[0].mxu0 %v2656
    %v2792 = vpop.f32.mrb[0].mxu0
    %v2793 = vadd.f32 %v47, %v2792
    %v2794 = vpop.f32.mrb[0].mxu0
    %v2795 = vpop.f32.mrb[0].mxu0
    %v2796 = vadd.f32 %v47, %v2795
    %v2797 = vpop.f32.mrb[0].mxu0
    %2798 = vmatprep.mubr.bf16.mxu0 0
    %2799 = vmatmul.mubr.bf16.gmra.mrb[0].mxu0 %v2659
    %v2800 = vpop.f32.mrb[0].mxu0
    %v2801 = vadd.f32 %v47, %v2800
    %v2802 = vpop.f32.mrb[0].mxu0
    %v2803 = vpop.f32.mrb[0].mxu0
    %v2804 = vadd.f32 %v47, %v2803
    %v2805 = vpop.f32.mrb[0].mxu0
    %2806 = vmatprep.mubr.bf16.mxu0 0
    %2807 = vmatmul.mubr.bf16.gmra.mrb[0].mxu0 %v2662
    %v2808 = vpop.f32.mrb[0].mxu0
    %v2809 = vadd.f32 %v47, %v2808
    %v2810 = vpop.f32.mrb[0].mxu0
    %v2811 = vpop.f32.mrb[0].mxu0
    %v2812 = vadd.f32 %v47, %v2811
    %v2813 = vpop.f32.mrb[0].mxu0
    %2814 = vmatprep.mubr.bf16.mxu0 0
    %2815 = vmatmul.mubr.bf16.gmra.mrb[0].mxu0 %v2665
    %v2816 = vpop.f32.mrb[0].mxu0
    %v2817 = vadd.f32 %v47, %v2816
    %v2818 = vpop.f32.mrb[0].mxu0
    %v2819 = vpop.f32.mrb[0].mxu0
    %v2820 = vadd.f32 %v47, %v2819
    %v2821 = vpop.f32.mrb[0].mxu0
    %2822 = vmatprep.mubr.bf16.mxu0 0
    %2823 = vmatmul.mubr.bf16.gmra.mrb[0].mxu0 %v2668
    %v2824 = vpop.f32.mrb[0].mxu0
    %v2825 = vadd.f32 %v47, %v2824
    %v2826 = vpop.f32.mrb[0].mxu0
    %v2827 = vpop.f32.mrb[0].mxu0
    %v2828 = vadd.f32 %v47, %v2827
    %v2829 = vpop.f32.mrb[0].mxu0
    %2830 = vdwg.mxu0
    %v2831 = vmax.f32 %v2705, 0.0
    %v2832 = vmax.f32 %v2708, 0.0
    %v2833 = vmax.f32 %v2713, 0.0
    %v2834 = vmax.f32 %v2716, 0.0
    %v2835 = vmax.f32 %v2721, 0.0
    %v2836 = vmax.f32 %v2724, 0.0
    %v2837 = vmax.f32 %v2729, 0.0
    %v2838 = vmax.f32 %v2732, 0.0
    %v2839 = vmax.f32 %v2737, 0.0
    %v2840 = vmax.f32 %v2740, 0.0
    %v2841 = vmax.f32 %v2745, 0.0
    %v2842 = vmax.f32 %v2748, 0.0
    %v2843 = vmax.f32 %v2753, 0.0
    %v2844 = vmax.f32 %v2756, 0.0
    %v2845 = vmax.f32 %v2761, 0.0
    %v2846 = vmax.f32 %v2764, 0.0
    %v2847 = vmax.f32 %v2769, 0.0
    %v2848 = vmax.f32 %v2772, 0.0
    %v2849 = vmax.f32 %v2777, 0.0
    %v2850 = vmax.f32 %v2780, 0.0
    %v2851 = vmax.f32 %v2785, 0.0
    %v2852 = vmax.f32 %v2788, 0.0
    %v2853 = vmax.f32 %v2793, 0.0
    %v2854 = vmax.f32 %v2796, 0.0
    %v2855 = vmax.f32 %v2801, 0.0
    %v2856 = vmax.f32 %v2804, 0.0
    %v2857 = vmax.f32 %v2809, 0.0
    %v2858 = vmax.f32 %v2812, 0.0
    %v2859 = vmax.f32 %v2817, 0.0
    %v2860 = vmax.f32 %v2820, 0.0
    %v2861 = vmax.f32 %v2825, 0.0
    %v2862 = vmax.f32 %v2828, 0.0
    %v2863 = vadd.f32 %v2831, %v2832
    %v2864 = vadd.f32 %v2863, %v2833
    %v2865 = vadd.f32 %v2864, %v2834
    %v2866 = vadd.f32 %v2865, %v2835
    %v2867 = vadd.f32 %v2866, %v2836
    %v2868 = vadd.f32 %v2867, %v2837
    %v2869 = vadd.f32 %v2868, %v2838
    %v2870 = vadd.f32 %v2869, %v2839
    %v2871 = vadd.f32 %v2870, %v2840
    %v2872 = vadd.f32 %v2871, %v2841
    %v2873 = vadd.f32 %v2872, %v2842
    %v2874 = vadd.f32 %v2873, %v2843
    %v2875 = vadd.f32 %v2874, %v2844
    %v2876 = vadd.f32 %v2875, %v2845
    %v2877 = vadd.f32 %v2876, %v2846
    %v2878 = vadd.f32 %v2877, %v2847
    %v2879 = vadd.f32 %v2878, %v2848
    %v2880 = vadd.f32 %v2879, %v2849
    %v2881 = vadd.f32 %v2880, %v2850
    %v2882 = vadd.f32 %v2881, %v2851
    %v2883 = vadd.f32 %v2882, %v2852
    %v2884 = vadd.f32 %v2883, %v2853
    %v2885 = vadd.f32 %v2884, %v2854
    %v2886 = vadd.f32 %v2885, %v2855
    %v2887 = vadd.f32 %v2886, %v2856
    %v2888 = vadd.f32 %v2887, %v2857
    %v2889 = vadd.f32 %v2888, %v2858
    %v2890 = vadd.f32 %v2889, %v2859
    %v2891 = vadd.f32 %v2890, %v2860
    %v2892 = vadd.f32 %v2891, %v2861
    %v2893 = vadd.f32 %v2892, %v2862
    %v2894 = vrot.slane %v2893, 4
    %v2895 = vadd.f32 %v2893, %v2894
    %v2896 = vrot.slane %v2895, 2
    %v2897 = vadd.f32 %v2895, %v2896
    %v2898 = vrot.slane %v2897, 1
    %v2899 = vadd.f32 %v2897, %v2898
    %v2900 = vmul.f32 %v2899, 0.00390625
    %2901 = vst [vmem:[#allocation2 + $0x8] sm:$0x1] %v2900
    %s2902 = scalar_lea.vmem %s0, 144
    %v2903 = vld [vmem:[%s2902] sm:$0xff]
    %v2904 = vld [vmem:[%s2902 + $0x8] sm:$0xff]
    %v2905 = vpack.c.bf16 %v2903, %v2903
    %v2906 = vpack.c.bf16 %v2904, %v2904
    %2907 = vxpose.xlu0.c.b16.start [1/8] %v2905, 128
    %2908 = vxpose.xlu0.c.b16.cont [2/8] 0, 128
    %2909 = vxpose.xlu0.c.b16.cont [3/8] 0, 128
    %2910 = vxpose.xlu0.c.b16.cont [4/8] 0, 128
    %2911 = vxpose.xlu0.c.b16.cont [5/8] 0, 128
    %2912 = vxpose.xlu0.c.b16.cont [6/8] 0, 128
    %2913 = vxpose.xlu0.c.b16.cont [7/8] 0, 128
    %2914 = vxpose.xlu0.c.b16.end [8/8] 0, 128
    %v2915 = vpop.trf.xlu0
    %v2916 = vpop.trf.xlu0
    %v2917 = vpop.trf.xlu0
    %v2918 = vpop.trf.xlu0
    %v2919 = vpop.trf.xlu0
    %v2920 = vpop.trf.xlu0
    %v2921 = vpop.trf.xlu0
    %v2922 = vpop.trf.xlu0
    %2923 = vxpose.xlu0.c.b16.start [1/8] %v2906, 128
    %2924 = vxpose.xlu0.c.b16.cont [2/8] 0, 128
    %2925 = vxpose.xlu0.c.b16.cont [3/8] 0, 128
    %2926 = vxpose.xlu0.c.b16.cont [4/8] 0, 128
    %2927 = vxpose.xlu0.c.b16.cont [5/8] 0, 128
    %2928 = vxpose.xlu0.c.b16.cont [6/8] 0, 128
    %2929 = vxpose.xlu0.c.b16.cont [7/8] 0, 128
    %2930 = vxpose.xlu0.c.b16.end [8/8] 0, 128
    %v2931 = vpop.trf.xlu0
    %v2932 = vpop.trf.xlu0
    %v2933 = vpop.trf.xlu0
    %v2934 = vpop.trf.xlu0
    %v2935 = vpop.trf.xlu0
    %v2936 = vpop.trf.xlu0
    %v2937 = vpop.trf.xlu0
    %v2938 = vpop.trf.xlu0
    %v2940 = vsel %vm81, %v2915, 0
    %v2943 = vsel %vm81, %v2916, 0
    %v2946 = vsel %vm81, %v2917, 0
    %v2949 = vsel %vm81, %v2918, 0
    %v2952 = vsel %vm81, %v2919, 0
    %v2955 = vsel %vm81, %v2920, 0
    %v2958 = vsel %vm81, %v2921, 0
    %v2961 = vsel %vm81, %v2922, 0
    %v2964 = vsel %vm81, %v2931, 0
    %v2967 = vsel %vm81, %v2932, 0
    %v2970 = vsel %vm81, %v2933, 0
    %v2973 = vsel %vm81, %v2934, 0
    %v2976 = vsel %vm81, %v2935, 0
    %v2979 = vsel %vm81, %v2936, 0
    %v2982 = vsel %vm81, %v2937, 0
    %v2985 = vsel %vm81, %v2938, 0
    %2987 = vmatprep.subr.bf16.mxu0 0
    %2988 = vmatpush1.bf16.msra.mxu0 %v132
    %2989 = vmatprep.subr.bf16.mxu0 0
    %2990 = vmatpush1.bf16.msra.mxu0 0
    %2991 = vmatprep.subr.bf16.mxu0 0
    %2992 = vmatpush1.bf16.msra.mxu0 0
    %2993 = vmatprep.subr.bf16.mxu0 0
    %2994 = vmatpush1.bf16.msra.mxu0 0
    %2995 = vmatprep.subr.bf16.mxu0 0
    %2996 = vmatpush1.bf16.msra.mxu0 0
    %2997 = vmatprep.subr.bf16.mxu0 0
    %2998 = vmatpush1.bf16.msra.mxu0 0
    %2999 = vmatprep.subr.bf16.mxu0 0
    %3000 = vmatpush1.bf16.msra.mxu0 0
    %3001 = vmatprep.subr.bf16.mxu0 0
    %3002 = vmatpush1.bf16.msra.mxu0 0
    %3003 = vmatprep.subr.bf16.mxu0 0
    %3004 = vmatpush1.bf16.msra.mxu0 0
    %3005 = vmatprep.subr.bf16.mxu0 0
    %3006 = vmatpush1.bf16.msra.mxu0 0
    %3007 = vmatprep.subr.bf16.mxu0 0
    %3008 = vmatpush1.bf16.msra.mxu0 0
    %3009 = vmatprep.subr.bf16.mxu0 0
    %3010 = vmatpush1.bf16.msra.mxu0 0
    %3011 = vmatprep.subr.bf16.mxu0 0
    %3012 = vmatpush1.bf16.msra.mxu0 0
    %3013 = vmatprep.subr.bf16.mxu0 0
    %3014 = vmatpush1.bf16.msra.mxu0 0
    %3015 = vmatprep.subr.bf16.mxu0 0
    %3016 = vmatpush1.bf16.msra.mxu0 0
    %3017 = vmatprep.subr.bf16.mxu0 0
    %3018 = vmatpush1.bf16.msra.mxu0 0
    %3019 = vmatprep.mubr.bf16.mxu0 0
    %3020 = vmatmul.mubr.bf16.gmra.mrb[0].mxu0 %v2940
    %v3021 = vpop.f32.mrb[0].mxu0
    %v3022 = vadd.f32 %v47, %v3021
    %v3023 = vpop.f32.mrb[0].mxu0
    %v3024 = vpop.f32.mrb[0].mxu0
    %v3025 = vadd.f32 %v47, %v3024
    %v3026 = vpop.f32.mrb[0].mxu0
    %3027 = vmatprep.mubr.bf16.mxu0 0
    %3028 = vmatmul.mubr.bf16.gmra.mrb[0].mxu0 %v2943
    %v3029 = vpop.f32.mrb[0].mxu0
    %v3030 = vadd.f32 %v47, %v3029
    %v3031 = vpop.f32.mrb[0].mxu0
    %v3032 = vpop.f32.mrb[0].mxu0
    %v3033 = vadd.f32 %v47, %v3032
    %v3034 = vpop.f32.mrb[0].mxu0
    %3035 = vmatprep.mubr.bf16.mxu0 0
    %3036 = vmatmul.mubr.bf16.gmra.mrb[0].mxu0 %v2946
    %v3037 = vpop.f32.mrb[0].mxu0
    %v3038 = vadd.f32 %v47, %v3037
    %v3039 = vpop.f32.mrb[0].mxu0
    %v3040 = vpop.f32.mrb[0].mxu0
    %v3041 = vadd.f32 %v47, %v3040
    %v3042 = vpop.f32.mrb[0].mxu0
    %3043 = vmatprep.mubr.bf16.mxu0 0
    %3044 = vmatmul.mubr.bf16.gmra.mrb[0].mxu0 %v2949
    %v3045 = vpop.f32.mrb[0].mxu0
    %v3046 = vadd.f32 %v47, %v3045
    %v3047 = vpop.f32.mrb[0].mxu0
    %v3048 = vpop.f32.mrb[0].mxu0
    %v3049 = vadd.f32 %v47, %v3048
    %v3050 = vpop.f32.mrb[0].mxu0
    %3051 = vmatprep.mubr.bf16.mxu0 0
    %3052 = vmatmul.mubr.bf16.gmra.mrb[0].mxu0 %v2952
    %v3053 = vpop.f32.mrb[0].mxu0
    %v3054 = vadd.f32 %v47, %v3053
    %v3055 = vpop.f32.mrb[0].mxu0
    %v3056 = vpop.f32.mrb[0].mxu0
    %v3057 = vadd.f32 %v47, %v3056
    %v3058 = vpop.f32.mrb[0].mxu0
    %3059 = vmatprep.mubr.bf16.mxu0 0
    %3060 = vmatmul.mubr.bf16.gmra.mrb[0].mxu0 %v2955
    %v3061 = vpop.f32.mrb[0].mxu0
    %v3062 = vadd.f32 %v47, %v3061
    %v3063 = vpop.f32.mrb[0].mxu0
    %v3064 = vpop.f32.mrb[0].mxu0
    %v3065 = vadd.f32 %v47, %v3064
    %v3066 = vpop.f32.mrb[0].mxu0
    %3067 = vmatprep.mubr.bf16.mxu0 0
    %3068 = vmatmul.mubr.bf16.gmra.mrb[0].mxu0 %v2958
    %v3069 = vpop.f32.mrb[0].mxu0
    %v3070 = vadd.f32 %v47, %v3069
    %v3071 = vpop.f32.mrb[0].mxu0
    %v3072 = vpop.f32.mrb[0].mxu0
    %v3073 = vadd.f32 %v47, %v3072
    %v3074 = vpop.f32.mrb[0].mxu0
    %3075 = vmatprep.mubr.bf16.mxu0 0
    %3076 = vmatmul.mubr.bf16.gmra.mrb[0].mxu0 %v2961
    %v3077 = vpop.f32.mrb[0].mxu0
    %v3078 = vadd.f32 %v47, %v3077
    %v3079 = vpop.f32.mrb[0].mxu0
    %v3080 = vpop.f32.mrb[0].mxu0
    %v3081 = vadd.f32 %v47, %v3080
    %v3082 = vpop.f32.mrb[0].mxu0
    %3083 = vmatprep.mubr.bf16.mxu0 0
    %3084 = vmatmul.mubr.bf16.gmra.mrb[0].mxu0 %v2964
    %v3085 = vpop.f32.mrb[0].mxu0
    %v3086 = vadd.f32 %v47, %v3085
    %v3087 = vpop.f32.mrb[0].mxu0
    %v3088 = vpop.f32.mrb[0].mxu0
    %v3089 = vadd.f32 %v47, %v3088
    %v3090 = vpop.f32.mrb[0].mxu0
    %3091 = vmatprep.mubr.bf16.mxu0 0
    %3092 = vmatmul.mubr.bf16.gmra.mrb[0].mxu0 %v2967
    %v3093 = vpop.f32.mrb[0].mxu0
    %v3094 = vadd.f32 %v47, %v3093
    %v3095 = vpop.f32.mrb[0].mxu0
    %v3096 = vpop.f32.mrb[0].mxu0
    %v3097 = vadd.f32 %v47, %v3096
    %v3098 = vpop.f32.mrb[0].mxu0
    %3099 = vmatprep.mubr.bf16.mxu0 0
    %3100 = vmatmul.mubr.bf16.gmra.mrb[0].mxu0 %v2970
    %v3101 = vpop.f32.mrb[0].mxu0
    %v3102 = vadd.f32 %v47, %v3101
    %v3103 = vpop.f32.mrb[0].mxu0
    %v3104 = vpop.f32.mrb[0].mxu0
    %v3105 = vadd.f32 %v47, %v3104
    %v3106 = vpop.f32.mrb[0].mxu0
    %3107 = vmatprep.mubr.bf16.mxu0 0
    %3108 = vmatmul.mubr.bf16.gmra.mrb[0].mxu0 %v2973
    %v3109 = vpop.f32.mrb[0].mxu0
    %v3110 = vadd.f32 %v47, %v3109
    %v3111 = vpop.f32.mrb[0].mxu0
    %v3112 = vpop.f32.mrb[0].mxu0
    %v3113 = vadd.f32 %v47, %v3112
    %v3114 = vpop.f32.mrb[0].mxu0
    %3115 = vmatprep.mubr.bf16.mxu0 0
    %3116 = vmatmul.mubr.bf16.gmra.mrb[0].mxu0 %v2976
    %v3117 = vpop.f32.mrb[0].mxu0
    %v3118 = vadd.f32 %v47, %v3117
    %v3119 = vpop.f32.mrb[0].mxu0
    %v3120 = vpop.f32.mrb[0].mxu0
    %v3121 = vadd.f32 %v47, %v3120
    %v3122 = vpop.f32.mrb[0].mxu0
    %3123 = vmatprep.mubr.bf16.mxu0 0
    %3124 = vmatmul.mubr.bf16.gmra.mrb[0].mxu0 %v2979
    %v3125 = vpop.f32.mrb[0].mxu0
    %v3126 = vadd.f32 %v47, %v3125
    %v3127 = vpop.f32.mrb[0].mxu0
    %v3128 = vpop.f32.mrb[0].mxu0
    %v3129 = vadd.f32 %v47, %v3128
    %v3130 = vpop.f32.mrb[0].mxu0
    %3131 = vmatprep.mubr.bf16.mxu0 0
    %3132 = vmatmul.mubr.bf16.gmra.mrb[0].mxu0 %v2982
    %v3133 = vpop.f32.mrb[0].mxu0
    %v3134 = vadd.f32 %v47, %v3133
    %v3135 = vpop.f32.mrb[0].mxu0
    %v3136 = vpop.f32.mrb[0].mxu0
    %v3137 = vadd.f32 %v47, %v3136
    %v3138 = vpop.f32.mrb[0].mxu0
    %3139 = vmatprep.mubr.bf16.mxu0 0
    %3140 = vmatmul.mubr.bf16.gmra.mrb[0].mxu0 %v2985
    %v3141 = vpop.f32.mrb[0].mxu0
    %v3142 = vadd.f32 %v47, %v3141
    %v3143 = vpop.f32.mrb[0].mxu0
    %v3144 = vpop.f32.mrb[0].mxu0
    %v3145 = vadd.f32 %v47, %v3144
    %v3146 = vpop.f32.mrb[0].mxu0
    %3147 = vdwg.mxu0
    %v3148 = vmax.f32 %v3022, 0.0
    %v3149 = vmax.f32 %v3025, 0.0
    %v3150 = vmax.f32 %v3030, 0.0
    %v3151 = vmax.f32 %v3033, 0.0
    %v3152 = vmax.f32 %v3038, 0.0
    %v3153 = vmax.f32 %v3041, 0.0
    %v3154 = vmax.f32 %v3046, 0.0
    %v3155 = vmax.f32 %v3049, 0.0
    %v3156 = vmax.f32 %v3054, 0.0
    %v3157 = vmax.f32 %v3057, 0.0
    %v3158 = vmax.f32 %v3062, 0.0
    %v3159 = vmax.f32 %v3065, 0.0
    %v3160 = vmax.f32 %v3070, 0.0
    %v3161 = vmax.f32 %v3073, 0.0
    %v3162 = vmax.f32 %v3078, 0.0
    %v3163 = vmax.f32 %v3081, 0.0
    %v3164 = vmax.f32 %v3086, 0.0
    %v3165 = vmax.f32 %v3089, 0.0
    %v3166 = vmax.f32 %v3094, 0.0
    %v3167 = vmax.f32 %v3097, 0.0
    %v3168 = vmax.f32 %v3102, 0.0
    %v3169 = vmax.f32 %v3105, 0.0
    %v3170 = vmax.f32 %v3110, 0.0
    %v3171 = vmax.f32 %v3113, 0.0
    %v3172 = vmax.f32 %v3118, 0.0
    %v3173 = vmax.f32 %v3121, 0.0
    %v3174 = vmax.f32 %v3126, 0.0
    %v3175 = vmax.f32 %v3129, 0.0
    %v3176 = vmax.f32 %v3134, 0.0
    %v3177 = vmax.f32 %v3137, 0.0
    %v3178 = vmax.f32 %v3142, 0.0
    %v3179 = vmax.f32 %v3145, 0.0
    %v3180 = vadd.f32 %v3148, %v3149
    %v3181 = vadd.f32 %v3180, %v3150
    %v3182 = vadd.f32 %v3181, %v3151
    %v3183 = vadd.f32 %v3182, %v3152
    %v3184 = vadd.f32 %v3183, %v3153
    %v3185 = vadd.f32 %v3184, %v3154
    %v3186 = vadd.f32 %v3185, %v3155
    %v3187 = vadd.f32 %v3186, %v3156
    %v3188 = vadd.f32 %v3187, %v3157
    %v3189 = vadd.f32 %v3188, %v3158
    %v3190 = vadd.f32 %v3189, %v3159
    %v3191 = vadd.f32 %v3190, %v3160
    %v3192 = vadd.f32 %v3191, %v3161
    %v3193 = vadd.f32 %v3192, %v3162
    %v3194 = vadd.f32 %v3193, %v3163
    %v3195 = vadd.f32 %v3194, %v3164
    %v3196 = vadd.f32 %v3195, %v3165
    %v3197 = vadd.f32 %v3196, %v3166
    %v3198 = vadd.f32 %v3197, %v3167
    %v3199 = vadd.f32 %v3198, %v3168
    %v3200 = vadd.f32 %v3199, %v3169
    %v3201 = vadd.f32 %v3200, %v3170
    %v3202 = vadd.f32 %v3201, %v3171
    %v3203 = vadd.f32 %v3202, %v3172
    %v3204 = vadd.f32 %v3203, %v3173
    %v3205 = vadd.f32 %v3204, %v3174
    %v3206 = vadd.f32 %v3205, %v3175
    %v3207 = vadd.f32 %v3206, %v3176
    %v3208 = vadd.f32 %v3207, %v3177
    %v3209 = vadd.f32 %v3208, %v3178
    %v3210 = vadd.f32 %v3209, %v3179
    %v3211 = vrot.slane %v3210, 4
    %v3212 = vadd.f32 %v3210, %v3211
    %v3213 = vrot.slane %v3212, 2
    %v3214 = vadd.f32 %v3212, %v3213
    %v3215 = vrot.slane %v3214, 1
    %v3216 = vadd.f32 %v3214, %v3215
    %v3217 = vmul.f32 %v3216, 0.00390625
    %3218 = vst [vmem:[#allocation2 + $0x9] sm:$0x1] %v3217
    %s3219 = scalar_lea.vmem %s0, 160
    %v3220 = vld [vmem:[%s3219] sm:$0xff]
    %v3221 = vld [vmem:[%s3219 + $0x8] sm:$0xff]
    %v3222 = vpack.c.bf16 %v3220, %v3220
    %v3223 = vpack.c.bf16 %v3221, %v3221
    %3224 = vxpose.xlu0.c.b16.start [1/8] %v3222, 128
    %3225 = vxpose.xlu0.c.b16.cont [2/8] 0, 128
    %3226 = vxpose.xlu0.c.b16.cont [3/8] 0, 128
    %3227 = vxpose.xlu0.c.b16.cont [4/8] 0, 128
    %3228 = vxpose.xlu0.c.b16.cont [5/8] 0, 128
    %3229 = vxpose.xlu0.c.b16.cont [6/8] 0, 128
    %3230 = vxpose.xlu0.c.b16.cont [7/8] 0, 128
    %3231 = vxpose.xlu0.c.b16.end [8/8] 0, 128
    %v3232 = vpop.trf.xlu0
    %v3233 = vpop.trf.xlu0
    %v3234 = vpop.trf.xlu0
    %v3235 = vpop.trf.xlu0
    %v3236 = vpop.trf.xlu0
    %v3237 = vpop.trf.xlu0
    %v3238 = vpop.trf.xlu0
    %v3239 = vpop.trf.xlu0
    %3240 = vxpose.xlu0.c.b16.start [1/8] %v3223, 128
    %3241 = vxpose.xlu0.c.b16.cont [2/8] 0, 128
    %3242 = vxpose.xlu0.c.b16.cont [3/8] 0, 128
    %3243 = vxpose.xlu0.c.b16.cont [4/8] 0, 128
    %3244 = vxpose.xlu0.c.b16.cont [5/8] 0, 128
    %3245 = vxpose.xlu0.c.b16.cont [6/8] 0, 128
    %3246 = vxpose.xlu0.c.b16.cont [7/8] 0, 128
    %3247 = vxpose.xlu0.c.b16.end [8/8] 0, 128
    %v3248 = vpop.trf.xlu0
    %v3249 = vpop.trf.xlu0
    %v3250 = vpop.trf.xlu0
    %v3251 = vpop.trf.xlu0
    %v3252 = vpop.trf.xlu0
    %v3253 = vpop.trf.xlu0
    %v3254 = vpop.trf.xlu0
    %v3255 = vpop.trf.xlu0
    %v3257 = vsel %vm81, %v3232, 0
    %v3260 = vsel %vm81, %v3233, 0
    %v3263 = vsel %vm81, %v3234, 0
    %v3266 = vsel %vm81, %v3235, 0
    %v3269 = vsel %vm81, %v3236, 0
    %v3272 = vsel %vm81, %v3237, 0
    %v3275 = vsel %vm81, %v3238, 0
    %v3278 = vsel %vm81, %v3239, 0
    %v3281 = vsel %vm81, %v3248, 0
    %v3284 = vsel %vm81, %v3249, 0
    %v3287 = vsel %vm81, %v3250, 0
    %v3290 = vsel %vm81, %v3251, 0
    %v3293 = vsel %vm81, %v3252, 0
    %v3296 = vsel %vm81, %v3253, 0
    %v3299 = vsel %vm81, %v3254, 0
    %v3302 = vsel %vm81, %v3255, 0
    %3304 = vmatprep.subr.bf16.mxu0 0
    %3305 = vmatpush1.bf16.msra.mxu0 %v132
    %3306 = vmatprep.subr.bf16.mxu0 0
    %3307 = vmatpush1.bf16.msra.mxu0 0
    %3308 = vmatprep.subr.bf16.mxu0 0
    %3309 = vmatpush1.bf16.msra.mxu0 0
    %3310 = vmatprep.subr.bf16.mxu0 0
    %3311 = vmatpush1.bf16.msra.mxu0 0
    %3312 = vmatprep.subr.bf16.mxu0 0
    %3313 = vmatpush1.bf16.msra.mxu0 0
    %3314 = vmatprep.subr.bf16.mxu0 0
    %3315 = vmatpush1.bf16.msra.mxu0 0
    %3316 = vmatprep.subr.bf16.mxu0 0
    %3317 = vmatpush1.bf16.msra.mxu0 0
    %3318 = vmatprep.subr.bf16.mxu0 0
    %3319 = vmatpush1.bf16.msra.mxu0 0
    %3320 = vmatprep.subr.bf16.mxu0 0
    %3321 = vmatpush1.bf16.msra.mxu0 0
    %3322 = vmatprep.subr.bf16.mxu0 0
    %3323 = vmatpush1.bf16.msra.mxu0 0
    %3324 = vmatprep.subr.bf16.mxu0 0
    %3325 = vmatpush1.bf16.msra.mxu0 0
    %3326 = vmatprep.subr.bf16.mxu0 0
    %3327 = vmatpush1.bf16.msra.mxu0 0
    %3328 = vmatprep.subr.bf16.mxu0 0
    %3329 = vmatpush1.bf16.msra.mxu0 0
    %3330 = vmatprep.subr.bf16.mxu0 0
    %3331 = vmatpush1.bf16.msra.mxu0 0
    %3332 = vmatprep.subr.bf16.mxu0 0
    %3333 = vmatpush1.bf16.msra.mxu0 0
    %3334 = vmatprep.subr.bf16.mxu0 0
    %3335 = vmatpush1.bf16.msra.mxu0 0
    %3336 = vmatprep.mubr.bf16.mxu0 0
    %3337 = vmatmul.mubr.bf16.gmra.mrb[0].mxu0 %v3257
    %v3338 = vpop.f32.mrb[0].mxu0
    %v3339 = vadd.f32 %v47, %v3338
    %v3340 = vpop.f32.mrb[0].mxu0
    %v3341 = vpop.f32.mrb[0].mxu0
    %v3342 = vadd.f32 %v47, %v3341
    %v3343 = vpop.f32.mrb[0].mxu0
    %3344 = vmatprep.mubr.bf16.mxu0 0
    %3345 = vmatmul.mubr.bf16.gmra.mrb[0].mxu0 %v3260
    %v3346 = vpop.f32.mrb[0].mxu0
    %v3347 = vadd.f32 %v47, %v3346
    %v3348 = vpop.f32.mrb[0].mxu0
    %v3349 = vpop.f32.mrb[0].mxu0
    %v3350 = vadd.f32 %v47, %v3349
    %v3351 = vpop.f32.mrb[0].mxu0
    %3352 = vmatprep.mubr.bf16.mxu0 0
    %3353 = vmatmul.mubr.bf16.gmra.mrb[0].mxu0 %v3263
    %v3354 = vpop.f32.mrb[0].mxu0
    %v3355 = vadd.f32 %v47, %v3354
    %v3356 = vpop.f32.mrb[0].mxu0
    %v3357 = vpop.f32.mrb[0].mxu0
    %v3358 = vadd.f32 %v47, %v3357
    %v3359 = vpop.f32.mrb[0].mxu0
    %3360 = vmatprep.mubr.bf16.mxu0 0
    %3361 = vmatmul.mubr.bf16.gmra.mrb[0].mxu0 %v3266
    %v3362 = vpop.f32.mrb[0].mxu0
    %v3363 = vadd.f32 %v47, %v3362
    %v3364 = vpop.f32.mrb[0].mxu0
    %v3365 = vpop.f32.mrb[0].mxu0
    %v3366 = vadd.f32 %v47, %v3365
    %v3367 = vpop.f32.mrb[0].mxu0
    %3368 = vmatprep.mubr.bf16.mxu0 0
    %3369 = vmatmul.mubr.bf16.gmra.mrb[0].mxu0 %v3269
    %v3370 = vpop.f32.mrb[0].mxu0
    %v3371 = vadd.f32 %v47, %v3370
    %v3372 = vpop.f32.mrb[0].mxu0
    %v3373 = vpop.f32.mrb[0].mxu0
    %v3374 = vadd.f32 %v47, %v3373
    %v3375 = vpop.f32.mrb[0].mxu0
    %3376 = vmatprep.mubr.bf16.mxu0 0
    %3377 = vmatmul.mubr.bf16.gmra.mrb[0].mxu0 %v3272
    %v3378 = vpop.f32.mrb[0].mxu0
    %v3379 = vadd.f32 %v47, %v3378
    %v3380 = vpop.f32.mrb[0].mxu0
    %v3381 = vpop.f32.mrb[0].mxu0
    %v3382 = vadd.f32 %v47, %v3381
    %v3383 = vpop.f32.mrb[0].mxu0
    %3384 = vmatprep.mubr.bf16.mxu0 0
    %3385 = vmatmul.mubr.bf16.gmra.mrb[0].mxu0 %v3275
    %v3386 = vpop.f32.mrb[0].mxu0
    %v3387 = vadd.f32 %v47, %v3386
    %v3388 = vpop.f32.mrb[0].mxu0
    %v3389 = vpop.f32.mrb[0].mxu0
    %v3390 = vadd.f32 %v47, %v3389
    %v3391 = vpop.f32.mrb[0].mxu0
    %3392 = vmatprep.mubr.bf16.mxu0 0
    %3393 = vmatmul.mubr.bf16.gmra.mrb[0].mxu0 %v3278
    %v3394 = vpop.f32.mrb[0].mxu0
    %v3395 = vadd.f32 %v47, %v3394
    %v3396 = vpop.f32.mrb[0].mxu0
    %v3397 = vpop.f32.mrb[0].mxu0
    %v3398 = vadd.f32 %v47, %v3397
    %v3399 = vpop.f32.mrb[0].mxu0
    %3400 = vmatprep.mubr.bf16.mxu0 0
    %3401 = vmatmul.mubr.bf16.gmra.mrb[0].mxu0 %v3281
    %v3402 = vpop.f32.mrb[0].mxu0
    %v3403 = vadd.f32 %v47, %v3402
    %v3404 = vpop.f32.mrb[0].mxu0
    %v3405 = vpop.f32.mrb[0].mxu0
    %v3406 = vadd.f32 %v47, %v3405
    %v3407 = vpop.f32.mrb[0].mxu0
    %3408 = vmatprep.mubr.bf16.mxu0 0
    %3409 = vmatmul.mubr.bf16.gmra.mrb[0].mxu0 %v3284
    %v3410 = vpop.f32.mrb[0].mxu0
    %v3411 = vadd.f32 %v47, %v3410
    %v3412 = vpop.f32.mrb[0].mxu0
    %v3413 = vpop.f32.mrb[0].mxu0
    %v3414 = vadd.f32 %v47, %v3413
    %v3415 = vpop.f32.mrb[0].mxu0
    %3416 = vmatprep.mubr.bf16.mxu0 0
    %3417 = vmatmul.mubr.bf16.gmra.mrb[0].mxu0 %v3287
    %v3418 = vpop.f32.mrb[0].mxu0
    %v3419 = vadd.f32 %v47, %v3418
    %v3420 = vpop.f32.mrb[0].mxu0
    %v3421 = vpop.f32.mrb[0].mxu0
    %v3422 = vadd.f32 %v47, %v3421
    %v3423 = vpop.f32.mrb[0].mxu0
    %3424 = vmatprep.mubr.bf16.mxu0 0
    %3425 = vmatmul.mubr.bf16.gmra.mrb[0].mxu0 %v3290
    %v3426 = vpop.f32.mrb[0].mxu0
    %v3427 = vadd.f32 %v47, %v3426
    %v3428 = vpop.f32.mrb[0].mxu0
    %v3429 = vpop.f32.mrb[0].mxu0
    %v3430 = vadd.f32 %v47, %v3429
    %v3431 = vpop.f32.mrb[0].mxu0
    %3432 = vmatprep.mubr.bf16.mxu0 0
    %3433 = vmatmul.mubr.bf16.gmra.mrb[0].mxu0 %v3293
    %v3434 = vpop.f32.mrb[0].mxu0
    %v3435 = vadd.f32 %v47, %v3434
    %v3436 = vpop.f32.mrb[0].mxu0
    %v3437 = vpop.f32.mrb[0].mxu0
    %v3438 = vadd.f32 %v47, %v3437
    %v3439 = vpop.f32.mrb[0].mxu0
    %3440 = vmatprep.mubr.bf16.mxu0 0
    %3441 = vmatmul.mubr.bf16.gmra.mrb[0].mxu0 %v3296
    %v3442 = vpop.f32.mrb[0].mxu0
    %v3443 = vadd.f32 %v47, %v3442
    %v3444 = vpop.f32.mrb[0].mxu0
    %v3445 = vpop.f32.mrb[0].mxu0
    %v3446 = vadd.f32 %v47, %v3445
    %v3447 = vpop.f32.mrb[0].mxu0
    %3448 = vmatprep.mubr.bf16.mxu0 0
    %3449 = vmatmul.mubr.bf16.gmra.mrb[0].mxu0 %v3299
    %v3450 = vpop.f32.mrb[0].mxu0
    %v3451 = vadd.f32 %v47, %v3450
    %v3452 = vpop.f32.mrb[0].mxu0
    %v3453 = vpop.f32.mrb[0].mxu0
    %v3454 = vadd.f32 %v47, %v3453
    %v3455 = vpop.f32.mrb[0].mxu0
    %3456 = vmatprep.mubr.bf16.mxu0 0
    %3457 = vmatmul.mubr.bf16.gmra.mrb[0].mxu0 %v3302
    %v3458 = vpop.f32.mrb[0].mxu0
    %v3459 = vadd.f32 %v47, %v3458
    %v3460 = vpop.f32.mrb[0].mxu0
    %v3461 = vpop.f32.mrb[0].mxu0
    %v3462 = vadd.f32 %v47, %v3461
    %v3463 = vpop.f32.mrb[0].mxu0
    %3464 = vdwg.mxu0
    %v3465 = vmax.f32 %v3339, 0.0
    %v3466 = vmax.f32 %v3342, 0.0
    %v3467 = vmax.f32 %v3347, 0.0
    %v3468 = vmax.f32 %v3350, 0.0
    %v3469 = vmax.f32 %v3355, 0.0
    %v3470 = vmax.f32 %v3358, 0.0
    %v3471 = vmax.f32 %v3363, 0.0
    %v3472 = vmax.f32 %v3366, 0.0
    %v3473 = vmax.f32 %v3371, 0.0
    %v3474 = vmax.f32 %v3374, 0.0
    %v3475 = vmax.f32 %v3379, 0.0
    %v3476 = vmax.f32 %v3382, 0.0
    %v3477 = vmax.f32 %v3387, 0.0
    %v3478 = vmax.f32 %v3390, 0.0
    %v3479 = vmax.f32 %v3395, 0.0
    %v3480 = vmax.f32 %v3398, 0.0
    %v3481 = vmax.f32 %v3403, 0.0
    %v3482 = vmax.f32 %v3406, 0.0
    %v3483 = vmax.f32 %v3411, 0.0
    %v3484 = vmax.f32 %v3414, 0.0
    %v3485 = vmax.f32 %v3419, 0.0
    %v3486 = vmax.f32 %v3422, 0.0
    %v3487 = vmax.f32 %v3427, 0.0
    %v3488 = vmax.f32 %v3430, 0.0
    %v3489 = vmax.f32 %v3435, 0.0
    %v3490 = vmax.f32 %v3438, 0.0
    %v3491 = vmax.f32 %v3443, 0.0
    %v3492 = vmax.f32 %v3446, 0.0
    %v3493 = vmax.f32 %v3451, 0.0
    %v3494 = vmax.f32 %v3454, 0.0
    %v3495 = vmax.f32 %v3459, 0.0
    %v3496 = vmax.f32 %v3462, 0.0
    %v3497 = vadd.f32 %v3465, %v3466
    %v3498 = vadd.f32 %v3497, %v3467
    %v3499 = vadd.f32 %v3498, %v3468
    %v3500 = vadd.f32 %v3499, %v3469
    %v3501 = vadd.f32 %v3500, %v3470
    %v3502 = vadd.f32 %v3501, %v3471
    %v3503 = vadd.f32 %v3502, %v3472
    %v3504 = vadd.f32 %v3503, %v3473
    %v3505 = vadd.f32 %v3504, %v3474
    %v3506 = vadd.f32 %v3505, %v3475
    %v3507 = vadd.f32 %v3506, %v3476
    %v3508 = vadd.f32 %v3507, %v3477
    %v3509 = vadd.f32 %v3508, %v3478
    %v3510 = vadd.f32 %v3509, %v3479
    %v3511 = vadd.f32 %v3510, %v3480
    %v3512 = vadd.f32 %v3511, %v3481
    %v3513 = vadd.f32 %v3512, %v3482
    %v3514 = vadd.f32 %v3513, %v3483
    %v3515 = vadd.f32 %v3514, %v3484
    %v3516 = vadd.f32 %v3515, %v3485
    %v3517 = vadd.f32 %v3516, %v3486
    %v3518 = vadd.f32 %v3517, %v3487
    %v3519 = vadd.f32 %v3518, %v3488
    %v3520 = vadd.f32 %v3519, %v3489
    %v3521 = vadd.f32 %v3520, %v3490
    %v3522 = vadd.f32 %v3521, %v3491
    %v3523 = vadd.f32 %v3522, %v3492
    %v3524 = vadd.f32 %v3523, %v3493
    %v3525 = vadd.f32 %v3524, %v3494
    %v3526 = vadd.f32 %v3525, %v3495
    %v3527 = vadd.f32 %v3526, %v3496
    %v3528 = vrot.slane %v3527, 4
    %v3529 = vadd.f32 %v3527, %v3528
    %v3530 = vrot.slane %v3529, 2
    %v3531 = vadd.f32 %v3529, %v3530
    %v3532 = vrot.slane %v3531, 1
    %v3533 = vadd.f32 %v3531, %v3532
    %v3534 = vmul.f32 %v3533, 0.00390625
    %3535 = vst [vmem:[#allocation2 + $0xa] sm:$0x1] %v3534
    %s3536 = scalar_lea.vmem %s0, 176
    %v3537 = vld [vmem:[%s3536] sm:$0xff]
    %v3538 = vld [vmem:[%s3536 + $0x8] sm:$0xff]
    %v3539 = vpack.c.bf16 %v3537, %v3537
    %v3540 = vpack.c.bf16 %v3538, %v3538
    %3541 = vxpose.xlu0.c.b16.start [1/8] %v3539, 128
    %3542 = vxpose.xlu0.c.b16.cont [2/8] 0, 128
    %3543 = vxpose.xlu0.c.b16.cont [3/8] 0, 128
    %3544 = vxpose.xlu0.c.b16.cont [4/8] 0, 128
    %3545 = vxpose.xlu0.c.b16.cont [5/8] 0, 128
    %3546 = vxpose.xlu0.c.b16.cont [6/8] 0, 128
    %3547 = vxpose.xlu0.c.b16.cont [7/8] 0, 128
    %3548 = vxpose.xlu0.c.b16.end [8/8] 0, 128
    %v3549 = vpop.trf.xlu0
    %v3550 = vpop.trf.xlu0
    %v3551 = vpop.trf.xlu0
    %v3552 = vpop.trf.xlu0
    %v3553 = vpop.trf.xlu0
    %v3554 = vpop.trf.xlu0
    %v3555 = vpop.trf.xlu0
    %v3556 = vpop.trf.xlu0
    %3557 = vxpose.xlu0.c.b16.start [1/8] %v3540, 128
    %3558 = vxpose.xlu0.c.b16.cont [2/8] 0, 128
    %3559 = vxpose.xlu0.c.b16.cont [3/8] 0, 128
    %3560 = vxpose.xlu0.c.b16.cont [4/8] 0, 128
    %3561 = vxpose.xlu0.c.b16.cont [5/8] 0, 128
    %3562 = vxpose.xlu0.c.b16.cont [6/8] 0, 128
    %3563 = vxpose.xlu0.c.b16.cont [7/8] 0, 128
    %3564 = vxpose.xlu0.c.b16.end [8/8] 0, 128
    %v3565 = vpop.trf.xlu0
    %v3566 = vpop.trf.xlu0
    %v3567 = vpop.trf.xlu0
    %v3568 = vpop.trf.xlu0
    %v3569 = vpop.trf.xlu0
    %v3570 = vpop.trf.xlu0
    %v3571 = vpop.trf.xlu0
    %v3572 = vpop.trf.xlu0
    %v3574 = vsel %vm81, %v3549, 0
    %v3577 = vsel %vm81, %v3550, 0
    %v3580 = vsel %vm81, %v3551, 0
    %v3583 = vsel %vm81, %v3552, 0
    %v3586 = vsel %vm81, %v3553, 0
    %v3589 = vsel %vm81, %v3554, 0
    %v3592 = vsel %vm81, %v3555, 0
    %v3595 = vsel %vm81, %v3556, 0
    %v3598 = vsel %vm81, %v3565, 0
    %v3601 = vsel %vm81, %v3566, 0
    %v3604 = vsel %vm81, %v3567, 0
    %v3607 = vsel %vm81, %v3568, 0
    %v3610 = vsel %vm81, %v3569, 0
    %v3613 = vsel %vm81, %v3570, 0
    %v3616 = vsel %vm81, %v3571, 0
    %v3619 = vsel %vm81, %v3572, 0
    %3621 = vmatprep.subr.bf16.mxu0 0
    %3622 = vmatpush1.bf16.msra.mxu0 %v132
    %3623 = vmatprep.subr.bf16.mxu0 0
    %3624 = vmatpush1.bf16.msra.mxu0 0
    %3625 = vmatprep.subr.bf16.mxu0 0
    %3626 = vmatpush1.bf16.msra.mxu0 0
    %3627 = vmatprep.subr.bf16.mxu0 0
    %3628 = vmatpush1.bf16.msra.mxu0 0
    %3629 = vmatprep.subr.bf16.mxu0 0
    %3630 = vmatpush1.bf16.msra.mxu0 0
    %3631 = vmatprep.subr.bf16.mxu0 0
    %3632 = vmatpush1.bf16.msra.mxu0 0
    %3633 = vmatprep.subr.bf16.mxu0 0
    %3634 = vmatpush1.bf16.msra.mxu0 0
    %3635 = vmatprep.subr.bf16.mxu0 0
    %3636 = vmatpush1.bf16.msra.mxu0 0
    %3637 = vmatprep.subr.bf16.mxu0 0
    %3638 = vmatpush1.bf16.msra.mxu0 0
    %3639 = vmatprep.subr.bf16.mxu0 0
    %3640 = vmatpush1.bf16.msra.mxu0 0
    %3641 = vmatprep.subr.bf16.mxu0 0
    %3642 = vmatpush1.bf16.msra.mxu0 0
    %3643 = vmatprep.subr.bf16.mxu0 0
    %3644 = vmatpush1.bf16.msra.mxu0 0
    %3645 = vmatprep.subr.bf16.mxu0 0
    %3646 = vmatpush1.bf16.msra.mxu0 0
    %3647 = vmatprep.subr.bf16.mxu0 0
    %3648 = vmatpush1.bf16.msra.mxu0 0
    %3649 = vmatprep.subr.bf16.mxu0 0
    %3650 = vmatpush1.bf16.msra.mxu0 0
    %3651 = vmatprep.subr.bf16.mxu0 0
    %3652 = vmatpush1.bf16.msra.mxu0 0
    %3653 = vmatprep.mubr.bf16.mxu0 0
    %3654 = vmatmul.mubr.bf16.gmra.mrb[0].mxu0 %v3574
    %v3655 = vpop.f32.mrb[0].mxu0
    %v3656 = vadd.f32 %v47, %v3655
    %v3657 = vpop.f32.mrb[0].mxu0
    %v3658 = vpop.f32.mrb[0].mxu0
    %v3659 = vadd.f32 %v47, %v3658
    %v3660 = vpop.f32.mrb[0].mxu0
    %3661 = vmatprep.mubr.bf16.mxu0 0
    %3662 = vmatmul.mubr.bf16.gmra.mrb[0].mxu0 %v3577
    %v3663 = vpop.f32.mrb[0].mxu0
    %v3664 = vadd.f32 %v47, %v3663
    %v3665 = vpop.f32.mrb[0].mxu0
    %v3666 = vpop.f32.mrb[0].mxu0
    %v3667 = vadd.f32 %v47, %v3666
    %v3668 = vpop.f32.mrb[0].mxu0
    %3669 = vmatprep.mubr.bf16.mxu0 0
    %3670 = vmatmul.mubr.bf16.gmra.mrb[0].mxu0 %v3580
    %v3671 = vpop.f32.mrb[0].mxu0
    %v3672 = vadd.f32 %v47, %v3671
    %v3673 = vpop.f32.mrb[0].mxu0
    %v3674 = vpop.f32.mrb[0].mxu0
    %v3675 = vadd.f32 %v47, %v3674
    %v3676 = vpop.f32.mrb[0].mxu0
    %3677 = vmatprep.mubr.bf16.mxu0 0
    %3678 = vmatmul.mubr.bf16.gmra.mrb[0].mxu0 %v3583
    %v3679 = vpop.f32.mrb[0].mxu0
    %v3680 = vadd.f32 %v47, %v3679
    %v3681 = vpop.f32.mrb[0].mxu0
    %v3682 = vpop.f32.mrb[0].mxu0
    %v3683 = vadd.f32 %v47, %v3682
    %v3684 = vpop.f32.mrb[0].mxu0
    %3685 = vmatprep.mubr.bf16.mxu0 0
    %3686 = vmatmul.mubr.bf16.gmra.mrb[0].mxu0 %v3586
    %v3687 = vpop.f32.mrb[0].mxu0
    %v3688 = vadd.f32 %v47, %v3687
    %v3689 = vpop.f32.mrb[0].mxu0
    %v3690 = vpop.f32.mrb[0].mxu0
    %v3691 = vadd.f32 %v47, %v3690
    %v3692 = vpop.f32.mrb[0].mxu0
    %3693 = vmatprep.mubr.bf16.mxu0 0
    %3694 = vmatmul.mubr.bf16.gmra.mrb[0].mxu0 %v3589
    %v3695 = vpop.f32.mrb[0].mxu0
    %v3696 = vadd.f32 %v47, %v3695
    %v3697 = vpop.f32.mrb[0].mxu0
    %v3698 = vpop.f32.mrb[0].mxu0
    %v3699 = vadd.f32 %v47, %v3698
    %v3700 = vpop.f32.mrb[0].mxu0
    %3701 = vmatprep.mubr.bf16.mxu0 0
    %3702 = vmatmul.mubr.bf16.gmra.mrb[0].mxu0 %v3592
    %v3703 = vpop.f32.mrb[0].mxu0
    %v3704 = vadd.f32 %v47, %v3703
    %v3705 = vpop.f32.mrb[0].mxu0
    %v3706 = vpop.f32.mrb[0].mxu0
    %v3707 = vadd.f32 %v47, %v3706
    %v3708 = vpop.f32.mrb[0].mxu0
    %3709 = vmatprep.mubr.bf16.mxu0 0
    %3710 = vmatmul.mubr.bf16.gmra.mrb[0].mxu0 %v3595
    %v3711 = vpop.f32.mrb[0].mxu0
    %v3712 = vadd.f32 %v47, %v3711
    %v3713 = vpop.f32.mrb[0].mxu0
    %v3714 = vpop.f32.mrb[0].mxu0
    %v3715 = vadd.f32 %v47, %v3714
    %v3716 = vpop.f32.mrb[0].mxu0
    %3717 = vmatprep.mubr.bf16.mxu0 0
    %3718 = vmatmul.mubr.bf16.gmra.mrb[0].mxu0 %v3598
    %v3719 = vpop.f32.mrb[0].mxu0
    %v3720 = vadd.f32 %v47, %v3719
    %v3721 = vpop.f32.mrb[0].mxu0
    %v3722 = vpop.f32.mrb[0].mxu0
    %v3723 = vadd.f32 %v47, %v3722
    %v3724 = vpop.f32.mrb[0].mxu0
    %3725 = vmatprep.mubr.bf16.mxu0 0
    %3726 = vmatmul.mubr.bf16.gmra.mrb[0].mxu0 %v3601
    %v3727 = vpop.f32.mrb[0].mxu0
    %v3728 = vadd.f32 %v47, %v3727
    %v3729 = vpop.f32.mrb[0].mxu0
    %v3730 = vpop.f32.mrb[0].mxu0
    %v3731 = vadd.f32 %v47, %v3730
    %v3732 = vpop.f32.mrb[0].mxu0
    %3733 = vmatprep.mubr.bf16.mxu0 0
    %3734 = vmatmul.mubr.bf16.gmra.mrb[0].mxu0 %v3604
    %v3735 = vpop.f32.mrb[0].mxu0
    %v3736 = vadd.f32 %v47, %v3735
    %v3737 = vpop.f32.mrb[0].mxu0
    %v3738 = vpop.f32.mrb[0].mxu0
    %v3739 = vadd.f32 %v47, %v3738
    %v3740 = vpop.f32.mrb[0].mxu0
    %3741 = vmatprep.mubr.bf16.mxu0 0
    %3742 = vmatmul.mubr.bf16.gmra.mrb[0].mxu0 %v3607
    %v3743 = vpop.f32.mrb[0].mxu0
    %v3744 = vadd.f32 %v47, %v3743
    %v3745 = vpop.f32.mrb[0].mxu0
    %v3746 = vpop.f32.mrb[0].mxu0
    %v3747 = vadd.f32 %v47, %v3746
    %v3748 = vpop.f32.mrb[0].mxu0
    %3749 = vmatprep.mubr.bf16.mxu0 0
    %3750 = vmatmul.mubr.bf16.gmra.mrb[0].mxu0 %v3610
    %v3751 = vpop.f32.mrb[0].mxu0
    %v3752 = vadd.f32 %v47, %v3751
    %v3753 = vpop.f32.mrb[0].mxu0
    %v3754 = vpop.f32.mrb[0].mxu0
    %v3755 = vadd.f32 %v47, %v3754
    %v3756 = vpop.f32.mrb[0].mxu0
    %3757 = vmatprep.mubr.bf16.mxu0 0
    %3758 = vmatmul.mubr.bf16.gmra.mrb[0].mxu0 %v3613
    %v3759 = vpop.f32.mrb[0].mxu0
    %v3760 = vadd.f32 %v47, %v3759
    %v3761 = vpop.f32.mrb[0].mxu0
    %v3762 = vpop.f32.mrb[0].mxu0
    %v3763 = vadd.f32 %v47, %v3762
    %v3764 = vpop.f32.mrb[0].mxu0
    %3765 = vmatprep.mubr.bf16.mxu0 0
    %3766 = vmatmul.mubr.bf16.gmra.mrb[0].mxu0 %v3616
    %v3767 = vpop.f32.mrb[0].mxu0
    %v3768 = vadd.f32 %v47, %v3767
    %v3769 = vpop.f32.mrb[0].mxu0
    %v3770 = vpop.f32.mrb[0].mxu0
    %v3771 = vadd.f32 %v47, %v3770
    %v3772 = vpop.f32.mrb[0].mxu0
    %3773 = vmatprep.mubr.bf16.mxu0 0
    %3774 = vmatmul.mubr.bf16.gmra.mrb[0].mxu0 %v3619
    %v3775 = vpop.f32.mrb[0].mxu0
    %v3776 = vadd.f32 %v47, %v3775
    %v3777 = vpop.f32.mrb[0].mxu0
    %v3778 = vpop.f32.mrb[0].mxu0
    %v3779 = vadd.f32 %v47, %v3778
    %v3780 = vpop.f32.mrb[0].mxu0
    %3781 = vdwg.mxu0
    %v3782 = vmax.f32 %v3656, 0.0
    %v3783 = vmax.f32 %v3659, 0.0
    %v3784 = vmax.f32 %v3664, 0.0
    %v3785 = vmax.f32 %v3667, 0.0
    %v3786 = vmax.f32 %v3672, 0.0
    %v3787 = vmax.f32 %v3675, 0.0
    %v3788 = vmax.f32 %v3680, 0.0
    %v3789 = vmax.f32 %v3683, 0.0
    %v3790 = vmax.f32 %v3688, 0.0
    %v3791 = vmax.f32 %v3691, 0.0
    %v3792 = vmax.f32 %v3696, 0.0
    %v3793 = vmax.f32 %v3699, 0.0
    %v3794 = vmax.f32 %v3704, 0.0
    %v3795 = vmax.f32 %v3707, 0.0
    %v3796 = vmax.f32 %v3712, 0.0
    %v3797 = vmax.f32 %v3715, 0.0
    %v3798 = vmax.f32 %v3720, 0.0
    %v3799 = vmax.f32 %v3723, 0.0
    %v3800 = vmax.f32 %v3728, 0.0
    %v3801 = vmax.f32 %v3731, 0.0
    %v3802 = vmax.f32 %v3736, 0.0
    %v3803 = vmax.f32 %v3739, 0.0
    %v3804 = vmax.f32 %v3744, 0.0
    %v3805 = vmax.f32 %v3747, 0.0
    %v3806 = vmax.f32 %v3752, 0.0
    %v3807 = vmax.f32 %v3755, 0.0
    %v3808 = vmax.f32 %v3760, 0.0
    %v3809 = vmax.f32 %v3763, 0.0
    %v3810 = vmax.f32 %v3768, 0.0
    %v3811 = vmax.f32 %v3771, 0.0
    %v3812 = vmax.f32 %v3776, 0.0
    %v3813 = vmax.f32 %v3779, 0.0
    %v3814 = vadd.f32 %v3782, %v3783
    %v3815 = vadd.f32 %v3814, %v3784
    %v3816 = vadd.f32 %v3815, %v3785
    %v3817 = vadd.f32 %v3816, %v3786
    %v3818 = vadd.f32 %v3817, %v3787
    %v3819 = vadd.f32 %v3818, %v3788
    %v3820 = vadd.f32 %v3819, %v3789
    %v3821 = vadd.f32 %v3820, %v3790
    %v3822 = vadd.f32 %v3821, %v3791
    %v3823 = vadd.f32 %v3822, %v3792
    %v3824 = vadd.f32 %v3823, %v3793
    %v3825 = vadd.f32 %v3824, %v3794
    %v3826 = vadd.f32 %v3825, %v3795
    %v3827 = vadd.f32 %v3826, %v3796
    %v3828 = vadd.f32 %v3827, %v3797
    %v3829 = vadd.f32 %v3828, %v3798
    %v3830 = vadd.f32 %v3829, %v3799
    %v3831 = vadd.f32 %v3830, %v3800
    %v3832 = vadd.f32 %v3831, %v3801
    %v3833 = vadd.f32 %v3832, %v3802
    %v3834 = vadd.f32 %v3833, %v3803
    %v3835 = vadd.f32 %v3834, %v3804
    %v3836 = vadd.f32 %v3835, %v3805
    %v3837 = vadd.f32 %v3836, %v3806
    %v3838 = vadd.f32 %v3837, %v3807
    %v3839 = vadd.f32 %v3838, %v3808
    %v3840 = vadd.f32 %v3839, %v3809
    %v3841 = vadd.f32 %v3840, %v3810
    %v3842 = vadd.f32 %v3841, %v3811
    %v3843 = vadd.f32 %v3842, %v3812
    %v3844 = vadd.f32 %v3843, %v3813
    %v3845 = vrot.slane %v3844, 4
    %v3846 = vadd.f32 %v3844, %v3845
    %v3847 = vrot.slane %v3846, 2
    %v3848 = vadd.f32 %v3846, %v3847
    %v3849 = vrot.slane %v3848, 1
    %v3850 = vadd.f32 %v3848, %v3849
    %v3851 = vmul.f32 %v3850, 0.00390625
    %3852 = vst [vmem:[#allocation2 + $0xb] sm:$0x1] %v3851
    %s3853 = scalar_lea.vmem %s0, 192
    %v3854 = vld [vmem:[%s3853] sm:$0xff]
    %v3855 = vld [vmem:[%s3853 + $0x8] sm:$0xff]
    %v3856 = vpack.c.bf16 %v3854, %v3854
    %v3857 = vpack.c.bf16 %v3855, %v3855
    %3858 = vxpose.xlu0.c.b16.start [1/8] %v3856, 128
    %3859 = vxpose.xlu0.c.b16.cont [2/8] 0, 128
    %3860 = vxpose.xlu0.c.b16.cont [3/8] 0, 128
    %3861 = vxpose.xlu0.c.b16.cont [4/8] 0, 128
    %3862 = vxpose.xlu0.c.b16.cont [5/8] 0, 128
    %3863 = vxpose.xlu0.c.b16.cont [6/8] 0, 128
    %3864 = vxpose.xlu0.c.b16.cont [7/8] 0, 128
    %3865 = vxpose.xlu0.c.b16.end [8/8] 0, 128
    %v3866 = vpop.trf.xlu0
    %v3867 = vpop.trf.xlu0
    %v3868 = vpop.trf.xlu0
    %v3869 = vpop.trf.xlu0
    %v3870 = vpop.trf.xlu0
    %v3871 = vpop.trf.xlu0
    %v3872 = vpop.trf.xlu0
    %v3873 = vpop.trf.xlu0
    %3874 = vxpose.xlu0.c.b16.start [1/8] %v3857, 128
    %3875 = vxpose.xlu0.c.b16.cont [2/8] 0, 128
    %3876 = vxpose.xlu0.c.b16.cont [3/8] 0, 128
    %3877 = vxpose.xlu0.c.b16.cont [4/8] 0, 128
    %3878 = vxpose.xlu0.c.b16.cont [5/8] 0, 128
    %3879 = vxpose.xlu0.c.b16.cont [6/8] 0, 128
    %3880 = vxpose.xlu0.c.b16.cont [7/8] 0, 128
    %3881 = vxpose.xlu0.c.b16.end [8/8] 0, 128
    %v3882 = vpop.trf.xlu0
    %v3883 = vpop.trf.xlu0
    %v3884 = vpop.trf.xlu0
    %v3885 = vpop.trf.xlu0
    %v3886 = vpop.trf.xlu0
    %v3887 = vpop.trf.xlu0
    %v3888 = vpop.trf.xlu0
    %v3889 = vpop.trf.xlu0
    %v3891 = vsel %vm81, %v3866, 0
    %v3894 = vsel %vm81, %v3867, 0
    %v3897 = vsel %vm81, %v3868, 0
    %v3900 = vsel %vm81, %v3869, 0
    %v3903 = vsel %vm81, %v3870, 0
    %v3906 = vsel %vm81, %v3871, 0
    %v3909 = vsel %vm81, %v3872, 0
    %v3912 = vsel %vm81, %v3873, 0
    %v3915 = vsel %vm81, %v3882, 0
    %v3918 = vsel %vm81, %v3883, 0
    %v3921 = vsel %vm81, %v3884, 0
    %v3924 = vsel %vm81, %v3885, 0
    %v3927 = vsel %vm81, %v3886, 0
    %v3930 = vsel %vm81, %v3887, 0
    %v3933 = vsel %vm81, %v3888, 0
    %v3936 = vsel %vm81, %v3889, 0
    %3938 = vmatprep.subr.bf16.mxu0 0
    %3939 = vmatpush1.bf16.msra.mxu0 %v132
    %3940 = vmatprep.subr.bf16.mxu0 0
    %3941 = vmatpush1.bf16.msra.mxu0 0
    %3942 = vmatprep.subr.bf16.mxu0 0
    %3943 = vmatpush1.bf16.msra.mxu0 0
    %3944 = vmatprep.subr.bf16.mxu0 0
    %3945 = vmatpush1.bf16.msra.mxu0 0
    %3946 = vmatprep.subr.bf16.mxu0 0
    %3947 = vmatpush1.bf16.msra.mxu0 0
    %3948 = vmatprep.subr.bf16.mxu0 0
    %3949 = vmatpush1.bf16.msra.mxu0 0
    %3950 = vmatprep.subr.bf16.mxu0 0
    %3951 = vmatpush1.bf16.msra.mxu0 0
    %3952 = vmatprep.subr.bf16.mxu0 0
    %3953 = vmatpush1.bf16.msra.mxu0 0
    %3954 = vmatprep.subr.bf16.mxu0 0
    %3955 = vmatpush1.bf16.msra.mxu0 0
    %3956 = vmatprep.subr.bf16.mxu0 0
    %3957 = vmatpush1.bf16.msra.mxu0 0
    %3958 = vmatprep.subr.bf16.mxu0 0
    %3959 = vmatpush1.bf16.msra.mxu0 0
    %3960 = vmatprep.subr.bf16.mxu0 0
    %3961 = vmatpush1.bf16.msra.mxu0 0
    %3962 = vmatprep.subr.bf16.mxu0 0
    %3963 = vmatpush1.bf16.msra.mxu0 0
    %3964 = vmatprep.subr.bf16.mxu0 0
    %3965 = vmatpush1.bf16.msra.mxu0 0
    %3966 = vmatprep.subr.bf16.mxu0 0
    %3967 = vmatpush1.bf16.msra.mxu0 0
    %3968 = vmatprep.subr.bf16.mxu0 0
    %3969 = vmatpush1.bf16.msra.mxu0 0
    %3970 = vmatprep.mubr.bf16.mxu0 0
    %3971 = vmatmul.mubr.bf16.gmra.mrb[0].mxu0 %v3891
    %v3972 = vpop.f32.mrb[0].mxu0
    %v3973 = vadd.f32 %v47, %v3972
    %v3974 = vpop.f32.mrb[0].mxu0
    %v3975 = vpop.f32.mrb[0].mxu0
    %v3976 = vadd.f32 %v47, %v3975
    %v3977 = vpop.f32.mrb[0].mxu0
    %3978 = vmatprep.mubr.bf16.mxu0 0
    %3979 = vmatmul.mubr.bf16.gmra.mrb[0].mxu0 %v3894
    %v3980 = vpop.f32.mrb[0].mxu0
    %v3981 = vadd.f32 %v47, %v3980
    %v3982 = vpop.f32.mrb[0].mxu0
    %v3983 = vpop.f32.mrb[0].mxu0
    %v3984 = vadd.f32 %v47, %v3983
    %v3985 = vpop.f32.mrb[0].mxu0
    %3986 = vmatprep.mubr.bf16.mxu0 0
    %3987 = vmatmul.mubr.bf16.gmra.mrb[0].mxu0 %v3897
    %v3988 = vpop.f32.mrb[0].mxu0
    %v3989 = vadd.f32 %v47, %v3988
    %v3990 = vpop.f32.mrb[0].mxu0
    %v3991 = vpop.f32.mrb[0].mxu0
    %v3992 = vadd.f32 %v47, %v3991
    %v3993 = vpop.f32.mrb[0].mxu0
    %3994 = vmatprep.mubr.bf16.mxu0 0
    %3995 = vmatmul.mubr.bf16.gmra.mrb[0].mxu0 %v3900
    %v3996 = vpop.f32.mrb[0].mxu0
    %v3997 = vadd.f32 %v47, %v3996
    %v3998 = vpop.f32.mrb[0].mxu0
    %v3999 = vpop.f32.mrb[0].mxu0
    %v4000 = vadd.f32 %v47, %v3999
    %v4001 = vpop.f32.mrb[0].mxu0
    %4002 = vmatprep.mubr.bf16.mxu0 0
    %4003 = vmatmul.mubr.bf16.gmra.mrb[0].mxu0 %v3903
    %v4004 = vpop.f32.mrb[0].mxu0
    %v4005 = vadd.f32 %v47, %v4004
    %v4006 = vpop.f32.mrb[0].mxu0
    %v4007 = vpop.f32.mrb[0].mxu0
    %v4008 = vadd.f32 %v47, %v4007
    %v4009 = vpop.f32.mrb[0].mxu0
    %4010 = vmatprep.mubr.bf16.mxu0 0
    %4011 = vmatmul.mubr.bf16.gmra.mrb[0].mxu0 %v3906
    %v4012 = vpop.f32.mrb[0].mxu0
    %v4013 = vadd.f32 %v47, %v4012
    %v4014 = vpop.f32.mrb[0].mxu0
    %v4015 = vpop.f32.mrb[0].mxu0
    %v4016 = vadd.f32 %v47, %v4015
    %v4017 = vpop.f32.mrb[0].mxu0
    %4018 = vmatprep.mubr.bf16.mxu0 0
    %4019 = vmatmul.mubr.bf16.gmra.mrb[0].mxu0 %v3909
    %v4020 = vpop.f32.mrb[0].mxu0
    %v4021 = vadd.f32 %v47, %v4020
    %v4022 = vpop.f32.mrb[0].mxu0
    %v4023 = vpop.f32.mrb[0].mxu0
    %v4024 = vadd.f32 %v47, %v4023
    %v4025 = vpop.f32.mrb[0].mxu0
    %4026 = vmatprep.mubr.bf16.mxu0 0
    %4027 = vmatmul.mubr.bf16.gmra.mrb[0].mxu0 %v3912
    %v4028 = vpop.f32.mrb[0].mxu0
    %v4029 = vadd.f32 %v47, %v4028
    %v4030 = vpop.f32.mrb[0].mxu0
    %v4031 = vpop.f32.mrb[0].mxu0
    %v4032 = vadd.f32 %v47, %v4031
    %v4033 = vpop.f32.mrb[0].mxu0
    %4034 = vmatprep.mubr.bf16.mxu0 0
    %4035 = vmatmul.mubr.bf16.gmra.mrb[0].mxu0 %v3915
    %v4036 = vpop.f32.mrb[0].mxu0
    %v4037 = vadd.f32 %v47, %v4036
    %v4038 = vpop.f32.mrb[0].mxu0
    %v4039 = vpop.f32.mrb[0].mxu0
    %v4040 = vadd.f32 %v47, %v4039
    %v4041 = vpop.f32.mrb[0].mxu0
    %4042 = vmatprep.mubr.bf16.mxu0 0
    %4043 = vmatmul.mubr.bf16.gmra.mrb[0].mxu0 %v3918
    %v4044 = vpop.f32.mrb[0].mxu0
    %v4045 = vadd.f32 %v47, %v4044
    %v4046 = vpop.f32.mrb[0].mxu0
    %v4047 = vpop.f32.mrb[0].mxu0
    %v4048 = vadd.f32 %v47, %v4047
    %v4049 = vpop.f32.mrb[0].mxu0
    %4050 = vmatprep.mubr.bf16.mxu0 0
    %4051 = vmatmul.mubr.bf16.gmra.mrb[0].mxu0 %v3921
    %v4052 = vpop.f32.mrb[0].mxu0
    %v4053 = vadd.f32 %v47, %v4052
    %v4054 = vpop.f32.mrb[0].mxu0
    %v4055 = vpop.f32.mrb[0].mxu0
    %v4056 = vadd.f32 %v47, %v4055
    %v4057 = vpop.f32.mrb[0].mxu0
    %4058 = vmatprep.mubr.bf16.mxu0 0
    %4059 = vmatmul.mubr.bf16.gmra.mrb[0].mxu0 %v3924
    %v4060 = vpop.f32.mrb[0].mxu0
    %v4061 = vadd.f32 %v47, %v4060
    %v4062 = vpop.f32.mrb[0].mxu0
    %v4063 = vpop.f32.mrb[0].mxu0
    %v4064 = vadd.f32 %v47, %v4063
    %v4065 = vpop.f32.mrb[0].mxu0
    %4066 = vmatprep.mubr.bf16.mxu0 0
    %4067 = vmatmul.mubr.bf16.gmra.mrb[0].mxu0 %v3927
    %v4068 = vpop.f32.mrb[0].mxu0
    %v4069 = vadd.f32 %v47, %v4068
    %v4070 = vpop.f32.mrb[0].mxu0
    %v4071 = vpop.f32.mrb[0].mxu0
    %v4072 = vadd.f32 %v47, %v4071
    %v4073 = vpop.f32.mrb[0].mxu0
    %4074 = vmatprep.mubr.bf16.mxu0 0
    %4075 = vmatmul.mubr.bf16.gmra.mrb[0].mxu0 %v3930
    %v4076 = vpop.f32.mrb[0].mxu0
    %v4077 = vadd.f32 %v47, %v4076
    %v4078 = vpop.f32.mrb[0].mxu0
    %v4079 = vpop.f32.mrb[0].mxu0
    %v4080 = vadd.f32 %v47, %v4079
    %v4081 = vpop.f32.mrb[0].mxu0
    %4082 = vmatprep.mubr.bf16.mxu0 0
    %4083 = vmatmul.mubr.bf16.gmra.mrb[0].mxu0 %v3933
    %v4084 = vpop.f32.mrb[0].mxu0
    %v4085 = vadd.f32 %v47, %v4084
    %v4086 = vpop.f32.mrb[0].mxu0
    %v4087 = vpop.f32.mrb[0].mxu0
    %v4088 = vadd.f32 %v47, %v4087
    %v4089 = vpop.f32.mrb[0].mxu0
    %4090 = vmatprep.mubr.bf16.mxu0 0
    %4091 = vmatmul.mubr.bf16.gmra.mrb[0].mxu0 %v3936
    %v4092 = vpop.f32.mrb[0].mxu0
    %v4093 = vadd.f32 %v47, %v4092
    %v4094 = vpop.f32.mrb[0].mxu0
    %v4095 = vpop.f32.mrb[0].mxu0
    %v4096 = vadd.f32 %v47, %v4095
    %v4097 = vpop.f32.mrb[0].mxu0
    %4098 = vdwg.mxu0
    %v4099 = vmax.f32 %v3973, 0.0
    %v4100 = vmax.f32 %v3976, 0.0
    %v4101 = vmax.f32 %v3981, 0.0
    %v4102 = vmax.f32 %v3984, 0.0
    %v4103 = vmax.f32 %v3989, 0.0
    %v4104 = vmax.f32 %v3992, 0.0
    %v4105 = vmax.f32 %v3997, 0.0
    %v4106 = vmax.f32 %v4000, 0.0
    %v4107 = vmax.f32 %v4005, 0.0
    %v4108 = vmax.f32 %v4008, 0.0
    %v4109 = vmax.f32 %v4013, 0.0
    %v4110 = vmax.f32 %v4016, 0.0
    %v4111 = vmax.f32 %v4021, 0.0
    %v4112 = vmax.f32 %v4024, 0.0
    %v4113 = vmax.f32 %v4029, 0.0
    %v4114 = vmax.f32 %v4032, 0.0
    %v4115 = vmax.f32 %v4037, 0.0
    %v4116 = vmax.f32 %v4040, 0.0
    %v4117 = vmax.f32 %v4045, 0.0
    %v4118 = vmax.f32 %v4048, 0.0
    %v4119 = vmax.f32 %v4053, 0.0
    %v4120 = vmax.f32 %v4056, 0.0
    %v4121 = vmax.f32 %v4061, 0.0
    %v4122 = vmax.f32 %v4064, 0.0
    %v4123 = vmax.f32 %v4069, 0.0
    %v4124 = vmax.f32 %v4072, 0.0
    %v4125 = vmax.f32 %v4077, 0.0
    %v4126 = vmax.f32 %v4080, 0.0
    %v4127 = vmax.f32 %v4085, 0.0
    %v4128 = vmax.f32 %v4088, 0.0
    %v4129 = vmax.f32 %v4093, 0.0
    %v4130 = vmax.f32 %v4096, 0.0
    %v4131 = vadd.f32 %v4099, %v4100
    %v4132 = vadd.f32 %v4131, %v4101
    %v4133 = vadd.f32 %v4132, %v4102
    %v4134 = vadd.f32 %v4133, %v4103
    %v4135 = vadd.f32 %v4134, %v4104
    %v4136 = vadd.f32 %v4135, %v4105
    %v4137 = vadd.f32 %v4136, %v4106
    %v4138 = vadd.f32 %v4137, %v4107
    %v4139 = vadd.f32 %v4138, %v4108
    %v4140 = vadd.f32 %v4139, %v4109
    %v4141 = vadd.f32 %v4140, %v4110
    %v4142 = vadd.f32 %v4141, %v4111
    %v4143 = vadd.f32 %v4142, %v4112
    %v4144 = vadd.f32 %v4143, %v4113
    %v4145 = vadd.f32 %v4144, %v4114
    %v4146 = vadd.f32 %v4145, %v4115
    %v4147 = vadd.f32 %v4146, %v4116
    %v4148 = vadd.f32 %v4147, %v4117
    %v4149 = vadd.f32 %v4148, %v4118
    %v4150 = vadd.f32 %v4149, %v4119
    %v4151 = vadd.f32 %v4150, %v4120
    %v4152 = vadd.f32 %v4151, %v4121
    %v4153 = vadd.f32 %v4152, %v4122
    %v4154 = vadd.f32 %v4153, %v4123
    %v4155 = vadd.f32 %v4154, %v4124
    %v4156 = vadd.f32 %v4155, %v4125
    %v4157 = vadd.f32 %v4156, %v4126
    %v4158 = vadd.f32 %v4157, %v4127
    %v4159 = vadd.f32 %v4158, %v4128
    %v4160 = vadd.f32 %v4159, %v4129
    %v4161 = vadd.f32 %v4160, %v4130
    %v4162 = vrot.slane %v4161, 4
    %v4163 = vadd.f32 %v4161, %v4162
    %v4164 = vrot.slane %v4163, 2
    %v4165 = vadd.f32 %v4163, %v4164
    %v4166 = vrot.slane %v4165, 1
    %v4167 = vadd.f32 %v4165, %v4166
    %v4168 = vmul.f32 %v4167, 0.00390625
    %4169 = vst [vmem:[#allocation2 + $0xc] sm:$0x1] %v4168
    %s4170 = scalar_lea.vmem %s0, 208
    %v4171 = vld [vmem:[%s4170] sm:$0xff]
    %v4172 = vld [vmem:[%s4170 + $0x8] sm:$0xff]
    %v4173 = vpack.c.bf16 %v4171, %v4171
    %v4174 = vpack.c.bf16 %v4172, %v4172
    %4175 = vxpose.xlu0.c.b16.start [1/8] %v4173, 128
    %4176 = vxpose.xlu0.c.b16.cont [2/8] 0, 128
    %4177 = vxpose.xlu0.c.b16.cont [3/8] 0, 128
    %4178 = vxpose.xlu0.c.b16.cont [4/8] 0, 128
    %4179 = vxpose.xlu0.c.b16.cont [5/8] 0, 128
    %4180 = vxpose.xlu0.c.b16.cont [6/8] 0, 128
    %4181 = vxpose.xlu0.c.b16.cont [7/8] 0, 128
    %4182 = vxpose.xlu0.c.b16.end [8/8] 0, 128
    %v4183 = vpop.trf.xlu0
    %v4184 = vpop.trf.xlu0
    %v4185 = vpop.trf.xlu0
    %v4186 = vpop.trf.xlu0
    %v4187 = vpop.trf.xlu0
    %v4188 = vpop.trf.xlu0
    %v4189 = vpop.trf.xlu0
    %v4190 = vpop.trf.xlu0
    %4191 = vxpose.xlu0.c.b16.start [1/8] %v4174, 128
    %4192 = vxpose.xlu0.c.b16.cont [2/8] 0, 128
    %4193 = vxpose.xlu0.c.b16.cont [3/8] 0, 128
    %4194 = vxpose.xlu0.c.b16.cont [4/8] 0, 128
    %4195 = vxpose.xlu0.c.b16.cont [5/8] 0, 128
    %4196 = vxpose.xlu0.c.b16.cont [6/8] 0, 128
    %4197 = vxpose.xlu0.c.b16.cont [7/8] 0, 128
    %4198 = vxpose.xlu0.c.b16.end [8/8] 0, 128
    %v4199 = vpop.trf.xlu0
    %v4200 = vpop.trf.xlu0
    %v4201 = vpop.trf.xlu0
    %v4202 = vpop.trf.xlu0
    %v4203 = vpop.trf.xlu0
    %v4204 = vpop.trf.xlu0
    %v4205 = vpop.trf.xlu0
    %v4206 = vpop.trf.xlu0
    %v4208 = vsel %vm81, %v4183, 0
    %v4211 = vsel %vm81, %v4184, 0
    %v4214 = vsel %vm81, %v4185, 0
    %v4217 = vsel %vm81, %v4186, 0
    %v4220 = vsel %vm81, %v4187, 0
    %v4223 = vsel %vm81, %v4188, 0
    %v4226 = vsel %vm81, %v4189, 0
    %v4229 = vsel %vm81, %v4190, 0
    %v4232 = vsel %vm81, %v4199, 0
    %v4235 = vsel %vm81, %v4200, 0
    %v4238 = vsel %vm81, %v4201, 0
    %v4241 = vsel %vm81, %v4202, 0
    %v4244 = vsel %vm81, %v4203, 0
    %v4247 = vsel %vm81, %v4204, 0
    %v4250 = vsel %vm81, %v4205, 0
    %v4253 = vsel %vm81, %v4206, 0
    %4255 = vmatprep.subr.bf16.mxu0 0
    %4256 = vmatpush1.bf16.msra.mxu0 %v132
    %4257 = vmatprep.subr.bf16.mxu0 0
    %4258 = vmatpush1.bf16.msra.mxu0 0
    %4259 = vmatprep.subr.bf16.mxu0 0
    %4260 = vmatpush1.bf16.msra.mxu0 0
    %4261 = vmatprep.subr.bf16.mxu0 0
    %4262 = vmatpush1.bf16.msra.mxu0 0
    %4263 = vmatprep.subr.bf16.mxu0 0
    %4264 = vmatpush1.bf16.msra.mxu0 0
    %4265 = vmatprep.subr.bf16.mxu0 0
    %4266 = vmatpush1.bf16.msra.mxu0 0
    %4267 = vmatprep.subr.bf16.mxu0 0
    %4268 = vmatpush1.bf16.msra.mxu0 0
    %4269 = vmatprep.subr.bf16.mxu0 0
    %4270 = vmatpush1.bf16.msra.mxu0 0
    %4271 = vmatprep.subr.bf16.mxu0 0
    %4272 = vmatpush1.bf16.msra.mxu0 0
    %4273 = vmatprep.subr.bf16.mxu0 0
    %4274 = vmatpush1.bf16.msra.mxu0 0
    %4275 = vmatprep.subr.bf16.mxu0 0
    %4276 = vmatpush1.bf16.msra.mxu0 0
    %4277 = vmatprep.subr.bf16.mxu0 0
    %4278 = vmatpush1.bf16.msra.mxu0 0
    %4279 = vmatprep.subr.bf16.mxu0 0
    %4280 = vmatpush1.bf16.msra.mxu0 0
    %4281 = vmatprep.subr.bf16.mxu0 0
    %4282 = vmatpush1.bf16.msra.mxu0 0
    %4283 = vmatprep.subr.bf16.mxu0 0
    %4284 = vmatpush1.bf16.msra.mxu0 0
    %4285 = vmatprep.subr.bf16.mxu0 0
    %4286 = vmatpush1.bf16.msra.mxu0 0
    %4287 = vmatprep.mubr.bf16.mxu0 0
    %4288 = vmatmul.mubr.bf16.gmra.mrb[0].mxu0 %v4208
    %v4289 = vpop.f32.mrb[0].mxu0
    %v4290 = vadd.f32 %v47, %v4289
    %v4291 = vpop.f32.mrb[0].mxu0
    %v4292 = vpop.f32.mrb[0].mxu0
    %v4293 = vadd.f32 %v47, %v4292
    %v4294 = vpop.f32.mrb[0].mxu0
    %4295 = vmatprep.mubr.bf16.mxu0 0
    %4296 = vmatmul.mubr.bf16.gmra.mrb[0].mxu0 %v4211
    %v4297 = vpop.f32.mrb[0].mxu0
    %v4298 = vadd.f32 %v47, %v4297
    %v4299 = vpop.f32.mrb[0].mxu0
    %v4300 = vpop.f32.mrb[0].mxu0
    %v4301 = vadd.f32 %v47, %v4300
    %v4302 = vpop.f32.mrb[0].mxu0
    %4303 = vmatprep.mubr.bf16.mxu0 0
    %4304 = vmatmul.mubr.bf16.gmra.mrb[0].mxu0 %v4214
    %v4305 = vpop.f32.mrb[0].mxu0
    %v4306 = vadd.f32 %v47, %v4305
    %v4307 = vpop.f32.mrb[0].mxu0
    %v4308 = vpop.f32.mrb[0].mxu0
    %v4309 = vadd.f32 %v47, %v4308
    %v4310 = vpop.f32.mrb[0].mxu0
    %4311 = vmatprep.mubr.bf16.mxu0 0
    %4312 = vmatmul.mubr.bf16.gmra.mrb[0].mxu0 %v4217
    %v4313 = vpop.f32.mrb[0].mxu0
    %v4314 = vadd.f32 %v47, %v4313
    %v4315 = vpop.f32.mrb[0].mxu0
    %v4316 = vpop.f32.mrb[0].mxu0
    %v4317 = vadd.f32 %v47, %v4316
    %v4318 = vpop.f32.mrb[0].mxu0
    %4319 = vmatprep.mubr.bf16.mxu0 0
    %4320 = vmatmul.mubr.bf16.gmra.mrb[0].mxu0 %v4220
    %v4321 = vpop.f32.mrb[0].mxu0
    %v4322 = vadd.f32 %v47, %v4321
    %v4323 = vpop.f32.mrb[0].mxu0
    %v4324 = vpop.f32.mrb[0].mxu0
    %v4325 = vadd.f32 %v47, %v4324
    %v4326 = vpop.f32.mrb[0].mxu0
    %4327 = vmatprep.mubr.bf16.mxu0 0
    %4328 = vmatmul.mubr.bf16.gmra.mrb[0].mxu0 %v4223
    %v4329 = vpop.f32.mrb[0].mxu0
    %v4330 = vadd.f32 %v47, %v4329
    %v4331 = vpop.f32.mrb[0].mxu0
    %v4332 = vpop.f32.mrb[0].mxu0
    %v4333 = vadd.f32 %v47, %v4332
    %v4334 = vpop.f32.mrb[0].mxu0
    %4335 = vmatprep.mubr.bf16.mxu0 0
    %4336 = vmatmul.mubr.bf16.gmra.mrb[0].mxu0 %v4226
    %v4337 = vpop.f32.mrb[0].mxu0
    %v4338 = vadd.f32 %v47, %v4337
    %v4339 = vpop.f32.mrb[0].mxu0
    %v4340 = vpop.f32.mrb[0].mxu0
    %v4341 = vadd.f32 %v47, %v4340
    %v4342 = vpop.f32.mrb[0].mxu0
    %4343 = vmatprep.mubr.bf16.mxu0 0
    %4344 = vmatmul.mubr.bf16.gmra.mrb[0].mxu0 %v4229
    %v4345 = vpop.f32.mrb[0].mxu0
    %v4346 = vadd.f32 %v47, %v4345
    %v4347 = vpop.f32.mrb[0].mxu0
    %v4348 = vpop.f32.mrb[0].mxu0
    %v4349 = vadd.f32 %v47, %v4348
    %v4350 = vpop.f32.mrb[0].mxu0
    %4351 = vmatprep.mubr.bf16.mxu0 0
    %4352 = vmatmul.mubr.bf16.gmra.mrb[0].mxu0 %v4232
    %v4353 = vpop.f32.mrb[0].mxu0
    %v4354 = vadd.f32 %v47, %v4353
    %v4355 = vpop.f32.mrb[0].mxu0
    %v4356 = vpop.f32.mrb[0].mxu0
    %v4357 = vadd.f32 %v47, %v4356
    %v4358 = vpop.f32.mrb[0].mxu0
    %4359 = vmatprep.mubr.bf16.mxu0 0
    %4360 = vmatmul.mubr.bf16.gmra.mrb[0].mxu0 %v4235
    %v4361 = vpop.f32.mrb[0].mxu0
    %v4362 = vadd.f32 %v47, %v4361
    %v4363 = vpop.f32.mrb[0].mxu0
    %v4364 = vpop.f32.mrb[0].mxu0
    %v4365 = vadd.f32 %v47, %v4364
    %v4366 = vpop.f32.mrb[0].mxu0
    %4367 = vmatprep.mubr.bf16.mxu0 0
    %4368 = vmatmul.mubr.bf16.gmra.mrb[0].mxu0 %v4238
    %v4369 = vpop.f32.mrb[0].mxu0
    %v4370 = vadd.f32 %v47, %v4369
    %v4371 = vpop.f32.mrb[0].mxu0
    %v4372 = vpop.f32.mrb[0].mxu0
    %v4373 = vadd.f32 %v47, %v4372
    %v4374 = vpop.f32.mrb[0].mxu0
    %4375 = vmatprep.mubr.bf16.mxu0 0
    %4376 = vmatmul.mubr.bf16.gmra.mrb[0].mxu0 %v4241
    %v4377 = vpop.f32.mrb[0].mxu0
    %v4378 = vadd.f32 %v47, %v4377
    %v4379 = vpop.f32.mrb[0].mxu0
    %v4380 = vpop.f32.mrb[0].mxu0
    %v4381 = vadd.f32 %v47, %v4380
    %v4382 = vpop.f32.mrb[0].mxu0
    %4383 = vmatprep.mubr.bf16.mxu0 0
    %4384 = vmatmul.mubr.bf16.gmra.mrb[0].mxu0 %v4244
    %v4385 = vpop.f32.mrb[0].mxu0
    %v4386 = vadd.f32 %v47, %v4385
    %v4387 = vpop.f32.mrb[0].mxu0
    %v4388 = vpop.f32.mrb[0].mxu0
    %v4389 = vadd.f32 %v47, %v4388
    %v4390 = vpop.f32.mrb[0].mxu0
    %4391 = vmatprep.mubr.bf16.mxu0 0
    %4392 = vmatmul.mubr.bf16.gmra.mrb[0].mxu0 %v4247
    %v4393 = vpop.f32.mrb[0].mxu0
    %v4394 = vadd.f32 %v47, %v4393
    %v4395 = vpop.f32.mrb[0].mxu0
    %v4396 = vpop.f32.mrb[0].mxu0
    %v4397 = vadd.f32 %v47, %v4396
    %v4398 = vpop.f32.mrb[0].mxu0
    %4399 = vmatprep.mubr.bf16.mxu0 0
    %4400 = vmatmul.mubr.bf16.gmra.mrb[0].mxu0 %v4250
    %v4401 = vpop.f32.mrb[0].mxu0
    %v4402 = vadd.f32 %v47, %v4401
    %v4403 = vpop.f32.mrb[0].mxu0
    %v4404 = vpop.f32.mrb[0].mxu0
    %v4405 = vadd.f32 %v47, %v4404
    %v4406 = vpop.f32.mrb[0].mxu0
    %4407 = vmatprep.mubr.bf16.mxu0 0
    %4408 = vmatmul.mubr.bf16.gmra.mrb[0].mxu0 %v4253
    %v4409 = vpop.f32.mrb[0].mxu0
    %v4410 = vadd.f32 %v47, %v4409
    %v4411 = vpop.f32.mrb[0].mxu0
    %v4412 = vpop.f32.mrb[0].mxu0
    %v4413 = vadd.f32 %v47, %v4412
    %v4414 = vpop.f32.mrb[0].mxu0
    %4415 = vdwg.mxu0
    %v4416 = vmax.f32 %v4290, 0.0
    %v4417 = vmax.f32 %v4293, 0.0
    %v4418 = vmax.f32 %v4298, 0.0
    %v4419 = vmax.f32 %v4301, 0.0
    %v4420 = vmax.f32 %v4306, 0.0
    %v4421 = vmax.f32 %v4309, 0.0
    %v4422 = vmax.f32 %v4314, 0.0
    %v4423 = vmax.f32 %v4317, 0.0
    %v4424 = vmax.f32 %v4322, 0.0
    %v4425 = vmax.f32 %v4325, 0.0
    %v4426 = vmax.f32 %v4330, 0.0
    %v4427 = vmax.f32 %v4333, 0.0
    %v4428 = vmax.f32 %v4338, 0.0
    %v4429 = vmax.f32 %v4341, 0.0
    %v4430 = vmax.f32 %v4346, 0.0
    %v4431 = vmax.f32 %v4349, 0.0
    %v4432 = vmax.f32 %v4354, 0.0
    %v4433 = vmax.f32 %v4357, 0.0
    %v4434 = vmax.f32 %v4362, 0.0
    %v4435 = vmax.f32 %v4365, 0.0
    %v4436 = vmax.f32 %v4370, 0.0
    %v4437 = vmax.f32 %v4373, 0.0
    %v4438 = vmax.f32 %v4378, 0.0
    %v4439 = vmax.f32 %v4381, 0.0
    %v4440 = vmax.f32 %v4386, 0.0
    %v4441 = vmax.f32 %v4389, 0.0
    %v4442 = vmax.f32 %v4394, 0.0
    %v4443 = vmax.f32 %v4397, 0.0
    %v4444 = vmax.f32 %v4402, 0.0
    %v4445 = vmax.f32 %v4405, 0.0
    %v4446 = vmax.f32 %v4410, 0.0
    %v4447 = vmax.f32 %v4413, 0.0
    %v4448 = vadd.f32 %v4416, %v4417
    %v4449 = vadd.f32 %v4448, %v4418
    %v4450 = vadd.f32 %v4449, %v4419
    %v4451 = vadd.f32 %v4450, %v4420
    %v4452 = vadd.f32 %v4451, %v4421
    %v4453 = vadd.f32 %v4452, %v4422
    %v4454 = vadd.f32 %v4453, %v4423
    %v4455 = vadd.f32 %v4454, %v4424
    %v4456 = vadd.f32 %v4455, %v4425
    %v4457 = vadd.f32 %v4456, %v4426
    %v4458 = vadd.f32 %v4457, %v4427
    %v4459 = vadd.f32 %v4458, %v4428
    %v4460 = vadd.f32 %v4459, %v4429
    %v4461 = vadd.f32 %v4460, %v4430
    %v4462 = vadd.f32 %v4461, %v4431
    %v4463 = vadd.f32 %v4462, %v4432
    %v4464 = vadd.f32 %v4463, %v4433
    %v4465 = vadd.f32 %v4464, %v4434
    %v4466 = vadd.f32 %v4465, %v4435
    %v4467 = vadd.f32 %v4466, %v4436
    %v4468 = vadd.f32 %v4467, %v4437
    %v4469 = vadd.f32 %v4468, %v4438
    %v4470 = vadd.f32 %v4469, %v4439
    %v4471 = vadd.f32 %v4470, %v4440
    %v4472 = vadd.f32 %v4471, %v4441
    %v4473 = vadd.f32 %v4472, %v4442
    %v4474 = vadd.f32 %v4473, %v4443
    %v4475 = vadd.f32 %v4474, %v4444
    %v4476 = vadd.f32 %v4475, %v4445
    %v4477 = vadd.f32 %v4476, %v4446
    %v4478 = vadd.f32 %v4477, %v4447
    %v4479 = vrot.slane %v4478, 4
    %v4480 = vadd.f32 %v4478, %v4479
    %v4481 = vrot.slane %v4480, 2
    %v4482 = vadd.f32 %v4480, %v4481
    %v4483 = vrot.slane %v4482, 1
    %v4484 = vadd.f32 %v4482, %v4483
    %v4485 = vmul.f32 %v4484, 0.00390625
    %4486 = vst [vmem:[#allocation2 + $0xd] sm:$0x1] %v4485
    %s4487 = scalar_lea.vmem %s0, 224
    %v4488 = vld [vmem:[%s4487] sm:$0xff]
    %v4489 = vld [vmem:[%s4487 + $0x8] sm:$0xff]
    %v4490 = vpack.c.bf16 %v4488, %v4488
    %v4491 = vpack.c.bf16 %v4489, %v4489
    %4492 = vxpose.xlu0.c.b16.start [1/8] %v4490, 128
    %4493 = vxpose.xlu0.c.b16.cont [2/8] 0, 128
    %4494 = vxpose.xlu0.c.b16.cont [3/8] 0, 128
    %4495 = vxpose.xlu0.c.b16.cont [4/8] 0, 128
    %4496 = vxpose.xlu0.c.b16.cont [5/8] 0, 128
    %4497 = vxpose.xlu0.c.b16.cont [6/8] 0, 128
    %4498 = vxpose.xlu0.c.b16.cont [7/8] 0, 128
    %4499 = vxpose.xlu0.c.b16.end [8/8] 0, 128
    %v4500 = vpop.trf.xlu0
    %v4501 = vpop.trf.xlu0
    %v4502 = vpop.trf.xlu0
    %v4503 = vpop.trf.xlu0
    %v4504 = vpop.trf.xlu0
    %v4505 = vpop.trf.xlu0
    %v4506 = vpop.trf.xlu0
    %v4507 = vpop.trf.xlu0
    %4508 = vxpose.xlu0.c.b16.start [1/8] %v4491, 128
    %4509 = vxpose.xlu0.c.b16.cont [2/8] 0, 128
    %4510 = vxpose.xlu0.c.b16.cont [3/8] 0, 128
    %4511 = vxpose.xlu0.c.b16.cont [4/8] 0, 128
    %4512 = vxpose.xlu0.c.b16.cont [5/8] 0, 128
    %4513 = vxpose.xlu0.c.b16.cont [6/8] 0, 128
    %4514 = vxpose.xlu0.c.b16.cont [7/8] 0, 128
    %4515 = vxpose.xlu0.c.b16.end [8/8] 0, 128
    %v4516 = vpop.trf.xlu0
    %v4517 = vpop.trf.xlu0
    %v4518 = vpop.trf.xlu0
    %v4519 = vpop.trf.xlu0
    %v4520 = vpop.trf.xlu0
    %v4521 = vpop.trf.xlu0
    %v4522 = vpop.trf.xlu0
    %v4523 = vpop.trf.xlu0
    %v4525 = vsel %vm81, %v4500, 0
    %v4528 = vsel %vm81, %v4501, 0
    %v4531 = vsel %vm81, %v4502, 0
    %v4534 = vsel %vm81, %v4503, 0
    %v4537 = vsel %vm81, %v4504, 0
    %v4540 = vsel %vm81, %v4505, 0
    %v4543 = vsel %vm81, %v4506, 0
    %v4546 = vsel %vm81, %v4507, 0
    %v4549 = vsel %vm81, %v4516, 0
    %v4552 = vsel %vm81, %v4517, 0
    %v4555 = vsel %vm81, %v4518, 0
    %v4558 = vsel %vm81, %v4519, 0
    %v4561 = vsel %vm81, %v4520, 0
    %v4564 = vsel %vm81, %v4521, 0
    %v4567 = vsel %vm81, %v4522, 0
    %v4570 = vsel %vm81, %v4523, 0
    %4572 = vmatprep.subr.bf16.mxu0 0
    %4573 = vmatpush1.bf16.msra.mxu0 %v132
    %4574 = vmatprep.subr.bf16.mxu0 0
    %4575 = vmatpush1.bf16.msra.mxu0 0
    %4576 = vmatprep.subr.bf16.mxu0 0
    %4577 = vmatpush1.bf16.msra.mxu0 0
    %4578 = vmatprep.subr.bf16.mxu0 0
    %4579 = vmatpush1.bf16.msra.mxu0 0
    %4580 = vmatprep.subr.bf16.mxu0 0
    %4581 = vmatpush1.bf16.msra.mxu0 0
    %4582 = vmatprep.subr.bf16.mxu0 0
    %4583 = vmatpush1.bf16.msra.mxu0 0
    %4584 = vmatprep.subr.bf16.mxu0 0
    %4585 = vmatpush1.bf16.msra.mxu0 0
    %4586 = vmatprep.subr.bf16.mxu0 0
    %4587 = vmatpush1.bf16.msra.mxu0 0
    %4588 = vmatprep.subr.bf16.mxu0 0
    %4589 = vmatpush1.bf16.msra.mxu0 0
    %4590 = vmatprep.subr.bf16.mxu0 0
    %4591 = vmatpush1.bf16.msra.mxu0 0
    %4592 = vmatprep.subr.bf16.mxu0 0
    %4593 = vmatpush1.bf16.msra.mxu0 0
    %4594 = vmatprep.subr.bf16.mxu0 0
    %4595 = vmatpush1.bf16.msra.mxu0 0
    %4596 = vmatprep.subr.bf16.mxu0 0
    %4597 = vmatpush1.bf16.msra.mxu0 0
    %4598 = vmatprep.subr.bf16.mxu0 0
    %4599 = vmatpush1.bf16.msra.mxu0 0
    %4600 = vmatprep.subr.bf16.mxu0 0
    %4601 = vmatpush1.bf16.msra.mxu0 0
    %4602 = vmatprep.subr.bf16.mxu0 0
    %4603 = vmatpush1.bf16.msra.mxu0 0
    %4604 = vmatprep.mubr.bf16.mxu0 0
    %4605 = vmatmul.mubr.bf16.gmra.mrb[0].mxu0 %v4525
    %v4606 = vpop.f32.mrb[0].mxu0
    %v4607 = vadd.f32 %v47, %v4606
    %v4608 = vpop.f32.mrb[0].mxu0
    %v4609 = vpop.f32.mrb[0].mxu0
    %v4610 = vadd.f32 %v47, %v4609
    %v4611 = vpop.f32.mrb[0].mxu0
    %4612 = vmatprep.mubr.bf16.mxu0 0
    %4613 = vmatmul.mubr.bf16.gmra.mrb[0].mxu0 %v4528
    %v4614 = vpop.f32.mrb[0].mxu0
    %v4615 = vadd.f32 %v47, %v4614
    %v4616 = vpop.f32.mrb[0].mxu0
    %v4617 = vpop.f32.mrb[0].mxu0
    %v4618 = vadd.f32 %v47, %v4617
    %v4619 = vpop.f32.mrb[0].mxu0
    %4620 = vmatprep.mubr.bf16.mxu0 0
    %4621 = vmatmul.mubr.bf16.gmra.mrb[0].mxu0 %v4531
    %v4622 = vpop.f32.mrb[0].mxu0
    %v4623 = vadd.f32 %v47, %v4622
    %v4624 = vpop.f32.mrb[0].mxu0
    %v4625 = vpop.f32.mrb[0].mxu0
    %v4626 = vadd.f32 %v47, %v4625
    %v4627 = vpop.f32.mrb[0].mxu0
    %4628 = vmatprep.mubr.bf16.mxu0 0
    %4629 = vmatmul.mubr.bf16.gmra.mrb[0].mxu0 %v4534
    %v4630 = vpop.f32.mrb[0].mxu0
    %v4631 = vadd.f32 %v47, %v4630
    %v4632 = vpop.f32.mrb[0].mxu0
    %v4633 = vpop.f32.mrb[0].mxu0
    %v4634 = vadd.f32 %v47, %v4633
    %v4635 = vpop.f32.mrb[0].mxu0
    %4636 = vmatprep.mubr.bf16.mxu0 0
    %4637 = vmatmul.mubr.bf16.gmra.mrb[0].mxu0 %v4537
    %v4638 = vpop.f32.mrb[0].mxu0
    %v4639 = vadd.f32 %v47, %v4638
    %v4640 = vpop.f32.mrb[0].mxu0
    %v4641 = vpop.f32.mrb[0].mxu0
    %v4642 = vadd.f32 %v47, %v4641
    %v4643 = vpop.f32.mrb[0].mxu0
    %4644 = vmatprep.mubr.bf16.mxu0 0
    %4645 = vmatmul.mubr.bf16.gmra.mrb[0].mxu0 %v4540
    %v4646 = vpop.f32.mrb[0].mxu0
    %v4647 = vadd.f32 %v47, %v4646
    %v4648 = vpop.f32.mrb[0].mxu0
    %v4649 = vpop.f32.mrb[0].mxu0
    %v4650 = vadd.f32 %v47, %v4649
    %v4651 = vpop.f32.mrb[0].mxu0
    %4652 = vmatprep.mubr.bf16.mxu0 0
    %4653 = vmatmul.mubr.bf16.gmra.mrb[0].mxu0 %v4543
    %v4654 = vpop.f32.mrb[0].mxu0
    %v4655 = vadd.f32 %v47, %v4654
    %v4656 = vpop.f32.mrb[0].mxu0
    %v4657 = vpop.f32.mrb[0].mxu0
    %v4658 = vadd.f32 %v47, %v4657
    %v4659 = vpop.f32.mrb[0].mxu0
    %4660 = vmatprep.mubr.bf16.mxu0 0
    %4661 = vmatmul.mubr.bf16.gmra.mrb[0].mxu0 %v4546
    %v4662 = vpop.f32.mrb[0].mxu0
    %v4663 = vadd.f32 %v47, %v4662
    %v4664 = vpop.f32.mrb[0].mxu0
    %v4665 = vpop.f32.mrb[0].mxu0
    %v4666 = vadd.f32 %v47, %v4665
    %v4667 = vpop.f32.mrb[0].mxu0
    %4668 = vmatprep.mubr.bf16.mxu0 0
    %4669 = vmatmul.mubr.bf16.gmra.mrb[0].mxu0 %v4549
    %v4670 = vpop.f32.mrb[0].mxu0
    %v4671 = vadd.f32 %v47, %v4670
    %v4672 = vpop.f32.mrb[0].mxu0
    %v4673 = vpop.f32.mrb[0].mxu0
    %v4674 = vadd.f32 %v47, %v4673
    %v4675 = vpop.f32.mrb[0].mxu0
    %4676 = vmatprep.mubr.bf16.mxu0 0
    %4677 = vmatmul.mubr.bf16.gmra.mrb[0].mxu0 %v4552
    %v4678 = vpop.f32.mrb[0].mxu0
    %v4679 = vadd.f32 %v47, %v4678
    %v4680 = vpop.f32.mrb[0].mxu0
    %v4681 = vpop.f32.mrb[0].mxu0
    %v4682 = vadd.f32 %v47, %v4681
    %v4683 = vpop.f32.mrb[0].mxu0
    %4684 = vmatprep.mubr.bf16.mxu0 0
    %4685 = vmatmul.mubr.bf16.gmra.mrb[0].mxu0 %v4555
    %v4686 = vpop.f32.mrb[0].mxu0
    %v4687 = vadd.f32 %v47, %v4686
    %v4688 = vpop.f32.mrb[0].mxu0
    %v4689 = vpop.f32.mrb[0].mxu0
    %v4690 = vadd.f32 %v47, %v4689
    %v4691 = vpop.f32.mrb[0].mxu0
    %4692 = vmatprep.mubr.bf16.mxu0 0
    %4693 = vmatmul.mubr.bf16.gmra.mrb[0].mxu0 %v4558
    %v4694 = vpop.f32.mrb[0].mxu0
    %v4695 = vadd.f32 %v47, %v4694
    %v4696 = vpop.f32.mrb[0].mxu0
    %v4697 = vpop.f32.mrb[0].mxu0
    %v4698 = vadd.f32 %v47, %v4697
    %v4699 = vpop.f32.mrb[0].mxu0
    %4700 = vmatprep.mubr.bf16.mxu0 0
    %4701 = vmatmul.mubr.bf16.gmra.mrb[0].mxu0 %v4561
    %v4702 = vpop.f32.mrb[0].mxu0
    %v4703 = vadd.f32 %v47, %v4702
    %v4704 = vpop.f32.mrb[0].mxu0
    %v4705 = vpop.f32.mrb[0].mxu0
    %v4706 = vadd.f32 %v47, %v4705
    %v4707 = vpop.f32.mrb[0].mxu0
    %4708 = vmatprep.mubr.bf16.mxu0 0
    %4709 = vmatmul.mubr.bf16.gmra.mrb[0].mxu0 %v4564
    %v4710 = vpop.f32.mrb[0].mxu0
    %v4711 = vadd.f32 %v47, %v4710
    %v4712 = vpop.f32.mrb[0].mxu0
    %v4713 = vpop.f32.mrb[0].mxu0
    %v4714 = vadd.f32 %v47, %v4713
    %v4715 = vpop.f32.mrb[0].mxu0
    %4716 = vmatprep.mubr.bf16.mxu0 0
    %4717 = vmatmul.mubr.bf16.gmra.mrb[0].mxu0 %v4567
    %v4718 = vpop.f32.mrb[0].mxu0
    %v4719 = vadd.f32 %v47, %v4718
    %v4720 = vpop.f32.mrb[0].mxu0
    %v4721 = vpop.f32.mrb[0].mxu0
    %v4722 = vadd.f32 %v47, %v4721
    %v4723 = vpop.f32.mrb[0].mxu0
    %4724 = vmatprep.mubr.bf16.mxu0 0
    %4725 = vmatmul.mubr.bf16.gmra.mrb[0].mxu0 %v4570
    %v4726 = vpop.f32.mrb[0].mxu0
    %v4727 = vadd.f32 %v47, %v4726
    %v4728 = vpop.f32.mrb[0].mxu0
    %v4729 = vpop.f32.mrb[0].mxu0
    %v4730 = vadd.f32 %v47, %v4729
    %v4731 = vpop.f32.mrb[0].mxu0
    %4732 = vdwg.mxu0
    %v4733 = vmax.f32 %v4607, 0.0
    %v4734 = vmax.f32 %v4610, 0.0
    %v4735 = vmax.f32 %v4615, 0.0
    %v4736 = vmax.f32 %v4618, 0.0
    %v4737 = vmax.f32 %v4623, 0.0
    %v4738 = vmax.f32 %v4626, 0.0
    %v4739 = vmax.f32 %v4631, 0.0
    %v4740 = vmax.f32 %v4634, 0.0
    %v4741 = vmax.f32 %v4639, 0.0
    %v4742 = vmax.f32 %v4642, 0.0
    %v4743 = vmax.f32 %v4647, 0.0
    %v4744 = vmax.f32 %v4650, 0.0
    %v4745 = vmax.f32 %v4655, 0.0
    %v4746 = vmax.f32 %v4658, 0.0
    %v4747 = vmax.f32 %v4663, 0.0
    %v4748 = vmax.f32 %v4666, 0.0
    %v4749 = vmax.f32 %v4671, 0.0
    %v4750 = vmax.f32 %v4674, 0.0
    %v4751 = vmax.f32 %v4679, 0.0
    %v4752 = vmax.f32 %v4682, 0.0
    %v4753 = vmax.f32 %v4687, 0.0
    %v4754 = vmax.f32 %v4690, 0.0
    %v4755 = vmax.f32 %v4695, 0.0
    %v4756 = vmax.f32 %v4698, 0.0
    %v4757 = vmax.f32 %v4703, 0.0
    %v4758 = vmax.f32 %v4706, 0.0
    %v4759 = vmax.f32 %v4711, 0.0
    %v4760 = vmax.f32 %v4714, 0.0
    %v4761 = vmax.f32 %v4719, 0.0
    %v4762 = vmax.f32 %v4722, 0.0
    %v4763 = vmax.f32 %v4727, 0.0
    %v4764 = vmax.f32 %v4730, 0.0
    %v4765 = vadd.f32 %v4733, %v4734
    %v4766 = vadd.f32 %v4765, %v4735
    %v4767 = vadd.f32 %v4766, %v4736
    %v4768 = vadd.f32 %v4767, %v4737
    %v4769 = vadd.f32 %v4768, %v4738
    %v4770 = vadd.f32 %v4769, %v4739
    %v4771 = vadd.f32 %v4770, %v4740
    %v4772 = vadd.f32 %v4771, %v4741
    %v4773 = vadd.f32 %v4772, %v4742
    %v4774 = vadd.f32 %v4773, %v4743
    %v4775 = vadd.f32 %v4774, %v4744
    %v4776 = vadd.f32 %v4775, %v4745
    %v4777 = vadd.f32 %v4776, %v4746
    %v4778 = vadd.f32 %v4777, %v4747
    %v4779 = vadd.f32 %v4778, %v4748
    %v4780 = vadd.f32 %v4779, %v4749
    %v4781 = vadd.f32 %v4780, %v4750
    %v4782 = vadd.f32 %v4781, %v4751
    %v4783 = vadd.f32 %v4782, %v4752
    %v4784 = vadd.f32 %v4783, %v4753
    %v4785 = vadd.f32 %v4784, %v4754
    %v4786 = vadd.f32 %v4785, %v4755
    %v4787 = vadd.f32 %v4786, %v4756
    %v4788 = vadd.f32 %v4787, %v4757
    %v4789 = vadd.f32 %v4788, %v4758
    %v4790 = vadd.f32 %v4789, %v4759
    %v4791 = vadd.f32 %v4790, %v4760
    %v4792 = vadd.f32 %v4791, %v4761
    %v4793 = vadd.f32 %v4792, %v4762
    %v4794 = vadd.f32 %v4793, %v4763
    %v4795 = vadd.f32 %v4794, %v4764
    %v4796 = vrot.slane %v4795, 4
    %v4797 = vadd.f32 %v4795, %v4796
    %v4798 = vrot.slane %v4797, 2
    %v4799 = vadd.f32 %v4797, %v4798
    %v4800 = vrot.slane %v4799, 1
    %v4801 = vadd.f32 %v4799, %v4800
    %v4802 = vmul.f32 %v4801, 0.00390625
    %4803 = vst [vmem:[#allocation2 + $0xe] sm:$0x1] %v4802
    %s4804 = scalar_lea.vmem %s0, 240
    %v4805 = vld [vmem:[%s4804] sm:$0xff]
    %v4806 = vld [vmem:[%s4804 + $0x8] sm:$0xff]
    %v4807 = vpack.c.bf16 %v4805, %v4805
    %v4808 = vpack.c.bf16 %v4806, %v4806
    %4809 = vxpose.xlu0.c.b16.start [1/8] %v4807, 128
    %4810 = vxpose.xlu0.c.b16.cont [2/8] 0, 128
    %4811 = vxpose.xlu0.c.b16.cont [3/8] 0, 128
    %4812 = vxpose.xlu0.c.b16.cont [4/8] 0, 128
    %4813 = vxpose.xlu0.c.b16.cont [5/8] 0, 128
    %4814 = vxpose.xlu0.c.b16.cont [6/8] 0, 128
    %4815 = vxpose.xlu0.c.b16.cont [7/8] 0, 128
    %4816 = vxpose.xlu0.c.b16.end [8/8] 0, 128
    %v4817 = vpop.trf.xlu0
    %v4818 = vpop.trf.xlu0
    %v4819 = vpop.trf.xlu0
    %v4820 = vpop.trf.xlu0
    %v4821 = vpop.trf.xlu0
    %v4822 = vpop.trf.xlu0
    %v4823 = vpop.trf.xlu0
    %v4824 = vpop.trf.xlu0
    %4825 = vxpose.xlu0.c.b16.start [1/8] %v4808, 128
    %4826 = vxpose.xlu0.c.b16.cont [2/8] 0, 128
    %4827 = vxpose.xlu0.c.b16.cont [3/8] 0, 128
    %4828 = vxpose.xlu0.c.b16.cont [4/8] 0, 128
    %4829 = vxpose.xlu0.c.b16.cont [5/8] 0, 128
    %4830 = vxpose.xlu0.c.b16.cont [6/8] 0, 128
    %4831 = vxpose.xlu0.c.b16.cont [7/8] 0, 128
    %4832 = vxpose.xlu0.c.b16.end [8/8] 0, 128
    %v4833 = vpop.trf.xlu0
    %v4834 = vpop.trf.xlu0
    %v4835 = vpop.trf.xlu0
    %v4836 = vpop.trf.xlu0
    %v4837 = vpop.trf.xlu0
    %v4838 = vpop.trf.xlu0
    %v4839 = vpop.trf.xlu0
    %v4840 = vpop.trf.xlu0
    %v4842 = vsel %vm81, %v4817, 0
    %v4845 = vsel %vm81, %v4818, 0
    %v4848 = vsel %vm81, %v4819, 0
    %v4851 = vsel %vm81, %v4820, 0
    %v4854 = vsel %vm81, %v4821, 0
    %v4857 = vsel %vm81, %v4822, 0
    %v4860 = vsel %vm81, %v4823, 0
    %v4863 = vsel %vm81, %v4824, 0
    %v4866 = vsel %vm81, %v4833, 0
    %v4869 = vsel %vm81, %v4834, 0
    %v4872 = vsel %vm81, %v4835, 0
    %v4875 = vsel %vm81, %v4836, 0
    %v4878 = vsel %vm81, %v4837, 0
    %v4881 = vsel %vm81, %v4838, 0
    %v4884 = vsel %vm81, %v4839, 0
    %v4887 = vsel %vm81, %v4840, 0
    %4889 = vmatprep.subr.bf16.mxu0 0
    %4890 = vmatpush1.bf16.msra.mxu0 %v132
    %4891 = vmatprep.subr.bf16.mxu0 0
    %4892 = vmatpush1.bf16.msra.mxu0 0
    %4893 = vmatprep.subr.bf16.mxu0 0
    %4894 = vmatpush1.bf16.msra.mxu0 0
    %4895 = vmatprep.subr.bf16.mxu0 0
    %4896 = vmatpush1.bf16.msra.mxu0 0
    %4897 = vmatprep.subr.bf16.mxu0 0
    %4898 = vmatpush1.bf16.msra.mxu0 0
    %4899 = vmatprep.subr.bf16.mxu0 0
    %4900 = vmatpush1.bf16.msra.mxu0 0
    %4901 = vmatprep.subr.bf16.mxu0 0
    %4902 = vmatpush1.bf16.msra.mxu0 0
    %4903 = vmatprep.subr.bf16.mxu0 0
    %4904 = vmatpush1.bf16.msra.mxu0 0
    %4905 = vmatprep.subr.bf16.mxu0 0
    %4906 = vmatpush1.bf16.msra.mxu0 0
    %4907 = vmatprep.subr.bf16.mxu0 0
    %4908 = vmatpush1.bf16.msra.mxu0 0
    %4909 = vmatprep.subr.bf16.mxu0 0
    %4910 = vmatpush1.bf16.msra.mxu0 0
    %4911 = vmatprep.subr.bf16.mxu0 0
    %4912 = vmatpush1.bf16.msra.mxu0 0
    %4913 = vmatprep.subr.bf16.mxu0 0
    %4914 = vmatpush1.bf16.msra.mxu0 0
    %4915 = vmatprep.subr.bf16.mxu0 0
    %4916 = vmatpush1.bf16.msra.mxu0 0
    %4917 = vmatprep.subr.bf16.mxu0 0
    %4918 = vmatpush1.bf16.msra.mxu0 0
    %4919 = vmatprep.subr.bf16.mxu0 0
    %4920 = vmatpush1.bf16.msra.mxu0 0
    %4921 = vmatprep.mubr.bf16.mxu0 0
    %4922 = vmatmul.mubr.bf16.gmra.mrb[0].mxu0 %v4842
    %v4923 = vpop.f32.mrb[0].mxu0
    %v4924 = vadd.f32 %v47, %v4923
    %v4925 = vpop.f32.mrb[0].mxu0
    %v4926 = vpop.f32.mrb[0].mxu0
    %v4927 = vadd.f32 %v47, %v4926
    %v4928 = vpop.f32.mrb[0].mxu0
    %4929 = vmatprep.mubr.bf16.mxu0 0
    %4930 = vmatmul.mubr.bf16.gmra.mrb[0].mxu0 %v4845
    %v4931 = vpop.f32.mrb[0].mxu0
    %v4932 = vadd.f32 %v47, %v4931
    %v4933 = vpop.f32.mrb[0].mxu0
    %v4934 = vpop.f32.mrb[0].mxu0
    %v4935 = vadd.f32 %v47, %v4934
    %v4936 = vpop.f32.mrb[0].mxu0
    %4937 = vmatprep.mubr.bf16.mxu0 0
    %4938 = vmatmul.mubr.bf16.gmra.mrb[0].mxu0 %v4848
    %v4939 = vpop.f32.mrb[0].mxu0
    %v4940 = vadd.f32 %v47, %v4939
    %v4941 = vpop.f32.mrb[0].mxu0
    %v4942 = vpop.f32.mrb[0].mxu0
    %v4943 = vadd.f32 %v47, %v4942
    %v4944 = vpop.f32.mrb[0].mxu0
    %4945 = vmatprep.mubr.bf16.mxu0 0
    %4946 = vmatmul.mubr.bf16.gmra.mrb[0].mxu0 %v4851
    %v4947 = vpop.f32.mrb[0].mxu0
    %v4948 = vadd.f32 %v47, %v4947
    %v4949 = vpop.f32.mrb[0].mxu0
    %v4950 = vpop.f32.mrb[0].mxu0
    %v4951 = vadd.f32 %v47, %v4950
    %v4952 = vpop.f32.mrb[0].mxu0
    %4953 = vmatprep.mubr.bf16.mxu0 0
    %4954 = vmatmul.mubr.bf16.gmra.mrb[0].mxu0 %v4854
    %v4955 = vpop.f32.mrb[0].mxu0
    %v4956 = vadd.f32 %v47, %v4955
    %v4957 = vpop.f32.mrb[0].mxu0
    %v4958 = vpop.f32.mrb[0].mxu0
    %v4959 = vadd.f32 %v47, %v4958
    %v4960 = vpop.f32.mrb[0].mxu0
    %4961 = vmatprep.mubr.bf16.mxu0 0
    %4962 = vmatmul.mubr.bf16.gmra.mrb[0].mxu0 %v4857
    %v4963 = vpop.f32.mrb[0].mxu0
    %v4964 = vadd.f32 %v47, %v4963
    %v4965 = vpop.f32.mrb[0].mxu0
    %v4966 = vpop.f32.mrb[0].mxu0
    %v4967 = vadd.f32 %v47, %v4966
    %v4968 = vpop.f32.mrb[0].mxu0
    %4969 = vmatprep.mubr.bf16.mxu0 0
    %4970 = vmatmul.mubr.bf16.gmra.mrb[0].mxu0 %v4860
    %v4971 = vpop.f32.mrb[0].mxu0
    %v4972 = vadd.f32 %v47, %v4971
    %v4973 = vpop.f32.mrb[0].mxu0
    %v4974 = vpop.f32.mrb[0].mxu0
    %v4975 = vadd.f32 %v47, %v4974
    %v4976 = vpop.f32.mrb[0].mxu0
    %4977 = vmatprep.mubr.bf16.mxu0 0
    %4978 = vmatmul.mubr.bf16.gmra.mrb[0].mxu0 %v4863
    %v4979 = vpop.f32.mrb[0].mxu0
    %v4980 = vadd.f32 %v47, %v4979
    %v4981 = vpop.f32.mrb[0].mxu0
    %v4982 = vpop.f32.mrb[0].mxu0
    %v4983 = vadd.f32 %v47, %v4982
    %v4984 = vpop.f32.mrb[0].mxu0
    %4985 = vmatprep.mubr.bf16.mxu0 0
    %4986 = vmatmul.mubr.bf16.gmra.mrb[0].mxu0 %v4866
    %v4987 = vpop.f32.mrb[0].mxu0
    %v4988 = vadd.f32 %v47, %v4987
    %v4989 = vpop.f32.mrb[0].mxu0
    %v4990 = vpop.f32.mrb[0].mxu0
    %v4991 = vadd.f32 %v47, %v4990
    %v4992 = vpop.f32.mrb[0].mxu0
    %4993 = vmatprep.mubr.bf16.mxu0 0
    %4994 = vmatmul.mubr.bf16.gmra.mrb[0].mxu0 %v4869
    %v4995 = vpop.f32.mrb[0].mxu0
    %v4996 = vadd.f32 %v47, %v4995
    %v4997 = vpop.f32.mrb[0].mxu0
    %v4998 = vpop.f32.mrb[0].mxu0
    %v4999 = vadd.f32 %v47, %v4998
    %v5000 = vpop.f32.mrb[0].mxu0
    %5001 = vmatprep.mubr.bf16.mxu0 0
    %5002 = vmatmul.mubr.bf16.gmra.mrb[0].mxu0 %v4872
    %v5003 = vpop.f32.mrb[0].mxu0
    %v5004 = vadd.f32 %v47, %v5003
    %v5005 = vpop.f32.mrb[0].mxu0
    %v5006 = vpop.f32.mrb[0].mxu0
    %v5007 = vadd.f32 %v47, %v5006
    %v5008 = vpop.f32.mrb[0].mxu0
    %5009 = vmatprep.mubr.bf16.mxu0 0
    %5010 = vmatmul.mubr.bf16.gmra.mrb[0].mxu0 %v4875
    %v5011 = vpop.f32.mrb[0].mxu0
    %v5012 = vadd.f32 %v47, %v5011
    %v5013 = vpop.f32.mrb[0].mxu0
    %v5014 = vpop.f32.mrb[0].mxu0
    %v5015 = vadd.f32 %v47, %v5014
    %v5016 = vpop.f32.mrb[0].mxu0
    %5017 = vmatprep.mubr.bf16.mxu0 0
    %5018 = vmatmul.mubr.bf16.gmra.mrb[0].mxu0 %v4878
    %v5019 = vpop.f32.mrb[0].mxu0
    %v5020 = vadd.f32 %v47, %v5019
    %v5021 = vpop.f32.mrb[0].mxu0
    %v5022 = vpop.f32.mrb[0].mxu0
    %v5023 = vadd.f32 %v47, %v5022
    %v5024 = vpop.f32.mrb[0].mxu0
    %5025 = vmatprep.mubr.bf16.mxu0 0
    %5026 = vmatmul.mubr.bf16.gmra.mrb[0].mxu0 %v4881
    %v5027 = vpop.f32.mrb[0].mxu0
    %v5028 = vadd.f32 %v47, %v5027
    %v5029 = vpop.f32.mrb[0].mxu0
    %v5030 = vpop.f32.mrb[0].mxu0
    %v5031 = vadd.f32 %v47, %v5030
    %v5032 = vpop.f32.mrb[0].mxu0
    %5033 = vmatprep.mubr.bf16.mxu0 0
    %5034 = vmatmul.mubr.bf16.gmra.mrb[0].mxu0 %v4884
    %v5035 = vpop.f32.mrb[0].mxu0
    %v5036 = vadd.f32 %v47, %v5035
    %v5037 = vpop.f32.mrb[0].mxu0
    %v5038 = vpop.f32.mrb[0].mxu0
    %v5039 = vadd.f32 %v47, %v5038
    %v5040 = vpop.f32.mrb[0].mxu0
    %5041 = vmatprep.mubr.bf16.mxu0 0
    %5042 = vmatmul.mubr.bf16.gmra.mrb[0].mxu0 %v4887
    %v5043 = vpop.f32.mrb[0].mxu0
    %v5044 = vadd.f32 %v47, %v5043
    %v5045 = vpop.f32.mrb[0].mxu0
    %v5046 = vpop.f32.mrb[0].mxu0
    %v5047 = vadd.f32 %v47, %v5046
    %v5048 = vpop.f32.mrb[0].mxu0
    %5049 = vdwg.mxu0
    %v5050 = vmax.f32 %v4924, 0.0
    %v5051 = vmax.f32 %v4927, 0.0
    %v5052 = vmax.f32 %v4932, 0.0
    %v5053 = vmax.f32 %v4935, 0.0
    %v5054 = vmax.f32 %v4940, 0.0
    %v5055 = vmax.f32 %v4943, 0.0
    %v5056 = vmax.f32 %v4948, 0.0
    %v5057 = vmax.f32 %v4951, 0.0
    %v5058 = vmax.f32 %v4956, 0.0
    %v5059 = vmax.f32 %v4959, 0.0
    %v5060 = vmax.f32 %v4964, 0.0
    %v5061 = vmax.f32 %v4967, 0.0
    %v5062 = vmax.f32 %v4972, 0.0
    %v5063 = vmax.f32 %v4975, 0.0
    %v5064 = vmax.f32 %v4980, 0.0
    %v5065 = vmax.f32 %v4983, 0.0
    %v5066 = vmax.f32 %v4988, 0.0
    %v5067 = vmax.f32 %v4991, 0.0
    %v5068 = vmax.f32 %v4996, 0.0
    %v5069 = vmax.f32 %v4999, 0.0
    %v5070 = vmax.f32 %v5004, 0.0
    %v5071 = vmax.f32 %v5007, 0.0
    %v5072 = vmax.f32 %v5012, 0.0
    %v5073 = vmax.f32 %v5015, 0.0
    %v5074 = vmax.f32 %v5020, 0.0
    %v5075 = vmax.f32 %v5023, 0.0
    %v5076 = vmax.f32 %v5028, 0.0
    %v5077 = vmax.f32 %v5031, 0.0
    %v5078 = vmax.f32 %v5036, 0.0
    %v5079 = vmax.f32 %v5039, 0.0
    %v5080 = vmax.f32 %v5044, 0.0
    %v5081 = vmax.f32 %v5047, 0.0
    %v5082 = vadd.f32 %v5050, %v5051
    %v5083 = vadd.f32 %v5082, %v5052
    %v5084 = vadd.f32 %v5083, %v5053
    %v5085 = vadd.f32 %v5084, %v5054
    %v5086 = vadd.f32 %v5085, %v5055
    %v5087 = vadd.f32 %v5086, %v5056
    %v5088 = vadd.f32 %v5087, %v5057
    %v5089 = vadd.f32 %v5088, %v5058
    %v5090 = vadd.f32 %v5089, %v5059
    %v5091 = vadd.f32 %v5090, %v5060
    %v5092 = vadd.f32 %v5091, %v5061
    %v5093 = vadd.f32 %v5092, %v5062
    %v5094 = vadd.f32 %v5093, %v5063
    %v5095 = vadd.f32 %v5094, %v5064
    %v5096 = vadd.f32 %v5095, %v5065
    %v5097 = vadd.f32 %v5096, %v5066
    %v5098 = vadd.f32 %v5097, %v5067
    %v5099 = vadd.f32 %v5098, %v5068
    %v5100 = vadd.f32 %v5099, %v5069
    %v5101 = vadd.f32 %v5100, %v5070
    %v5102 = vadd.f32 %v5101, %v5071
    %v5103 = vadd.f32 %v5102, %v5072
    %v5104 = vadd.f32 %v5103, %v5073
    %v5105 = vadd.f32 %v5104, %v5074
    %v5106 = vadd.f32 %v5105, %v5075
    %v5107 = vadd.f32 %v5106, %v5076
    %v5108 = vadd.f32 %v5107, %v5077
    %v5109 = vadd.f32 %v5108, %v5078
    %v5110 = vadd.f32 %v5109, %v5079
    %v5111 = vadd.f32 %v5110, %v5080
    %v5112 = vadd.f32 %v5111, %v5081
    %v5113 = vrot.slane %v5112, 4
    %v5114 = vadd.f32 %v5112, %v5113
    %v5115 = vrot.slane %v5114, 2
    %v5116 = vadd.f32 %v5114, %v5115
    %v5117 = vrot.slane %v5116, 1
    %v5118 = vadd.f32 %v5116, %v5117
    %v5119 = vmul.f32 %v5118, 0.00390625
    %5120 = vst [vmem:[#allocation2 + $0xf] sm:$0x1] %v5119
    %v5121 = vld [vmem:[#allocation2] sm:$0xff]
    %v5122 = vld [vmem:[#allocation2 + $0x8] sm:$0xff]
    %v5123 = vld [vmem:[%s8] ss:$8 sm:$0x3]
    %s5124 = scalar_lea.vmem %s8, 1
    %v5125 = vld [vmem:[%s5124] ss:$8 sm:$0x3]
    %s5126 = scalar_lea.vmem %s8, 2
    %v5127 = vld [vmem:[%s5126] ss:$8 sm:$0x3]
    %s5128 = scalar_lea.vmem %s8, 3
    %v5129 = vld [vmem:[%s5128] ss:$8 sm:$0x3]
    %s5130 = scalar_lea.vmem %s8, 4
    %v5131 = vld [vmem:[%s5130] ss:$8 sm:$0x3]
    %s5132 = scalar_lea.vmem %s8, 5
    %v5133 = vld [vmem:[%s5132] ss:$8 sm:$0x3]
    %s5134 = scalar_lea.vmem %s8, 6
    %v5135 = vld [vmem:[%s5134] ss:$8 sm:$0x3]
    %s5136 = scalar_lea.vmem %s8, 7
    %v5137 = vld [vmem:[%s5136] ss:$8 sm:$0x3]
    %v5138 = vld [vmem:[%s9] sm:$0x1]
    %v5139 = vld [vmem:[%s9 + $0x1] sm:$0x1]
    %v5140 = vld [vmem:[%s9 + $0x2] sm:$0x1]
    %v5141 = vpack.c.bf16 %v5122, %v5121
    %v5142 = vld [vmem:[%s3] sm:$0xff]
    %v5143 = vld [vmem:[%s3 + $0x8] sm:$0xff]
    %v5144 = vld [vmem:[%s3 + $0x10] sm:$0xff]
    %v5145 = vld [vmem:[%s3 + $0x18] sm:$0xff]
    %v5146 = vld [vmem:[%s3 + $0x20] sm:$0xff]
    %v5147 = vld [vmem:[%s3 + $0x28] sm:$0xff]
    %v5148 = vld [vmem:[%s3 + $0x30] sm:$0xff]
    %v5149 = vld [vmem:[%s3 + $0x38] sm:$0xff]
    %v5150 = vld [vmem:[%s3 + $0x40] sm:$0xff]
    %v5151 = vld [vmem:[%s3 + $0x48] sm:$0xff]
    %v5152 = vld [vmem:[%s3 + $0x50] sm:$0xff]
    %v5153 = vld [vmem:[%s3 + $0x58] sm:$0xff]
    %v5154 = vld [vmem:[%s3 + $0x60] sm:$0xff]
    %v5155 = vld [vmem:[%s3 + $0x68] sm:$0xff]
    %v5156 = vld [vmem:[%s3 + $0x70] sm:$0xff]
    %v5157 = vld [vmem:[%s3 + $0x78] sm:$0xff]
    %v5159 = vlaneseq
    %v5160 = vshrl.u32 %v5159, 7
    %v5161 = vsub.s32 0, %v5160
    %v5162 = vrot.slane %v5123, %v5161
    %v5163 = vlaneseq
    %v5164 = vshrl.u32 %v5163, 7
    %v5165 = vsub.s32 1, %v5164
    %v5166 = vrot.slane %v5123, %v5165
    %v5185 = vunpack.c.l.b16 %v5142
    %v5186 = vunpack.c.h.b16 %v5142
    %v5187 = vunpack.c.l.b16 %v5143
    %v5188 = vunpack.c.h.b16 %v5143
    %v5189 = vunpack.c.l.b16 %v5144
    %v5190 = vunpack.c.h.b16 %v5144
    %v5191 = vunpack.c.l.b16 %v5145
    %v5192 = vunpack.c.h.b16 %v5145
    %v5193 = vunpack.c.l.b16 %v5146
    %v5194 = vunpack.c.h.b16 %v5146
    %v5195 = vunpack.c.l.b16 %v5147
    %v5196 = vunpack.c.h.b16 %v5147
    %v5197 = vunpack.c.l.b16 %v5148
    %v5198 = vunpack.c.h.b16 %v5148
    %v5199 = vunpack.c.l.b16 %v5149
    %v5200 = vunpack.c.h.b16 %v5149
    %v5201 = vunpack.c.l.b16 %v5150
    %v5202 = vunpack.c.h.b16 %v5150
    %v5203 = vunpack.c.l.b16 %v5151
    %v5204 = vunpack.c.h.b16 %v5151
    %v5205 = vunpack.c.l.b16 %v5152
    %v5206 = vunpack.c.h.b16 %v5152
    %v5207 = vunpack.c.l.b16 %v5153
    %v5208 = vunpack.c.h.b16 %v5153
    %v5209 = vunpack.c.l.b16 %v5154
    %v5210 = vunpack.c.h.b16 %v5154
    %v5211 = vunpack.c.l.b16 %v5155
    %v5212 = vunpack.c.h.b16 %v5155
    %v5213 = vunpack.c.l.b16 %v5156
    %v5214 = vunpack.c.h.b16 %v5156
    %v5215 = vunpack.c.l.b16 %v5157
    %v5216 = vunpack.c.h.b16 %v5157
    %v5217 = vpack.c.b16 %v5187, %v5185
    %v5218 = vpack.c.b16 %v5188, %v5186
    %v5219 = vpack.c.b16 %v5191, %v5189
    %v5220 = vpack.c.b16 %v5192, %v5190
    %v5221 = vpack.c.b16 %v5195, %v5193
    %v5222 = vpack.c.b16 %v5196, %v5194
    %v5223 = vpack.c.b16 %v5199, %v5197
    %v5224 = vpack.c.b16 %v5200, %v5198
    %v5225 = vpack.c.b16 %v5203, %v5201
    %v5226 = vpack.c.b16 %v5204, %v5202
    %v5227 = vpack.c.b16 %v5207, %v5205
    %v5228 = vpack.c.b16 %v5208, %v5206
    %v5229 = vpack.c.b16 %v5211, %v5209
    %v5230 = vpack.c.b16 %v5212, %v5210
    %v5231 = vpack.c.b16 %v5215, %v5213
    %v5232 = vpack.c.b16 %v5216, %v5214
    %5249 = vmatprep.subr.bf16.mxu0 %v5218
    %5250 = vmatpush1.bf16.msra.mxu0 %v5217
    %5251 = vmatprep.subr.bf16.mxu0 %v5220
    %5252 = vmatpush1.bf16.msra.mxu0 %v5219
    %5253 = vmatprep.subr.bf16.mxu0 %v5222
    %5254 = vmatpush1.bf16.msra.mxu0 %v5221
    %5255 = vmatprep.subr.bf16.mxu0 %v5224
    %5256 = vmatpush1.bf16.msra.mxu0 %v5223
    %5257 = vmatprep.subr.bf16.mxu0 %v5226
    %5258 = vmatpush1.bf16.msra.mxu0 %v5225
    %5259 = vmatprep.subr.bf16.mxu0 %v5228
    %5260 = vmatpush1.bf16.msra.mxu0 %v5227
    %5261 = vmatprep.subr.bf16.mxu0 %v5230
    %5262 = vmatpush1.bf16.msra.mxu0 %v5229
    %5263 = vmatprep.subr.bf16.mxu0 %v5232
    %5264 = vmatpush1.bf16.msra.mxu0 %v5231
    %5265 = vmatprep.subr.bf16.mxu0 0
    %5266 = vmatpush1.bf16.msra.mxu0 0
    %5267 = vmatprep.subr.bf16.mxu0 0
    %5268 = vmatpush1.bf16.msra.mxu0 0
    %5269 = vmatprep.subr.bf16.mxu0 0
    %5270 = vmatpush1.bf16.msra.mxu0 0
    %5271 = vmatprep.subr.bf16.mxu0 0
    %5272 = vmatpush1.bf16.msra.mxu0 0
    %5273 = vmatprep.subr.bf16.mxu0 0
    %5274 = vmatpush1.bf16.msra.mxu0 0
    %5275 = vmatprep.subr.bf16.mxu0 0
    %5276 = vmatpush1.bf16.msra.mxu0 0
    %5277 = vmatprep.subr.bf16.mxu0 0
    %5278 = vmatpush1.bf16.msra.mxu0 0
    %5279 = vmatprep.subr.bf16.mxu0 0
    %5280 = vmatpush1.bf16.msra.mxu0 0
    %5281 = vmatprep.mubr.bf16.mxu0 0
    %5282 = vmatmul.mubr.bf16.gmra.mrb[0].mxu0 %v5141
    %v5283 = vpop.f32.mrb[0].mxu0
    %v5284 = vadd.f32 %v5162, %v5283
    %v5285 = vpop.f32.mrb[0].mxu0
    %v5286 = vadd.f32 %v5166, %v5285
    %v5287 = vpop.f32.mrb[0].mxu0
    %v5288 = vadd.f32 %v5162, %v5287
    %v5289 = vpop.f32.mrb[0].mxu0
    %v5290 = vadd.f32 %v5166, %v5289
    %5291 = vdwg.mxu0
    %v5292 = vrot.slane %v5284, 4
    %v5293 = vadd.f32 %v5284, %v5292
    %v5294 = vrot.slane %v5293, 2
    %v5295 = vadd.f32 %v5293, %v5294
    %v5296 = vrot.slane %v5295, 1
    %v5297 = vadd.f32 %v5295, %v5296
    %v5298 = vrot.slane %v5286, 4
    %v5299 = vadd.f32 %v5286, %v5298
    %v5300 = vrot.slane %v5299, 2
    %v5301 = vadd.f32 %v5299, %v5300
    %v5302 = vrot.slane %v5301, 1
    %v5303 = vadd.f32 %v5301, %v5302
    %v5304 = vrot.slane %v5288, 4
    %v5305 = vadd.f32 %v5288, %v5304
    %v5306 = vrot.slane %v5305, 2
    %v5307 = vadd.f32 %v5305, %v5306
    %v5308 = vrot.slane %v5307, 1
    %v5309 = vadd.f32 %v5307, %v5308
    %v5310 = vrot.slane %v5290, 4
    %v5311 = vadd.f32 %v5290, %v5310
    %v5312 = vrot.slane %v5311, 2
    %v5313 = vadd.f32 %v5311, %v5312
    %v5314 = vrot.slane %v5313, 1
    %v5315 = vadd.f32 %v5313, %v5314
    %v5316 = vrcp.pop 8.0
    %v5317 = vmul.f32 %v5297, %v5316
    %v5318 = vmul.f32 %v5303, %v5316
    %v5319 = vmul.f32 %v5309, %v5316
    %v5320 = vmul.f32 %v5315, %v5316
    %v5321 = vsub.f32 %v5284, %v5317
    %v5322 = vsub.f32 %v5286, %v5318
    %v5323 = vsub.f32 %v5288, %v5319
    %v5324 = vsub.f32 %v5290, %v5320
    %v5325 = vmul.f32 %v5321, %v5321
    %v5326 = vmul.f32 %v5322, %v5322
    %v5327 = vmul.f32 %v5323, %v5323
    %v5328 = vmul.f32 %v5324, %v5324
    %v5329 = vrot.slane %v5325, 4
    %v5330 = vadd.f32 %v5325, %v5329
    %v5331 = vrot.slane %v5330, 2
    %v5332 = vadd.f32 %v5330, %v5331
    %v5333 = vrot.slane %v5332, 1
    %v5334 = vadd.f32 %v5332, %v5333
    %v5335 = vrot.slane %v5326, 4
    %v5336 = vadd.f32 %v5326, %v5335
    %v5337 = vrot.slane %v5336, 2
    %v5338 = vadd.f32 %v5336, %v5337
    %v5339 = vrot.slane %v5338, 1
    %v5340 = vadd.f32 %v5338, %v5339
    %v5341 = vrot.slane %v5327, 4
    %v5342 = vadd.f32 %v5327, %v5341
    %v5343 = vrot.slane %v5342, 2
    %v5344 = vadd.f32 %v5342, %v5343
    %v5345 = vrot.slane %v5344, 1
    %v5346 = vadd.f32 %v5344, %v5345
    %v5347 = vrot.slane %v5328, 4
    %v5348 = vadd.f32 %v5328, %v5347
    %v5349 = vrot.slane %v5348, 2
    %v5350 = vadd.f32 %v5348, %v5349
    %v5351 = vrot.slane %v5350, 1
    %v5352 = vadd.f32 %v5350, %v5351
    %v5353 = vmul.f32 %v5334, %v5316
    %v5354 = vmul.f32 %v5340, %v5316
    %v5355 = vmul.f32 %v5346, %v5316
    %v5356 = vmul.f32 %v5352, %v5316
    %v5357 = vadd.f32 %v5353, 1e-05
    %v5358 = vadd.f32 %v5354, 1e-05
    %v5359 = vadd.f32 %v5355, 1e-05
    %v5360 = vadd.f32 %v5356, 1e-05
    %v5361 = vrsqrt.pop %v5357
    %v5362 = vrsqrt.pop %v5358
    %v5363 = vrsqrt.pop %v5359
    %v5364 = vrsqrt.pop %v5360
    %v5365 = vmul.f32 %v5321, %v5361
    %v5366 = vmul.f32 %v5322, %v5362
    %v5367 = vmul.f32 %v5323, %v5363
    %v5368 = vmul.f32 %v5324, %v5364
    %v5370 = vlaneseq
    %v5371 = vshrl.u32 %v5370, 7
    %v5372 = vsub.s32 0, %v5371
    %v5373 = vrot.slane %v5125, %v5372
    %v5374 = vlaneseq
    %v5375 = vshrl.u32 %v5374, 7
    %v5376 = vsub.s32 1, %v5375
    %v5377 = vrot.slane %v5125, %v5376
    %v5380 = vmul.f32 %v5365, %v5373
    %v5381 = vmul.f32 %v5366, %v5377
    %v5382 = vmul.f32 %v5367, %v5373
    %v5383 = vmul.f32 %v5368, %v5377
    %v5385 = vlaneseq
    %v5386 = vshrl.u32 %v5385, 7
    %v5387 = vsub.s32 0, %v5386
    %v5388 = vrot.slane %v5127, %v5387
    %v5389 = vlaneseq
    %v5390 = vshrl.u32 %v5389, 7
    %v5391 = vsub.s32 1, %v5390
    %v5392 = vrot.slane %v5127, %v5391
    %v5395 = vadd.f32 %v5380, %v5388
    %v5396 = vadd.f32 %v5381, %v5392
    %v5397 = vadd.f32 %v5382, %v5388
    %v5398 = vadd.f32 %v5383, %v5392
    %v5399 = vmax.f32 %v5395, 0.0
    %v5400 = vmax.f32 %v5396, 0.0
    %v5401 = vmax.f32 %v5397, 0.0
    %v5402 = vmax.f32 %v5398, 0.0
    %v5403 = vpack.c.bf16 %v5401, %v5399
    %v5404 = vpack.c.bf16 %v5402, %v5400
    %v5405 = vld [vmem:[%s4] sm:$0xff]
    %v5406 = vld [vmem:[%s4 + $0x8] sm:$0xff]
    %v5407 = vld [vmem:[%s4 + $0x10] sm:$0xff]
    %v5408 = vld [vmem:[%s4 + $0x18] sm:$0xff]
    %v5409 = vld [vmem:[%s4 + $0x20] sm:$0xff]
    %v5410 = vld [vmem:[%s4 + $0x28] sm:$0xff]
    %v5411 = vld [vmem:[%s4 + $0x30] sm:$0xff]
    %v5412 = vld [vmem:[%s4 + $0x38] sm:$0xff]
    %v5413 = vld [vmem:[%s4 + $0x40] sm:$0xff]
    %v5414 = vld [vmem:[%s4 + $0x48] sm:$0xff]
    %v5415 = vld [vmem:[%s4 + $0x50] sm:$0xff]
    %v5416 = vld [vmem:[%s4 + $0x58] sm:$0xff]
    %v5417 = vld [vmem:[%s4 + $0x60] sm:$0xff]
    %v5418 = vld [vmem:[%s4 + $0x68] sm:$0xff]
    %v5419 = vld [vmem:[%s4 + $0x70] sm:$0xff]
    %v5420 = vld [vmem:[%s4 + $0x78] sm:$0xff]
    %v5421 = vld [vmem:[%s4 + $0x80] sm:$0xff]
    %v5422 = vld [vmem:[%s4 + $0x88] sm:$0xff]
    %v5423 = vld [vmem:[%s4 + $0x90] sm:$0xff]
    %v5424 = vld [vmem:[%s4 + $0x98] sm:$0xff]
    %v5425 = vld [vmem:[%s4 + $0xa0] sm:$0xff]
    %v5426 = vld [vmem:[%s4 + $0xa8] sm:$0xff]
    %v5427 = vld [vmem:[%s4 + $0xb0] sm:$0xff]
    %v5428 = vld [vmem:[%s4 + $0xb8] sm:$0xff]
    %v5429 = vld [vmem:[%s4 + $0xc0] sm:$0xff]
    %v5430 = vld [vmem:[%s4 + $0xc8] sm:$0xff]
    %v5431 = vld [vmem:[%s4 + $0xd0] sm:$0xff]
    %v5432 = vld [vmem:[%s4 + $0xd8] sm:$0xff]
    %v5433 = vld [vmem:[%s4 + $0xe0] sm:$0xff]
    %v5434 = vld [vmem:[%s4 + $0xe8] sm:$0xff]
    %v5435 = vld [vmem:[%s4 + $0xf0] sm:$0xff]
    %v5436 = vld [vmem:[%s4 + $0xf8] sm:$0xff]
    %v5438 = vlaneseq
    %v5439 = vshrl.u32 %v5438, 7
    %v5440 = vsub.s32 0, %v5439
    %v5441 = vrot.slane %v5129, %v5440
    %v5442 = vlaneseq
    %v5443 = vshrl.u32 %v5442, 7
    %v5444 = vsub.s32 1, %v5443
    %v5445 = vrot.slane %v5129, %v5444
    %v5480 = vunpack.c.l.b16 %v5405
    %v5481 = vunpack.c.h.b16 %v5405
    %v5482 = vunpack.c.l.b16 %v5406
    %v5483 = vunpack.c.h.b16 %v5406
    %v5484 = vunpack.c.l.b16 %v5407
    %v5485 = vunpack.c.h.b16 %v5407
    %v5486 = vunpack.c.l.b16 %v5408
    %v5487 = vunpack.c.h.b16 %v5408
    %v5488 = vunpack.c.l.b16 %v5409
    %v5489 = vunpack.c.h.b16 %v5409
    %v5490 = vunpack.c.l.b16 %v5410
    %v5491 = vunpack.c.h.b16 %v5410
    %v5492 = vunpack.c.l.b16 %v5411
    %v5493 = vunpack.c.h.b16 %v5411
    %v5494 = vunpack.c.l.b16 %v5412
    %v5495 = vunpack.c.h.b16 %v5412
    %v5496 = vunpack.c.l.b16 %v5413
    %v5497 = vunpack.c.h.b16 %v5413
    %v5498 = vunpack.c.l.b16 %v5414
    %v5499 = vunpack.c.h.b16 %v5414
    %v5500 = vunpack.c.l.b16 %v5415
    %v5501 = vunpack.c.h.b16 %v5415
    %v5502 = vunpack.c.l.b16 %v5416
    %v5503 = vunpack.c.h.b16 %v5416
    %v5504 = vunpack.c.l.b16 %v5417
    %v5505 = vunpack.c.h.b16 %v5417
    %v5506 = vunpack.c.l.b16 %v5418
    %v5507 = vunpack.c.h.b16 %v5418
    %v5508 = vunpack.c.l.b16 %v5419
    %v5509 = vunpack.c.h.b16 %v5419
    %v5510 = vunpack.c.l.b16 %v5420
    %v5511 = vunpack.c.h.b16 %v5420
    %v5512 = vunpack.c.l.b16 %v5421
    %v5513 = vunpack.c.h.b16 %v5421
    %v5514 = vunpack.c.l.b16 %v5422
    %v5515 = vunpack.c.h.b16 %v5422
    %v5516 = vunpack.c.l.b16 %v5423
    %v5517 = vunpack.c.h.b16 %v5423
    %v5518 = vunpack.c.l.b16 %v5424
    %v5519 = vunpack.c.h.b16 %v5424
    %v5520 = vunpack.c.l.b16 %v5425
    %v5521 = vunpack.c.h.b16 %v5425
    %v5522 = vunpack.c.l.b16 %v5426
    %v5523 = vunpack.c.h.b16 %v5426
    %v5524 = vunpack.c.l.b16 %v5427
    %v5525 = vunpack.c.h.b16 %v5427
    %v5526 = vunpack.c.l.b16 %v5428
    %v5527 = vunpack.c.h.b16 %v5428
    %v5528 = vunpack.c.l.b16 %v5429
    %v5529 = vunpack.c.h.b16 %v5429
    %v5530 = vunpack.c.l.b16 %v5430
    %v5531 = vunpack.c.h.b16 %v5430
    %v5532 = vunpack.c.l.b16 %v5431
    %v5533 = vunpack.c.h.b16 %v5431
    %v5534 = vunpack.c.l.b16 %v5432
    %v5535 = vunpack.c.h.b16 %v5432
    %v5536 = vunpack.c.l.b16 %v5433
    %v5537 = vunpack.c.h.b16 %v5433
    %v5538 = vunpack.c.l.b16 %v5434
    %v5539 = vunpack.c.h.b16 %v5434
    %v5540 = vunpack.c.l.b16 %v5435
    %v5541 = vunpack.c.h.b16 %v5435
    %v5542 = vunpack.c.l.b16 %v5436
    %v5543 = vunpack.c.h.b16 %v5436
    %v5544 = vpack.c.b16 %v5482, %v5480
    %v5545 = vpack.c.b16 %v5483, %v5481
    %v5546 = vpack.c.b16 %v5486, %v5484
    %v5547 = vpack.c.b16 %v5487, %v5485
    %v5548 = vpack.c.b16 %v5490, %v5488
    %v5549 = vpack.c.b16 %v5491, %v5489
    %v5550 = vpack.c.b16 %v5494, %v5492
    %v5551 = vpack.c.b16 %v5495, %v5493
    %v5552 = vpack.c.b16 %v5498, %v5496
    %v5553 = vpack.c.b16 %v5499, %v5497
    %v5554 = vpack.c.b16 %v5502, %v5500
    %v5555 = vpack.c.b16 %v5503, %v5501
    %v5556 = vpack.c.b16 %v5506, %v5504
    %v5557 = vpack.c.b16 %v5507, %v5505
    %v5558 = vpack.c.b16 %v5510, %v5508
    %v5559 = vpack.c.b16 %v5511, %v5509
    %v5560 = vpack.c.b16 %v5514, %v5512
    %v5561 = vpack.c.b16 %v5515, %v5513
    %v5562 = vpack.c.b16 %v5518, %v5516
    %v5563 = vpack.c.b16 %v5519, %v5517
    %v5564 = vpack.c.b16 %v5522, %v5520
    %v5565 = vpack.c.b16 %v5523, %v5521
    %v5566 = vpack.c.b16 %v5526, %v5524
    %v5567 = vpack.c.b16 %v5527, %v5525
    %v5568 = vpack.c.b16 %v5530, %v5528
    %v5569 = vpack.c.b16 %v5531, %v5529
    %v5570 = vpack.c.b16 %v5534, %v5532
    %v5571 = vpack.c.b16 %v5535, %v5533
    %v5572 = vpack.c.b16 %v5538, %v5536
    %v5573 = vpack.c.b16 %v5539, %v5537
    %v5574 = vpack.c.b16 %v5542, %v5540
    %v5575 = vpack.c.b16 %v5543, %v5541
    %5608 = vmatprep.subr.bf16.mxu0 %v5545
    %5609 = vmatpush1.bf16.msra.mxu0 %v5544
    %5610 = vmatprep.subr.bf16.mxu0 %v5547
    %5611 = vmatpush1.bf16.msra.mxu0 %v5546
    %5612 = vmatprep.subr.bf16.mxu0 %v5549
    %5613 = vmatpush1.bf16.msra.mxu0 %v5548
    %5614 = vmatprep.subr.bf16.mxu0 %v5551
    %5615 = vmatpush1.bf16.msra.mxu0 %v5550
    %5616 = vmatprep.subr.bf16.mxu0 %v5553
    %5617 = vmatpush1.bf16.msra.mxu0 %v5552
    %5618 = vmatprep.subr.bf16.mxu0 %v5555
    %5619 = vmatpush1.bf16.msra.mxu0 %v5554
    %5620 = vmatprep.subr.bf16.mxu0 %v5557
    %5621 = vmatpush1.bf16.msra.mxu0 %v5556
    %5622 = vmatprep.subr.bf16.mxu0 %v5559
    %5623 = vmatpush1.bf16.msra.mxu0 %v5558
    %5624 = vmatprep.subr.bf16.mxu0 %v5561
    %5625 = vmatpush1.bf16.msra.mxu0 %v5560
    %5626 = vmatprep.subr.bf16.mxu0 %v5563
    %5627 = vmatpush1.bf16.msra.mxu0 %v5562
    %5628 = vmatprep.subr.bf16.mxu0 %v5565
    %5629 = vmatpush1.bf16.msra.mxu0 %v5564
    %5630 = vmatprep.subr.bf16.mxu0 %v5567
    %5631 = vmatpush1.bf16.msra.mxu0 %v5566
    %5632 = vmatprep.subr.bf16.mxu0 %v5569
    %5633 = vmatpush1.bf16.msra.mxu0 %v5568
    %5634 = vmatprep.subr.bf16.mxu0 %v5571
    %5635 = vmatpush1.bf16.msra.mxu0 %v5570
    %5636 = vmatprep.subr.bf16.mxu0 %v5573
    %5637 = vmatpush1.bf16.msra.mxu0 %v5572
    %5638 = vmatprep.subr.bf16.mxu0 %v5575
    %5639 = vmatpush1.bf16.msra.mxu0 %v5574
    %5640 = vmatprep.mubr.bf16.mxu0 %v5404
    %5641 = vmatmul.mubr.bf16.gmra.mrb[0].mxu0 %v5403
    %v5642 = vpop.f32.mrb[0].mxu0
    %v5643 = vadd.f32 %v5441, %v5642
    %v5644 = vpop.f32.mrb[0].mxu0
    %v5645 = vadd.f32 %v5445, %v5644
    %v5646 = vpop.f32.mrb[0].mxu0
    %v5647 = vadd.f32 %v5441, %v5646
    %v5648 = vpop.f32.mrb[0].mxu0
    %v5649 = vadd.f32 %v5445, %v5648
    %5650 = vdwg.mxu0
    %v5651 = vrot.slane %v5643, 4
    %v5652 = vadd.f32 %v5643, %v5651
    %v5653 = vrot.slane %v5652, 2
    %v5654 = vadd.f32 %v5652, %v5653
    %v5655 = vrot.slane %v5654, 1
    %v5656 = vadd.f32 %v5654, %v5655
    %v5657 = vrot.slane %v5645, 4
    %v5658 = vadd.f32 %v5645, %v5657
    %v5659 = vrot.slane %v5658, 2
    %v5660 = vadd.f32 %v5658, %v5659
    %v5661 = vrot.slane %v5660, 1
    %v5662 = vadd.f32 %v5660, %v5661
    %v5663 = vrot.slane %v5647, 4
    %v5664 = vadd.f32 %v5647, %v5663
    %v5665 = vrot.slane %v5664, 2
    %v5666 = vadd.f32 %v5664, %v5665
    %v5667 = vrot.slane %v5666, 1
    %v5668 = vadd.f32 %v5666, %v5667
    %v5669 = vrot.slane %v5649, 4
    %v5670 = vadd.f32 %v5649, %v5669
    %v5671 = vrot.slane %v5670, 2
    %v5672 = vadd.f32 %v5670, %v5671
    %v5673 = vrot.slane %v5672, 1
    %v5674 = vadd.f32 %v5672, %v5673
    %v5675 = vmul.f32 %v5656, %v5316
    %v5676 = vmul.f32 %v5662, %v5316
    %v5677 = vmul.f32 %v5668, %v5316
    %v5678 = vmul.f32 %v5674, %v5316
    %v5679 = vsub.f32 %v5643, %v5675
    %v5680 = vsub.f32 %v5645, %v5676
    %v5681 = vsub.f32 %v5647, %v5677
    %v5682 = vsub.f32 %v5649, %v5678
    %v5683 = vmul.f32 %v5679, %v5679
    %v5684 = vmul.f32 %v5680, %v5680
    %v5685 = vmul.f32 %v5681, %v5681
    %v5686 = vmul.f32 %v5682, %v5682
    %v5687 = vrot.slane %v5683, 4
    %v5688 = vadd.f32 %v5683, %v5687
    %v5689 = vrot.slane %v5688, 2
    %v5690 = vadd.f32 %v5688, %v5689
    %v5691 = vrot.slane %v5690, 1
    %v5692 = vadd.f32 %v5690, %v5691
    %v5693 = vrot.slane %v5684, 4
    %v5694 = vadd.f32 %v5684, %v5693
    %v5695 = vrot.slane %v5694, 2
    %v5696 = vadd.f32 %v5694, %v5695
    %v5697 = vrot.slane %v5696, 1
    %v5698 = vadd.f32 %v5696, %v5697
    %v5699 = vrot.slane %v5685, 4
    %v5700 = vadd.f32 %v5685, %v5699
    %v5701 = vrot.slane %v5700, 2
    %v5702 = vadd.f32 %v5700, %v5701
    %v5703 = vrot.slane %v5702, 1
    %v5704 = vadd.f32 %v5702, %v5703
    %v5705 = vrot.slane %v5686, 4
    %v5706 = vadd.f32 %v5686, %v5705
    %v5707 = vrot.slane %v5706, 2
    %v5708 = vadd.f32 %v5706, %v5707
    %v5709 = vrot.slane %v5708, 1
    %v5710 = vadd.f32 %v5708, %v5709
    %v5711 = vmul.f32 %v5692, %v5316
    %v5712 = vmul.f32 %v5698, %v5316
    %v5713 = vmul.f32 %v5704, %v5316
    %v5714 = vmul.f32 %v5710, %v5316
    %v5715 = vadd.f32 %v5711, 1e-05
    %v5716 = vadd.f32 %v5712, 1e-05
    %v5717 = vadd.f32 %v5713, 1e-05
    %v5718 = vadd.f32 %v5714, 1e-05
    %v5719 = vrsqrt.pop %v5715
    %v5720 = vrsqrt.pop %v5716
    %v5721 = vrsqrt.pop %v5717
    %v5722 = vrsqrt.pop %v5718
    %v5723 = vmul.f32 %v5679, %v5719
    %v5724 = vmul.f32 %v5680, %v5720
    %v5725 = vmul.f32 %v5681, %v5721
    %v5726 = vmul.f32 %v5682, %v5722
    %v5728 = vlaneseq
    %v5729 = vshrl.u32 %v5728, 7
    %v5730 = vsub.s32 0, %v5729
    %v5731 = vrot.slane %v5131, %v5730
    %v5732 = vlaneseq
    %v5733 = vshrl.u32 %v5732, 7
    %v5734 = vsub.s32 1, %v5733
    %v5735 = vrot.slane %v5131, %v5734
    %v5738 = vmul.f32 %v5723, %v5731
    %v5739 = vmul.f32 %v5724, %v5735
    %v5740 = vmul.f32 %v5725, %v5731
    %v5741 = vmul.f32 %v5726, %v5735
    %v5743 = vlaneseq
    %v5744 = vshrl.u32 %v5743, 7
    %v5745 = vsub.s32 0, %v5744
    %v5746 = vrot.slane %v5133, %v5745
    %v5747 = vlaneseq
    %v5748 = vshrl.u32 %v5747, 7
    %v5749 = vsub.s32 1, %v5748
    %v5750 = vrot.slane %v5133, %v5749
    %v5753 = vadd.f32 %v5738, %v5746
    %v5754 = vadd.f32 %v5739, %v5750
    %v5755 = vadd.f32 %v5740, %v5746
    %v5756 = vadd.f32 %v5741, %v5750
    %v5757 = vmax.f32 %v5753, 0.0
    %v5758 = vmax.f32 %v5754, 0.0
    %v5759 = vmax.f32 %v5755, 0.0
    %v5760 = vmax.f32 %v5756, 0.0
    %v5761 = vpack.c.bf16 %v5759, %v5757
    %v5762 = vpack.c.bf16 %v5760, %v5758
    %v5763 = vld [vmem:[%s5] sm:$0xff]
    %v5764 = vld [vmem:[%s5 + $0x8] sm:$0xff]
    %v5765 = vld [vmem:[%s5 + $0x10] sm:$0xff]
    %v5766 = vld [vmem:[%s5 + $0x18] sm:$0xff]
    %v5767 = vld [vmem:[%s5 + $0x20] sm:$0xff]
    %v5768 = vld [vmem:[%s5 + $0x28] sm:$0xff]
    %v5769 = vld [vmem:[%s5 + $0x30] sm:$0xff]
    %v5770 = vld [vmem:[%s5 + $0x38] sm:$0xff]
    %v5771 = vld [vmem:[%s5 + $0x40] sm:$0xff]
    %v5772 = vld [vmem:[%s5 + $0x48] sm:$0xff]
    %v5773 = vld [vmem:[%s5 + $0x50] sm:$0xff]
    %v5774 = vld [vmem:[%s5 + $0x58] sm:$0xff]
    %v5775 = vld [vmem:[%s5 + $0x60] sm:$0xff]
    %v5776 = vld [vmem:[%s5 + $0x68] sm:$0xff]
    %v5777 = vld [vmem:[%s5 + $0x70] sm:$0xff]
    %v5778 = vld [vmem:[%s5 + $0x78] sm:$0xff]
    %v5779 = vld [vmem:[%s5 + $0x80] sm:$0xff]
    %v5780 = vld [vmem:[%s5 + $0x88] sm:$0xff]
    %v5781 = vld [vmem:[%s5 + $0x90] sm:$0xff]
    %v5782 = vld [vmem:[%s5 + $0x98] sm:$0xff]
    %v5783 = vld [vmem:[%s5 + $0xa0] sm:$0xff]
    %v5784 = vld [vmem:[%s5 + $0xa8] sm:$0xff]
    %v5785 = vld [vmem:[%s5 + $0xb0] sm:$0xff]
    %v5786 = vld [vmem:[%s5 + $0xb8] sm:$0xff]
    %v5787 = vld [vmem:[%s5 + $0xc0] sm:$0xff]
    %v5788 = vld [vmem:[%s5 + $0xc8] sm:$0xff]
    %v5789 = vld [vmem:[%s5 + $0xd0] sm:$0xff]
    %v5790 = vld [vmem:[%s5 + $0xd8] sm:$0xff]
    %v5791 = vld [vmem:[%s5 + $0xe0] sm:$0xff]
    %v5792 = vld [vmem:[%s5 + $0xe8] sm:$0xff]
    %v5793 = vld [vmem:[%s5 + $0xf0] sm:$0xff]
    %v5794 = vld [vmem:[%s5 + $0xf8] sm:$0xff]
    %v5796 = vlaneseq
    %v5797 = vshrl.u32 %v5796, 7
    %v5798 = vsub.s32 0, %v5797
    %v5799 = vrot.slane %v5135, %v5798
    %v5800 = vlaneseq
    %v5801 = vshrl.u32 %v5800, 7
    %v5802 = vsub.s32 1, %v5801
    %v5803 = vrot.slane %v5135, %v5802
    %v5838 = vunpack.c.l.b16 %v5763
    %v5839 = vunpack.c.h.b16 %v5763
    %v5840 = vunpack.c.l.b16 %v5764
    %v5841 = vunpack.c.h.b16 %v5764
    %v5842 = vunpack.c.l.b16 %v5765
    %v5843 = vunpack.c.h.b16 %v5765
    %v5844 = vunpack.c.l.b16 %v5766
    %v5845 = vunpack.c.h.b16 %v5766
    %v5846 = vunpack.c.l.b16 %v5767
    %v5847 = vunpack.c.h.b16 %v5767
    %v5848 = vunpack.c.l.b16 %v5768
    %v5849 = vunpack.c.h.b16 %v5768
    %v5850 = vunpack.c.l.b16 %v5769
    %v5851 = vunpack.c.h.b16 %v5769
    %v5852 = vunpack.c.l.b16 %v5770
    %v5853 = vunpack.c.h.b16 %v5770
    %v5854 = vunpack.c.l.b16 %v5771
    %v5855 = vunpack.c.h.b16 %v5771
    %v5856 = vunpack.c.l.b16 %v5772
    %v5857 = vunpack.c.h.b16 %v5772
    %v5858 = vunpack.c.l.b16 %v5773
    %v5859 = vunpack.c.h.b16 %v5773
    %v5860 = vunpack.c.l.b16 %v5774
    %v5861 = vunpack.c.h.b16 %v5774
    %v5862 = vunpack.c.l.b16 %v5775
    %v5863 = vunpack.c.h.b16 %v5775
    %v5864 = vunpack.c.l.b16 %v5776
    %v5865 = vunpack.c.h.b16 %v5776
    %v5866 = vunpack.c.l.b16 %v5777
    %v5867 = vunpack.c.h.b16 %v5777
    %v5868 = vunpack.c.l.b16 %v5778
    %v5869 = vunpack.c.h.b16 %v5778
    %v5870 = vunpack.c.l.b16 %v5779
    %v5871 = vunpack.c.h.b16 %v5779
    %v5872 = vunpack.c.l.b16 %v5780
    %v5873 = vunpack.c.h.b16 %v5780
    %v5874 = vunpack.c.l.b16 %v5781
    %v5875 = vunpack.c.h.b16 %v5781
    %v5876 = vunpack.c.l.b16 %v5782
    %v5877 = vunpack.c.h.b16 %v5782
    %v5878 = vunpack.c.l.b16 %v5783
    %v5879 = vunpack.c.h.b16 %v5783
    %v5880 = vunpack.c.l.b16 %v5784
    %v5881 = vunpack.c.h.b16 %v5784
    %v5882 = vunpack.c.l.b16 %v5785
    %v5883 = vunpack.c.h.b16 %v5785
    %v5884 = vunpack.c.l.b16 %v5786
    %v5885 = vunpack.c.h.b16 %v5786
    %v5886 = vunpack.c.l.b16 %v5787
    %v5887 = vunpack.c.h.b16 %v5787
    %v5888 = vunpack.c.l.b16 %v5788
    %v5889 = vunpack.c.h.b16 %v5788
    %v5890 = vunpack.c.l.b16 %v5789
    %v5891 = vunpack.c.h.b16 %v5789
    %v5892 = vunpack.c.l.b16 %v5790
    %v5893 = vunpack.c.h.b16 %v5790
    %v5894 = vunpack.c.l.b16 %v5791
    %v5895 = vunpack.c.h.b16 %v5791
    %v5896 = vunpack.c.l.b16 %v5792
    %v5897 = vunpack.c.h.b16 %v5792
    %v5898 = vunpack.c.l.b16 %v5793
    %v5899 = vunpack.c.h.b16 %v5793
    %v5900 = vunpack.c.l.b16 %v5794
    %v5901 = vunpack.c.h.b16 %v5794
    %v5902 = vpack.c.b16 %v5840, %v5838
    %v5903 = vpack.c.b16 %v5841, %v5839
    %v5904 = vpack.c.b16 %v5844, %v5842
    %v5905 = vpack.c.b16 %v5845, %v5843
    %v5906 = vpack.c.b16 %v5848, %v5846
    %v5907 = vpack.c.b16 %v5849, %v5847
    %v5908 = vpack.c.b16 %v5852, %v5850
    %v5909 = vpack.c.b16 %v5853, %v5851
    %v5910 = vpack.c.b16 %v5856, %v5854
    %v5911 = vpack.c.b16 %v5857, %v5855
    %v5912 = vpack.c.b16 %v5860, %v5858
    %v5913 = vpack.c.b16 %v5861, %v5859
    %v5914 = vpack.c.b16 %v5864, %v5862
    %v5915 = vpack.c.b16 %v5865, %v5863
    %v5916 = vpack.c.b16 %v5868, %v5866
    %v5917 = vpack.c.b16 %v5869, %v5867
    %v5918 = vpack.c.b16 %v5872, %v5870
    %v5919 = vpack.c.b16 %v5873, %v5871
    %v5920 = vpack.c.b16 %v5876, %v5874
    %v5921 = vpack.c.b16 %v5877, %v5875
    %v5922 = vpack.c.b16 %v5880, %v5878
    %v5923 = vpack.c.b16 %v5881, %v5879
    %v5924 = vpack.c.b16 %v5884, %v5882
    %v5925 = vpack.c.b16 %v5885, %v5883
    %v5926 = vpack.c.b16 %v5888, %v5886
    %v5927 = vpack.c.b16 %v5889, %v5887
    %v5928 = vpack.c.b16 %v5892, %v5890
    %v5929 = vpack.c.b16 %v5893, %v5891
    %v5930 = vpack.c.b16 %v5896, %v5894
    %v5931 = vpack.c.b16 %v5897, %v5895
    %v5932 = vpack.c.b16 %v5900, %v5898
    %v5933 = vpack.c.b16 %v5901, %v5899
    %5966 = vmatprep.subr.bf16.mxu0 %v5903
    %5967 = vmatpush1.bf16.msra.mxu0 %v5902
    %5968 = vmatprep.subr.bf16.mxu0 %v5905
    %5969 = vmatpush1.bf16.msra.mxu0 %v5904
    %5970 = vmatprep.subr.bf16.mxu0 %v5907
    %5971 = vmatpush1.bf16.msra.mxu0 %v5906
    %5972 = vmatprep.subr.bf16.mxu0 %v5909
    %5973 = vmatpush1.bf16.msra.mxu0 %v5908
    %5974 = vmatprep.subr.bf16.mxu0 %v5911
    %5975 = vmatpush1.bf16.msra.mxu0 %v5910
    %5976 = vmatprep.subr.bf16.mxu0 %v5913
    %5977 = vmatpush1.bf16.msra.mxu0 %v5912
    %5978 = vmatprep.subr.bf16.mxu0 %v5915
    %5979 = vmatpush1.bf16.msra.mxu0 %v5914
    %5980 = vmatprep.subr.bf16.mxu0 %v5917
    %5981 = vmatpush1.bf16.msra.mxu0 %v5916
    %5982 = vmatprep.subr.bf16.mxu0 %v5919
    %5983 = vmatpush1.bf16.msra.mxu0 %v5918
    %5984 = vmatprep.subr.bf16.mxu0 %v5921
    %5985 = vmatpush1.bf16.msra.mxu0 %v5920
    %5986 = vmatprep.subr.bf16.mxu0 %v5923
    %5987 = vmatpush1.bf16.msra.mxu0 %v5922
    %5988 = vmatprep.subr.bf16.mxu0 %v5925
    %5989 = vmatpush1.bf16.msra.mxu0 %v5924
    %5990 = vmatprep.subr.bf16.mxu0 %v5927
    %5991 = vmatpush1.bf16.msra.mxu0 %v5926
    %5992 = vmatprep.subr.bf16.mxu0 %v5929
    %5993 = vmatpush1.bf16.msra.mxu0 %v5928
    %5994 = vmatprep.subr.bf16.mxu0 %v5931
    %5995 = vmatpush1.bf16.msra.mxu0 %v5930
    %5996 = vmatprep.subr.bf16.mxu0 %v5933
    %5997 = vmatpush1.bf16.msra.mxu0 %v5932
    %5998 = vmatprep.mubr.bf16.mxu0 %v5762
    %5999 = vmatmul.mubr.bf16.gmra.mrb[0].mxu0 %v5761
    %v6000 = vpop.f32.mrb[0].mxu0
    %v6001 = vadd.f32 %v5799, %v6000
    %v6002 = vpop.f32.mrb[0].mxu0
    %v6003 = vadd.f32 %v5803, %v6002
    %v6004 = vpop.f32.mrb[0].mxu0
    %v6005 = vadd.f32 %v5799, %v6004
    %v6006 = vpop.f32.mrb[0].mxu0
    %v6007 = vadd.f32 %v5803, %v6006
    %6008 = vdwg.mxu0
    %v6009 = vrot.slane %v6001, 4
    %v6010 = vadd.f32 %v6001, %v6009
    %v6011 = vrot.slane %v6010, 2
    %v6012 = vadd.f32 %v6010, %v6011
    %v6013 = vrot.slane %v6012, 1
    %v6014 = vadd.f32 %v6012, %v6013
    %v6015 = vrot.slane %v6003, 4
    %v6016 = vadd.f32 %v6003, %v6015
    %v6017 = vrot.slane %v6016, 2
    %v6018 = vadd.f32 %v6016, %v6017
    %v6019 = vrot.slane %v6018, 1
    %v6020 = vadd.f32 %v6018, %v6019
    %v6021 = vrot.slane %v6005, 4
    %v6022 = vadd.f32 %v6005, %v6021
    %v6023 = vrot.slane %v6022, 2
    %v6024 = vadd.f32 %v6022, %v6023
    %v6025 = vrot.slane %v6024, 1
    %v6026 = vadd.f32 %v6024, %v6025
    %v6027 = vrot.slane %v6007, 4
    %v6028 = vadd.f32 %v6007, %v6027
    %v6029 = vrot.slane %v6028, 2
    %v6030 = vadd.f32 %v6028, %v6029
    %v6031 = vrot.slane %v6030, 1
    %v6032 = vadd.f32 %v6030, %v6031
    %v6033 = vmul.f32 %v6014, %v5316
    %v6034 = vmul.f32 %v6020, %v5316
    %v6035 = vmul.f32 %v6026, %v5316
    %v6036 = vmul.f32 %v6032, %v5316
    %v6037 = vsub.f32 %v6001, %v6033
    %v6038 = vsub.f32 %v6003, %v6034
    %v6039 = vsub.f32 %v6005, %v6035
    %v6040 = vsub.f32 %v6007, %v6036
    %v6041 = vmul.f32 %v6037, %v6037
    %v6042 = vmul.f32 %v6038, %v6038
    %v6043 = vmul.f32 %v6039, %v6039
    %v6044 = vmul.f32 %v6040, %v6040
    %v6045 = vrot.slane %v6041, 4
    %v6046 = vadd.f32 %v6041, %v6045
    %v6047 = vrot.slane %v6046, 2
    %v6048 = vadd.f32 %v6046, %v6047
    %v6049 = vrot.slane %v6048, 1
    %v6050 = vadd.f32 %v6048, %v6049
    %v6051 = vrot.slane %v6042, 4
    %v6052 = vadd.f32 %v6042, %v6051
    %v6053 = vrot.slane %v6052, 2
    %v6054 = vadd.f32 %v6052, %v6053
    %v6055 = vrot.slane %v6054, 1
    %v6056 = vadd.f32 %v6054, %v6055
    %v6057 = vrot.slane %v6043, 4
    %v6058 = vadd.f32 %v6043, %v6057
    %v6059 = vrot.slane %v6058, 2
    %v6060 = vadd.f32 %v6058, %v6059
    %v6061 = vrot.slane %v6060, 1
    %v6062 = vadd.f32 %v6060, %v6061
    %v6063 = vrot.slane %v6044, 4
    %v6064 = vadd.f32 %v6044, %v6063
    %v6065 = vrot.slane %v6064, 2
    %v6066 = vadd.f32 %v6064, %v6065
    %v6067 = vrot.slane %v6066, 1
    %v6068 = vadd.f32 %v6066, %v6067
    %v6069 = vmul.f32 %v6050, %v5316
    %v6070 = vmul.f32 %v6056, %v5316
    %v6071 = vmul.f32 %v6062, %v5316
    %v6072 = vmul.f32 %v6068, %v5316
    %v6073 = vadd.f32 %v6069, 1e-05
    %v6074 = vadd.f32 %v6070, 1e-05
    %v6075 = vadd.f32 %v6071, 1e-05
    %v6076 = vadd.f32 %v6072, 1e-05
    %v6077 = vrsqrt.pop %v6073
    %v6078 = vrsqrt.pop %v6074
    %v6079 = vrsqrt.pop %v6075
    %v6080 = vrsqrt.pop %v6076
    %v6081 = vmul.f32 %v6037, %v6077
    %v6082 = vmul.f32 %v6038, %v6078
    %v6083 = vmul.f32 %v6039, %v6079
    %v6084 = vmul.f32 %v6040, %v6080
    %v6085 = vpack.c.bf16 %v6083, %v6081
    %v6086 = vpack.c.bf16 %v6084, %v6082
    %v6087 = vld [vmem:[%s6] sm:$0xf]
    %v6088 = vld [vmem:[%s6 + $0x4] sm:$0xf]
    %v6089 = vld [vmem:[%s6 + $0x8] sm:$0xf]
    %v6090 = vld [vmem:[%s6 + $0xc] sm:$0xf]
    %v6091 = vld [vmem:[%s6 + $0x10] sm:$0xf]
    %v6092 = vld [vmem:[%s6 + $0x14] sm:$0xf]
    %v6093 = vld [vmem:[%s6 + $0x18] sm:$0xf]
    %v6094 = vld [vmem:[%s6 + $0x1c] sm:$0xf]
    %v6095 = vld [vmem:[%s6 + $0x20] sm:$0xf]
    %v6096 = vld [vmem:[%s6 + $0x24] sm:$0xf]
    %v6097 = vld [vmem:[%s6 + $0x28] sm:$0xf]
    %v6098 = vld [vmem:[%s6 + $0x2c] sm:$0xf]
    %v6099 = vld [vmem:[%s6 + $0x30] sm:$0xf]
    %v6100 = vld [vmem:[%s6 + $0x34] sm:$0xf]
    %v6101 = vld [vmem:[%s6 + $0x38] sm:$0xf]
    %v6102 = vld [vmem:[%s6 + $0x3c] sm:$0xf]
    %v6103 = vld [vmem:[%s6 + $0x40] sm:$0xf]
    %v6104 = vld [vmem:[%s6 + $0x44] sm:$0xf]
    %v6105 = vld [vmem:[%s6 + $0x48] sm:$0xf]
    %v6106 = vld [vmem:[%s6 + $0x4c] sm:$0xf]
    %v6107 = vld [vmem:[%s6 + $0x50] sm:$0xf]
    %v6108 = vld [vmem:[%s6 + $0x54] sm:$0xf]
    %v6109 = vld [vmem:[%s6 + $0x58] sm:$0xf]
    %v6110 = vld [vmem:[%s6 + $0x5c] sm:$0xf]
    %v6111 = vld [vmem:[%s6 + $0x60] sm:$0xf]
    %v6112 = vld [vmem:[%s6 + $0x64] sm:$0xf]
    %v6113 = vld [vmem:[%s6 + $0x68] sm:$0xf]
    %v6114 = vld [vmem:[%s6 + $0x6c] sm:$0xf]
    %v6115 = vld [vmem:[%s6 + $0x70] sm:$0xf]
    %v6116 = vld [vmem:[%s6 + $0x74] sm:$0xf]
    %v6117 = vld [vmem:[%s6 + $0x78] sm:$0xf]
    %v6118 = vld [vmem:[%s6 + $0x7c] sm:$0xf]
    %v6119 = vlaneseq
    %v6120 = vshrl.u32 %v6119, 7
    %v6121 = vsub.s32 0, %v6120
    %v6122 = vrot.slane %v5138, %v6121
    %v6155 = vunpack.c.l.b16 %v6087
    %v6156 = vunpack.c.l.b16 %v6088
    %v6157 = vunpack.c.l.b16 %v6089
    %v6158 = vunpack.c.l.b16 %v6090
    %v6159 = vunpack.c.l.b16 %v6091
    %v6160 = vunpack.c.l.b16 %v6092
    %v6161 = vunpack.c.l.b16 %v6093
    %v6162 = vunpack.c.l.b16 %v6094
    %v6163 = vunpack.c.l.b16 %v6095
    %v6164 = vunpack.c.l.b16 %v6096
    %v6165 = vunpack.c.l.b16 %v6097
    %v6166 = vunpack.c.l.b16 %v6098
    %v6167 = vunpack.c.l.b16 %v6099
    %v6168 = vunpack.c.l.b16 %v6100
    %v6169 = vunpack.c.l.b16 %v6101
    %v6170 = vunpack.c.l.b16 %v6102
    %v6171 = vunpack.c.l.b16 %v6103
    %v6172 = vunpack.c.l.b16 %v6104
    %v6173 = vunpack.c.l.b16 %v6105
    %v6174 = vunpack.c.l.b16 %v6106
    %v6175 = vunpack.c.l.b16 %v6107
    %v6176 = vunpack.c.l.b16 %v6108
    %v6177 = vunpack.c.l.b16 %v6109
    %v6178 = vunpack.c.l.b16 %v6110
    %v6179 = vunpack.c.l.b16 %v6111
    %v6180 = vunpack.c.l.b16 %v6112
    %v6181 = vunpack.c.l.b16 %v6113
    %v6182 = vunpack.c.l.b16 %v6114
    %v6183 = vunpack.c.l.b16 %v6115
    %v6184 = vunpack.c.l.b16 %v6116
    %v6185 = vunpack.c.l.b16 %v6117
    %v6186 = vunpack.c.l.b16 %v6118
    %v6187 = vpack.c.b16 %v6156, %v6155
    %v6188 = vpack.c.b16 %v6158, %v6157
    %v6189 = vpack.c.b16 %v6160, %v6159
    %v6190 = vpack.c.b16 %v6162, %v6161
    %v6191 = vpack.c.b16 %v6164, %v6163
    %v6192 = vpack.c.b16 %v6166, %v6165
    %v6193 = vpack.c.b16 %v6168, %v6167
    %v6194 = vpack.c.b16 %v6170, %v6169
    %v6195 = vpack.c.b16 %v6172, %v6171
    %v6196 = vpack.c.b16 %v6174, %v6173
    %v6197 = vpack.c.b16 %v6176, %v6175
    %v6198 = vpack.c.b16 %v6178, %v6177
    %v6199 = vpack.c.b16 %v6180, %v6179
    %v6200 = vpack.c.b16 %v6182, %v6181
    %v6201 = vpack.c.b16 %v6184, %v6183
    %v6202 = vpack.c.b16 %v6186, %v6185
    %6219 = vmatprep.subr.bf16.mxu0 0
    %6220 = vmatpush1.bf16.msra.mxu0 %v6187
    %6221 = vmatprep.subr.bf16.mxu0 0
    %6222 = vmatpush1.bf16.msra.mxu0 %v6188
    %6223 = vmatprep.subr.bf16.mxu0 0
    %6224 = vmatpush1.bf16.msra.mxu0 %v6189
    %6225 = vmatprep.subr.bf16.mxu0 0
    %6226 = vmatpush1.bf16.msra.mxu0 %v6190
    %6227 = vmatprep.subr.bf16.mxu0 0
    %6228 = vmatpush1.bf16.msra.mxu0 %v6191
    %6229 = vmatprep.subr.bf16.mxu0 0
    %6230 = vmatpush1.bf16.msra.mxu0 %v6192
    %6231 = vmatprep.subr.bf16.mxu0 0
    %6232 = vmatpush1.bf16.msra.mxu0 %v6193
    %6233 = vmatprep.subr.bf16.mxu0 0
    %6234 = vmatpush1.bf16.msra.mxu0 %v6194
    %6235 = vmatprep.subr.bf16.mxu0 0
    %6236 = vmatpush1.bf16.msra.mxu0 %v6195
    %6237 = vmatprep.subr.bf16.mxu0 0
    %6238 = vmatpush1.bf16.msra.mxu0 %v6196
    %6239 = vmatprep.subr.bf16.mxu0 0
    %6240 = vmatpush1.bf16.msra.mxu0 %v6197
    %6241 = vmatprep.subr.bf16.mxu0 0
    %6242 = vmatpush1.bf16.msra.mxu0 %v6198
    %6243 = vmatprep.subr.bf16.mxu0 0
    %6244 = vmatpush1.bf16.msra.mxu0 %v6199
    %6245 = vmatprep.subr.bf16.mxu0 0
    %6246 = vmatpush1.bf16.msra.mxu0 %v6200
    %6247 = vmatprep.subr.bf16.mxu0 0
    %6248 = vmatpush1.bf16.msra.mxu0 %v6201
    %6249 = vmatprep.subr.bf16.mxu0 0
    %6250 = vmatpush1.bf16.msra.mxu0 %v6202
    %6251 = vmatprep.mubr.bf16.mxu0 %v6086
    %6252 = vmatmul.mubr.bf16.gmra.mrb[0].mxu0 %v6085
    %v6253 = vpop.f32.mrb[0].mxu0
    %v6254 = vadd.f32 %v6122, %v6253
    %v6255 = vpop.f32.mrb[0].mxu0
    %v6256 = vpop.f32.mrb[0].mxu0
    %v6257 = vadd.f32 %v6122, %v6256
    %v6258 = vpop.f32.mrb[0].mxu0
    %6259 = vdwg.mxu0
    %v6260 = vrot.slane %v6254, 4
    %v6261 = vadd.f32 %v6254, %v6260
    %v6262 = vrot.slane %v6261, 2
    %v6263 = vadd.f32 %v6261, %v6262
    %v6264 = vrot.slane %v6263, 1
    %v6265 = vadd.f32 %v6263, %v6264
    %v6266 = vrot.slane %v6257, 4
    %v6267 = vadd.f32 %v6257, %v6266
    %v6268 = vrot.slane %v6267, 2
    %v6269 = vadd.f32 %v6267, %v6268
    %v6270 = vrot.slane %v6269, 1
    %v6271 = vadd.f32 %v6269, %v6270
    %v6272 = vmul.f32 %v6265, %v5316
    %v6273 = vmul.f32 %v6271, %v5316
    %v6274 = vsub.f32 %v6254, %v6272
    %v6275 = vsub.f32 %v6257, %v6273
    %v6276 = vmul.f32 %v6274, %v6274
    %v6277 = vmul.f32 %v6275, %v6275
    %v6278 = vrot.slane %v6276, 4
    %v6279 = vadd.f32 %v6276, %v6278
    %v6280 = vrot.slane %v6279, 2
    %v6281 = vadd.f32 %v6279, %v6280
    %v6282 = vrot.slane %v6281, 1
    %v6283 = vadd.f32 %v6281, %v6282
    %v6284 = vrot.slane %v6277, 4
    %v6285 = vadd.f32 %v6277, %v6284
    %v6286 = vrot.slane %v6285, 2
    %v6287 = vadd.f32 %v6285, %v6286
    %v6288 = vrot.slane %v6287, 1
    %v6289 = vadd.f32 %v6287, %v6288
    %v6290 = vmul.f32 %v6283, %v5316
    %v6291 = vmul.f32 %v6289, %v5316
    %v6292 = vadd.f32 %v6290, 1e-05
    %v6293 = vadd.f32 %v6291, 1e-05
    %v6294 = vrsqrt.pop %v6292
    %v6295 = vrsqrt.pop %v6293
    %v6296 = vmul.f32 %v6274, %v6294
    %v6297 = vmul.f32 %v6275, %v6295
    %v6298 = vlaneseq
    %v6299 = vshrl.u32 %v6298, 7
    %v6300 = vsub.s32 0, %v6299
    %v6301 = vrot.slane %v5139, %v6300
    %v6302 = vmul.f32 %v6296, %v6301
    %v6303 = vmul.f32 %v6297, %v6301
    %v6304 = vlaneseq
    %v6305 = vshrl.u32 %v6304, 7
    %v6306 = vsub.s32 0, %v6305
    %v6307 = vrot.slane %v5140, %v6306
    %v6308 = vadd.f32 %v6302, %v6307
    %v6309 = vadd.f32 %v6303, %v6307
    %v6310 = vmax.f32 %v6308, 0.0
    %v6311 = vmax.f32 %v6309, 0.0
    %v6312 = vpack.c.bf16 %v6311, %v6310
    %v6313 = vld [vmem:[%s7] sm:$0xff]
    %v6314 = vld [vmem:[%s7 + $0x8] sm:$0xff]
    %v6315 = vld [vmem:[%s7 + $0x10] sm:$0xff]
    %v6316 = vld [vmem:[%s7 + $0x18] sm:$0xff]
    %v6317 = vld [vmem:[%s7 + $0x20] sm:$0xff]
    %v6318 = vld [vmem:[%s7 + $0x28] sm:$0xff]
    %v6319 = vld [vmem:[%s7 + $0x30] sm:$0xff]
    %v6320 = vld [vmem:[%s7 + $0x38] sm:$0xff]
    %v6321 = vld [vmem:[%s7 + $0x40] sm:$0xff]
    %v6322 = vld [vmem:[%s7 + $0x48] sm:$0xff]
    %v6323 = vld [vmem:[%s7 + $0x50] sm:$0xff]
    %v6324 = vld [vmem:[%s7 + $0x58] sm:$0xff]
    %v6325 = vld [vmem:[%s7 + $0x60] sm:$0xff]
    %v6326 = vld [vmem:[%s7 + $0x68] sm:$0xff]
    %v6327 = vld [vmem:[%s7 + $0x70] sm:$0xff]
    %v6328 = vld [vmem:[%s7 + $0x78] sm:$0xff]
    %v6330 = vlaneseq
    %v6331 = vshrl.u32 %v6330, 7
    %v6332 = vsub.s32 0, %v6331
    %v6333 = vrot.slane %v5137, %v6332
    %v6334 = vlaneseq
    %v6335 = vshrl.u32 %v6334, 7
    %v6336 = vsub.s32 1, %v6335
    %v6337 = vrot.slane %v5137, %v6336
    %v6356 = vunpack.c.l.b16 %v6313
    %v6357 = vunpack.c.h.b16 %v6313
    %v6358 = vunpack.c.l.b16 %v6314
    %v6359 = vunpack.c.h.b16 %v6314
    %v6360 = vunpack.c.l.b16 %v6315
    %v6361 = vunpack.c.h.b16 %v6315
    %v6362 = vunpack.c.l.b16 %v6316
    %v6363 = vunpack.c.h.b16 %v6316
    %v6364 = vunpack.c.l.b16 %v6317
    %v6365 = vunpack.c.h.b16 %v6317
    %v6366 = vunpack.c.l.b16 %v6318
    %v6367 = vunpack.c.h.b16 %v6318
    %v6368 = vunpack.c.l.b16 %v6319
    %v6369 = vunpack.c.h.b16 %v6319
    %v6370 = vunpack.c.l.b16 %v6320
    %v6371 = vunpack.c.h.b16 %v6320
    %v6372 = vunpack.c.l.b16 %v6321
    %v6373 = vunpack.c.h.b16 %v6321
    %v6374 = vunpack.c.l.b16 %v6322
    %v6375 = vunpack.c.h.b16 %v6322
    %v6376 = vunpack.c.l.b16 %v6323
    %v6377 = vunpack.c.h.b16 %v6323
    %v6378 = vunpack.c.l.b16 %v6324
    %v6379 = vunpack.c.h.b16 %v6324
    %v6380 = vunpack.c.l.b16 %v6325
    %v6381 = vunpack.c.h.b16 %v6325
    %v6382 = vunpack.c.l.b16 %v6326
    %v6383 = vunpack.c.h.b16 %v6326
    %v6384 = vunpack.c.l.b16 %v6327
    %v6385 = vunpack.c.h.b16 %v6327
    %v6386 = vunpack.c.l.b16 %v6328
    %v6387 = vunpack.c.h.b16 %v6328
    %v6388 = vpack.c.b16 %v6358, %v6356
    %v6389 = vpack.c.b16 %v6359, %v6357
    %v6390 = vpack.c.b16 %v6362, %v6360
    %v6391 = vpack.c.b16 %v6363, %v6361
    %v6392 = vpack.c.b16 %v6366, %v6364
    %v6393 = vpack.c.b16 %v6367, %v6365
    %v6394 = vpack.c.b16 %v6370, %v6368
    %v6395 = vpack.c.b16 %v6371, %v6369
    %v6396 = vpack.c.b16 %v6374, %v6372
    %v6397 = vpack.c.b16 %v6375, %v6373
    %v6398 = vpack.c.b16 %v6378, %v6376
    %v6399 = vpack.c.b16 %v6379, %v6377
    %v6400 = vpack.c.b16 %v6382, %v6380
    %v6401 = vpack.c.b16 %v6383, %v6381
    %v6402 = vpack.c.b16 %v6386, %v6384
    %v6403 = vpack.c.b16 %v6387, %v6385
    %6420 = vmatprep.subr.bf16.mxu0 %v6389
    %6421 = vmatpush1.bf16.msra.mxu0 %v6388
    %6422 = vmatprep.subr.bf16.mxu0 %v6391
    %6423 = vmatpush1.bf16.msra.mxu0 %v6390
    %6424 = vmatprep.subr.bf16.mxu0 %v6393
    %6425 = vmatpush1.bf16.msra.mxu0 %v6392
    %6426 = vmatprep.subr.bf16.mxu0 %v6395
    %6427 = vmatpush1.bf16.msra.mxu0 %v6394
    %6428 = vmatprep.subr.bf16.mxu0 %v6397
    %6429 = vmatpush1.bf16.msra.mxu0 %v6396
    %6430 = vmatprep.subr.bf16.mxu0 %v6399
    %6431 = vmatpush1.bf16.msra.mxu0 %v6398
    %6432 = vmatprep.subr.bf16.mxu0 %v6401
    %6433 = vmatpush1.bf16.msra.mxu0 %v6400
    %6434 = vmatprep.subr.bf16.mxu0 %v6403
    %6435 = vmatpush1.bf16.msra.mxu0 %v6402
    %6436 = vmatprep.subr.bf16.mxu0 0
    %6437 = vmatpush1.bf16.msra.mxu0 0
    %6438 = vmatprep.subr.bf16.mxu0 0
    %6439 = vmatpush1.bf16.msra.mxu0 0
    %6440 = vmatprep.subr.bf16.mxu0 0
    %6441 = vmatpush1.bf16.msra.mxu0 0
    %6442 = vmatprep.subr.bf16.mxu0 0
    %6443 = vmatpush1.bf16.msra.mxu0 0
    %6444 = vmatprep.subr.bf16.mxu0 0
    %6445 = vmatpush1.bf16.msra.mxu0 0
    %6446 = vmatprep.subr.bf16.mxu0 0
    %6447 = vmatpush1.bf16.msra.mxu0 0
    %6448 = vmatprep.subr.bf16.mxu0 0
    %6449 = vmatpush1.bf16.msra.mxu0 0
    %6450 = vmatprep.subr.bf16.mxu0 0
    %6451 = vmatpush1.bf16.msra.mxu0 0
    %6452 = vmatprep.mubr.bf16.mxu0 0
    %6453 = vmatmul.mubr.bf16.gmra.mrb[0].mxu0 %v6312
    %v6454 = vpop.f32.mrb[0].mxu0
    %v6455 = vadd.f32 %v6333, %v6454
    %v6456 = vpop.f32.mrb[0].mxu0
    %v6457 = vadd.f32 %v6337, %v6456
    %v6458 = vpop.f32.mrb[0].mxu0
    %v6459 = vadd.f32 %v6333, %v6458
    %v6460 = vpop.f32.mrb[0].mxu0
    %v6461 = vadd.f32 %v6337, %v6460
    %6462 = vdwg.mxu0
    %v6463 = vmul.f32 %v6455, %v6455
    %v6464 = vmul.f32 %v6457, %v6457
    %v6465 = vmul.f32 %v6459, %v6459
    %v6466 = vmul.f32 %v6461, %v6461
    %v6467 = vadd.f32 %v6463, %v6464
    %6468 = vadd.xlane.f32.xlu0 %v6467
    %v6469 = vpop.xlane.xlu0 %6468
    %v6470 = vadd.f32 %v6465, %v6466
    %6471 = vadd.xlane.f32.xlu0 %v6470
    %v6472 = vpop.xlane.xlu0 %6471
    %v6473 = vmul.f32 %v6083, %v6083
    %v6474 = vmul.f32 %v6084, %v6084
    %v6475 = vmul.f32 %v6081, %v6081
    %v6476 = vmul.f32 %v6082, %v6082
    %v6477 = vadd.f32 %v6473, %v6474
    %6478 = vadd.xlane.f32.xlu0 %v6477
    %v6479 = vpop.xlane.xlu0 %6478
    %v6480 = vadd.f32 %v6475, %v6476
    %6481 = vadd.xlane.f32.xlu0 %v6480
    %v6482 = vpop.xlane.xlu0 %6481
    %v6483 = vmax.f32 %v6469, 1e-16
    %v6484 = vmax.f32 %v6472, 1e-16
    %v6485 = vrsqrt.pop %v6483
    %v6486 = vrsqrt.pop %v6484
    %v6487 = vmax.f32 %v6479, 1e-16
    %v6488 = vmax.f32 %v6482, 1e-16
    %v6489 = vrsqrt.pop %v6487
    %v6490 = vrsqrt.pop %v6488
    %v6491 = vmul.f32 %v6485, %v6489
    %v6492 = vmul.f32 %v6486, %v6490
    %v6493 = vmul.f32 %v6455, %v6083
    %v6494 = vmul.f32 %v6457, %v6084
    %v6495 = vmul.f32 %v6459, %v6081
    %v6496 = vmul.f32 %v6461, %v6082
    %v6497 = vadd.f32 %v6493, %v6494
    %6498 = vadd.xlane.f32.xlu0 %v6497
    %v6499 = vpop.xlane.xlu0 %6498
    %v6500 = vadd.f32 %v6495, %v6496
    %6501 = vadd.xlane.f32.xlu0 %v6500
    %v6502 = vpop.xlane.xlu0 %6501
    %v6503 = vmul.f32 %v6499, %v6491
    %v6504 = vmul.f32 %v6502, %v6492
    %v6505 = vadd.f32 %v6503, %v6504
    %v6506 = vrot.slane %v6505, 4
    %v6507 = vadd.f32 %v6505, %v6506
    %v6508 = vrot.slane %v6507, 2
    %v6509 = vadd.f32 %v6507, %v6508
    %v6510 = vrot.slane %v6509, 1
    %v6511 = vadd.f32 %v6509, %v6510
    %v6512 = vsub.f32 0.0, %v6511
    %v6513 = vrcp.pop 16.0
    %v6514 = vmul.f32 %v6512, %v6513
    %vm6515 = vcmask 0
    %6516 = vst.msk [vmem:[#allocation3] sm:$0x1] %vm6515, %v6514
    // Predicated region
    $region42: #{simsiam_forward.1} parent=1 // pred_check
      _
    $region43: #{simsiam_forward.1} parent=1 // pred_check_branch
      %6518 = sbr.rel (0) target = $region45
    $region44: #{simsiam_forward.1} parent=1 // pred_region
      %s6520 = ssub.s32 16, 16
      %6521 = vsyncadd [#allocation4], %s6520
      %s6523 = sshll.u32 [#allocation3], 4
      %s6524 = int_to_ptr.vmem [resolvable:$true] %s6523
      %6526 = dma.vmem_to_hbm [thread:$0]  %s6524, 16, %s10, [#allocation4]
    $region45: #{simsiam_forward.1} parent=1 // pred_fallthru
      _
    // Predicated region
    $region46: #{simsiam_forward.1} parent=1 // pred_check
      _
    $region47: #{simsiam_forward.1} parent=1 // pred_check_branch
      %6528 = sbr.rel (0) target = $region49
    $region48: #{simsiam_forward.1} parent=1 // pred_region
      %6529 = dma.done [#allocation4], 16
    $region49: #{simsiam_forward.1} parent=1 // pred_fallthru
      _
    %6530 = vsyncpa [#allocation4], 1

</llo_original>
